<compile_context>
chip_gen: v5e
topology: v5e:2x2
jax: 0.10.0
libtpu: 0.0.40
codegen_flags: <defaults>
</compile_context>

<pallas_src>
import functools

import jax
import jax.numpy as jnp
from jax import lax
from jax.experimental import pallas as pl
from jax.experimental.pallas import tpu as pltpu

EPS = 1e-5  # PyTorch BatchNorm2d default eps


def _lane_fold(v, c, wc):
    """Sum the W pixel-column replicas of every channel and re-broadcast.

    `v` lives in the fused lane layout lane = w*C + c.  A log2(W) roll-reduce
    along the lane axis (XLU) both folds over w and leaves every lane holding
    its per-channel total -- exactly what the old (WC,WC) indicator matmul
    did, but in exact f32 and off the MXU.  Requires W = wc // c to be a
    power of two (asserted in the wrapper).
    """
    shift = c
    while shift < wc:
        v = v + pltpu.roll(v, shift=shift, axis=1)
        shift *= 2
    return v


def resblock_kernel(x_ref, w1a_ref, w1b_ref, g1_ref, b1_ref,
                    w2a_ref, w2b_ref, g2_ref, b2_ref, mask1_ref,
                    o_ref, *, N, H, W, C):
    """conv1+bn1+relu+conv2+bn2+residual+relu, fused, in (N*H, W*C) layout."""
    NH, WC = N * H, W * C
    f32 = jnp.float32

    x = x_ref[...]                       # (NH, WC) f32
    mask1 = mask1_ref[...]               # 1.0 at valid conv1 outputs, else 0.0

    # ---- conv1: 2x2 VALID -> two accumulating K=WC bf16 MXU matmuls --------
    # Row shift via XLU sublane roll (replaces the old (NH,NH) f32 matmul).
    # x_dn[r] = x[r+1]; rows that cross an image boundary (r % H == H-1) and
    # the wrap row only feed conv1 outputs that mask1 zeroes below.
    x_dn = pltpu.roll(x, shift=NH - 1, axis=0)
    o1 = jnp.dot(x.astype(jnp.bfloat16), w1a_ref[...],
                 preferred_element_type=f32)
    o1 = o1 + jnp.dot(x_dn.astype(jnp.bfloat16), w1b_ref[...],
                      preferred_element_type=f32)

    # ---- bn1 (two-pass, exact f32) + relu; invalid row/col zeroed ----------
    cnt1 = float(N * (H - 1) * (W - 1))
    s1 = _lane_fold(jnp.sum(o1 * mask1, axis=0, keepdims=True), C, WC)
    mean1 = s1 * (1.0 / cnt1)
    d1 = (o1 - mean1) * mask1                        # centered; invalid -> 0
    v1 = _lane_fold(jnp.sum(d1 * d1, axis=0, keepdims=True), C, WC) * (1.0 / cnt1)
    scale1 = g1_ref[...] * lax.rsqrt(v1 + EPS)
    # The trailing *mask1 zeroes the invalid row/col band: that zero band IS
    # conv2's bottom/right padding (and the source of its zero top padding).
    h1 = jnp.maximum(d1 * scale1 + b1_ref[...], 0.0) * mask1

    # ---- conv2: 2x2, pad 1 -> two accumulating K=WC bf16 MXU matmuls -------
    # h1_up[r] = h1[r-1]; rows with r % H == 0 (top pad) and the wrap row
    # pick up the zero band mask1 left in h1, so no extra mask is needed.
    h1_up = pltpu.roll(h1, shift=1, axis=0)
    o2 = jnp.dot(h1_up.astype(jnp.bfloat16), w2a_ref[...],
                 preferred_element_type=f32)
    o2 = o2 + jnp.dot(h1.astype(jnp.bfloat16), w2b_ref[...],
                      preferred_element_type=f32)

    # ---- bn2 (two-pass) + residual add + relu -------------------------------
    cnt2 = float(N * H * W)
    s2 = _lane_fold(jnp.sum(o2, axis=0, keepdims=True), C, WC)
    mean2 = s2 * (1.0 / cnt2)
    d2 = o2 - mean2
    v2 = _lane_fold(jnp.sum(d2 * d2, axis=0, keepdims=True), C, WC) * (1.0 / cnt2)
    scale2 = g2_ref[...] * lax.rsqrt(v2 + EPS)
    o_ref[...] = jnp.maximum(d2 * scale2 + b2_ref[...] + x, 0.0)  # lane-dense store


@jax.jit
def resblock_forward(x_nchw, w1_oihw, g1, b1, w2_oihw, g2, b2):
    """PyTorch-facing wrapper: NCHW in, NCHW out."""
    N, C, H, W = x_nchw.shape
    NH, WC = N * H, W * C
    assert W & (W - 1) == 0, "lane-fold butterfly assumes W is a power of two"
    assert WC % 128 == 0, "fused lane dim must be a multiple of 128"

    # NCHW -> fused lane-dense (N*H, W*C) (NHWC with W and C merged in lanes).
    x_f = jnp.transpose(x_nchw, (0, 2, 3, 1)).reshape(NH, WC).astype(jnp.float32)

    # PyTorch conv weights (Cout, Cin, kh, kw) -> (kh, kw, Cin, Cout).
    w1t = jnp.transpose(w1_oihw, (2, 3, 1, 0)).astype(jnp.float32)
    w2t = jnp.transpose(w2_oihw, (2, 3, 1, 0)).astype(jnp.float32)

    # Per-kh block-banded weights acting directly on the fused layout:
    # rows = [input pixel-column jin, cin], cols = [output pixel-column j, cout].
    # Split by kh so each conv is two K=WC matmuls (one MXU K pass each).
    eye = jnp.eye(W, dtype=jnp.float32)
    inds1 = jnp.stack([eye, jnp.eye(W, k=-1, dtype=jnp.float32)])  # conv1: jin = j + kw
    inds2 = jnp.stack([jnp.eye(W, k=1, dtype=jnp.float32), eye])   # conv2: jin = j + kw - 1
    wb1 = jnp.einsum("hkab,kij->hiajb", w1t, inds1).reshape(2, WC, WC).astype(jnp.bfloat16)
    wb2 = jnp.einsum("hkab,kij->hiajb", w2t, inds2).reshape(2, WC, WC).astype(jnp.bfloat16)
    w1a, w1b = wb1[0], wb1[1]   # kh=0 (applied to x)     / kh=1 (applied to x_dn)
    w2a, w2b = wb2[0], wb2[1]   # kh=0 (applied to h1_up) / kh=1 (applied to h1)

    # Per-channel BN affine params tiled to the fused lane layout (1, W*C).
    tile = lambda v: jnp.tile(v.astype(jnp.float32), W).reshape(1, WC)
    g1t, b1t, g2t, b2t = tile(g1), tile(b1), tile(g2), tile(b2)

    # Valid conv1 (VALID-padding) output positions; everything else is the
    # zero band that doubles as conv2's padding.  Built once here so the
    # kernel body contains no iota/constant construction.
    rows = jnp.arange(NH) % H
    cols = jnp.arange(WC) // C
    mask1 = ((rows[:, None] != H - 1) & (cols[None, :] != W - 1)).astype(jnp.float32)

    vmem = pl.BlockSpec(memory_space=pltpu.MemorySpace.VMEM)
    out_f = pl.pallas_call(
        functools.partial(resblock_kernel, N=N, H=H, W=W, C=C),
        out_shape=jax.ShapeDtypeStruct((NH, WC), jnp.float32),
        in_specs=[vmem] * 10,
        out_specs=vmem,
    )(x_f, w1a, w1b, g1t, b1t, w2a, w2b, g2t, b2t, mask1)

    # fused (N*H, W*C) -> NCHW
    return jnp.transpose(out_f.reshape(N, H, W, C), (0, 3, 1, 2))


def _ref_forward(x, w1, g1, b1, w2, g2, b2):
    """Pure-JAX reference (NCHW) matching PyTorch training-mode semantics."""
    def bn(o, g, b):
        mu = jnp.mean(o, axis=(0, 2, 3), keepdims=True)
        var = jnp.mean((o - mu) ** 2, axis=(0, 2, 3), keepdims=True)
        return ((o - mu) * lax.rsqrt(var + EPS) * g.reshape(1, -1, 1, 1)
                + b.reshape(1, -1, 1, 1))

    dn = ("NCHW", "OIHW", "NCHW")
    o = lax.conv_general_dilated(x, w1, (1, 1), "VALID", dimension_numbers=dn)
    o = jnp.maximum(bn(o, g1, b1), 0.0)
    o = lax.conv_general_dilated(o, w2, (1, 1), [(1, 1), (1, 1)],
                                 dimension_numbers=dn)
    o = bn(o, g2, b2) + x
    return jnp.maximum(o, 0.0)


if __name__ == "__main__":
    # Small, deterministic synthetic setup (inplanes = planes = 32).
    N, C, H, W = 2, 32, 8, 8
    key = jax.random.PRNGKey(0)
    kx, kw1, kw2, kg1, kb1, kg2, kb2 = jax.random.split(key, 7)

    x = jax.random.normal(kx, (N, C, H, W), jnp.float32)
    w1 = jax.random.normal(kw1, (C, C, 2, 2), jnp.float32) * 0.1   # conv1 weight
    w2 = jax.random.normal(kw2, (C, C, 2, 2), jnp.float32) * 0.1   # conv2 weight
    g1 = 1.0 + 0.1 * jax.random.normal(kg1, (C,), jnp.float32)     # bn1 gamma
    b1 = 0.1 * jax.random.normal(kb1, (C,), jnp.float32)           # bn1 beta
    g2 = 1.0 + 0.1 * jax.random.normal(kg2, (C,), jnp.float32)     # bn2 gamma
    b2 = 0.1 * jax.random.normal(kb2, (C,), jnp.float32)           # bn2 beta

    out = jax.block_until_ready(resblock_forward(x, w1, g1, b1, w2, g2, b2))
    ref = jax.block_until_ready(_ref_forward(x, w1, g1, b1, w2, g2, b2))

    assert out.shape == (N, C, H, W)
    err = float(jnp.max(jnp.abs(out - ref)))
    # bf16 MXU inputs (f32 accumulation) -> slightly looser tolerance than pure f32.
    assert jnp.allclose(out, ref, atol=5e-2, rtol=5e-2), err
    print("KERNEL_OK")
</pallas_src>

<mosaic_0001>
module attributes {stable_mosaic.version = 11 : i64} {
  func.func @resblock_kernel(%arg0: memref<16x256xf32, #tpu.memory_space<vmem>>, %arg1: memref<256x256xbf16, #tpu.memory_space<vmem>>, %arg2: memref<256x256xbf16, #tpu.memory_space<vmem>>, %arg3: memref<1x256xf32, #tpu.memory_space<vmem>>, %arg4: memref<1x256xf32, #tpu.memory_space<vmem>>, %arg5: memref<256x256xbf16, #tpu.memory_space<vmem>>, %arg6: memref<256x256xbf16, #tpu.memory_space<vmem>>, %arg7: memref<1x256xf32, #tpu.memory_space<vmem>>, %arg8: memref<1x256xf32, #tpu.memory_space<vmem>>, %arg9: memref<16x256xf32, #tpu.memory_space<vmem>>, %arg10: memref<16x256xf32, #tpu.memory_space<vmem>>) attributes {dimension_semantics = [], scalar_prefetch = 0 : i64, scratch_operands = 0 : i64, tpu.core_type = #tpu.core_type<tc>} {
    %c0 = arith.constant 0 : index
    %c0_0 = arith.constant 0 : index
    %0 = vector.load %arg0[%c0, %c0_0] : memref<16x256xf32, #tpu.memory_space<vmem>>, vector<16x256xf32>
    %c0_1 = arith.constant 0 : index
    %c0_2 = arith.constant 0 : index
    %1 = vector.load %arg9[%c0_1, %c0_2] : memref<16x256xf32, #tpu.memory_space<vmem>>, vector<16x256xf32>
    %c15_i32 = arith.constant 15 : i32
    %2 = tpu.dynamic_rotate %0 by %c15_i32 dim 0 : vector<16x256xf32>, i32 -> vector<16x256xf32>
    %3 = arith.truncf %0 : vector<16x256xf32> to vector<16x256xbf16>
    %c0_3 = arith.constant 0 : index
    %c0_4 = arith.constant 0 : index
    %4 = vector.load %arg1[%c0_3, %c0_4] : memref<256x256xbf16, #tpu.memory_space<vmem>>, vector<256x256xbf16>
    %cst = arith.constant dense<0.000000e+00> : vector<16x256xf32>
    %5 = tpu.matmul %3, %4, %cst {dimension_numbers = #tpu.dot_dimension_numbers<[1], [0], [0], [1], [0, 0, 1, 1], [], []>} : vector<16x256xbf16>, vector<256x256xbf16>, vector<16x256xf32> -> vector<16x256xf32>
    %6 = arith.truncf %2 : vector<16x256xf32> to vector<16x256xbf16>
    %c0_5 = arith.constant 0 : index
    %c0_6 = arith.constant 0 : index
    %7 = vector.load %arg2[%c0_5, %c0_6] : memref<256x256xbf16, #tpu.memory_space<vmem>>, vector<256x256xbf16>
    %cst_7 = arith.constant dense<0.000000e+00> : vector<16x256xf32>
    %8 = tpu.matmul %6, %7, %cst_7 {dimension_numbers = #tpu.dot_dimension_numbers<[1], [0], [0], [1], [0, 0, 1, 1], [], []>} : vector<16x256xbf16>, vector<256x256xbf16>, vector<16x256xf32> -> vector<16x256xf32>
    %9 = arith.addf %5, %8 : vector<16x256xf32>
    %10 = arith.mulf %9, %1 : vector<16x256xf32>
    %cst_8 = arith.constant dense<0.000000e+00> : vector<256xf32>
    %11 = vector.multi_reduction <add>, %10, %cst_8 [0] : vector<16x256xf32> to vector<256xf32>
    %12 = vector.shape_cast %11 : vector<256xf32> to vector<1x256xf32>
    %c32_i32 = arith.constant 32 : i32
    %13 = tpu.dynamic_rotate %12 by %c32_i32 dim 1 : vector<1x256xf32>, i32 -> vector<1x256xf32>
    %14 = arith.addf %12, %13 : vector<1x256xf32>
    %c64_i32 = arith.constant 64 : i32
    %15 = tpu.dynamic_rotate %14 by %c64_i32 dim 1 : vector<1x256xf32>, i32 -> vector<1x256xf32>
    %16 = arith.addf %14, %15 : vector<1x256xf32>
    %c128_i32 = arith.constant 128 : i32
    %17 = tpu.dynamic_rotate %16 by %c128_i32 dim 1 : vector<1x256xf32>, i32 -> vector<1x256xf32>
    %18 = arith.addf %16, %17 : vector<1x256xf32>
    %cst_9 = arith.constant 0.0102040814 : f32
    %19 = vector.broadcast %cst_9 : f32 to vector<1x256xf32>
    %20 = arith.mulf %18, %19 : vector<1x256xf32>
    %21 = vector.broadcast %20 : vector<1x256xf32> to vector<16x256xf32>
    %22 = arith.subf %9, %21 : vector<16x256xf32>
    %23 = arith.mulf %22, %1 : vector<16x256xf32>
    %24 = arith.mulf %23, %23 : vector<16x256xf32>
    %cst_10 = arith.constant dense<0.000000e+00> : vector<256xf32>
    %25 = vector.multi_reduction <add>, %24, %cst_10 [0] : vector<16x256xf32> to vector<256xf32>
    %26 = vector.shape_cast %25 : vector<256xf32> to vector<1x256xf32>
    %c32_i32_11 = arith.constant 32 : i32
    %27 = tpu.dynamic_rotate %26 by %c32_i32_11 dim 1 : vector<1x256xf32>, i32 -> vector<1x256xf32>
    %28 = arith.addf %26, %27 : vector<1x256xf32>
    %c64_i32_12 = arith.constant 64 : i32
    %29 = tpu.dynamic_rotate %28 by %c64_i32_12 dim 1 : vector<1x256xf32>, i32 -> vector<1x256xf32>
    %30 = arith.addf %28, %29 : vector<1x256xf32>
    %c128_i32_13 = arith.constant 128 : i32
    %31 = tpu.dynamic_rotate %30 by %c128_i32_13 dim 1 : vector<1x256xf32>, i32 -> vector<1x256xf32>
    %32 = arith.addf %30, %31 : vector<1x256xf32>
    %cst_14 = arith.constant 0.0102040814 : f32
    %33 = vector.broadcast %cst_14 : f32 to vector<1x256xf32>
    %34 = arith.mulf %32, %33 : vector<1x256xf32>
    %c0_15 = arith.constant 0 : index
    %c0_16 = arith.constant 0 : index
    %35 = vector.load %arg3[%c0_15, %c0_16] : memref<1x256xf32, #tpu.memory_space<vmem>>, vector<1x256xf32>
    %cst_17 = arith.constant 9.99999974E-6 : f32
    %36 = vector.broadcast %cst_17 : f32 to vector<1x256xf32>
    %37 = arith.addf %34, %36 : vector<1x256xf32>
    %38 = math.rsqrt %37 : vector<1x256xf32>
    %39 = arith.mulf %35, %38 : vector<1x256xf32>
    %40 = vector.broadcast %39 : vector<1x256xf32> to vector<16x256xf32>
    %41 = arith.mulf %23, %40 : vector<16x256xf32>
    %c0_18 = arith.constant 0 : index
    %c0_19 = arith.constant 0 : index
    %42 = vector.load %arg4[%c0_18, %c0_19] : memref<1x256xf32, #tpu.memory_space<vmem>>, vector<1x256xf32>
    %43 = vector.broadcast %42 : vector<1x256xf32> to vector<16x256xf32>
    %44 = arith.addf %41, %43 : vector<16x256xf32>
    %cst_20 = arith.constant 0.000000e+00 : f32
    %45 = vector.broadcast %cst_20 : f32 to vector<16x256xf32>
    %46 = arith.maximumf %44, %45 : vector<16x256xf32>
    %47 = arith.mulf %46, %1 : vector<16x256xf32>
    %c1_i32 = arith.constant 1 : i32
    %48 = tpu.dynamic_rotate %47 by %c1_i32 dim 0 : vector<16x256xf32>, i32 -> vector<16x256xf32>
    %49 = arith.truncf %48 : vector<16x256xf32> to vector<16x256xbf16>
    %c0_21 = arith.constant 0 : index
    %c0_22 = arith.constant 0 : index
    %50 = vector.load %arg5[%c0_21, %c0_22] : memref<256x256xbf16, #tpu.memory_space<vmem>>, vector<256x256xbf16>
    %cst_23 = arith.constant dense<0.000000e+00> : vector<16x256xf32>
    %51 = tpu.matmul %49, %50, %cst_23 {dimension_numbers = #tpu.dot_dimension_numbers<[1], [0], [0], [1], [0, 0, 1, 1], [], []>} : vector<16x256xbf16>, vector<256x256xbf16>, vector<16x256xf32> -> vector<16x256xf32>
    %52 = arith.truncf %47 : vector<16x256xf32> to vector<16x256xbf16>
    %c0_24 = arith.constant 0 : index
    %c0_25 = arith.constant 0 : index
    %53 = vector.load %arg6[%c0_24, %c0_25] : memref<256x256xbf16, #tpu.memory_space<vmem>>, vector<256x256xbf16>
    %cst_26 = arith.constant dense<0.000000e+00> : vector<16x256xf32>
    %54 = tpu.matmul %52, %53, %cst_26 {dimension_numbers = #tpu.dot_dimension_numbers<[1], [0], [0], [1], [0, 0, 1, 1], [], []>} : vector<16x256xbf16>, vector<256x256xbf16>, vector<16x256xf32> -> vector<16x256xf32>
    %55 = arith.addf %51, %54 : vector<16x256xf32>
    %cst_27 = arith.constant dense<0.000000e+00> : vector<256xf32>
    %56 = vector.multi_reduction <add>, %55, %cst_27 [0] : vector<16x256xf32> to vector<256xf32>
    %57 = vector.shape_cast %56 : vector<256xf32> to vector<1x256xf32>
    %c32_i32_28 = arith.constant 32 : i32
    %58 = tpu.dynamic_rotate %57 by %c32_i32_28 dim 1 : vector<1x256xf32>, i32 -> vector<1x256xf32>
    %59 = arith.addf %57, %58 : vector<1x256xf32>
    %c64_i32_29 = arith.constant 64 : i32
    %60 = tpu.dynamic_rotate %59 by %c64_i32_29 dim 1 : vector<1x256xf32>, i32 -> vector<1x256xf32>
    %61 = arith.addf %59, %60 : vector<1x256xf32>
    %c128_i32_30 = arith.constant 128 : i32
    %62 = tpu.dynamic_rotate %61 by %c128_i32_30 dim 1 : vector<1x256xf32>, i32 -> vector<1x256xf32>
    %63 = arith.addf %61, %62 : vector<1x256xf32>
    %cst_31 = arith.constant 7.812500e-03 : f32
    %64 = vector.broadcast %cst_31 : f32 to vector<1x256xf32>
    %65 = arith.mulf %63, %64 : vector<1x256xf32>
    %66 = vector.broadcast %65 : vector<1x256xf32> to vector<16x256xf32>
    %67 = arith.subf %55, %66 : vector<16x256xf32>
    %68 = arith.mulf %67, %67 : vector<16x256xf32>
    %cst_32 = arith.constant dense<0.000000e+00> : vector<256xf32>
    %69 = vector.multi_reduction <add>, %68, %cst_32 [0] : vector<16x256xf32> to vector<256xf32>
    %70 = vector.shape_cast %69 : vector<256xf32> to vector<1x256xf32>
    %c32_i32_33 = arith.constant 32 : i32
    %71 = tpu.dynamic_rotate %70 by %c32_i32_33 dim 1 : vector<1x256xf32>, i32 -> vector<1x256xf32>
    %72 = arith.addf %70, %71 : vector<1x256xf32>
    %c64_i32_34 = arith.constant 64 : i32
    %73 = tpu.dynamic_rotate %72 by %c64_i32_34 dim 1 : vector<1x256xf32>, i32 -> vector<1x256xf32>
    %74 = arith.addf %72, %73 : vector<1x256xf32>
    %c128_i32_35 = arith.constant 128 : i32
    %75 = tpu.dynamic_rotate %74 by %c128_i32_35 dim 1 : vector<1x256xf32>, i32 -> vector<1x256xf32>
    %76 = arith.addf %74, %75 : vector<1x256xf32>
    %cst_36 = arith.constant 7.812500e-03 : f32
    %77 = vector.broadcast %cst_36 : f32 to vector<1x256xf32>
    %78 = arith.mulf %76, %77 : vector<1x256xf32>
    %c0_37 = arith.constant 0 : index
    %c0_38 = arith.constant 0 : index
    %79 = vector.load %arg7[%c0_37, %c0_38] : memref<1x256xf32, #tpu.memory_space<vmem>>, vector<1x256xf32>
    %cst_39 = arith.constant 9.99999974E-6 : f32
    %80 = vector.broadcast %cst_39 : f32 to vector<1x256xf32>
    %81 = arith.addf %78, %80 : vector<1x256xf32>
    %82 = math.rsqrt %81 : vector<1x256xf32>
    %83 = arith.mulf %79, %82 : vector<1x256xf32>
    %84 = vector.broadcast %83 : vector<1x256xf32> to vector<16x256xf32>
    %85 = arith.mulf %67, %84 : vector<16x256xf32>
    %c0_40 = arith.constant 0 : index
    %c0_41 = arith.constant 0 : index
    %86 = vector.load %arg8[%c0_40, %c0_41] : memref<1x256xf32, #tpu.memory_space<vmem>>, vector<1x256xf32>
    %87 = vector.broadcast %86 : vector<1x256xf32> to vector<16x256xf32>
    %88 = arith.addf %85, %87 : vector<16x256xf32>
    %89 = arith.addf %88, %0 : vector<16x256xf32>
    %cst_42 = arith.constant 0.000000e+00 : f32
    %90 = vector.broadcast %cst_42 : f32 to vector<16x256xf32>
    %91 = arith.maximumf %89, %90 : vector<16x256xf32>
    %c0_43 = arith.constant 0 : index
    %c0_44 = arith.constant 0 : index
    %92 = vector.load %arg10[%c0_43, %c0_44] : memref<16x256xf32, #tpu.memory_space<vmem>>, vector<16x256xf32>
    tpu.vector_store %arg10[%c0_43, %c0_44], %91 {strides = array<i32>} : memref<16x256xf32, #tpu.memory_space<vmem>>, vector<16x256xf32>,
    return
  }
}

</mosaic_0001>

<llo_original>
// kernel: squeeze.4
$region0: #{squeeze.4}
  %s0 = inlined_call_operand.vmem [shape: bf16[1,8,32,8,32], index: 0, kind: input, shape index: {}]
  %s1 = inlined_call_operand.vmem [shape: bf16[256,256], index: 1, kind: output, shape index: {}]
  $region1: #{squeeze.4} parent=0
    #allocation0 [shape = 'u8[262144]{0}', space=vmem, size = 0x40000, scoped, tag = 'scoped mem for output reshape']
    #allocation1 [shape = 'u8[1048576]{0}', space=vmem, size = 0x100000, scoped, tag = 'scoped mem for input reshape']
    %s3 = ssub.s32 256, 1
    %s4 = scalar_lea.vmem %s0, 1020
    %s5 = sshrl.u32 %s3, 1
    %s6 = sor.u32 %s3, %s5
    %s7 = sand.u32 %s6, 85
    %s8 = sshrl.u32 %s7, 1
    %s9 = sor.u32 %s7, %s8
    %s10 = sand.u32 51, %s9
    %s11 = sshrl.u32 %s10, 2
    %s12 = sor.u32 %s10, %s11
    %s13 = sand.u32 15, %s12
    %v14 = vld [vmem:[%s4] sm:%s13]
    %v15 = vunpack.c.l.bf16 %v14
    %v16 = vunpack.c.h.bf16 %v14
    %s17 = scalar_lea.vmem [#allocation1], 2040
    %18 = vst [vmem:[%s17] sm:%s3] %v15
    %s19 = scalar_lea.vmem %s0, 1016
    %s20 = sshrl.u32 %s3, 1
    %s21 = sor.u32 %s3, %s20
    %s22 = sand.u32 %s21, 85
    %s23 = sshrl.u32 %s22, 1
    %s24 = sor.u32 %s22, %s23
    %s25 = sand.u32 51, %s24
    %s26 = sshrl.u32 %s25, 2
    %s27 = sor.u32 %s25, %s26
    %s28 = sand.u32 15, %s27
    %v29 = vld [vmem:[%s19] sm:%s28]
    %v30 = vunpack.c.l.bf16 %v29
    %v31 = vunpack.c.h.bf16 %v29
    %s32 = scalar_lea.vmem [#allocation1], 2032
    %33 = vst [vmem:[%s32] sm:%s3] %v30
    %s34 = scalar_lea.vmem %s0, 1012
    %s35 = sshrl.u32 %s3, 1
    %s36 = sor.u32 %s3, %s35
    %s37 = sand.u32 %s36, 85
    %s38 = sshrl.u32 %s37, 1
    %s39 = sor.u32 %s37, %s38
    %s40 = sand.u32 51, %s39
    %s41 = sshrl.u32 %s40, 2
    %s42 = sor.u32 %s40, %s41
    %s43 = sand.u32 15, %s42
    %v44 = vld [vmem:[%s34] sm:%s43]
    %v45 = vunpack.c.l.bf16 %v44
    %v46 = vunpack.c.h.bf16 %v44
    %s47 = scalar_lea.vmem [#allocation1], 2024
    %48 = vst [vmem:[%s47] sm:%s3] %v45
    %s49 = scalar_lea.vmem %s0, 1008
    %s50 = sshrl.u32 %s3, 1
    %s51 = sor.u32 %s3, %s50
    %s52 = sand.u32 %s51, 85
    %s53 = sshrl.u32 %s52, 1
    %s54 = sor.u32 %s52, %s53
    %s55 = sand.u32 51, %s54
    %s56 = sshrl.u32 %s55, 2
    %s57 = sor.u32 %s55, %s56
    %s58 = sand.u32 15, %s57
    %v59 = vld [vmem:[%s49] sm:%s58]
    %v60 = vunpack.c.l.bf16 %v59
    %v61 = vunpack.c.h.bf16 %v59
    %s62 = scalar_lea.vmem [#allocation1], 2016
    %63 = vst [vmem:[%s62] sm:%s3] %v60
    %s64 = scalar_lea.vmem %s0, 1004
    %s65 = sshrl.u32 %s3, 1
    %s66 = sor.u32 %s3, %s65
    %s67 = sand.u32 %s66, 85
    %s68 = sshrl.u32 %s67, 1
    %s69 = sor.u32 %s67, %s68
    %s70 = sand.u32 51, %s69
    %s71 = sshrl.u32 %s70, 2
    %s72 = sor.u32 %s70, %s71
    %s73 = sand.u32 15, %s72
    %v74 = vld [vmem:[%s64] sm:%s73]
    %v75 = vunpack.c.l.bf16 %v74
    %v76 = vunpack.c.h.bf16 %v74
    %s77 = scalar_lea.vmem [#allocation1], 2008
    %78 = vst [vmem:[%s77] sm:%s3] %v75
    %s79 = scalar_lea.vmem %s0, 1000
    %s80 = sshrl.u32 %s3, 1
    %s81 = sor.u32 %s3, %s80
    %s82 = sand.u32 %s81, 85
    %s83 = sshrl.u32 %s82, 1
    %s84 = sor.u32 %s82, %s83
    %s85 = sand.u32 51, %s84
    %s86 = sshrl.u32 %s85, 2
    %s87 = sor.u32 %s85, %s86
    %s88 = sand.u32 15, %s87
    %v89 = vld [vmem:[%s79] sm:%s88]
    %v90 = vunpack.c.l.bf16 %v89
    %v91 = vunpack.c.h.bf16 %v89
    %s92 = scalar_lea.vmem [#allocation1], 2000
    %93 = vst [vmem:[%s92] sm:%s3] %v90
    %s94 = scalar_lea.vmem %s0, 996
    %s95 = sshrl.u32 %s3, 1
    %s96 = sor.u32 %s3, %s95
    %s97 = sand.u32 %s96, 85
    %s98 = sshrl.u32 %s97, 1
    %s99 = sor.u32 %s97, %s98
    %s100 = sand.u32 51, %s99
    %s101 = sshrl.u32 %s100, 2
    %s102 = sor.u32 %s100, %s101
    %s103 = sand.u32 15, %s102
    %v104 = vld [vmem:[%s94] sm:%s103]
    %v105 = vunpack.c.l.bf16 %v104
    %v106 = vunpack.c.h.bf16 %v104
    %s107 = scalar_lea.vmem [#allocation1], 1992
    %108 = vst [vmem:[%s107] sm:%s3] %v105
    %s109 = scalar_lea.vmem %s0, 992
    %s110 = sshrl.u32 %s3, 1
    %s111 = sor.u32 %s3, %s110
    %s112 = sand.u32 %s111, 85
    %s113 = sshrl.u32 %s112, 1
    %s114 = sor.u32 %s112, %s113
    %s115 = sand.u32 51, %s114
    %s116 = sshrl.u32 %s115, 2
    %s117 = sor.u32 %s115, %s116
    %s118 = sand.u32 15, %s117
    %v119 = vld [vmem:[%s109] sm:%s118]
    %v120 = vunpack.c.l.bf16 %v119
    %v121 = vunpack.c.h.bf16 %v119
    %s122 = scalar_lea.vmem [#allocation1], 1984
    %123 = vst [vmem:[%s122] sm:%s3] %v120
    %s124 = scalar_lea.vmem %s0, 988
    %s125 = sshrl.u32 %s3, 1
    %s126 = sor.u32 %s3, %s125
    %s127 = sand.u32 %s126, 85
    %s128 = sshrl.u32 %s127, 1
    %s129 = sor.u32 %s127, %s128
    %s130 = sand.u32 51, %s129
    %s131 = sshrl.u32 %s130, 2
    %s132 = sor.u32 %s130, %s131
    %s133 = sand.u32 15, %s132
    %v134 = vld [vmem:[%s124] sm:%s133]
    %v135 = vunpack.c.l.bf16 %v134
    %v136 = vunpack.c.h.bf16 %v134
    %s137 = scalar_lea.vmem [#allocation1], 1976
    %138 = vst [vmem:[%s137] sm:%s3] %v135
    %s139 = scalar_lea.vmem %s0, 984
    %s140 = sshrl.u32 %s3, 1
    %s141 = sor.u32 %s3, %s140
    %s142 = sand.u32 %s141, 85
    %s143 = sshrl.u32 %s142, 1
    %s144 = sor.u32 %s142, %s143
    %s145 = sand.u32 51, %s144
    %s146 = sshrl.u32 %s145, 2
    %s147 = sor.u32 %s145, %s146
    %s148 = sand.u32 15, %s147
    %v149 = vld [vmem:[%s139] sm:%s148]
    %v150 = vunpack.c.l.bf16 %v149
    %v151 = vunpack.c.h.bf16 %v149
    %s152 = scalar_lea.vmem [#allocation1], 1968
    %153 = vst [vmem:[%s152] sm:%s3] %v150
    %s154 = scalar_lea.vmem %s0, 980
    %s155 = sshrl.u32 %s3, 1
    %s156 = sor.u32 %s3, %s155
    %s157 = sand.u32 %s156, 85
    %s158 = sshrl.u32 %s157, 1
    %s159 = sor.u32 %s157, %s158
    %s160 = sand.u32 51, %s159
    %s161 = sshrl.u32 %s160, 2
    %s162 = sor.u32 %s160, %s161
    %s163 = sand.u32 15, %s162
    %v164 = vld [vmem:[%s154] sm:%s163]
    %v165 = vunpack.c.l.bf16 %v164
    %v166 = vunpack.c.h.bf16 %v164
    %s167 = scalar_lea.vmem [#allocation1], 1960
    %168 = vst [vmem:[%s167] sm:%s3] %v165
    %s169 = scalar_lea.vmem %s0, 976
    %s170 = sshrl.u32 %s3, 1
    %s171 = sor.u32 %s3, %s170
    %s172 = sand.u32 %s171, 85
    %s173 = sshrl.u32 %s172, 1
    %s174 = sor.u32 %s172, %s173
    %s175 = sand.u32 51, %s174
    %s176 = sshrl.u32 %s175, 2
    %s177 = sor.u32 %s175, %s176
    %s178 = sand.u32 15, %s177
    %v179 = vld [vmem:[%s169] sm:%s178]
    %v180 = vunpack.c.l.bf16 %v179
    %v181 = vunpack.c.h.bf16 %v179
    %s182 = scalar_lea.vmem [#allocation1], 1952
    %183 = vst [vmem:[%s182] sm:%s3] %v180
    %s184 = scalar_lea.vmem %s0, 972
    %s185 = sshrl.u32 %s3, 1
    %s186 = sor.u32 %s3, %s185
    %s187 = sand.u32 %s186, 85
    %s188 = sshrl.u32 %s187, 1
    %s189 = sor.u32 %s187, %s188
    %s190 = sand.u32 51, %s189
    %s191 = sshrl.u32 %s190, 2
    %s192 = sor.u32 %s190, %s191
    %s193 = sand.u32 15, %s192
    %v194 = vld [vmem:[%s184] sm:%s193]
    %v195 = vunpack.c.l.bf16 %v194
    %v196 = vunpack.c.h.bf16 %v194
    %s197 = scalar_lea.vmem [#allocation1], 1944
    %198 = vst [vmem:[%s197] sm:%s3] %v195
    %s199 = scalar_lea.vmem %s0, 968
    %s200 = sshrl.u32 %s3, 1
    %s201 = sor.u32 %s3, %s200
    %s202 = sand.u32 %s201, 85
    %s203 = sshrl.u32 %s202, 1
    %s204 = sor.u32 %s202, %s203
    %s205 = sand.u32 51, %s204
    %s206 = sshrl.u32 %s205, 2
    %s207 = sor.u32 %s205, %s206
    %s208 = sand.u32 15, %s207
    %v209 = vld [vmem:[%s199] sm:%s208]
    %v210 = vunpack.c.l.bf16 %v209
    %v211 = vunpack.c.h.bf16 %v209
    %s212 = scalar_lea.vmem [#allocation1], 1936
    %213 = vst [vmem:[%s212] sm:%s3] %v210
    %s214 = scalar_lea.vmem %s0, 964
    %s215 = sshrl.u32 %s3, 1
    %s216 = sor.u32 %s3, %s215
    %s217 = sand.u32 %s216, 85
    %s218 = sshrl.u32 %s217, 1
    %s219 = sor.u32 %s217, %s218
    %s220 = sand.u32 51, %s219
    %s221 = sshrl.u32 %s220, 2
    %s222 = sor.u32 %s220, %s221
    %s223 = sand.u32 15, %s222
    %v224 = vld [vmem:[%s214] sm:%s223]
    %v225 = vunpack.c.l.bf16 %v224
    %v226 = vunpack.c.h.bf16 %v224
    %s227 = scalar_lea.vmem [#allocation1], 1928
    %228 = vst [vmem:[%s227] sm:%s3] %v225
    %s229 = scalar_lea.vmem %s0, 960
    %s230 = sshrl.u32 %s3, 1
    %s231 = sor.u32 %s3, %s230
    %s232 = sand.u32 %s231, 85
    %s233 = sshrl.u32 %s232, 1
    %s234 = sor.u32 %s232, %s233
    %s235 = sand.u32 51, %s234
    %s236 = sshrl.u32 %s235, 2
    %s237 = sor.u32 %s235, %s236
    %s238 = sand.u32 15, %s237
    %v239 = vld [vmem:[%s229] sm:%s238]
    %v240 = vunpack.c.l.bf16 %v239
    %v241 = vunpack.c.h.bf16 %v239
    %s242 = scalar_lea.vmem [#allocation1], 1920
    %243 = vst [vmem:[%s242] sm:%s3] %v240
    %s244 = scalar_lea.vmem %s0, 956
    %s245 = sshrl.u32 %s3, 1
    %s246 = sor.u32 %s3, %s245
    %s247 = sand.u32 %s246, 85
    %s248 = sshrl.u32 %s247, 1
    %s249 = sor.u32 %s247, %s248
    %s250 = sand.u32 51, %s249
    %s251 = sshrl.u32 %s250, 2
    %s252 = sor.u32 %s250, %s251
    %s253 = sand.u32 15, %s252
    %v254 = vld [vmem:[%s244] sm:%s253]
    %v255 = vunpack.c.l.bf16 %v254
    %v256 = vunpack.c.h.bf16 %v254
    %s257 = scalar_lea.vmem [#allocation1], 1912
    %258 = vst [vmem:[%s257] sm:%s3] %v255
    %s259 = scalar_lea.vmem %s0, 952
    %s260 = sshrl.u32 %s3, 1
    %s261 = sor.u32 %s3, %s260
    %s262 = sand.u32 %s261, 85
    %s263 = sshrl.u32 %s262, 1
    %s264 = sor.u32 %s262, %s263
    %s265 = sand.u32 51, %s264
    %s266 = sshrl.u32 %s265, 2
    %s267 = sor.u32 %s265, %s266
    %s268 = sand.u32 15, %s267
    %v269 = vld [vmem:[%s259] sm:%s268]
    %v270 = vunpack.c.l.bf16 %v269
    %v271 = vunpack.c.h.bf16 %v269
    %s272 = scalar_lea.vmem [#allocation1], 1904
    %273 = vst [vmem:[%s272] sm:%s3] %v270
    %s274 = scalar_lea.vmem %s0, 948
    %s275 = sshrl.u32 %s3, 1
    %s276 = sor.u32 %s3, %s275
    %s277 = sand.u32 %s276, 85
    %s278 = sshrl.u32 %s277, 1
    %s279 = sor.u32 %s277, %s278
    %s280 = sand.u32 51, %s279
    %s281 = sshrl.u32 %s280, 2
    %s282 = sor.u32 %s280, %s281
    %s283 = sand.u32 15, %s282
    %v284 = vld [vmem:[%s274] sm:%s283]
    %v285 = vunpack.c.l.bf16 %v284
    %v286 = vunpack.c.h.bf16 %v284
    %s287 = scalar_lea.vmem [#allocation1], 1896
    %288 = vst [vmem:[%s287] sm:%s3] %v285
    %s289 = scalar_lea.vmem %s0, 944
    %s290 = sshrl.u32 %s3, 1
    %s291 = sor.u32 %s3, %s290
    %s292 = sand.u32 %s291, 85
    %s293 = sshrl.u32 %s292, 1
    %s294 = sor.u32 %s292, %s293
    %s295 = sand.u32 51, %s294
    %s296 = sshrl.u32 %s295, 2
    %s297 = sor.u32 %s295, %s296
    %s298 = sand.u32 15, %s297
    %v299 = vld [vmem:[%s289] sm:%s298]
    %v300 = vunpack.c.l.bf16 %v299
    %v301 = vunpack.c.h.bf16 %v299
    %s302 = scalar_lea.vmem [#allocation1], 1888
    %303 = vst [vmem:[%s302] sm:%s3] %v300
    %s304 = scalar_lea.vmem %s0, 940
    %s305 = sshrl.u32 %s3, 1
    %s306 = sor.u32 %s3, %s305
    %s307 = sand.u32 %s306, 85
    %s308 = sshrl.u32 %s307, 1
    %s309 = sor.u32 %s307, %s308
    %s310 = sand.u32 51, %s309
    %s311 = sshrl.u32 %s310, 2
    %s312 = sor.u32 %s310, %s311
    %s313 = sand.u32 15, %s312
    %v314 = vld [vmem:[%s304] sm:%s313]
    %v315 = vunpack.c.l.bf16 %v314
    %v316 = vunpack.c.h.bf16 %v314
    %s317 = scalar_lea.vmem [#allocation1], 1880
    %318 = vst [vmem:[%s317] sm:%s3] %v315
    %s319 = scalar_lea.vmem %s0, 936
    %s320 = sshrl.u32 %s3, 1
    %s321 = sor.u32 %s3, %s320
    %s322 = sand.u32 %s321, 85
    %s323 = sshrl.u32 %s322, 1
    %s324 = sor.u32 %s322, %s323
    %s325 = sand.u32 51, %s324
    %s326 = sshrl.u32 %s325, 2
    %s327 = sor.u32 %s325, %s326
    %s328 = sand.u32 15, %s327
    %v329 = vld [vmem:[%s319] sm:%s328]
    %v330 = vunpack.c.l.bf16 %v329
    %v331 = vunpack.c.h.bf16 %v329
    %s332 = scalar_lea.vmem [#allocation1], 1872
    %333 = vst [vmem:[%s332] sm:%s3] %v330
    %s334 = scalar_lea.vmem %s0, 932
    %s335 = sshrl.u32 %s3, 1
    %s336 = sor.u32 %s3, %s335
    %s337 = sand.u32 %s336, 85
    %s338 = sshrl.u32 %s337, 1
    %s339 = sor.u32 %s337, %s338
    %s340 = sand.u32 51, %s339
    %s341 = sshrl.u32 %s340, 2
    %s342 = sor.u32 %s340, %s341
    %s343 = sand.u32 15, %s342
    %v344 = vld [vmem:[%s334] sm:%s343]
    %v345 = vunpack.c.l.bf16 %v344
    %v346 = vunpack.c.h.bf16 %v344
    %s347 = scalar_lea.vmem [#allocation1], 1864
    %348 = vst [vmem:[%s347] sm:%s3] %v345
    %s349 = scalar_lea.vmem %s0, 928
    %s350 = sshrl.u32 %s3, 1
    %s351 = sor.u32 %s3, %s350
    %s352 = sand.u32 %s351, 85
    %s353 = sshrl.u32 %s352, 1
    %s354 = sor.u32 %s352, %s353
    %s355 = sand.u32 51, %s354
    %s356 = sshrl.u32 %s355, 2
    %s357 = sor.u32 %s355, %s356
    %s358 = sand.u32 15, %s357
    %v359 = vld [vmem:[%s349] sm:%s358]
    %v360 = vunpack.c.l.bf16 %v359
    %v361 = vunpack.c.h.bf16 %v359
    %s362 = scalar_lea.vmem [#allocation1], 1856
    %363 = vst [vmem:[%s362] sm:%s3] %v360
    %s364 = scalar_lea.vmem %s0, 924
    %s365 = sshrl.u32 %s3, 1
    %s366 = sor.u32 %s3, %s365
    %s367 = sand.u32 %s366, 85
    %s368 = sshrl.u32 %s367, 1
    %s369 = sor.u32 %s367, %s368
    %s370 = sand.u32 51, %s369
    %s371 = sshrl.u32 %s370, 2
    %s372 = sor.u32 %s370, %s371
    %s373 = sand.u32 15, %s372
    %v374 = vld [vmem:[%s364] sm:%s373]
    %v375 = vunpack.c.l.bf16 %v374
    %v376 = vunpack.c.h.bf16 %v374
    %s377 = scalar_lea.vmem [#allocation1], 1848
    %378 = vst [vmem:[%s377] sm:%s3] %v375
    %s379 = scalar_lea.vmem %s0, 920
    %s380 = sshrl.u32 %s3, 1
    %s381 = sor.u32 %s3, %s380
    %s382 = sand.u32 %s381, 85
    %s383 = sshrl.u32 %s382, 1
    %s384 = sor.u32 %s382, %s383
    %s385 = sand.u32 51, %s384
    %s386 = sshrl.u32 %s385, 2
    %s387 = sor.u32 %s385, %s386
    %s388 = sand.u32 15, %s387
    %v389 = vld [vmem:[%s379] sm:%s388]
    %v390 = vunpack.c.l.bf16 %v389
    %v391 = vunpack.c.h.bf16 %v389
    %s392 = scalar_lea.vmem [#allocation1], 1840
    %393 = vst [vmem:[%s392] sm:%s3] %v390
    %s394 = scalar_lea.vmem %s0, 916
    %s395 = sshrl.u32 %s3, 1
    %s396 = sor.u32 %s3, %s395
    %s397 = sand.u32 %s396, 85
    %s398 = sshrl.u32 %s397, 1
    %s399 = sor.u32 %s397, %s398
    %s400 = sand.u32 51, %s399
    %s401 = sshrl.u32 %s400, 2
    %s402 = sor.u32 %s400, %s401
    %s403 = sand.u32 15, %s402
    %v404 = vld [vmem:[%s394] sm:%s403]
    %v405 = vunpack.c.l.bf16 %v404
    %v406 = vunpack.c.h.bf16 %v404
    %s407 = scalar_lea.vmem [#allocation1], 1832
    %408 = vst [vmem:[%s407] sm:%s3] %v405
    %s409 = scalar_lea.vmem %s0, 912
    %s410 = sshrl.u32 %s3, 1
    %s411 = sor.u32 %s3, %s410
    %s412 = sand.u32 %s411, 85
    %s413 = sshrl.u32 %s412, 1
    %s414 = sor.u32 %s412, %s413
    %s415 = sand.u32 51, %s414
    %s416 = sshrl.u32 %s415, 2
    %s417 = sor.u32 %s415, %s416
    %s418 = sand.u32 15, %s417
    %v419 = vld [vmem:[%s409] sm:%s418]
    %v420 = vunpack.c.l.bf16 %v419
    %v421 = vunpack.c.h.bf16 %v419
    %s422 = scalar_lea.vmem [#allocation1], 1824
    %423 = vst [vmem:[%s422] sm:%s3] %v420
    %s424 = scalar_lea.vmem %s0, 908
    %s425 = sshrl.u32 %s3, 1
    %s426 = sor.u32 %s3, %s425
    %s427 = sand.u32 %s426, 85
    %s428 = sshrl.u32 %s427, 1
    %s429 = sor.u32 %s427, %s428
    %s430 = sand.u32 51, %s429
    %s431 = sshrl.u32 %s430, 2
    %s432 = sor.u32 %s430, %s431
    %s433 = sand.u32 15, %s432
    %v434 = vld [vmem:[%s424] sm:%s433]
    %v435 = vunpack.c.l.bf16 %v434
    %v436 = vunpack.c.h.bf16 %v434
    %s437 = scalar_lea.vmem [#allocation1], 1816
    %438 = vst [vmem:[%s437] sm:%s3] %v435
    %s439 = scalar_lea.vmem %s0, 904
    %s440 = sshrl.u32 %s3, 1
    %s441 = sor.u32 %s3, %s440
    %s442 = sand.u32 %s441, 85
    %s443 = sshrl.u32 %s442, 1
    %s444 = sor.u32 %s442, %s443
    %s445 = sand.u32 51, %s444
    %s446 = sshrl.u32 %s445, 2
    %s447 = sor.u32 %s445, %s446
    %s448 = sand.u32 15, %s447
    %v449 = vld [vmem:[%s439] sm:%s448]
    %v450 = vunpack.c.l.bf16 %v449
    %v451 = vunpack.c.h.bf16 %v449
    %s452 = scalar_lea.vmem [#allocation1], 1808
    %453 = vst [vmem:[%s452] sm:%s3] %v450
    %s454 = scalar_lea.vmem %s0, 900
    %s455 = sshrl.u32 %s3, 1
    %s456 = sor.u32 %s3, %s455
    %s457 = sand.u32 %s456, 85
    %s458 = sshrl.u32 %s457, 1
    %s459 = sor.u32 %s457, %s458
    %s460 = sand.u32 51, %s459
    %s461 = sshrl.u32 %s460, 2
    %s462 = sor.u32 %s460, %s461
    %s463 = sand.u32 15, %s462
    %v464 = vld [vmem:[%s454] sm:%s463]
    %v465 = vunpack.c.l.bf16 %v464
    %v466 = vunpack.c.h.bf16 %v464
    %s467 = scalar_lea.vmem [#allocation1], 1800
    %468 = vst [vmem:[%s467] sm:%s3] %v465
    %s469 = scalar_lea.vmem %s0, 896
    %s470 = sshrl.u32 %s3, 1
    %s471 = sor.u32 %s3, %s470
    %s472 = sand.u32 %s471, 85
    %s473 = sshrl.u32 %s472, 1
    %s474 = sor.u32 %s472, %s473
    %s475 = sand.u32 51, %s474
    %s476 = sshrl.u32 %s475, 2
    %s477 = sor.u32 %s475, %s476
    %s478 = sand.u32 15, %s477
    %v479 = vld [vmem:[%s469] sm:%s478]
    %v480 = vunpack.c.l.bf16 %v479
    %v481 = vunpack.c.h.bf16 %v479
    %s482 = scalar_lea.vmem [#allocation1], 1792
    %483 = vst [vmem:[%s482] sm:%s3] %v480
    %s484 = scalar_lea.vmem %s0, 892
    %s485 = sshrl.u32 %s3, 1
    %s486 = sor.u32 %s3, %s485
    %s487 = sand.u32 %s486, 85
    %s488 = sshrl.u32 %s487, 1
    %s489 = sor.u32 %s487, %s488
    %s490 = sand.u32 51, %s489
    %s491 = sshrl.u32 %s490, 2
    %s492 = sor.u32 %s490, %s491
    %s493 = sand.u32 15, %s492
    %v494 = vld [vmem:[%s484] sm:%s493]
    %v495 = vunpack.c.l.bf16 %v494
    %v496 = vunpack.c.h.bf16 %v494
    %s497 = scalar_lea.vmem [#allocation1], 1784
    %498 = vst [vmem:[%s497] sm:%s3] %v495
    %s499 = scalar_lea.vmem %s0, 888
    %s500 = sshrl.u32 %s3, 1
    %s501 = sor.u32 %s3, %s500
    %s502 = sand.u32 %s501, 85
    %s503 = sshrl.u32 %s502, 1
    %s504 = sor.u32 %s502, %s503
    %s505 = sand.u32 51, %s504
    %s506 = sshrl.u32 %s505, 2
    %s507 = sor.u32 %s505, %s506
    %s508 = sand.u32 15, %s507
    %v509 = vld [vmem:[%s499] sm:%s508]
    %v510 = vunpack.c.l.bf16 %v509
    %v511 = vunpack.c.h.bf16 %v509
    %s512 = scalar_lea.vmem [#allocation1], 1776
    %513 = vst [vmem:[%s512] sm:%s3] %v510
    %s514 = scalar_lea.vmem %s0, 884
    %s515 = sshrl.u32 %s3, 1
    %s516 = sor.u32 %s3, %s515
    %s517 = sand.u32 %s516, 85
    %s518 = sshrl.u32 %s517, 1
    %s519 = sor.u32 %s517, %s518
    %s520 = sand.u32 51, %s519
    %s521 = sshrl.u32 %s520, 2
    %s522 = sor.u32 %s520, %s521
    %s523 = sand.u32 15, %s522
    %v524 = vld [vmem:[%s514] sm:%s523]
    %v525 = vunpack.c.l.bf16 %v524
    %v526 = vunpack.c.h.bf16 %v524
    %s527 = scalar_lea.vmem [#allocation1], 1768
    %528 = vst [vmem:[%s527] sm:%s3] %v525
    %s529 = scalar_lea.vmem %s0, 880
    %s530 = sshrl.u32 %s3, 1
    %s531 = sor.u32 %s3, %s530
    %s532 = sand.u32 %s531, 85
    %s533 = sshrl.u32 %s532, 1
    %s534 = sor.u32 %s532, %s533
    %s535 = sand.u32 51, %s534
    %s536 = sshrl.u32 %s535, 2
    %s537 = sor.u32 %s535, %s536
    %s538 = sand.u32 15, %s537
    %v539 = vld [vmem:[%s529] sm:%s538]
    %v540 = vunpack.c.l.bf16 %v539
    %v541 = vunpack.c.h.bf16 %v539
    %s542 = scalar_lea.vmem [#allocation1], 1760
    %543 = vst [vmem:[%s542] sm:%s3] %v540
    %s544 = scalar_lea.vmem %s0, 876
    %s545 = sshrl.u32 %s3, 1
    %s546 = sor.u32 %s3, %s545
    %s547 = sand.u32 %s546, 85
    %s548 = sshrl.u32 %s547, 1
    %s549 = sor.u32 %s547, %s548
    %s550 = sand.u32 51, %s549
    %s551 = sshrl.u32 %s550, 2
    %s552 = sor.u32 %s550, %s551
    %s553 = sand.u32 15, %s552
    %v554 = vld [vmem:[%s544] sm:%s553]
    %v555 = vunpack.c.l.bf16 %v554
    %v556 = vunpack.c.h.bf16 %v554
    %s557 = scalar_lea.vmem [#allocation1], 1752
    %558 = vst [vmem:[%s557] sm:%s3] %v555
    %s559 = scalar_lea.vmem %s0, 872
    %s560 = sshrl.u32 %s3, 1
    %s561 = sor.u32 %s3, %s560
    %s562 = sand.u32 %s561, 85
    %s563 = sshrl.u32 %s562, 1
    %s564 = sor.u32 %s562, %s563
    %s565 = sand.u32 51, %s564
    %s566 = sshrl.u32 %s565, 2
    %s567 = sor.u32 %s565, %s566
    %s568 = sand.u32 15, %s567
    %v569 = vld [vmem:[%s559] sm:%s568]
    %v570 = vunpack.c.l.bf16 %v569
    %v571 = vunpack.c.h.bf16 %v569
    %s572 = scalar_lea.vmem [#allocation1], 1744
    %573 = vst [vmem:[%s572] sm:%s3] %v570
    %s574 = scalar_lea.vmem %s0, 868
    %s575 = sshrl.u32 %s3, 1
    %s576 = sor.u32 %s3, %s575
    %s577 = sand.u32 %s576, 85
    %s578 = sshrl.u32 %s577, 1
    %s579 = sor.u32 %s577, %s578
    %s580 = sand.u32 51, %s579
    %s581 = sshrl.u32 %s580, 2
    %s582 = sor.u32 %s580, %s581
    %s583 = sand.u32 15, %s582
    %v584 = vld [vmem:[%s574] sm:%s583]
    %v585 = vunpack.c.l.bf16 %v584
    %v586 = vunpack.c.h.bf16 %v584
    %s587 = scalar_lea.vmem [#allocation1], 1736
    %588 = vst [vmem:[%s587] sm:%s3] %v585
    %s589 = scalar_lea.vmem %s0, 864
    %s590 = sshrl.u32 %s3, 1
    %s591 = sor.u32 %s3, %s590
    %s592 = sand.u32 %s591, 85
    %s593 = sshrl.u32 %s592, 1
    %s594 = sor.u32 %s592, %s593
    %s595 = sand.u32 51, %s594
    %s596 = sshrl.u32 %s595, 2
    %s597 = sor.u32 %s595, %s596
    %s598 = sand.u32 15, %s597
    %v599 = vld [vmem:[%s589] sm:%s598]
    %v600 = vunpack.c.l.bf16 %v599
    %v601 = vunpack.c.h.bf16 %v599
    %s602 = scalar_lea.vmem [#allocation1], 1728
    %603 = vst [vmem:[%s602] sm:%s3] %v600
    %s604 = scalar_lea.vmem %s0, 860
    %s605 = sshrl.u32 %s3, 1
    %s606 = sor.u32 %s3, %s605
    %s607 = sand.u32 %s606, 85
    %s608 = sshrl.u32 %s607, 1
    %s609 = sor.u32 %s607, %s608
    %s610 = sand.u32 51, %s609
    %s611 = sshrl.u32 %s610, 2
    %s612 = sor.u32 %s610, %s611
    %s613 = sand.u32 15, %s612
    %v614 = vld [vmem:[%s604] sm:%s613]
    %v615 = vunpack.c.l.bf16 %v614
    %v616 = vunpack.c.h.bf16 %v614
    %s617 = scalar_lea.vmem [#allocation1], 1720
    %618 = vst [vmem:[%s617] sm:%s3] %v615
    %s619 = scalar_lea.vmem %s0, 856
    %s620 = sshrl.u32 %s3, 1
    %s621 = sor.u32 %s3, %s620
    %s622 = sand.u32 %s621, 85
    %s623 = sshrl.u32 %s622, 1
    %s624 = sor.u32 %s622, %s623
    %s625 = sand.u32 51, %s624
    %s626 = sshrl.u32 %s625, 2
    %s627 = sor.u32 %s625, %s626
    %s628 = sand.u32 15, %s627
    %v629 = vld [vmem:[%s619] sm:%s628]
    %v630 = vunpack.c.l.bf16 %v629
    %v631 = vunpack.c.h.bf16 %v629
    %s632 = scalar_lea.vmem [#allocation1], 1712
    %633 = vst [vmem:[%s632] sm:%s3] %v630
    %s634 = scalar_lea.vmem %s0, 852
    %s635 = sshrl.u32 %s3, 1
    %s636 = sor.u32 %s3, %s635
    %s637 = sand.u32 %s636, 85
    %s638 = sshrl.u32 %s637, 1
    %s639 = sor.u32 %s637, %s638
    %s640 = sand.u32 51, %s639
    %s641 = sshrl.u32 %s640, 2
    %s642 = sor.u32 %s640, %s641
    %s643 = sand.u32 15, %s642
    %v644 = vld [vmem:[%s634] sm:%s643]
    %v645 = vunpack.c.l.bf16 %v644
    %v646 = vunpack.c.h.bf16 %v644
    %s647 = scalar_lea.vmem [#allocation1], 1704
    %648 = vst [vmem:[%s647] sm:%s3] %v645
    %s649 = scalar_lea.vmem %s0, 848
    %s650 = sshrl.u32 %s3, 1
    %s651 = sor.u32 %s3, %s650
    %s652 = sand.u32 %s651, 85
    %s653 = sshrl.u32 %s652, 1
    %s654 = sor.u32 %s652, %s653
    %s655 = sand.u32 51, %s654
    %s656 = sshrl.u32 %s655, 2
    %s657 = sor.u32 %s655, %s656
    %s658 = sand.u32 15, %s657
    %v659 = vld [vmem:[%s649] sm:%s658]
    %v660 = vunpack.c.l.bf16 %v659
    %v661 = vunpack.c.h.bf16 %v659
    %s662 = scalar_lea.vmem [#allocation1], 1696
    %663 = vst [vmem:[%s662] sm:%s3] %v660
    %s664 = scalar_lea.vmem %s0, 844
    %s665 = sshrl.u32 %s3, 1
    %s666 = sor.u32 %s3, %s665
    %s667 = sand.u32 %s666, 85
    %s668 = sshrl.u32 %s667, 1
    %s669 = sor.u32 %s667, %s668
    %s670 = sand.u32 51, %s669
    %s671 = sshrl.u32 %s670, 2
    %s672 = sor.u32 %s670, %s671
    %s673 = sand.u32 15, %s672
    %v674 = vld [vmem:[%s664] sm:%s673]
    %v675 = vunpack.c.l.bf16 %v674
    %v676 = vunpack.c.h.bf16 %v674
    %s677 = scalar_lea.vmem [#allocation1], 1688
    %678 = vst [vmem:[%s677] sm:%s3] %v675
    %s679 = scalar_lea.vmem %s0, 840
    %s680 = sshrl.u32 %s3, 1
    %s681 = sor.u32 %s3, %s680
    %s682 = sand.u32 %s681, 85
    %s683 = sshrl.u32 %s682, 1
    %s684 = sor.u32 %s682, %s683
    %s685 = sand.u32 51, %s684
    %s686 = sshrl.u32 %s685, 2
    %s687 = sor.u32 %s685, %s686
    %s688 = sand.u32 15, %s687
    %v689 = vld [vmem:[%s679] sm:%s688]
    %v690 = vunpack.c.l.bf16 %v689
    %v691 = vunpack.c.h.bf16 %v689
    %s692 = scalar_lea.vmem [#allocation1], 1680
    %693 = vst [vmem:[%s692] sm:%s3] %v690
    %s694 = scalar_lea.vmem %s0, 836
    %s695 = sshrl.u32 %s3, 1
    %s696 = sor.u32 %s3, %s695
    %s697 = sand.u32 %s696, 85
    %s698 = sshrl.u32 %s697, 1
    %s699 = sor.u32 %s697, %s698
    %s700 = sand.u32 51, %s699
    %s701 = sshrl.u32 %s700, 2
    %s702 = sor.u32 %s700, %s701
    %s703 = sand.u32 15, %s702
    %v704 = vld [vmem:[%s694] sm:%s703]
    %v705 = vunpack.c.l.bf16 %v704
    %v706 = vunpack.c.h.bf16 %v704
    %s707 = scalar_lea.vmem [#allocation1], 1672
    %708 = vst [vmem:[%s707] sm:%s3] %v705
    %s709 = scalar_lea.vmem %s0, 832
    %s710 = sshrl.u32 %s3, 1
    %s711 = sor.u32 %s3, %s710
    %s712 = sand.u32 %s711, 85
    %s713 = sshrl.u32 %s712, 1
    %s714 = sor.u32 %s712, %s713
    %s715 = sand.u32 51, %s714
    %s716 = sshrl.u32 %s715, 2
    %s717 = sor.u32 %s715, %s716
    %s718 = sand.u32 15, %s717
    %v719 = vld [vmem:[%s709] sm:%s718]
    %v720 = vunpack.c.l.bf16 %v719
    %v721 = vunpack.c.h.bf16 %v719
    %s722 = scalar_lea.vmem [#allocation1], 1664
    %723 = vst [vmem:[%s722] sm:%s3] %v720
    %s724 = scalar_lea.vmem %s0, 828
    %s725 = sshrl.u32 %s3, 1
    %s726 = sor.u32 %s3, %s725
    %s727 = sand.u32 %s726, 85
    %s728 = sshrl.u32 %s727, 1
    %s729 = sor.u32 %s727, %s728
    %s730 = sand.u32 51, %s729
    %s731 = sshrl.u32 %s730, 2
    %s732 = sor.u32 %s730, %s731
    %s733 = sand.u32 15, %s732
    %v734 = vld [vmem:[%s724] sm:%s733]
    %v735 = vunpack.c.l.bf16 %v734
    %v736 = vunpack.c.h.bf16 %v734
    %s737 = scalar_lea.vmem [#allocation1], 1656
    %738 = vst [vmem:[%s737] sm:%s3] %v735
    %s739 = scalar_lea.vmem %s0, 824
    %s740 = sshrl.u32 %s3, 1
    %s741 = sor.u32 %s3, %s740
    %s742 = sand.u32 %s741, 85
    %s743 = sshrl.u32 %s742, 1
    %s744 = sor.u32 %s742, %s743
    %s745 = sand.u32 51, %s744
    %s746 = sshrl.u32 %s745, 2
    %s747 = sor.u32 %s745, %s746
    %s748 = sand.u32 15, %s747
    %v749 = vld [vmem:[%s739] sm:%s748]
    %v750 = vunpack.c.l.bf16 %v749
    %v751 = vunpack.c.h.bf16 %v749
    %s752 = scalar_lea.vmem [#allocation1], 1648
    %753 = vst [vmem:[%s752] sm:%s3] %v750
    %s754 = scalar_lea.vmem %s0, 820
    %s755 = sshrl.u32 %s3, 1
    %s756 = sor.u32 %s3, %s755
    %s757 = sand.u32 %s756, 85
    %s758 = sshrl.u32 %s757, 1
    %s759 = sor.u32 %s757, %s758
    %s760 = sand.u32 51, %s759
    %s761 = sshrl.u32 %s760, 2
    %s762 = sor.u32 %s760, %s761
    %s763 = sand.u32 15, %s762
    %v764 = vld [vmem:[%s754] sm:%s763]
    %v765 = vunpack.c.l.bf16 %v764
    %v766 = vunpack.c.h.bf16 %v764
    %s767 = scalar_lea.vmem [#allocation1], 1640
    %768 = vst [vmem:[%s767] sm:%s3] %v765
    %s769 = scalar_lea.vmem %s0, 816
    %s770 = sshrl.u32 %s3, 1
    %s771 = sor.u32 %s3, %s770
    %s772 = sand.u32 %s771, 85
    %s773 = sshrl.u32 %s772, 1
    %s774 = sor.u32 %s772, %s773
    %s775 = sand.u32 51, %s774
    %s776 = sshrl.u32 %s775, 2
    %s777 = sor.u32 %s775, %s776
    %s778 = sand.u32 15, %s777
    %v779 = vld [vmem:[%s769] sm:%s778]
    %v780 = vunpack.c.l.bf16 %v779
    %v781 = vunpack.c.h.bf16 %v779
    %s782 = scalar_lea.vmem [#allocation1], 1632
    %783 = vst [vmem:[%s782] sm:%s3] %v780
    %s784 = scalar_lea.vmem %s0, 812
    %s785 = sshrl.u32 %s3, 1
    %s786 = sor.u32 %s3, %s785
    %s787 = sand.u32 %s786, 85
    %s788 = sshrl.u32 %s787, 1
    %s789 = sor.u32 %s787, %s788
    %s790 = sand.u32 51, %s789
    %s791 = sshrl.u32 %s790, 2
    %s792 = sor.u32 %s790, %s791
    %s793 = sand.u32 15, %s792
    %v794 = vld [vmem:[%s784] sm:%s793]
    %v795 = vunpack.c.l.bf16 %v794
    %v796 = vunpack.c.h.bf16 %v794
    %s797 = scalar_lea.vmem [#allocation1], 1624
    %798 = vst [vmem:[%s797] sm:%s3] %v795
    %s799 = scalar_lea.vmem %s0, 808
    %s800 = sshrl.u32 %s3, 1
    %s801 = sor.u32 %s3, %s800
    %s802 = sand.u32 %s801, 85
    %s803 = sshrl.u32 %s802, 1
    %s804 = sor.u32 %s802, %s803
    %s805 = sand.u32 51, %s804
    %s806 = sshrl.u32 %s805, 2
    %s807 = sor.u32 %s805, %s806
    %s808 = sand.u32 15, %s807
    %v809 = vld [vmem:[%s799] sm:%s808]
    %v810 = vunpack.c.l.bf16 %v809
    %v811 = vunpack.c.h.bf16 %v809
    %s812 = scalar_lea.vmem [#allocation1], 1616
    %813 = vst [vmem:[%s812] sm:%s3] %v810
    %s814 = scalar_lea.vmem %s0, 804
    %s815 = sshrl.u32 %s3, 1
    %s816 = sor.u32 %s3, %s815
    %s817 = sand.u32 %s816, 85
    %s818 = sshrl.u32 %s817, 1
    %s819 = sor.u32 %s817, %s818
    %s820 = sand.u32 51, %s819
    %s821 = sshrl.u32 %s820, 2
    %s822 = sor.u32 %s820, %s821
    %s823 = sand.u32 15, %s822
    %v824 = vld [vmem:[%s814] sm:%s823]
    %v825 = vunpack.c.l.bf16 %v824
    %v826 = vunpack.c.h.bf16 %v824
    %s827 = scalar_lea.vmem [#allocation1], 1608
    %828 = vst [vmem:[%s827] sm:%s3] %v825
    %s829 = scalar_lea.vmem %s0, 800
    %s830 = sshrl.u32 %s3, 1
    %s831 = sor.u32 %s3, %s830
    %s832 = sand.u32 %s831, 85
    %s833 = sshrl.u32 %s832, 1
    %s834 = sor.u32 %s832, %s833
    %s835 = sand.u32 51, %s834
    %s836 = sshrl.u32 %s835, 2
    %s837 = sor.u32 %s835, %s836
    %s838 = sand.u32 15, %s837
    %v839 = vld [vmem:[%s829] sm:%s838]
    %v840 = vunpack.c.l.bf16 %v839
    %v841 = vunpack.c.h.bf16 %v839
    %s842 = scalar_lea.vmem [#allocation1], 1600
    %843 = vst [vmem:[%s842] sm:%s3] %v840
    %s844 = scalar_lea.vmem %s0, 796
    %s845 = sshrl.u32 %s3, 1
    %s846 = sor.u32 %s3, %s845
    %s847 = sand.u32 %s846, 85
    %s848 = sshrl.u32 %s847, 1
    %s849 = sor.u32 %s847, %s848
    %s850 = sand.u32 51, %s849
    %s851 = sshrl.u32 %s850, 2
    %s852 = sor.u32 %s850, %s851
    %s853 = sand.u32 15, %s852
    %v854 = vld [vmem:[%s844] sm:%s853]
    %v855 = vunpack.c.l.bf16 %v854
    %v856 = vunpack.c.h.bf16 %v854
    %s857 = scalar_lea.vmem [#allocation1], 1592
    %858 = vst [vmem:[%s857] sm:%s3] %v855
    %s859 = scalar_lea.vmem %s0, 792
    %s860 = sshrl.u32 %s3, 1
    %s861 = sor.u32 %s3, %s860
    %s862 = sand.u32 %s861, 85
    %s863 = sshrl.u32 %s862, 1
    %s864 = sor.u32 %s862, %s863
    %s865 = sand.u32 51, %s864
    %s866 = sshrl.u32 %s865, 2
    %s867 = sor.u32 %s865, %s866
    %s868 = sand.u32 15, %s867
    %v869 = vld [vmem:[%s859] sm:%s868]
    %v870 = vunpack.c.l.bf16 %v869
    %v871 = vunpack.c.h.bf16 %v869
    %s872 = scalar_lea.vmem [#allocation1], 1584
    %873 = vst [vmem:[%s872] sm:%s3] %v870
    %s874 = scalar_lea.vmem %s0, 788
    %s875 = sshrl.u32 %s3, 1
    %s876 = sor.u32 %s3, %s875
    %s877 = sand.u32 %s876, 85
    %s878 = sshrl.u32 %s877, 1
    %s879 = sor.u32 %s877, %s878
    %s880 = sand.u32 51, %s879
    %s881 = sshrl.u32 %s880, 2
    %s882 = sor.u32 %s880, %s881
    %s883 = sand.u32 15, %s882
    %v884 = vld [vmem:[%s874] sm:%s883]
    %v885 = vunpack.c.l.bf16 %v884
    %v886 = vunpack.c.h.bf16 %v884
    %s887 = scalar_lea.vmem [#allocation1], 1576
    %888 = vst [vmem:[%s887] sm:%s3] %v885
    %s889 = scalar_lea.vmem %s0, 784
    %s890 = sshrl.u32 %s3, 1
    %s891 = sor.u32 %s3, %s890
    %s892 = sand.u32 %s891, 85
    %s893 = sshrl.u32 %s892, 1
    %s894 = sor.u32 %s892, %s893
    %s895 = sand.u32 51, %s894
    %s896 = sshrl.u32 %s895, 2
    %s897 = sor.u32 %s895, %s896
    %s898 = sand.u32 15, %s897
    %v899 = vld [vmem:[%s889] sm:%s898]
    %v900 = vunpack.c.l.bf16 %v899
    %v901 = vunpack.c.h.bf16 %v899
    %s902 = scalar_lea.vmem [#allocation1], 1568
    %903 = vst [vmem:[%s902] sm:%s3] %v900
    %s904 = scalar_lea.vmem %s0, 780
    %s905 = sshrl.u32 %s3, 1
    %s906 = sor.u32 %s3, %s905
    %s907 = sand.u32 %s906, 85
    %s908 = sshrl.u32 %s907, 1
    %s909 = sor.u32 %s907, %s908
    %s910 = sand.u32 51, %s909
    %s911 = sshrl.u32 %s910, 2
    %s912 = sor.u32 %s910, %s911
    %s913 = sand.u32 15, %s912
    %v914 = vld [vmem:[%s904] sm:%s913]
    %v915 = vunpack.c.l.bf16 %v914
    %v916 = vunpack.c.h.bf16 %v914
    %s917 = scalar_lea.vmem [#allocation1], 1560
    %918 = vst [vmem:[%s917] sm:%s3] %v915
    %s919 = scalar_lea.vmem %s0, 776
    %s920 = sshrl.u32 %s3, 1
    %s921 = sor.u32 %s3, %s920
    %s922 = sand.u32 %s921, 85
    %s923 = sshrl.u32 %s922, 1
    %s924 = sor.u32 %s922, %s923
    %s925 = sand.u32 51, %s924
    %s926 = sshrl.u32 %s925, 2
    %s927 = sor.u32 %s925, %s926
    %s928 = sand.u32 15, %s927
    %v929 = vld [vmem:[%s919] sm:%s928]
    %v930 = vunpack.c.l.bf16 %v929
    %v931 = vunpack.c.h.bf16 %v929
    %s932 = scalar_lea.vmem [#allocation1], 1552
    %933 = vst [vmem:[%s932] sm:%s3] %v930
    %s934 = scalar_lea.vmem %s0, 772
    %s935 = sshrl.u32 %s3, 1
    %s936 = sor.u32 %s3, %s935
    %s937 = sand.u32 %s936, 85
    %s938 = sshrl.u32 %s937, 1
    %s939 = sor.u32 %s937, %s938
    %s940 = sand.u32 51, %s939
    %s941 = sshrl.u32 %s940, 2
    %s942 = sor.u32 %s940, %s941
    %s943 = sand.u32 15, %s942
    %v944 = vld [vmem:[%s934] sm:%s943]
    %v945 = vunpack.c.l.bf16 %v944
    %v946 = vunpack.c.h.bf16 %v944
    %s947 = scalar_lea.vmem [#allocation1], 1544
    %948 = vst [vmem:[%s947] sm:%s3] %v945
    %s949 = scalar_lea.vmem %s0, 768
    %s950 = sshrl.u32 %s3, 1
    %s951 = sor.u32 %s3, %s950
    %s952 = sand.u32 %s951, 85
    %s953 = sshrl.u32 %s952, 1
    %s954 = sor.u32 %s952, %s953
    %s955 = sand.u32 51, %s954
    %s956 = sshrl.u32 %s955, 2
    %s957 = sor.u32 %s955, %s956
    %s958 = sand.u32 15, %s957
    %v959 = vld [vmem:[%s949] sm:%s958]
    %v960 = vunpack.c.l.bf16 %v959
    %v961 = vunpack.c.h.bf16 %v959
    %s962 = scalar_lea.vmem [#allocation1], 1536
    %963 = vst [vmem:[%s962] sm:%s3] %v960
    %s964 = scalar_lea.vmem %s0, 764
    %s965 = sshrl.u32 %s3, 1
    %s966 = sor.u32 %s3, %s965
    %s967 = sand.u32 %s966, 85
    %s968 = sshrl.u32 %s967, 1
    %s969 = sor.u32 %s967, %s968
    %s970 = sand.u32 51, %s969
    %s971 = sshrl.u32 %s970, 2
    %s972 = sor.u32 %s970, %s971
    %s973 = sand.u32 15, %s972
    %v974 = vld [vmem:[%s964] sm:%s973]
    %v975 = vunpack.c.l.bf16 %v974
    %v976 = vunpack.c.h.bf16 %v974
    %s977 = scalar_lea.vmem [#allocation1], 1528
    %978 = vst [vmem:[%s977] sm:%s3] %v975
    %s979 = scalar_lea.vmem %s0, 760
    %s980 = sshrl.u32 %s3, 1
    %s981 = sor.u32 %s3, %s980
    %s982 = sand.u32 %s981, 85
    %s983 = sshrl.u32 %s982, 1
    %s984 = sor.u32 %s982, %s983
    %s985 = sand.u32 51, %s984
    %s986 = sshrl.u32 %s985, 2
    %s987 = sor.u32 %s985, %s986
    %s988 = sand.u32 15, %s987
    %v989 = vld [vmem:[%s979] sm:%s988]
    %v990 = vunpack.c.l.bf16 %v989
    %v991 = vunpack.c.h.bf16 %v989
    %s992 = scalar_lea.vmem [#allocation1], 1520
    %993 = vst [vmem:[%s992] sm:%s3] %v990
    %s994 = scalar_lea.vmem %s0, 756
    %s995 = sshrl.u32 %s3, 1
    %s996 = sor.u32 %s3, %s995
    %s997 = sand.u32 %s996, 85
    %s998 = sshrl.u32 %s997, 1
    %s999 = sor.u32 %s997, %s998
    %s1000 = sand.u32 51, %s999
    %s1001 = sshrl.u32 %s1000, 2
    %s1002 = sor.u32 %s1000, %s1001
    %s1003 = sand.u32 15, %s1002
    %v1004 = vld [vmem:[%s994] sm:%s1003]
    %v1005 = vunpack.c.l.bf16 %v1004
    %v1006 = vunpack.c.h.bf16 %v1004
    %s1007 = scalar_lea.vmem [#allocation1], 1512
    %1008 = vst [vmem:[%s1007] sm:%s3] %v1005
    %s1009 = scalar_lea.vmem %s0, 752
    %s1010 = sshrl.u32 %s3, 1
    %s1011 = sor.u32 %s3, %s1010
    %s1012 = sand.u32 %s1011, 85
    %s1013 = sshrl.u32 %s1012, 1
    %s1014 = sor.u32 %s1012, %s1013
    %s1015 = sand.u32 51, %s1014
    %s1016 = sshrl.u32 %s1015, 2
    %s1017 = sor.u32 %s1015, %s1016
    %s1018 = sand.u32 15, %s1017
    %v1019 = vld [vmem:[%s1009] sm:%s1018]
    %v1020 = vunpack.c.l.bf16 %v1019
    %v1021 = vunpack.c.h.bf16 %v1019
    %s1022 = scalar_lea.vmem [#allocation1], 1504
    %1023 = vst [vmem:[%s1022] sm:%s3] %v1020
    %s1024 = scalar_lea.vmem %s0, 748
    %s1025 = sshrl.u32 %s3, 1
    %s1026 = sor.u32 %s3, %s1025
    %s1027 = sand.u32 %s1026, 85
    %s1028 = sshrl.u32 %s1027, 1
    %s1029 = sor.u32 %s1027, %s1028
    %s1030 = sand.u32 51, %s1029
    %s1031 = sshrl.u32 %s1030, 2
    %s1032 = sor.u32 %s1030, %s1031
    %s1033 = sand.u32 15, %s1032
    %v1034 = vld [vmem:[%s1024] sm:%s1033]
    %v1035 = vunpack.c.l.bf16 %v1034
    %v1036 = vunpack.c.h.bf16 %v1034
    %s1037 = scalar_lea.vmem [#allocation1], 1496
    %1038 = vst [vmem:[%s1037] sm:%s3] %v1035
    %s1039 = scalar_lea.vmem %s0, 744
    %s1040 = sshrl.u32 %s3, 1
    %s1041 = sor.u32 %s3, %s1040
    %s1042 = sand.u32 %s1041, 85
    %s1043 = sshrl.u32 %s1042, 1
    %s1044 = sor.u32 %s1042, %s1043
    %s1045 = sand.u32 51, %s1044
    %s1046 = sshrl.u32 %s1045, 2
    %s1047 = sor.u32 %s1045, %s1046
    %s1048 = sand.u32 15, %s1047
    %v1049 = vld [vmem:[%s1039] sm:%s1048]
    %v1050 = vunpack.c.l.bf16 %v1049
    %v1051 = vunpack.c.h.bf16 %v1049
    %s1052 = scalar_lea.vmem [#allocation1], 1488
    %1053 = vst [vmem:[%s1052] sm:%s3] %v1050
    %s1054 = scalar_lea.vmem %s0, 740
    %s1055 = sshrl.u32 %s3, 1
    %s1056 = sor.u32 %s3, %s1055
    %s1057 = sand.u32 %s1056, 85
    %s1058 = sshrl.u32 %s1057, 1
    %s1059 = sor.u32 %s1057, %s1058
    %s1060 = sand.u32 51, %s1059
    %s1061 = sshrl.u32 %s1060, 2
    %s1062 = sor.u32 %s1060, %s1061
    %s1063 = sand.u32 15, %s1062
    %v1064 = vld [vmem:[%s1054] sm:%s1063]
    %v1065 = vunpack.c.l.bf16 %v1064
    %v1066 = vunpack.c.h.bf16 %v1064
    %s1067 = scalar_lea.vmem [#allocation1], 1480
    %1068 = vst [vmem:[%s1067] sm:%s3] %v1065
    %s1069 = scalar_lea.vmem %s0, 736
    %s1070 = sshrl.u32 %s3, 1
    %s1071 = sor.u32 %s3, %s1070
    %s1072 = sand.u32 %s1071, 85
    %s1073 = sshrl.u32 %s1072, 1
    %s1074 = sor.u32 %s1072, %s1073
    %s1075 = sand.u32 51, %s1074
    %s1076 = sshrl.u32 %s1075, 2
    %s1077 = sor.u32 %s1075, %s1076
    %s1078 = sand.u32 15, %s1077
    %v1079 = vld [vmem:[%s1069] sm:%s1078]
    %v1080 = vunpack.c.l.bf16 %v1079
    %v1081 = vunpack.c.h.bf16 %v1079
    %s1082 = scalar_lea.vmem [#allocation1], 1472
    %1083 = vst [vmem:[%s1082] sm:%s3] %v1080
    %s1084 = scalar_lea.vmem %s0, 732
    %s1085 = sshrl.u32 %s3, 1
    %s1086 = sor.u32 %s3, %s1085
    %s1087 = sand.u32 %s1086, 85
    %s1088 = sshrl.u32 %s1087, 1
    %s1089 = sor.u32 %s1087, %s1088
    %s1090 = sand.u32 51, %s1089
    %s1091 = sshrl.u32 %s1090, 2
    %s1092 = sor.u32 %s1090, %s1091
    %s1093 = sand.u32 15, %s1092
    %v1094 = vld [vmem:[%s1084] sm:%s1093]
    %v1095 = vunpack.c.l.bf16 %v1094
    %v1096 = vunpack.c.h.bf16 %v1094
    %s1097 = scalar_lea.vmem [#allocation1], 1464
    %1098 = vst [vmem:[%s1097] sm:%s3] %v1095
    %s1099 = scalar_lea.vmem %s0, 728
    %s1100 = sshrl.u32 %s3, 1
    %s1101 = sor.u32 %s3, %s1100
    %s1102 = sand.u32 %s1101, 85
    %s1103 = sshrl.u32 %s1102, 1
    %s1104 = sor.u32 %s1102, %s1103
    %s1105 = sand.u32 51, %s1104
    %s1106 = sshrl.u32 %s1105, 2
    %s1107 = sor.u32 %s1105, %s1106
    %s1108 = sand.u32 15, %s1107
    %v1109 = vld [vmem:[%s1099] sm:%s1108]
    %v1110 = vunpack.c.l.bf16 %v1109
    %v1111 = vunpack.c.h.bf16 %v1109
    %s1112 = scalar_lea.vmem [#allocation1], 1456
    %1113 = vst [vmem:[%s1112] sm:%s3] %v1110
    %s1114 = scalar_lea.vmem %s0, 724
    %s1115 = sshrl.u32 %s3, 1
    %s1116 = sor.u32 %s3, %s1115
    %s1117 = sand.u32 %s1116, 85
    %s1118 = sshrl.u32 %s1117, 1
    %s1119 = sor.u32 %s1117, %s1118
    %s1120 = sand.u32 51, %s1119
    %s1121 = sshrl.u32 %s1120, 2
    %s1122 = sor.u32 %s1120, %s1121
    %s1123 = sand.u32 15, %s1122
    %v1124 = vld [vmem:[%s1114] sm:%s1123]
    %v1125 = vunpack.c.l.bf16 %v1124
    %v1126 = vunpack.c.h.bf16 %v1124
    %s1127 = scalar_lea.vmem [#allocation1], 1448
    %1128 = vst [vmem:[%s1127] sm:%s3] %v1125
    %s1129 = scalar_lea.vmem %s0, 720
    %s1130 = sshrl.u32 %s3, 1
    %s1131 = sor.u32 %s3, %s1130
    %s1132 = sand.u32 %s1131, 85
    %s1133 = sshrl.u32 %s1132, 1
    %s1134 = sor.u32 %s1132, %s1133
    %s1135 = sand.u32 51, %s1134
    %s1136 = sshrl.u32 %s1135, 2
    %s1137 = sor.u32 %s1135, %s1136
    %s1138 = sand.u32 15, %s1137
    %v1139 = vld [vmem:[%s1129] sm:%s1138]
    %v1140 = vunpack.c.l.bf16 %v1139
    %v1141 = vunpack.c.h.bf16 %v1139
    %s1142 = scalar_lea.vmem [#allocation1], 1440
    %1143 = vst [vmem:[%s1142] sm:%s3] %v1140
    %s1144 = scalar_lea.vmem %s0, 716
    %s1145 = sshrl.u32 %s3, 1
    %s1146 = sor.u32 %s3, %s1145
    %s1147 = sand.u32 %s1146, 85
    %s1148 = sshrl.u32 %s1147, 1
    %s1149 = sor.u32 %s1147, %s1148
    %s1150 = sand.u32 51, %s1149
    %s1151 = sshrl.u32 %s1150, 2
    %s1152 = sor.u32 %s1150, %s1151
    %s1153 = sand.u32 15, %s1152
    %v1154 = vld [vmem:[%s1144] sm:%s1153]
    %v1155 = vunpack.c.l.bf16 %v1154
    %v1156 = vunpack.c.h.bf16 %v1154
    %s1157 = scalar_lea.vmem [#allocation1], 1432
    %1158 = vst [vmem:[%s1157] sm:%s3] %v1155
    %s1159 = scalar_lea.vmem %s0, 712
    %s1160 = sshrl.u32 %s3, 1
    %s1161 = sor.u32 %s3, %s1160
    %s1162 = sand.u32 %s1161, 85
    %s1163 = sshrl.u32 %s1162, 1
    %s1164 = sor.u32 %s1162, %s1163
    %s1165 = sand.u32 51, %s1164
    %s1166 = sshrl.u32 %s1165, 2
    %s1167 = sor.u32 %s1165, %s1166
    %s1168 = sand.u32 15, %s1167
    %v1169 = vld [vmem:[%s1159] sm:%s1168]
    %v1170 = vunpack.c.l.bf16 %v1169
    %v1171 = vunpack.c.h.bf16 %v1169
    %s1172 = scalar_lea.vmem [#allocation1], 1424
    %1173 = vst [vmem:[%s1172] sm:%s3] %v1170
    %s1174 = scalar_lea.vmem %s0, 708
    %s1175 = sshrl.u32 %s3, 1
    %s1176 = sor.u32 %s3, %s1175
    %s1177 = sand.u32 %s1176, 85
    %s1178 = sshrl.u32 %s1177, 1
    %s1179 = sor.u32 %s1177, %s1178
    %s1180 = sand.u32 51, %s1179
    %s1181 = sshrl.u32 %s1180, 2
    %s1182 = sor.u32 %s1180, %s1181
    %s1183 = sand.u32 15, %s1182
    %v1184 = vld [vmem:[%s1174] sm:%s1183]
    %v1185 = vunpack.c.l.bf16 %v1184
    %v1186 = vunpack.c.h.bf16 %v1184
    %s1187 = scalar_lea.vmem [#allocation1], 1416
    %1188 = vst [vmem:[%s1187] sm:%s3] %v1185
    %s1189 = scalar_lea.vmem %s0, 704
    %s1190 = sshrl.u32 %s3, 1
    %s1191 = sor.u32 %s3, %s1190
    %s1192 = sand.u32 %s1191, 85
    %s1193 = sshrl.u32 %s1192, 1
    %s1194 = sor.u32 %s1192, %s1193
    %s1195 = sand.u32 51, %s1194
    %s1196 = sshrl.u32 %s1195, 2
    %s1197 = sor.u32 %s1195, %s1196
    %s1198 = sand.u32 15, %s1197
    %v1199 = vld [vmem:[%s1189] sm:%s1198]
    %v1200 = vunpack.c.l.bf16 %v1199
    %v1201 = vunpack.c.h.bf16 %v1199
    %s1202 = scalar_lea.vmem [#allocation1], 1408
    %1203 = vst [vmem:[%s1202] sm:%s3] %v1200
    %s1204 = scalar_lea.vmem %s0, 700
    %s1205 = sshrl.u32 %s3, 1
    %s1206 = sor.u32 %s3, %s1205
    %s1207 = sand.u32 %s1206, 85
    %s1208 = sshrl.u32 %s1207, 1
    %s1209 = sor.u32 %s1207, %s1208
    %s1210 = sand.u32 51, %s1209
    %s1211 = sshrl.u32 %s1210, 2
    %s1212 = sor.u32 %s1210, %s1211
    %s1213 = sand.u32 15, %s1212
    %v1214 = vld [vmem:[%s1204] sm:%s1213]
    %v1215 = vunpack.c.l.bf16 %v1214
    %v1216 = vunpack.c.h.bf16 %v1214
    %s1217 = scalar_lea.vmem [#allocation1], 1400
    %1218 = vst [vmem:[%s1217] sm:%s3] %v1215
    %s1219 = scalar_lea.vmem %s0, 696
    %s1220 = sshrl.u32 %s3, 1
    %s1221 = sor.u32 %s3, %s1220
    %s1222 = sand.u32 %s1221, 85
    %s1223 = sshrl.u32 %s1222, 1
    %s1224 = sor.u32 %s1222, %s1223
    %s1225 = sand.u32 51, %s1224
    %s1226 = sshrl.u32 %s1225, 2
    %s1227 = sor.u32 %s1225, %s1226
    %s1228 = sand.u32 15, %s1227
    %v1229 = vld [vmem:[%s1219] sm:%s1228]
    %v1230 = vunpack.c.l.bf16 %v1229
    %v1231 = vunpack.c.h.bf16 %v1229
    %s1232 = scalar_lea.vmem [#allocation1], 1392
    %1233 = vst [vmem:[%s1232] sm:%s3] %v1230
    %s1234 = scalar_lea.vmem %s0, 692
    %s1235 = sshrl.u32 %s3, 1
    %s1236 = sor.u32 %s3, %s1235
    %s1237 = sand.u32 %s1236, 85
    %s1238 = sshrl.u32 %s1237, 1
    %s1239 = sor.u32 %s1237, %s1238
    %s1240 = sand.u32 51, %s1239
    %s1241 = sshrl.u32 %s1240, 2
    %s1242 = sor.u32 %s1240, %s1241
    %s1243 = sand.u32 15, %s1242
    %v1244 = vld [vmem:[%s1234] sm:%s1243]
    %v1245 = vunpack.c.l.bf16 %v1244
    %v1246 = vunpack.c.h.bf16 %v1244
    %s1247 = scalar_lea.vmem [#allocation1], 1384
    %1248 = vst [vmem:[%s1247] sm:%s3] %v1245
    %s1249 = scalar_lea.vmem %s0, 688
    %s1250 = sshrl.u32 %s3, 1
    %s1251 = sor.u32 %s3, %s1250
    %s1252 = sand.u32 %s1251, 85
    %s1253 = sshrl.u32 %s1252, 1
    %s1254 = sor.u32 %s1252, %s1253
    %s1255 = sand.u32 51, %s1254
    %s1256 = sshrl.u32 %s1255, 2
    %s1257 = sor.u32 %s1255, %s1256
    %s1258 = sand.u32 15, %s1257
    %v1259 = vld [vmem:[%s1249] sm:%s1258]
    %v1260 = vunpack.c.l.bf16 %v1259
    %v1261 = vunpack.c.h.bf16 %v1259
    %s1262 = scalar_lea.vmem [#allocation1], 1376
    %1263 = vst [vmem:[%s1262] sm:%s3] %v1260
    %s1264 = scalar_lea.vmem %s0, 684
    %s1265 = sshrl.u32 %s3, 1
    %s1266 = sor.u32 %s3, %s1265
    %s1267 = sand.u32 %s1266, 85
    %s1268 = sshrl.u32 %s1267, 1
    %s1269 = sor.u32 %s1267, %s1268
    %s1270 = sand.u32 51, %s1269
    %s1271 = sshrl.u32 %s1270, 2
    %s1272 = sor.u32 %s1270, %s1271
    %s1273 = sand.u32 15, %s1272
    %v1274 = vld [vmem:[%s1264] sm:%s1273]
    %v1275 = vunpack.c.l.bf16 %v1274
    %v1276 = vunpack.c.h.bf16 %v1274
    %s1277 = scalar_lea.vmem [#allocation1], 1368
    %1278 = vst [vmem:[%s1277] sm:%s3] %v1275
    %s1279 = scalar_lea.vmem %s0, 680
    %s1280 = sshrl.u32 %s3, 1
    %s1281 = sor.u32 %s3, %s1280
    %s1282 = sand.u32 %s1281, 85
    %s1283 = sshrl.u32 %s1282, 1
    %s1284 = sor.u32 %s1282, %s1283
    %s1285 = sand.u32 51, %s1284
    %s1286 = sshrl.u32 %s1285, 2
    %s1287 = sor.u32 %s1285, %s1286
    %s1288 = sand.u32 15, %s1287
    %v1289 = vld [vmem:[%s1279] sm:%s1288]
    %v1290 = vunpack.c.l.bf16 %v1289
    %v1291 = vunpack.c.h.bf16 %v1289
    %s1292 = scalar_lea.vmem [#allocation1], 1360
    %1293 = vst [vmem:[%s1292] sm:%s3] %v1290
    %s1294 = scalar_lea.vmem %s0, 676
    %s1295 = sshrl.u32 %s3, 1
    %s1296 = sor.u32 %s3, %s1295
    %s1297 = sand.u32 %s1296, 85
    %s1298 = sshrl.u32 %s1297, 1
    %s1299 = sor.u32 %s1297, %s1298
    %s1300 = sand.u32 51, %s1299
    %s1301 = sshrl.u32 %s1300, 2
    %s1302 = sor.u32 %s1300, %s1301
    %s1303 = sand.u32 15, %s1302
    %v1304 = vld [vmem:[%s1294] sm:%s1303]
    %v1305 = vunpack.c.l.bf16 %v1304
    %v1306 = vunpack.c.h.bf16 %v1304
    %s1307 = scalar_lea.vmem [#allocation1], 1352
    %1308 = vst [vmem:[%s1307] sm:%s3] %v1305
    %s1309 = scalar_lea.vmem %s0, 672
    %s1310 = sshrl.u32 %s3, 1
    %s1311 = sor.u32 %s3, %s1310
    %s1312 = sand.u32 %s1311, 85
    %s1313 = sshrl.u32 %s1312, 1
    %s1314 = sor.u32 %s1312, %s1313
    %s1315 = sand.u32 51, %s1314
    %s1316 = sshrl.u32 %s1315, 2
    %s1317 = sor.u32 %s1315, %s1316
    %s1318 = sand.u32 15, %s1317
    %v1319 = vld [vmem:[%s1309] sm:%s1318]
    %v1320 = vunpack.c.l.bf16 %v1319
    %v1321 = vunpack.c.h.bf16 %v1319
    %s1322 = scalar_lea.vmem [#allocation1], 1344
    %1323 = vst [vmem:[%s1322] sm:%s3] %v1320
    %s1324 = scalar_lea.vmem %s0, 668
    %s1325 = sshrl.u32 %s3, 1
    %s1326 = sor.u32 %s3, %s1325
    %s1327 = sand.u32 %s1326, 85
    %s1328 = sshrl.u32 %s1327, 1
    %s1329 = sor.u32 %s1327, %s1328
    %s1330 = sand.u32 51, %s1329
    %s1331 = sshrl.u32 %s1330, 2
    %s1332 = sor.u32 %s1330, %s1331
    %s1333 = sand.u32 15, %s1332
    %v1334 = vld [vmem:[%s1324] sm:%s1333]
    %v1335 = vunpack.c.l.bf16 %v1334
    %v1336 = vunpack.c.h.bf16 %v1334
    %s1337 = scalar_lea.vmem [#allocation1], 1336
    %1338 = vst [vmem:[%s1337] sm:%s3] %v1335
    %s1339 = scalar_lea.vmem %s0, 664
    %s1340 = sshrl.u32 %s3, 1
    %s1341 = sor.u32 %s3, %s1340
    %s1342 = sand.u32 %s1341, 85
    %s1343 = sshrl.u32 %s1342, 1
    %s1344 = sor.u32 %s1342, %s1343
    %s1345 = sand.u32 51, %s1344
    %s1346 = sshrl.u32 %s1345, 2
    %s1347 = sor.u32 %s1345, %s1346
    %s1348 = sand.u32 15, %s1347
    %v1349 = vld [vmem:[%s1339] sm:%s1348]
    %v1350 = vunpack.c.l.bf16 %v1349
    %v1351 = vunpack.c.h.bf16 %v1349
    %s1352 = scalar_lea.vmem [#allocation1], 1328
    %1353 = vst [vmem:[%s1352] sm:%s3] %v1350
    %s1354 = scalar_lea.vmem %s0, 660
    %s1355 = sshrl.u32 %s3, 1
    %s1356 = sor.u32 %s3, %s1355
    %s1357 = sand.u32 %s1356, 85
    %s1358 = sshrl.u32 %s1357, 1
    %s1359 = sor.u32 %s1357, %s1358
    %s1360 = sand.u32 51, %s1359
    %s1361 = sshrl.u32 %s1360, 2
    %s1362 = sor.u32 %s1360, %s1361
    %s1363 = sand.u32 15, %s1362
    %v1364 = vld [vmem:[%s1354] sm:%s1363]
    %v1365 = vunpack.c.l.bf16 %v1364
    %v1366 = vunpack.c.h.bf16 %v1364
    %s1367 = scalar_lea.vmem [#allocation1], 1320
    %1368 = vst [vmem:[%s1367] sm:%s3] %v1365
    %s1369 = scalar_lea.vmem %s0, 656
    %s1370 = sshrl.u32 %s3, 1
    %s1371 = sor.u32 %s3, %s1370
    %s1372 = sand.u32 %s1371, 85
    %s1373 = sshrl.u32 %s1372, 1
    %s1374 = sor.u32 %s1372, %s1373
    %s1375 = sand.u32 51, %s1374
    %s1376 = sshrl.u32 %s1375, 2
    %s1377 = sor.u32 %s1375, %s1376
    %s1378 = sand.u32 15, %s1377
    %v1379 = vld [vmem:[%s1369] sm:%s1378]
    %v1380 = vunpack.c.l.bf16 %v1379
    %v1381 = vunpack.c.h.bf16 %v1379
    %s1382 = scalar_lea.vmem [#allocation1], 1312
    %1383 = vst [vmem:[%s1382] sm:%s3] %v1380
    %s1384 = scalar_lea.vmem %s0, 652
    %s1385 = sshrl.u32 %s3, 1
    %s1386 = sor.u32 %s3, %s1385
    %s1387 = sand.u32 %s1386, 85
    %s1388 = sshrl.u32 %s1387, 1
    %s1389 = sor.u32 %s1387, %s1388
    %s1390 = sand.u32 51, %s1389
    %s1391 = sshrl.u32 %s1390, 2
    %s1392 = sor.u32 %s1390, %s1391
    %s1393 = sand.u32 15, %s1392
    %v1394 = vld [vmem:[%s1384] sm:%s1393]
    %v1395 = vunpack.c.l.bf16 %v1394
    %v1396 = vunpack.c.h.bf16 %v1394
    %s1397 = scalar_lea.vmem [#allocation1], 1304
    %1398 = vst [vmem:[%s1397] sm:%s3] %v1395
    %s1399 = scalar_lea.vmem %s0, 648
    %s1400 = sshrl.u32 %s3, 1
    %s1401 = sor.u32 %s3, %s1400
    %s1402 = sand.u32 %s1401, 85
    %s1403 = sshrl.u32 %s1402, 1
    %s1404 = sor.u32 %s1402, %s1403
    %s1405 = sand.u32 51, %s1404
    %s1406 = sshrl.u32 %s1405, 2
    %s1407 = sor.u32 %s1405, %s1406
    %s1408 = sand.u32 15, %s1407
    %v1409 = vld [vmem:[%s1399] sm:%s1408]
    %v1410 = vunpack.c.l.bf16 %v1409
    %v1411 = vunpack.c.h.bf16 %v1409
    %s1412 = scalar_lea.vmem [#allocation1], 1296
    %1413 = vst [vmem:[%s1412] sm:%s3] %v1410
    %s1414 = scalar_lea.vmem %s0, 644
    %s1415 = sshrl.u32 %s3, 1
    %s1416 = sor.u32 %s3, %s1415
    %s1417 = sand.u32 %s1416, 85
    %s1418 = sshrl.u32 %s1417, 1
    %s1419 = sor.u32 %s1417, %s1418
    %s1420 = sand.u32 51, %s1419
    %s1421 = sshrl.u32 %s1420, 2
    %s1422 = sor.u32 %s1420, %s1421
    %s1423 = sand.u32 15, %s1422
    %v1424 = vld [vmem:[%s1414] sm:%s1423]
    %v1425 = vunpack.c.l.bf16 %v1424
    %v1426 = vunpack.c.h.bf16 %v1424
    %s1427 = scalar_lea.vmem [#allocation1], 1288
    %1428 = vst [vmem:[%s1427] sm:%s3] %v1425
    %s1429 = scalar_lea.vmem %s0, 640
    %s1430 = sshrl.u32 %s3, 1
    %s1431 = sor.u32 %s3, %s1430
    %s1432 = sand.u32 %s1431, 85
    %s1433 = sshrl.u32 %s1432, 1
    %s1434 = sor.u32 %s1432, %s1433
    %s1435 = sand.u32 51, %s1434
    %s1436 = sshrl.u32 %s1435, 2
    %s1437 = sor.u32 %s1435, %s1436
    %s1438 = sand.u32 15, %s1437
    %v1439 = vld [vmem:[%s1429] sm:%s1438]
    %v1440 = vunpack.c.l.bf16 %v1439
    %v1441 = vunpack.c.h.bf16 %v1439
    %s1442 = scalar_lea.vmem [#allocation1], 1280
    %1443 = vst [vmem:[%s1442] sm:%s3] %v1440
    %s1444 = scalar_lea.vmem %s0, 636
    %s1445 = sshrl.u32 %s3, 1
    %s1446 = sor.u32 %s3, %s1445
    %s1447 = sand.u32 %s1446, 85
    %s1448 = sshrl.u32 %s1447, 1
    %s1449 = sor.u32 %s1447, %s1448
    %s1450 = sand.u32 51, %s1449
    %s1451 = sshrl.u32 %s1450, 2
    %s1452 = sor.u32 %s1450, %s1451
    %s1453 = sand.u32 15, %s1452
    %v1454 = vld [vmem:[%s1444] sm:%s1453]
    %v1455 = vunpack.c.l.bf16 %v1454
    %v1456 = vunpack.c.h.bf16 %v1454
    %s1457 = scalar_lea.vmem [#allocation1], 1272
    %1458 = vst [vmem:[%s1457] sm:%s3] %v1455
    %s1459 = scalar_lea.vmem %s0, 632
    %s1460 = sshrl.u32 %s3, 1
    %s1461 = sor.u32 %s3, %s1460
    %s1462 = sand.u32 %s1461, 85
    %s1463 = sshrl.u32 %s1462, 1
    %s1464 = sor.u32 %s1462, %s1463
    %s1465 = sand.u32 51, %s1464
    %s1466 = sshrl.u32 %s1465, 2
    %s1467 = sor.u32 %s1465, %s1466
    %s1468 = sand.u32 15, %s1467
    %v1469 = vld [vmem:[%s1459] sm:%s1468]
    %v1470 = vunpack.c.l.bf16 %v1469
    %v1471 = vunpack.c.h.bf16 %v1469
    %s1472 = scalar_lea.vmem [#allocation1], 1264
    %1473 = vst [vmem:[%s1472] sm:%s3] %v1470
    %s1474 = scalar_lea.vmem %s0, 628
    %s1475 = sshrl.u32 %s3, 1
    %s1476 = sor.u32 %s3, %s1475
    %s1477 = sand.u32 %s1476, 85
    %s1478 = sshrl.u32 %s1477, 1
    %s1479 = sor.u32 %s1477, %s1478
    %s1480 = sand.u32 51, %s1479
    %s1481 = sshrl.u32 %s1480, 2
    %s1482 = sor.u32 %s1480, %s1481
    %s1483 = sand.u32 15, %s1482
    %v1484 = vld [vmem:[%s1474] sm:%s1483]
    %v1485 = vunpack.c.l.bf16 %v1484
    %v1486 = vunpack.c.h.bf16 %v1484
    %s1487 = scalar_lea.vmem [#allocation1], 1256
    %1488 = vst [vmem:[%s1487] sm:%s3] %v1485
    %s1489 = scalar_lea.vmem %s0, 624
    %s1490 = sshrl.u32 %s3, 1
    %s1491 = sor.u32 %s3, %s1490
    %s1492 = sand.u32 %s1491, 85
    %s1493 = sshrl.u32 %s1492, 1
    %s1494 = sor.u32 %s1492, %s1493
    %s1495 = sand.u32 51, %s1494
    %s1496 = sshrl.u32 %s1495, 2
    %s1497 = sor.u32 %s1495, %s1496
    %s1498 = sand.u32 15, %s1497
    %v1499 = vld [vmem:[%s1489] sm:%s1498]
    %v1500 = vunpack.c.l.bf16 %v1499
    %v1501 = vunpack.c.h.bf16 %v1499
    %s1502 = scalar_lea.vmem [#allocation1], 1248
    %1503 = vst [vmem:[%s1502] sm:%s3] %v1500
    %s1504 = scalar_lea.vmem %s0, 620
    %s1505 = sshrl.u32 %s3, 1
    %s1506 = sor.u32 %s3, %s1505
    %s1507 = sand.u32 %s1506, 85
    %s1508 = sshrl.u32 %s1507, 1
    %s1509 = sor.u32 %s1507, %s1508
    %s1510 = sand.u32 51, %s1509
    %s1511 = sshrl.u32 %s1510, 2
    %s1512 = sor.u32 %s1510, %s1511
    %s1513 = sand.u32 15, %s1512
    %v1514 = vld [vmem:[%s1504] sm:%s1513]
    %v1515 = vunpack.c.l.bf16 %v1514
    %v1516 = vunpack.c.h.bf16 %v1514
    %s1517 = scalar_lea.vmem [#allocation1], 1240
    %1518 = vst [vmem:[%s1517] sm:%s3] %v1515
    %s1519 = scalar_lea.vmem %s0, 616
    %s1520 = sshrl.u32 %s3, 1
    %s1521 = sor.u32 %s3, %s1520
    %s1522 = sand.u32 %s1521, 85
    %s1523 = sshrl.u32 %s1522, 1
    %s1524 = sor.u32 %s1522, %s1523
    %s1525 = sand.u32 51, %s1524
    %s1526 = sshrl.u32 %s1525, 2
    %s1527 = sor.u32 %s1525, %s1526
    %s1528 = sand.u32 15, %s1527
    %v1529 = vld [vmem:[%s1519] sm:%s1528]
    %v1530 = vunpack.c.l.bf16 %v1529
    %v1531 = vunpack.c.h.bf16 %v1529
    %s1532 = scalar_lea.vmem [#allocation1], 1232
    %1533 = vst [vmem:[%s1532] sm:%s3] %v1530
    %s1534 = scalar_lea.vmem %s0, 612
    %s1535 = sshrl.u32 %s3, 1
    %s1536 = sor.u32 %s3, %s1535
    %s1537 = sand.u32 %s1536, 85
    %s1538 = sshrl.u32 %s1537, 1
    %s1539 = sor.u32 %s1537, %s1538
    %s1540 = sand.u32 51, %s1539
    %s1541 = sshrl.u32 %s1540, 2
    %s1542 = sor.u32 %s1540, %s1541
    %s1543 = sand.u32 15, %s1542
    %v1544 = vld [vmem:[%s1534] sm:%s1543]
    %v1545 = vunpack.c.l.bf16 %v1544
    %v1546 = vunpack.c.h.bf16 %v1544
    %s1547 = scalar_lea.vmem [#allocation1], 1224
    %1548 = vst [vmem:[%s1547] sm:%s3] %v1545
    %s1549 = scalar_lea.vmem %s0, 608
    %s1550 = sshrl.u32 %s3, 1
    %s1551 = sor.u32 %s3, %s1550
    %s1552 = sand.u32 %s1551, 85
    %s1553 = sshrl.u32 %s1552, 1
    %s1554 = sor.u32 %s1552, %s1553
    %s1555 = sand.u32 51, %s1554
    %s1556 = sshrl.u32 %s1555, 2
    %s1557 = sor.u32 %s1555, %s1556
    %s1558 = sand.u32 15, %s1557
    %v1559 = vld [vmem:[%s1549] sm:%s1558]
    %v1560 = vunpack.c.l.bf16 %v1559
    %v1561 = vunpack.c.h.bf16 %v1559
    %s1562 = scalar_lea.vmem [#allocation1], 1216
    %1563 = vst [vmem:[%s1562] sm:%s3] %v1560
    %s1564 = scalar_lea.vmem %s0, 604
    %s1565 = sshrl.u32 %s3, 1
    %s1566 = sor.u32 %s3, %s1565
    %s1567 = sand.u32 %s1566, 85
    %s1568 = sshrl.u32 %s1567, 1
    %s1569 = sor.u32 %s1567, %s1568
    %s1570 = sand.u32 51, %s1569
    %s1571 = sshrl.u32 %s1570, 2
    %s1572 = sor.u32 %s1570, %s1571
    %s1573 = sand.u32 15, %s1572
    %v1574 = vld [vmem:[%s1564] sm:%s1573]
    %v1575 = vunpack.c.l.bf16 %v1574
    %v1576 = vunpack.c.h.bf16 %v1574
    %s1577 = scalar_lea.vmem [#allocation1], 1208
    %1578 = vst [vmem:[%s1577] sm:%s3] %v1575
    %s1579 = scalar_lea.vmem %s0, 600
    %s1580 = sshrl.u32 %s3, 1
    %s1581 = sor.u32 %s3, %s1580
    %s1582 = sand.u32 %s1581, 85
    %s1583 = sshrl.u32 %s1582, 1
    %s1584 = sor.u32 %s1582, %s1583
    %s1585 = sand.u32 51, %s1584
    %s1586 = sshrl.u32 %s1585, 2
    %s1587 = sor.u32 %s1585, %s1586
    %s1588 = sand.u32 15, %s1587
    %v1589 = vld [vmem:[%s1579] sm:%s1588]
    %v1590 = vunpack.c.l.bf16 %v1589
    %v1591 = vunpack.c.h.bf16 %v1589
    %s1592 = scalar_lea.vmem [#allocation1], 1200
    %1593 = vst [vmem:[%s1592] sm:%s3] %v1590
    %s1594 = scalar_lea.vmem %s0, 596
    %s1595 = sshrl.u32 %s3, 1
    %s1596 = sor.u32 %s3, %s1595
    %s1597 = sand.u32 %s1596, 85
    %s1598 = sshrl.u32 %s1597, 1
    %s1599 = sor.u32 %s1597, %s1598
    %s1600 = sand.u32 51, %s1599
    %s1601 = sshrl.u32 %s1600, 2
    %s1602 = sor.u32 %s1600, %s1601
    %s1603 = sand.u32 15, %s1602
    %v1604 = vld [vmem:[%s1594] sm:%s1603]
    %v1605 = vunpack.c.l.bf16 %v1604
    %v1606 = vunpack.c.h.bf16 %v1604
    %s1607 = scalar_lea.vmem [#allocation1], 1192
    %1608 = vst [vmem:[%s1607] sm:%s3] %v1605
    %s1609 = scalar_lea.vmem %s0, 592
    %s1610 = sshrl.u32 %s3, 1
    %s1611 = sor.u32 %s3, %s1610
    %s1612 = sand.u32 %s1611, 85
    %s1613 = sshrl.u32 %s1612, 1
    %s1614 = sor.u32 %s1612, %s1613
    %s1615 = sand.u32 51, %s1614
    %s1616 = sshrl.u32 %s1615, 2
    %s1617 = sor.u32 %s1615, %s1616
    %s1618 = sand.u32 15, %s1617
    %v1619 = vld [vmem:[%s1609] sm:%s1618]
    %v1620 = vunpack.c.l.bf16 %v1619
    %v1621 = vunpack.c.h.bf16 %v1619
    %s1622 = scalar_lea.vmem [#allocation1], 1184
    %1623 = vst [vmem:[%s1622] sm:%s3] %v1620
    %s1624 = scalar_lea.vmem %s0, 588
    %s1625 = sshrl.u32 %s3, 1
    %s1626 = sor.u32 %s3, %s1625
    %s1627 = sand.u32 %s1626, 85
    %s1628 = sshrl.u32 %s1627, 1
    %s1629 = sor.u32 %s1627, %s1628
    %s1630 = sand.u32 51, %s1629
    %s1631 = sshrl.u32 %s1630, 2
    %s1632 = sor.u32 %s1630, %s1631
    %s1633 = sand.u32 15, %s1632
    %v1634 = vld [vmem:[%s1624] sm:%s1633]
    %v1635 = vunpack.c.l.bf16 %v1634
    %v1636 = vunpack.c.h.bf16 %v1634
    %s1637 = scalar_lea.vmem [#allocation1], 1176
    %1638 = vst [vmem:[%s1637] sm:%s3] %v1635
    %s1639 = scalar_lea.vmem %s0, 584
    %s1640 = sshrl.u32 %s3, 1
    %s1641 = sor.u32 %s3, %s1640
    %s1642 = sand.u32 %s1641, 85
    %s1643 = sshrl.u32 %s1642, 1
    %s1644 = sor.u32 %s1642, %s1643
    %s1645 = sand.u32 51, %s1644
    %s1646 = sshrl.u32 %s1645, 2
    %s1647 = sor.u32 %s1645, %s1646
    %s1648 = sand.u32 15, %s1647
    %v1649 = vld [vmem:[%s1639] sm:%s1648]
    %v1650 = vunpack.c.l.bf16 %v1649
    %v1651 = vunpack.c.h.bf16 %v1649
    %s1652 = scalar_lea.vmem [#allocation1], 1168
    %1653 = vst [vmem:[%s1652] sm:%s3] %v1650
    %s1654 = scalar_lea.vmem %s0, 580
    %s1655 = sshrl.u32 %s3, 1
    %s1656 = sor.u32 %s3, %s1655
    %s1657 = sand.u32 %s1656, 85
    %s1658 = sshrl.u32 %s1657, 1
    %s1659 = sor.u32 %s1657, %s1658
    %s1660 = sand.u32 51, %s1659
    %s1661 = sshrl.u32 %s1660, 2
    %s1662 = sor.u32 %s1660, %s1661
    %s1663 = sand.u32 15, %s1662
    %v1664 = vld [vmem:[%s1654] sm:%s1663]
    %v1665 = vunpack.c.l.bf16 %v1664
    %v1666 = vunpack.c.h.bf16 %v1664
    %s1667 = scalar_lea.vmem [#allocation1], 1160
    %1668 = vst [vmem:[%s1667] sm:%s3] %v1665
    %s1669 = scalar_lea.vmem %s0, 576
    %s1670 = sshrl.u32 %s3, 1
    %s1671 = sor.u32 %s3, %s1670
    %s1672 = sand.u32 %s1671, 85
    %s1673 = sshrl.u32 %s1672, 1
    %s1674 = sor.u32 %s1672, %s1673
    %s1675 = sand.u32 51, %s1674
    %s1676 = sshrl.u32 %s1675, 2
    %s1677 = sor.u32 %s1675, %s1676
    %s1678 = sand.u32 15, %s1677
    %v1679 = vld [vmem:[%s1669] sm:%s1678]
    %v1680 = vunpack.c.l.bf16 %v1679
    %v1681 = vunpack.c.h.bf16 %v1679
    %s1682 = scalar_lea.vmem [#allocation1], 1152
    %1683 = vst [vmem:[%s1682] sm:%s3] %v1680
    %s1684 = scalar_lea.vmem %s0, 572
    %s1685 = sshrl.u32 %s3, 1
    %s1686 = sor.u32 %s3, %s1685
    %s1687 = sand.u32 %s1686, 85
    %s1688 = sshrl.u32 %s1687, 1
    %s1689 = sor.u32 %s1687, %s1688
    %s1690 = sand.u32 51, %s1689
    %s1691 = sshrl.u32 %s1690, 2
    %s1692 = sor.u32 %s1690, %s1691
    %s1693 = sand.u32 15, %s1692
    %v1694 = vld [vmem:[%s1684] sm:%s1693]
    %v1695 = vunpack.c.l.bf16 %v1694
    %v1696 = vunpack.c.h.bf16 %v1694
    %s1697 = scalar_lea.vmem [#allocation1], 1144
    %1698 = vst [vmem:[%s1697] sm:%s3] %v1695
    %s1699 = scalar_lea.vmem %s0, 568
    %s1700 = sshrl.u32 %s3, 1
    %s1701 = sor.u32 %s3, %s1700
    %s1702 = sand.u32 %s1701, 85
    %s1703 = sshrl.u32 %s1702, 1
    %s1704 = sor.u32 %s1702, %s1703
    %s1705 = sand.u32 51, %s1704
    %s1706 = sshrl.u32 %s1705, 2
    %s1707 = sor.u32 %s1705, %s1706
    %s1708 = sand.u32 15, %s1707
    %v1709 = vld [vmem:[%s1699] sm:%s1708]
    %v1710 = vunpack.c.l.bf16 %v1709
    %v1711 = vunpack.c.h.bf16 %v1709
    %s1712 = scalar_lea.vmem [#allocation1], 1136
    %1713 = vst [vmem:[%s1712] sm:%s3] %v1710
    %s1714 = scalar_lea.vmem %s0, 564
    %s1715 = sshrl.u32 %s3, 1
    %s1716 = sor.u32 %s3, %s1715
    %s1717 = sand.u32 %s1716, 85
    %s1718 = sshrl.u32 %s1717, 1
    %s1719 = sor.u32 %s1717, %s1718
    %s1720 = sand.u32 51, %s1719
    %s1721 = sshrl.u32 %s1720, 2
    %s1722 = sor.u32 %s1720, %s1721
    %s1723 = sand.u32 15, %s1722
    %v1724 = vld [vmem:[%s1714] sm:%s1723]
    %v1725 = vunpack.c.l.bf16 %v1724
    %v1726 = vunpack.c.h.bf16 %v1724
    %s1727 = scalar_lea.vmem [#allocation1], 1128
    %1728 = vst [vmem:[%s1727] sm:%s3] %v1725
    %s1729 = scalar_lea.vmem %s0, 560
    %s1730 = sshrl.u32 %s3, 1
    %s1731 = sor.u32 %s3, %s1730
    %s1732 = sand.u32 %s1731, 85
    %s1733 = sshrl.u32 %s1732, 1
    %s1734 = sor.u32 %s1732, %s1733
    %s1735 = sand.u32 51, %s1734
    %s1736 = sshrl.u32 %s1735, 2
    %s1737 = sor.u32 %s1735, %s1736
    %s1738 = sand.u32 15, %s1737
    %v1739 = vld [vmem:[%s1729] sm:%s1738]
    %v1740 = vunpack.c.l.bf16 %v1739
    %v1741 = vunpack.c.h.bf16 %v1739
    %s1742 = scalar_lea.vmem [#allocation1], 1120
    %1743 = vst [vmem:[%s1742] sm:%s3] %v1740
    %s1744 = scalar_lea.vmem %s0, 556
    %s1745 = sshrl.u32 %s3, 1
    %s1746 = sor.u32 %s3, %s1745
    %s1747 = sand.u32 %s1746, 85
    %s1748 = sshrl.u32 %s1747, 1
    %s1749 = sor.u32 %s1747, %s1748
    %s1750 = sand.u32 51, %s1749
    %s1751 = sshrl.u32 %s1750, 2
    %s1752 = sor.u32 %s1750, %s1751
    %s1753 = sand.u32 15, %s1752
    %v1754 = vld [vmem:[%s1744] sm:%s1753]
    %v1755 = vunpack.c.l.bf16 %v1754
    %v1756 = vunpack.c.h.bf16 %v1754
    %s1757 = scalar_lea.vmem [#allocation1], 1112
    %1758 = vst [vmem:[%s1757] sm:%s3] %v1755
    %s1759 = scalar_lea.vmem %s0, 552
    %s1760 = sshrl.u32 %s3, 1
    %s1761 = sor.u32 %s3, %s1760
    %s1762 = sand.u32 %s1761, 85
    %s1763 = sshrl.u32 %s1762, 1
    %s1764 = sor.u32 %s1762, %s1763
    %s1765 = sand.u32 51, %s1764
    %s1766 = sshrl.u32 %s1765, 2
    %s1767 = sor.u32 %s1765, %s1766
    %s1768 = sand.u32 15, %s1767
    %v1769 = vld [vmem:[%s1759] sm:%s1768]
    %v1770 = vunpack.c.l.bf16 %v1769
    %v1771 = vunpack.c.h.bf16 %v1769
    %s1772 = scalar_lea.vmem [#allocation1], 1104
    %1773 = vst [vmem:[%s1772] sm:%s3] %v1770
    %s1774 = scalar_lea.vmem %s0, 548
    %s1775 = sshrl.u32 %s3, 1
    %s1776 = sor.u32 %s3, %s1775
    %s1777 = sand.u32 %s1776, 85
    %s1778 = sshrl.u32 %s1777, 1
    %s1779 = sor.u32 %s1777, %s1778
    %s1780 = sand.u32 51, %s1779
    %s1781 = sshrl.u32 %s1780, 2
    %s1782 = sor.u32 %s1780, %s1781
    %s1783 = sand.u32 15, %s1782
    %v1784 = vld [vmem:[%s1774] sm:%s1783]
    %v1785 = vunpack.c.l.bf16 %v1784
    %v1786 = vunpack.c.h.bf16 %v1784
    %s1787 = scalar_lea.vmem [#allocation1], 1096
    %1788 = vst [vmem:[%s1787] sm:%s3] %v1785
    %s1789 = scalar_lea.vmem %s0, 544
    %s1790 = sshrl.u32 %s3, 1
    %s1791 = sor.u32 %s3, %s1790
    %s1792 = sand.u32 %s1791, 85
    %s1793 = sshrl.u32 %s1792, 1
    %s1794 = sor.u32 %s1792, %s1793
    %s1795 = sand.u32 51, %s1794
    %s1796 = sshrl.u32 %s1795, 2
    %s1797 = sor.u32 %s1795, %s1796
    %s1798 = sand.u32 15, %s1797
    %v1799 = vld [vmem:[%s1789] sm:%s1798]
    %v1800 = vunpack.c.l.bf16 %v1799
    %v1801 = vunpack.c.h.bf16 %v1799
    %s1802 = scalar_lea.vmem [#allocation1], 1088
    %1803 = vst [vmem:[%s1802] sm:%s3] %v1800
    %s1804 = scalar_lea.vmem %s0, 540
    %s1805 = sshrl.u32 %s3, 1
    %s1806 = sor.u32 %s3, %s1805
    %s1807 = sand.u32 %s1806, 85
    %s1808 = sshrl.u32 %s1807, 1
    %s1809 = sor.u32 %s1807, %s1808
    %s1810 = sand.u32 51, %s1809
    %s1811 = sshrl.u32 %s1810, 2
    %s1812 = sor.u32 %s1810, %s1811
    %s1813 = sand.u32 15, %s1812
    %v1814 = vld [vmem:[%s1804] sm:%s1813]
    %v1815 = vunpack.c.l.bf16 %v1814
    %v1816 = vunpack.c.h.bf16 %v1814
    %s1817 = scalar_lea.vmem [#allocation1], 1080
    %1818 = vst [vmem:[%s1817] sm:%s3] %v1815
    %s1819 = scalar_lea.vmem %s0, 536
    %s1820 = sshrl.u32 %s3, 1
    %s1821 = sor.u32 %s3, %s1820
    %s1822 = sand.u32 %s1821, 85
    %s1823 = sshrl.u32 %s1822, 1
    %s1824 = sor.u32 %s1822, %s1823
    %s1825 = sand.u32 51, %s1824
    %s1826 = sshrl.u32 %s1825, 2
    %s1827 = sor.u32 %s1825, %s1826
    %s1828 = sand.u32 15, %s1827
    %v1829 = vld [vmem:[%s1819] sm:%s1828]
    %v1830 = vunpack.c.l.bf16 %v1829
    %v1831 = vunpack.c.h.bf16 %v1829
    %s1832 = scalar_lea.vmem [#allocation1], 1072
    %1833 = vst [vmem:[%s1832] sm:%s3] %v1830
    %s1834 = scalar_lea.vmem %s0, 532
    %s1835 = sshrl.u32 %s3, 1
    %s1836 = sor.u32 %s3, %s1835
    %s1837 = sand.u32 %s1836, 85
    %s1838 = sshrl.u32 %s1837, 1
    %s1839 = sor.u32 %s1837, %s1838
    %s1840 = sand.u32 51, %s1839
    %s1841 = sshrl.u32 %s1840, 2
    %s1842 = sor.u32 %s1840, %s1841
    %s1843 = sand.u32 15, %s1842
    %v1844 = vld [vmem:[%s1834] sm:%s1843]
    %v1845 = vunpack.c.l.bf16 %v1844
    %v1846 = vunpack.c.h.bf16 %v1844
    %s1847 = scalar_lea.vmem [#allocation1], 1064
    %1848 = vst [vmem:[%s1847] sm:%s3] %v1845
    %s1849 = scalar_lea.vmem %s0, 528
    %s1850 = sshrl.u32 %s3, 1
    %s1851 = sor.u32 %s3, %s1850
    %s1852 = sand.u32 %s1851, 85
    %s1853 = sshrl.u32 %s1852, 1
    %s1854 = sor.u32 %s1852, %s1853
    %s1855 = sand.u32 51, %s1854
    %s1856 = sshrl.u32 %s1855, 2
    %s1857 = sor.u32 %s1855, %s1856
    %s1858 = sand.u32 15, %s1857
    %v1859 = vld [vmem:[%s1849] sm:%s1858]
    %v1860 = vunpack.c.l.bf16 %v1859
    %v1861 = vunpack.c.h.bf16 %v1859
    %s1862 = scalar_lea.vmem [#allocation1], 1056
    %1863 = vst [vmem:[%s1862] sm:%s3] %v1860
    %s1864 = scalar_lea.vmem %s0, 524
    %s1865 = sshrl.u32 %s3, 1
    %s1866 = sor.u32 %s3, %s1865
    %s1867 = sand.u32 %s1866, 85
    %s1868 = sshrl.u32 %s1867, 1
    %s1869 = sor.u32 %s1867, %s1868
    %s1870 = sand.u32 51, %s1869
    %s1871 = sshrl.u32 %s1870, 2
    %s1872 = sor.u32 %s1870, %s1871
    %s1873 = sand.u32 15, %s1872
    %v1874 = vld [vmem:[%s1864] sm:%s1873]
    %v1875 = vunpack.c.l.bf16 %v1874
    %v1876 = vunpack.c.h.bf16 %v1874
    %s1877 = scalar_lea.vmem [#allocation1], 1048
    %1878 = vst [vmem:[%s1877] sm:%s3] %v1875
    %s1879 = scalar_lea.vmem %s0, 520
    %s1880 = sshrl.u32 %s3, 1
    %s1881 = sor.u32 %s3, %s1880
    %s1882 = sand.u32 %s1881, 85
    %s1883 = sshrl.u32 %s1882, 1
    %s1884 = sor.u32 %s1882, %s1883
    %s1885 = sand.u32 51, %s1884
    %s1886 = sshrl.u32 %s1885, 2
    %s1887 = sor.u32 %s1885, %s1886
    %s1888 = sand.u32 15, %s1887
    %v1889 = vld [vmem:[%s1879] sm:%s1888]
    %v1890 = vunpack.c.l.bf16 %v1889
    %v1891 = vunpack.c.h.bf16 %v1889
    %s1892 = scalar_lea.vmem [#allocation1], 1040
    %1893 = vst [vmem:[%s1892] sm:%s3] %v1890
    %s1894 = scalar_lea.vmem %s0, 516
    %s1895 = sshrl.u32 %s3, 1
    %s1896 = sor.u32 %s3, %s1895
    %s1897 = sand.u32 %s1896, 85
    %s1898 = sshrl.u32 %s1897, 1
    %s1899 = sor.u32 %s1897, %s1898
    %s1900 = sand.u32 51, %s1899
    %s1901 = sshrl.u32 %s1900, 2
    %s1902 = sor.u32 %s1900, %s1901
    %s1903 = sand.u32 15, %s1902
    %v1904 = vld [vmem:[%s1894] sm:%s1903]
    %v1905 = vunpack.c.l.bf16 %v1904
    %v1906 = vunpack.c.h.bf16 %v1904
    %s1907 = scalar_lea.vmem [#allocation1], 1032
    %1908 = vst [vmem:[%s1907] sm:%s3] %v1905
    %s1909 = scalar_lea.vmem %s0, 512
    %s1910 = sshrl.u32 %s3, 1
    %s1911 = sor.u32 %s3, %s1910
    %s1912 = sand.u32 %s1911, 85
    %s1913 = sshrl.u32 %s1912, 1
    %s1914 = sor.u32 %s1912, %s1913
    %s1915 = sand.u32 51, %s1914
    %s1916 = sshrl.u32 %s1915, 2
    %s1917 = sor.u32 %s1915, %s1916
    %s1918 = sand.u32 15, %s1917
    %v1919 = vld [vmem:[%s1909] sm:%s1918]
    %v1920 = vunpack.c.l.bf16 %v1919
    %v1921 = vunpack.c.h.bf16 %v1919
    %s1922 = scalar_lea.vmem [#allocation1], 1024
    %1923 = vst [vmem:[%s1922] sm:%s3] %v1920
    %s1924 = scalar_lea.vmem %s0, 508
    %s1925 = sshrl.u32 %s3, 1
    %s1926 = sor.u32 %s3, %s1925
    %s1927 = sand.u32 %s1926, 85
    %s1928 = sshrl.u32 %s1927, 1
    %s1929 = sor.u32 %s1927, %s1928
    %s1930 = sand.u32 51, %s1929
    %s1931 = sshrl.u32 %s1930, 2
    %s1932 = sor.u32 %s1930, %s1931
    %s1933 = sand.u32 15, %s1932
    %v1934 = vld [vmem:[%s1924] sm:%s1933]
    %v1935 = vunpack.c.l.bf16 %v1934
    %v1936 = vunpack.c.h.bf16 %v1934
    %s1937 = scalar_lea.vmem [#allocation1], 1016
    %1938 = vst [vmem:[%s1937] sm:%s3] %v1935
    %s1939 = scalar_lea.vmem %s0, 504
    %s1940 = sshrl.u32 %s3, 1
    %s1941 = sor.u32 %s3, %s1940
    %s1942 = sand.u32 %s1941, 85
    %s1943 = sshrl.u32 %s1942, 1
    %s1944 = sor.u32 %s1942, %s1943
    %s1945 = sand.u32 51, %s1944
    %s1946 = sshrl.u32 %s1945, 2
    %s1947 = sor.u32 %s1945, %s1946
    %s1948 = sand.u32 15, %s1947
    %v1949 = vld [vmem:[%s1939] sm:%s1948]
    %v1950 = vunpack.c.l.bf16 %v1949
    %v1951 = vunpack.c.h.bf16 %v1949
    %s1952 = scalar_lea.vmem [#allocation1], 1008
    %1953 = vst [vmem:[%s1952] sm:%s3] %v1950
    %s1954 = scalar_lea.vmem %s0, 500
    %s1955 = sshrl.u32 %s3, 1
    %s1956 = sor.u32 %s3, %s1955
    %s1957 = sand.u32 %s1956, 85
    %s1958 = sshrl.u32 %s1957, 1
    %s1959 = sor.u32 %s1957, %s1958
    %s1960 = sand.u32 51, %s1959
    %s1961 = sshrl.u32 %s1960, 2
    %s1962 = sor.u32 %s1960, %s1961
    %s1963 = sand.u32 15, %s1962
    %v1964 = vld [vmem:[%s1954] sm:%s1963]
    %v1965 = vunpack.c.l.bf16 %v1964
    %v1966 = vunpack.c.h.bf16 %v1964
    %s1967 = scalar_lea.vmem [#allocation1], 1000
    %1968 = vst [vmem:[%s1967] sm:%s3] %v1965
    %s1969 = scalar_lea.vmem %s0, 496
    %s1970 = sshrl.u32 %s3, 1
    %s1971 = sor.u32 %s3, %s1970
    %s1972 = sand.u32 %s1971, 85
    %s1973 = sshrl.u32 %s1972, 1
    %s1974 = sor.u32 %s1972, %s1973
    %s1975 = sand.u32 51, %s1974
    %s1976 = sshrl.u32 %s1975, 2
    %s1977 = sor.u32 %s1975, %s1976
    %s1978 = sand.u32 15, %s1977
    %v1979 = vld [vmem:[%s1969] sm:%s1978]
    %v1980 = vunpack.c.l.bf16 %v1979
    %v1981 = vunpack.c.h.bf16 %v1979
    %s1982 = scalar_lea.vmem [#allocation1], 992
    %1983 = vst [vmem:[%s1982] sm:%s3] %v1980
    %s1984 = scalar_lea.vmem %s0, 492
    %s1985 = sshrl.u32 %s3, 1
    %s1986 = sor.u32 %s3, %s1985
    %s1987 = sand.u32 %s1986, 85
    %s1988 = sshrl.u32 %s1987, 1
    %s1989 = sor.u32 %s1987, %s1988
    %s1990 = sand.u32 51, %s1989
    %s1991 = sshrl.u32 %s1990, 2
    %s1992 = sor.u32 %s1990, %s1991
    %s1993 = sand.u32 15, %s1992
    %v1994 = vld [vmem:[%s1984] sm:%s1993]
    %v1995 = vunpack.c.l.bf16 %v1994
    %v1996 = vunpack.c.h.bf16 %v1994
    %s1997 = scalar_lea.vmem [#allocation1], 984
    %1998 = vst [vmem:[%s1997] sm:%s3] %v1995
    %s1999 = scalar_lea.vmem %s0, 488
    %s2000 = sshrl.u32 %s3, 1
    %s2001 = sor.u32 %s3, %s2000
    %s2002 = sand.u32 %s2001, 85
    %s2003 = sshrl.u32 %s2002, 1
    %s2004 = sor.u32 %s2002, %s2003
    %s2005 = sand.u32 51, %s2004
    %s2006 = sshrl.u32 %s2005, 2
    %s2007 = sor.u32 %s2005, %s2006
    %s2008 = sand.u32 15, %s2007
    %v2009 = vld [vmem:[%s1999] sm:%s2008]
    %v2010 = vunpack.c.l.bf16 %v2009
    %v2011 = vunpack.c.h.bf16 %v2009
    %s2012 = scalar_lea.vmem [#allocation1], 976
    %2013 = vst [vmem:[%s2012] sm:%s3] %v2010
    %s2014 = scalar_lea.vmem %s0, 484
    %s2015 = sshrl.u32 %s3, 1
    %s2016 = sor.u32 %s3, %s2015
    %s2017 = sand.u32 %s2016, 85
    %s2018 = sshrl.u32 %s2017, 1
    %s2019 = sor.u32 %s2017, %s2018
    %s2020 = sand.u32 51, %s2019
    %s2021 = sshrl.u32 %s2020, 2
    %s2022 = sor.u32 %s2020, %s2021
    %s2023 = sand.u32 15, %s2022
    %v2024 = vld [vmem:[%s2014] sm:%s2023]
    %v2025 = vunpack.c.l.bf16 %v2024
    %v2026 = vunpack.c.h.bf16 %v2024
    %s2027 = scalar_lea.vmem [#allocation1], 968
    %2028 = vst [vmem:[%s2027] sm:%s3] %v2025
    %s2029 = scalar_lea.vmem %s0, 480
    %s2030 = sshrl.u32 %s3, 1
    %s2031 = sor.u32 %s3, %s2030
    %s2032 = sand.u32 %s2031, 85
    %s2033 = sshrl.u32 %s2032, 1
    %s2034 = sor.u32 %s2032, %s2033
    %s2035 = sand.u32 51, %s2034
    %s2036 = sshrl.u32 %s2035, 2
    %s2037 = sor.u32 %s2035, %s2036
    %s2038 = sand.u32 15, %s2037
    %v2039 = vld [vmem:[%s2029] sm:%s2038]
    %v2040 = vunpack.c.l.bf16 %v2039
    %v2041 = vunpack.c.h.bf16 %v2039
    %s2042 = scalar_lea.vmem [#allocation1], 960
    %2043 = vst [vmem:[%s2042] sm:%s3] %v2040
    %s2044 = scalar_lea.vmem %s0, 476
    %s2045 = sshrl.u32 %s3, 1
    %s2046 = sor.u32 %s3, %s2045
    %s2047 = sand.u32 %s2046, 85
    %s2048 = sshrl.u32 %s2047, 1
    %s2049 = sor.u32 %s2047, %s2048
    %s2050 = sand.u32 51, %s2049
    %s2051 = sshrl.u32 %s2050, 2
    %s2052 = sor.u32 %s2050, %s2051
    %s2053 = sand.u32 15, %s2052
    %v2054 = vld [vmem:[%s2044] sm:%s2053]
    %v2055 = vunpack.c.l.bf16 %v2054
    %v2056 = vunpack.c.h.bf16 %v2054
    %s2057 = scalar_lea.vmem [#allocation1], 952
    %2058 = vst [vmem:[%s2057] sm:%s3] %v2055
    %s2059 = scalar_lea.vmem %s0, 472
    %s2060 = sshrl.u32 %s3, 1
    %s2061 = sor.u32 %s3, %s2060
    %s2062 = sand.u32 %s2061, 85
    %s2063 = sshrl.u32 %s2062, 1
    %s2064 = sor.u32 %s2062, %s2063
    %s2065 = sand.u32 51, %s2064
    %s2066 = sshrl.u32 %s2065, 2
    %s2067 = sor.u32 %s2065, %s2066
    %s2068 = sand.u32 15, %s2067
    %v2069 = vld [vmem:[%s2059] sm:%s2068]
    %v2070 = vunpack.c.l.bf16 %v2069
    %v2071 = vunpack.c.h.bf16 %v2069
    %s2072 = scalar_lea.vmem [#allocation1], 944
    %2073 = vst [vmem:[%s2072] sm:%s3] %v2070
    %s2074 = scalar_lea.vmem %s0, 468
    %s2075 = sshrl.u32 %s3, 1
    %s2076 = sor.u32 %s3, %s2075
    %s2077 = sand.u32 %s2076, 85
    %s2078 = sshrl.u32 %s2077, 1
    %s2079 = sor.u32 %s2077, %s2078
    %s2080 = sand.u32 51, %s2079
    %s2081 = sshrl.u32 %s2080, 2
    %s2082 = sor.u32 %s2080, %s2081
    %s2083 = sand.u32 15, %s2082
    %v2084 = vld [vmem:[%s2074] sm:%s2083]
    %v2085 = vunpack.c.l.bf16 %v2084
    %v2086 = vunpack.c.h.bf16 %v2084
    %s2087 = scalar_lea.vmem [#allocation1], 936
    %2088 = vst [vmem:[%s2087] sm:%s3] %v2085
    %s2089 = scalar_lea.vmem %s0, 464
    %s2090 = sshrl.u32 %s3, 1
    %s2091 = sor.u32 %s3, %s2090
    %s2092 = sand.u32 %s2091, 85
    %s2093 = sshrl.u32 %s2092, 1
    %s2094 = sor.u32 %s2092, %s2093
    %s2095 = sand.u32 51, %s2094
    %s2096 = sshrl.u32 %s2095, 2
    %s2097 = sor.u32 %s2095, %s2096
    %s2098 = sand.u32 15, %s2097
    %v2099 = vld [vmem:[%s2089] sm:%s2098]
    %v2100 = vunpack.c.l.bf16 %v2099
    %v2101 = vunpack.c.h.bf16 %v2099
    %s2102 = scalar_lea.vmem [#allocation1], 928
    %2103 = vst [vmem:[%s2102] sm:%s3] %v2100
    %s2104 = scalar_lea.vmem %s0, 460
    %s2105 = sshrl.u32 %s3, 1
    %s2106 = sor.u32 %s3, %s2105
    %s2107 = sand.u32 %s2106, 85
    %s2108 = sshrl.u32 %s2107, 1
    %s2109 = sor.u32 %s2107, %s2108
    %s2110 = sand.u32 51, %s2109
    %s2111 = sshrl.u32 %s2110, 2
    %s2112 = sor.u32 %s2110, %s2111
    %s2113 = sand.u32 15, %s2112
    %v2114 = vld [vmem:[%s2104] sm:%s2113]
    %v2115 = vunpack.c.l.bf16 %v2114
    %v2116 = vunpack.c.h.bf16 %v2114
    %s2117 = scalar_lea.vmem [#allocation1], 920
    %2118 = vst [vmem:[%s2117] sm:%s3] %v2115
    %s2119 = scalar_lea.vmem %s0, 456
    %s2120 = sshrl.u32 %s3, 1
    %s2121 = sor.u32 %s3, %s2120
    %s2122 = sand.u32 %s2121, 85
    %s2123 = sshrl.u32 %s2122, 1
    %s2124 = sor.u32 %s2122, %s2123
    %s2125 = sand.u32 51, %s2124
    %s2126 = sshrl.u32 %s2125, 2
    %s2127 = sor.u32 %s2125, %s2126
    %s2128 = sand.u32 15, %s2127
    %v2129 = vld [vmem:[%s2119] sm:%s2128]
    %v2130 = vunpack.c.l.bf16 %v2129
    %v2131 = vunpack.c.h.bf16 %v2129
    %s2132 = scalar_lea.vmem [#allocation1], 912
    %2133 = vst [vmem:[%s2132] sm:%s3] %v2130
    %s2134 = scalar_lea.vmem %s0, 452
    %s2135 = sshrl.u32 %s3, 1
    %s2136 = sor.u32 %s3, %s2135
    %s2137 = sand.u32 %s2136, 85
    %s2138 = sshrl.u32 %s2137, 1
    %s2139 = sor.u32 %s2137, %s2138
    %s2140 = sand.u32 51, %s2139
    %s2141 = sshrl.u32 %s2140, 2
    %s2142 = sor.u32 %s2140, %s2141
    %s2143 = sand.u32 15, %s2142
    %v2144 = vld [vmem:[%s2134] sm:%s2143]
    %v2145 = vunpack.c.l.bf16 %v2144
    %v2146 = vunpack.c.h.bf16 %v2144
    %s2147 = scalar_lea.vmem [#allocation1], 904
    %2148 = vst [vmem:[%s2147] sm:%s3] %v2145
    %s2149 = scalar_lea.vmem %s0, 448
    %s2150 = sshrl.u32 %s3, 1
    %s2151 = sor.u32 %s3, %s2150
    %s2152 = sand.u32 %s2151, 85
    %s2153 = sshrl.u32 %s2152, 1
    %s2154 = sor.u32 %s2152, %s2153
    %s2155 = sand.u32 51, %s2154
    %s2156 = sshrl.u32 %s2155, 2
    %s2157 = sor.u32 %s2155, %s2156
    %s2158 = sand.u32 15, %s2157
    %v2159 = vld [vmem:[%s2149] sm:%s2158]
    %v2160 = vunpack.c.l.bf16 %v2159
    %v2161 = vunpack.c.h.bf16 %v2159
    %s2162 = scalar_lea.vmem [#allocation1], 896
    %2163 = vst [vmem:[%s2162] sm:%s3] %v2160
    %s2164 = scalar_lea.vmem %s0, 444
    %s2165 = sshrl.u32 %s3, 1
    %s2166 = sor.u32 %s3, %s2165
    %s2167 = sand.u32 %s2166, 85
    %s2168 = sshrl.u32 %s2167, 1
    %s2169 = sor.u32 %s2167, %s2168
    %s2170 = sand.u32 51, %s2169
    %s2171 = sshrl.u32 %s2170, 2
    %s2172 = sor.u32 %s2170, %s2171
    %s2173 = sand.u32 15, %s2172
    %v2174 = vld [vmem:[%s2164] sm:%s2173]
    %v2175 = vunpack.c.l.bf16 %v2174
    %v2176 = vunpack.c.h.bf16 %v2174
    %s2177 = scalar_lea.vmem [#allocation1], 888
    %2178 = vst [vmem:[%s2177] sm:%s3] %v2175
    %s2179 = scalar_lea.vmem %s0, 440
    %s2180 = sshrl.u32 %s3, 1
    %s2181 = sor.u32 %s3, %s2180
    %s2182 = sand.u32 %s2181, 85
    %s2183 = sshrl.u32 %s2182, 1
    %s2184 = sor.u32 %s2182, %s2183
    %s2185 = sand.u32 51, %s2184
    %s2186 = sshrl.u32 %s2185, 2
    %s2187 = sor.u32 %s2185, %s2186
    %s2188 = sand.u32 15, %s2187
    %v2189 = vld [vmem:[%s2179] sm:%s2188]
    %v2190 = vunpack.c.l.bf16 %v2189
    %v2191 = vunpack.c.h.bf16 %v2189
    %s2192 = scalar_lea.vmem [#allocation1], 880
    %2193 = vst [vmem:[%s2192] sm:%s3] %v2190
    %s2194 = scalar_lea.vmem %s0, 436
    %s2195 = sshrl.u32 %s3, 1
    %s2196 = sor.u32 %s3, %s2195
    %s2197 = sand.u32 %s2196, 85
    %s2198 = sshrl.u32 %s2197, 1
    %s2199 = sor.u32 %s2197, %s2198
    %s2200 = sand.u32 51, %s2199
    %s2201 = sshrl.u32 %s2200, 2
    %s2202 = sor.u32 %s2200, %s2201
    %s2203 = sand.u32 15, %s2202
    %v2204 = vld [vmem:[%s2194] sm:%s2203]
    %v2205 = vunpack.c.l.bf16 %v2204
    %v2206 = vunpack.c.h.bf16 %v2204
    %s2207 = scalar_lea.vmem [#allocation1], 872
    %2208 = vst [vmem:[%s2207] sm:%s3] %v2205
    %s2209 = scalar_lea.vmem %s0, 432
    %s2210 = sshrl.u32 %s3, 1
    %s2211 = sor.u32 %s3, %s2210
    %s2212 = sand.u32 %s2211, 85
    %s2213 = sshrl.u32 %s2212, 1
    %s2214 = sor.u32 %s2212, %s2213
    %s2215 = sand.u32 51, %s2214
    %s2216 = sshrl.u32 %s2215, 2
    %s2217 = sor.u32 %s2215, %s2216
    %s2218 = sand.u32 15, %s2217
    %v2219 = vld [vmem:[%s2209] sm:%s2218]
    %v2220 = vunpack.c.l.bf16 %v2219
    %v2221 = vunpack.c.h.bf16 %v2219
    %s2222 = scalar_lea.vmem [#allocation1], 864
    %2223 = vst [vmem:[%s2222] sm:%s3] %v2220
    %s2224 = scalar_lea.vmem %s0, 428
    %s2225 = sshrl.u32 %s3, 1
    %s2226 = sor.u32 %s3, %s2225
    %s2227 = sand.u32 %s2226, 85
    %s2228 = sshrl.u32 %s2227, 1
    %s2229 = sor.u32 %s2227, %s2228
    %s2230 = sand.u32 51, %s2229
    %s2231 = sshrl.u32 %s2230, 2
    %s2232 = sor.u32 %s2230, %s2231
    %s2233 = sand.u32 15, %s2232
    %v2234 = vld [vmem:[%s2224] sm:%s2233]
    %v2235 = vunpack.c.l.bf16 %v2234
    %v2236 = vunpack.c.h.bf16 %v2234
    %s2237 = scalar_lea.vmem [#allocation1], 856
    %2238 = vst [vmem:[%s2237] sm:%s3] %v2235
    %s2239 = scalar_lea.vmem %s0, 424
    %s2240 = sshrl.u32 %s3, 1
    %s2241 = sor.u32 %s3, %s2240
    %s2242 = sand.u32 %s2241, 85
    %s2243 = sshrl.u32 %s2242, 1
    %s2244 = sor.u32 %s2242, %s2243
    %s2245 = sand.u32 51, %s2244
    %s2246 = sshrl.u32 %s2245, 2
    %s2247 = sor.u32 %s2245, %s2246
    %s2248 = sand.u32 15, %s2247
    %v2249 = vld [vmem:[%s2239] sm:%s2248]
    %v2250 = vunpack.c.l.bf16 %v2249
    %v2251 = vunpack.c.h.bf16 %v2249
    %s2252 = scalar_lea.vmem [#allocation1], 848
    %2253 = vst [vmem:[%s2252] sm:%s3] %v2250
    %s2254 = scalar_lea.vmem %s0, 420
    %s2255 = sshrl.u32 %s3, 1
    %s2256 = sor.u32 %s3, %s2255
    %s2257 = sand.u32 %s2256, 85
    %s2258 = sshrl.u32 %s2257, 1
    %s2259 = sor.u32 %s2257, %s2258
    %s2260 = sand.u32 51, %s2259
    %s2261 = sshrl.u32 %s2260, 2
    %s2262 = sor.u32 %s2260, %s2261
    %s2263 = sand.u32 15, %s2262
    %v2264 = vld [vmem:[%s2254] sm:%s2263]
    %v2265 = vunpack.c.l.bf16 %v2264
    %v2266 = vunpack.c.h.bf16 %v2264
    %s2267 = scalar_lea.vmem [#allocation1], 840
    %2268 = vst [vmem:[%s2267] sm:%s3] %v2265
    %s2269 = scalar_lea.vmem %s0, 416
    %s2270 = sshrl.u32 %s3, 1
    %s2271 = sor.u32 %s3, %s2270
    %s2272 = sand.u32 %s2271, 85
    %s2273 = sshrl.u32 %s2272, 1
    %s2274 = sor.u32 %s2272, %s2273
    %s2275 = sand.u32 51, %s2274
    %s2276 = sshrl.u32 %s2275, 2
    %s2277 = sor.u32 %s2275, %s2276
    %s2278 = sand.u32 15, %s2277
    %v2279 = vld [vmem:[%s2269] sm:%s2278]
    %v2280 = vunpack.c.l.bf16 %v2279
    %v2281 = vunpack.c.h.bf16 %v2279
    %s2282 = scalar_lea.vmem [#allocation1], 832
    %2283 = vst [vmem:[%s2282] sm:%s3] %v2280
    %s2284 = scalar_lea.vmem %s0, 412
    %s2285 = sshrl.u32 %s3, 1
    %s2286 = sor.u32 %s3, %s2285
    %s2287 = sand.u32 %s2286, 85
    %s2288 = sshrl.u32 %s2287, 1
    %s2289 = sor.u32 %s2287, %s2288
    %s2290 = sand.u32 51, %s2289
    %s2291 = sshrl.u32 %s2290, 2
    %s2292 = sor.u32 %s2290, %s2291
    %s2293 = sand.u32 15, %s2292
    %v2294 = vld [vmem:[%s2284] sm:%s2293]
    %v2295 = vunpack.c.l.bf16 %v2294
    %v2296 = vunpack.c.h.bf16 %v2294
    %s2297 = scalar_lea.vmem [#allocation1], 824
    %2298 = vst [vmem:[%s2297] sm:%s3] %v2295
    %s2299 = scalar_lea.vmem %s0, 408
    %s2300 = sshrl.u32 %s3, 1
    %s2301 = sor.u32 %s3, %s2300
    %s2302 = sand.u32 %s2301, 85
    %s2303 = sshrl.u32 %s2302, 1
    %s2304 = sor.u32 %s2302, %s2303
    %s2305 = sand.u32 51, %s2304
    %s2306 = sshrl.u32 %s2305, 2
    %s2307 = sor.u32 %s2305, %s2306
    %s2308 = sand.u32 15, %s2307
    %v2309 = vld [vmem:[%s2299] sm:%s2308]
    %v2310 = vunpack.c.l.bf16 %v2309
    %v2311 = vunpack.c.h.bf16 %v2309
    %s2312 = scalar_lea.vmem [#allocation1], 816
    %2313 = vst [vmem:[%s2312] sm:%s3] %v2310
    %s2314 = scalar_lea.vmem %s0, 404
    %s2315 = sshrl.u32 %s3, 1
    %s2316 = sor.u32 %s3, %s2315
    %s2317 = sand.u32 %s2316, 85
    %s2318 = sshrl.u32 %s2317, 1
    %s2319 = sor.u32 %s2317, %s2318
    %s2320 = sand.u32 51, %s2319
    %s2321 = sshrl.u32 %s2320, 2
    %s2322 = sor.u32 %s2320, %s2321
    %s2323 = sand.u32 15, %s2322
    %v2324 = vld [vmem:[%s2314] sm:%s2323]
    %v2325 = vunpack.c.l.bf16 %v2324
    %v2326 = vunpack.c.h.bf16 %v2324
    %s2327 = scalar_lea.vmem [#allocation1], 808
    %2328 = vst [vmem:[%s2327] sm:%s3] %v2325
    %s2329 = scalar_lea.vmem %s0, 400
    %s2330 = sshrl.u32 %s3, 1
    %s2331 = sor.u32 %s3, %s2330
    %s2332 = sand.u32 %s2331, 85
    %s2333 = sshrl.u32 %s2332, 1
    %s2334 = sor.u32 %s2332, %s2333
    %s2335 = sand.u32 51, %s2334
    %s2336 = sshrl.u32 %s2335, 2
    %s2337 = sor.u32 %s2335, %s2336
    %s2338 = sand.u32 15, %s2337
    %v2339 = vld [vmem:[%s2329] sm:%s2338]
    %v2340 = vunpack.c.l.bf16 %v2339
    %v2341 = vunpack.c.h.bf16 %v2339
    %s2342 = scalar_lea.vmem [#allocation1], 800
    %2343 = vst [vmem:[%s2342] sm:%s3] %v2340
    %s2344 = scalar_lea.vmem %s0, 396
    %s2345 = sshrl.u32 %s3, 1
    %s2346 = sor.u32 %s3, %s2345
    %s2347 = sand.u32 %s2346, 85
    %s2348 = sshrl.u32 %s2347, 1
    %s2349 = sor.u32 %s2347, %s2348
    %s2350 = sand.u32 51, %s2349
    %s2351 = sshrl.u32 %s2350, 2
    %s2352 = sor.u32 %s2350, %s2351
    %s2353 = sand.u32 15, %s2352
    %v2354 = vld [vmem:[%s2344] sm:%s2353]
    %v2355 = vunpack.c.l.bf16 %v2354
    %v2356 = vunpack.c.h.bf16 %v2354
    %s2357 = scalar_lea.vmem [#allocation1], 792
    %2358 = vst [vmem:[%s2357] sm:%s3] %v2355
    %s2359 = scalar_lea.vmem %s0, 392
    %s2360 = sshrl.u32 %s3, 1
    %s2361 = sor.u32 %s3, %s2360
    %s2362 = sand.u32 %s2361, 85
    %s2363 = sshrl.u32 %s2362, 1
    %s2364 = sor.u32 %s2362, %s2363
    %s2365 = sand.u32 51, %s2364
    %s2366 = sshrl.u32 %s2365, 2
    %s2367 = sor.u32 %s2365, %s2366
    %s2368 = sand.u32 15, %s2367
    %v2369 = vld [vmem:[%s2359] sm:%s2368]
    %v2370 = vunpack.c.l.bf16 %v2369
    %v2371 = vunpack.c.h.bf16 %v2369
    %s2372 = scalar_lea.vmem [#allocation1], 784
    %2373 = vst [vmem:[%s2372] sm:%s3] %v2370
    %s2374 = scalar_lea.vmem %s0, 388
    %s2375 = sshrl.u32 %s3, 1
    %s2376 = sor.u32 %s3, %s2375
    %s2377 = sand.u32 %s2376, 85
    %s2378 = sshrl.u32 %s2377, 1
    %s2379 = sor.u32 %s2377, %s2378
    %s2380 = sand.u32 51, %s2379
    %s2381 = sshrl.u32 %s2380, 2
    %s2382 = sor.u32 %s2380, %s2381
    %s2383 = sand.u32 15, %s2382
    %v2384 = vld [vmem:[%s2374] sm:%s2383]
    %v2385 = vunpack.c.l.bf16 %v2384
    %v2386 = vunpack.c.h.bf16 %v2384
    %s2387 = scalar_lea.vmem [#allocation1], 776
    %2388 = vst [vmem:[%s2387] sm:%s3] %v2385
    %s2389 = scalar_lea.vmem %s0, 384
    %s2390 = sshrl.u32 %s3, 1
    %s2391 = sor.u32 %s3, %s2390
    %s2392 = sand.u32 %s2391, 85
    %s2393 = sshrl.u32 %s2392, 1
    %s2394 = sor.u32 %s2392, %s2393
    %s2395 = sand.u32 51, %s2394
    %s2396 = sshrl.u32 %s2395, 2
    %s2397 = sor.u32 %s2395, %s2396
    %s2398 = sand.u32 15, %s2397
    %v2399 = vld [vmem:[%s2389] sm:%s2398]
    %v2400 = vunpack.c.l.bf16 %v2399
    %v2401 = vunpack.c.h.bf16 %v2399
    %s2402 = scalar_lea.vmem [#allocation1], 768
    %2403 = vst [vmem:[%s2402] sm:%s3] %v2400
    %s2404 = scalar_lea.vmem %s0, 380
    %s2405 = sshrl.u32 %s3, 1
    %s2406 = sor.u32 %s3, %s2405
    %s2407 = sand.u32 %s2406, 85
    %s2408 = sshrl.u32 %s2407, 1
    %s2409 = sor.u32 %s2407, %s2408
    %s2410 = sand.u32 51, %s2409
    %s2411 = sshrl.u32 %s2410, 2
    %s2412 = sor.u32 %s2410, %s2411
    %s2413 = sand.u32 15, %s2412
    %v2414 = vld [vmem:[%s2404] sm:%s2413]
    %v2415 = vunpack.c.l.bf16 %v2414
    %v2416 = vunpack.c.h.bf16 %v2414
    %s2417 = scalar_lea.vmem [#allocation1], 760
    %2418 = vst [vmem:[%s2417] sm:%s3] %v2415
    %s2419 = scalar_lea.vmem %s0, 376
    %s2420 = sshrl.u32 %s3, 1
    %s2421 = sor.u32 %s3, %s2420
    %s2422 = sand.u32 %s2421, 85
    %s2423 = sshrl.u32 %s2422, 1
    %s2424 = sor.u32 %s2422, %s2423
    %s2425 = sand.u32 51, %s2424
    %s2426 = sshrl.u32 %s2425, 2
    %s2427 = sor.u32 %s2425, %s2426
    %s2428 = sand.u32 15, %s2427
    %v2429 = vld [vmem:[%s2419] sm:%s2428]
    %v2430 = vunpack.c.l.bf16 %v2429
    %v2431 = vunpack.c.h.bf16 %v2429
    %s2432 = scalar_lea.vmem [#allocation1], 752
    %2433 = vst [vmem:[%s2432] sm:%s3] %v2430
    %s2434 = scalar_lea.vmem %s0, 372
    %s2435 = sshrl.u32 %s3, 1
    %s2436 = sor.u32 %s3, %s2435
    %s2437 = sand.u32 %s2436, 85
    %s2438 = sshrl.u32 %s2437, 1
    %s2439 = sor.u32 %s2437, %s2438
    %s2440 = sand.u32 51, %s2439
    %s2441 = sshrl.u32 %s2440, 2
    %s2442 = sor.u32 %s2440, %s2441
    %s2443 = sand.u32 15, %s2442
    %v2444 = vld [vmem:[%s2434] sm:%s2443]
    %v2445 = vunpack.c.l.bf16 %v2444
    %v2446 = vunpack.c.h.bf16 %v2444
    %s2447 = scalar_lea.vmem [#allocation1], 744
    %2448 = vst [vmem:[%s2447] sm:%s3] %v2445
    %s2449 = scalar_lea.vmem %s0, 368
    %s2450 = sshrl.u32 %s3, 1
    %s2451 = sor.u32 %s3, %s2450
    %s2452 = sand.u32 %s2451, 85
    %s2453 = sshrl.u32 %s2452, 1
    %s2454 = sor.u32 %s2452, %s2453
    %s2455 = sand.u32 51, %s2454
    %s2456 = sshrl.u32 %s2455, 2
    %s2457 = sor.u32 %s2455, %s2456
    %s2458 = sand.u32 15, %s2457
    %v2459 = vld [vmem:[%s2449] sm:%s2458]
    %v2460 = vunpack.c.l.bf16 %v2459
    %v2461 = vunpack.c.h.bf16 %v2459
    %s2462 = scalar_lea.vmem [#allocation1], 736
    %2463 = vst [vmem:[%s2462] sm:%s3] %v2460
    %s2464 = scalar_lea.vmem %s0, 364
    %s2465 = sshrl.u32 %s3, 1
    %s2466 = sor.u32 %s3, %s2465
    %s2467 = sand.u32 %s2466, 85
    %s2468 = sshrl.u32 %s2467, 1
    %s2469 = sor.u32 %s2467, %s2468
    %s2470 = sand.u32 51, %s2469
    %s2471 = sshrl.u32 %s2470, 2
    %s2472 = sor.u32 %s2470, %s2471
    %s2473 = sand.u32 15, %s2472
    %v2474 = vld [vmem:[%s2464] sm:%s2473]
    %v2475 = vunpack.c.l.bf16 %v2474
    %v2476 = vunpack.c.h.bf16 %v2474
    %s2477 = scalar_lea.vmem [#allocation1], 728
    %2478 = vst [vmem:[%s2477] sm:%s3] %v2475
    %s2479 = scalar_lea.vmem %s0, 360
    %s2480 = sshrl.u32 %s3, 1
    %s2481 = sor.u32 %s3, %s2480
    %s2482 = sand.u32 %s2481, 85
    %s2483 = sshrl.u32 %s2482, 1
    %s2484 = sor.u32 %s2482, %s2483
    %s2485 = sand.u32 51, %s2484
    %s2486 = sshrl.u32 %s2485, 2
    %s2487 = sor.u32 %s2485, %s2486
    %s2488 = sand.u32 15, %s2487
    %v2489 = vld [vmem:[%s2479] sm:%s2488]
    %v2490 = vunpack.c.l.bf16 %v2489
    %v2491 = vunpack.c.h.bf16 %v2489
    %s2492 = scalar_lea.vmem [#allocation1], 720
    %2493 = vst [vmem:[%s2492] sm:%s3] %v2490
    %s2494 = scalar_lea.vmem %s0, 356
    %s2495 = sshrl.u32 %s3, 1
    %s2496 = sor.u32 %s3, %s2495
    %s2497 = sand.u32 %s2496, 85
    %s2498 = sshrl.u32 %s2497, 1
    %s2499 = sor.u32 %s2497, %s2498
    %s2500 = sand.u32 51, %s2499
    %s2501 = sshrl.u32 %s2500, 2
    %s2502 = sor.u32 %s2500, %s2501
    %s2503 = sand.u32 15, %s2502
    %v2504 = vld [vmem:[%s2494] sm:%s2503]
    %v2505 = vunpack.c.l.bf16 %v2504
    %v2506 = vunpack.c.h.bf16 %v2504
    %s2507 = scalar_lea.vmem [#allocation1], 712
    %2508 = vst [vmem:[%s2507] sm:%s3] %v2505
    %s2509 = scalar_lea.vmem %s0, 352
    %s2510 = sshrl.u32 %s3, 1
    %s2511 = sor.u32 %s3, %s2510
    %s2512 = sand.u32 %s2511, 85
    %s2513 = sshrl.u32 %s2512, 1
    %s2514 = sor.u32 %s2512, %s2513
    %s2515 = sand.u32 51, %s2514
    %s2516 = sshrl.u32 %s2515, 2
    %s2517 = sor.u32 %s2515, %s2516
    %s2518 = sand.u32 15, %s2517
    %v2519 = vld [vmem:[%s2509] sm:%s2518]
    %v2520 = vunpack.c.l.bf16 %v2519
    %v2521 = vunpack.c.h.bf16 %v2519
    %s2522 = scalar_lea.vmem [#allocation1], 704
    %2523 = vst [vmem:[%s2522] sm:%s3] %v2520
    %s2524 = scalar_lea.vmem %s0, 348
    %s2525 = sshrl.u32 %s3, 1
    %s2526 = sor.u32 %s3, %s2525
    %s2527 = sand.u32 %s2526, 85
    %s2528 = sshrl.u32 %s2527, 1
    %s2529 = sor.u32 %s2527, %s2528
    %s2530 = sand.u32 51, %s2529
    %s2531 = sshrl.u32 %s2530, 2
    %s2532 = sor.u32 %s2530, %s2531
    %s2533 = sand.u32 15, %s2532
    %v2534 = vld [vmem:[%s2524] sm:%s2533]
    %v2535 = vunpack.c.l.bf16 %v2534
    %v2536 = vunpack.c.h.bf16 %v2534
    %s2537 = scalar_lea.vmem [#allocation1], 696
    %2538 = vst [vmem:[%s2537] sm:%s3] %v2535
    %s2539 = scalar_lea.vmem %s0, 344
    %s2540 = sshrl.u32 %s3, 1
    %s2541 = sor.u32 %s3, %s2540
    %s2542 = sand.u32 %s2541, 85
    %s2543 = sshrl.u32 %s2542, 1
    %s2544 = sor.u32 %s2542, %s2543
    %s2545 = sand.u32 51, %s2544
    %s2546 = sshrl.u32 %s2545, 2
    %s2547 = sor.u32 %s2545, %s2546
    %s2548 = sand.u32 15, %s2547
    %v2549 = vld [vmem:[%s2539] sm:%s2548]
    %v2550 = vunpack.c.l.bf16 %v2549
    %v2551 = vunpack.c.h.bf16 %v2549
    %s2552 = scalar_lea.vmem [#allocation1], 688
    %2553 = vst [vmem:[%s2552] sm:%s3] %v2550
    %s2554 = scalar_lea.vmem %s0, 340
    %s2555 = sshrl.u32 %s3, 1
    %s2556 = sor.u32 %s3, %s2555
    %s2557 = sand.u32 %s2556, 85
    %s2558 = sshrl.u32 %s2557, 1
    %s2559 = sor.u32 %s2557, %s2558
    %s2560 = sand.u32 51, %s2559
    %s2561 = sshrl.u32 %s2560, 2
    %s2562 = sor.u32 %s2560, %s2561
    %s2563 = sand.u32 15, %s2562
    %v2564 = vld [vmem:[%s2554] sm:%s2563]
    %v2565 = vunpack.c.l.bf16 %v2564
    %v2566 = vunpack.c.h.bf16 %v2564
    %s2567 = scalar_lea.vmem [#allocation1], 680
    %2568 = vst [vmem:[%s2567] sm:%s3] %v2565
    %s2569 = scalar_lea.vmem %s0, 336
    %s2570 = sshrl.u32 %s3, 1
    %s2571 = sor.u32 %s3, %s2570
    %s2572 = sand.u32 %s2571, 85
    %s2573 = sshrl.u32 %s2572, 1
    %s2574 = sor.u32 %s2572, %s2573
    %s2575 = sand.u32 51, %s2574
    %s2576 = sshrl.u32 %s2575, 2
    %s2577 = sor.u32 %s2575, %s2576
    %s2578 = sand.u32 15, %s2577
    %v2579 = vld [vmem:[%s2569] sm:%s2578]
    %v2580 = vunpack.c.l.bf16 %v2579
    %v2581 = vunpack.c.h.bf16 %v2579
    %s2582 = scalar_lea.vmem [#allocation1], 672
    %2583 = vst [vmem:[%s2582] sm:%s3] %v2580
    %s2584 = scalar_lea.vmem %s0, 332
    %s2585 = sshrl.u32 %s3, 1
    %s2586 = sor.u32 %s3, %s2585
    %s2587 = sand.u32 %s2586, 85
    %s2588 = sshrl.u32 %s2587, 1
    %s2589 = sor.u32 %s2587, %s2588
    %s2590 = sand.u32 51, %s2589
    %s2591 = sshrl.u32 %s2590, 2
    %s2592 = sor.u32 %s2590, %s2591
    %s2593 = sand.u32 15, %s2592
    %v2594 = vld [vmem:[%s2584] sm:%s2593]
    %v2595 = vunpack.c.l.bf16 %v2594
    %v2596 = vunpack.c.h.bf16 %v2594
    %s2597 = scalar_lea.vmem [#allocation1], 664
    %2598 = vst [vmem:[%s2597] sm:%s3] %v2595
    %s2599 = scalar_lea.vmem %s0, 328
    %s2600 = sshrl.u32 %s3, 1
    %s2601 = sor.u32 %s3, %s2600
    %s2602 = sand.u32 %s2601, 85
    %s2603 = sshrl.u32 %s2602, 1
    %s2604 = sor.u32 %s2602, %s2603
    %s2605 = sand.u32 51, %s2604
    %s2606 = sshrl.u32 %s2605, 2
    %s2607 = sor.u32 %s2605, %s2606
    %s2608 = sand.u32 15, %s2607
    %v2609 = vld [vmem:[%s2599] sm:%s2608]
    %v2610 = vunpack.c.l.bf16 %v2609
    %v2611 = vunpack.c.h.bf16 %v2609
    %s2612 = scalar_lea.vmem [#allocation1], 656
    %2613 = vst [vmem:[%s2612] sm:%s3] %v2610
    %s2614 = scalar_lea.vmem %s0, 324
    %s2615 = sshrl.u32 %s3, 1
    %s2616 = sor.u32 %s3, %s2615
    %s2617 = sand.u32 %s2616, 85
    %s2618 = sshrl.u32 %s2617, 1
    %s2619 = sor.u32 %s2617, %s2618
    %s2620 = sand.u32 51, %s2619
    %s2621 = sshrl.u32 %s2620, 2
    %s2622 = sor.u32 %s2620, %s2621
    %s2623 = sand.u32 15, %s2622
    %v2624 = vld [vmem:[%s2614] sm:%s2623]
    %v2625 = vunpack.c.l.bf16 %v2624
    %v2626 = vunpack.c.h.bf16 %v2624
    %s2627 = scalar_lea.vmem [#allocation1], 648
    %2628 = vst [vmem:[%s2627] sm:%s3] %v2625
    %s2629 = scalar_lea.vmem %s0, 320
    %s2630 = sshrl.u32 %s3, 1
    %s2631 = sor.u32 %s3, %s2630
    %s2632 = sand.u32 %s2631, 85
    %s2633 = sshrl.u32 %s2632, 1
    %s2634 = sor.u32 %s2632, %s2633
    %s2635 = sand.u32 51, %s2634
    %s2636 = sshrl.u32 %s2635, 2
    %s2637 = sor.u32 %s2635, %s2636
    %s2638 = sand.u32 15, %s2637
    %v2639 = vld [vmem:[%s2629] sm:%s2638]
    %v2640 = vunpack.c.l.bf16 %v2639
    %v2641 = vunpack.c.h.bf16 %v2639
    %s2642 = scalar_lea.vmem [#allocation1], 640
    %2643 = vst [vmem:[%s2642] sm:%s3] %v2640
    %s2644 = scalar_lea.vmem %s0, 316
    %s2645 = sshrl.u32 %s3, 1
    %s2646 = sor.u32 %s3, %s2645
    %s2647 = sand.u32 %s2646, 85
    %s2648 = sshrl.u32 %s2647, 1
    %s2649 = sor.u32 %s2647, %s2648
    %s2650 = sand.u32 51, %s2649
    %s2651 = sshrl.u32 %s2650, 2
    %s2652 = sor.u32 %s2650, %s2651
    %s2653 = sand.u32 15, %s2652
    %v2654 = vld [vmem:[%s2644] sm:%s2653]
    %v2655 = vunpack.c.l.bf16 %v2654
    %v2656 = vunpack.c.h.bf16 %v2654
    %s2657 = scalar_lea.vmem [#allocation1], 632
    %2658 = vst [vmem:[%s2657] sm:%s3] %v2655
    %s2659 = scalar_lea.vmem %s0, 312
    %s2660 = sshrl.u32 %s3, 1
    %s2661 = sor.u32 %s3, %s2660
    %s2662 = sand.u32 %s2661, 85
    %s2663 = sshrl.u32 %s2662, 1
    %s2664 = sor.u32 %s2662, %s2663
    %s2665 = sand.u32 51, %s2664
    %s2666 = sshrl.u32 %s2665, 2
    %s2667 = sor.u32 %s2665, %s2666
    %s2668 = sand.u32 15, %s2667
    %v2669 = vld [vmem:[%s2659] sm:%s2668]
    %v2670 = vunpack.c.l.bf16 %v2669
    %v2671 = vunpack.c.h.bf16 %v2669
    %s2672 = scalar_lea.vmem [#allocation1], 624
    %2673 = vst [vmem:[%s2672] sm:%s3] %v2670
    %s2674 = scalar_lea.vmem %s0, 308
    %s2675 = sshrl.u32 %s3, 1
    %s2676 = sor.u32 %s3, %s2675
    %s2677 = sand.u32 %s2676, 85
    %s2678 = sshrl.u32 %s2677, 1
    %s2679 = sor.u32 %s2677, %s2678
    %s2680 = sand.u32 51, %s2679
    %s2681 = sshrl.u32 %s2680, 2
    %s2682 = sor.u32 %s2680, %s2681
    %s2683 = sand.u32 15, %s2682
    %v2684 = vld [vmem:[%s2674] sm:%s2683]
    %v2685 = vunpack.c.l.bf16 %v2684
    %v2686 = vunpack.c.h.bf16 %v2684
    %s2687 = scalar_lea.vmem [#allocation1], 616
    %2688 = vst [vmem:[%s2687] sm:%s3] %v2685
    %s2689 = scalar_lea.vmem %s0, 304
    %s2690 = sshrl.u32 %s3, 1
    %s2691 = sor.u32 %s3, %s2690
    %s2692 = sand.u32 %s2691, 85
    %s2693 = sshrl.u32 %s2692, 1
    %s2694 = sor.u32 %s2692, %s2693
    %s2695 = sand.u32 51, %s2694
    %s2696 = sshrl.u32 %s2695, 2
    %s2697 = sor.u32 %s2695, %s2696
    %s2698 = sand.u32 15, %s2697
    %v2699 = vld [vmem:[%s2689] sm:%s2698]
    %v2700 = vunpack.c.l.bf16 %v2699
    %v2701 = vunpack.c.h.bf16 %v2699
    %s2702 = scalar_lea.vmem [#allocation1], 608
    %2703 = vst [vmem:[%s2702] sm:%s3] %v2700
    %s2704 = scalar_lea.vmem %s0, 300
    %s2705 = sshrl.u32 %s3, 1
    %s2706 = sor.u32 %s3, %s2705
    %s2707 = sand.u32 %s2706, 85
    %s2708 = sshrl.u32 %s2707, 1
    %s2709 = sor.u32 %s2707, %s2708
    %s2710 = sand.u32 51, %s2709
    %s2711 = sshrl.u32 %s2710, 2
    %s2712 = sor.u32 %s2710, %s2711
    %s2713 = sand.u32 15, %s2712
    %v2714 = vld [vmem:[%s2704] sm:%s2713]
    %v2715 = vunpack.c.l.bf16 %v2714
    %v2716 = vunpack.c.h.bf16 %v2714
    %s2717 = scalar_lea.vmem [#allocation1], 600
    %2718 = vst [vmem:[%s2717] sm:%s3] %v2715
    %s2719 = scalar_lea.vmem %s0, 296
    %s2720 = sshrl.u32 %s3, 1
    %s2721 = sor.u32 %s3, %s2720
    %s2722 = sand.u32 %s2721, 85
    %s2723 = sshrl.u32 %s2722, 1
    %s2724 = sor.u32 %s2722, %s2723
    %s2725 = sand.u32 51, %s2724
    %s2726 = sshrl.u32 %s2725, 2
    %s2727 = sor.u32 %s2725, %s2726
    %s2728 = sand.u32 15, %s2727
    %v2729 = vld [vmem:[%s2719] sm:%s2728]
    %v2730 = vunpack.c.l.bf16 %v2729
    %v2731 = vunpack.c.h.bf16 %v2729
    %s2732 = scalar_lea.vmem [#allocation1], 592
    %2733 = vst [vmem:[%s2732] sm:%s3] %v2730
    %s2734 = scalar_lea.vmem %s0, 292
    %s2735 = sshrl.u32 %s3, 1
    %s2736 = sor.u32 %s3, %s2735
    %s2737 = sand.u32 %s2736, 85
    %s2738 = sshrl.u32 %s2737, 1
    %s2739 = sor.u32 %s2737, %s2738
    %s2740 = sand.u32 51, %s2739
    %s2741 = sshrl.u32 %s2740, 2
    %s2742 = sor.u32 %s2740, %s2741
    %s2743 = sand.u32 15, %s2742
    %v2744 = vld [vmem:[%s2734] sm:%s2743]
    %v2745 = vunpack.c.l.bf16 %v2744
    %v2746 = vunpack.c.h.bf16 %v2744
    %s2747 = scalar_lea.vmem [#allocation1], 584
    %2748 = vst [vmem:[%s2747] sm:%s3] %v2745
    %s2749 = scalar_lea.vmem %s0, 288
    %s2750 = sshrl.u32 %s3, 1
    %s2751 = sor.u32 %s3, %s2750
    %s2752 = sand.u32 %s2751, 85
    %s2753 = sshrl.u32 %s2752, 1
    %s2754 = sor.u32 %s2752, %s2753
    %s2755 = sand.u32 51, %s2754
    %s2756 = sshrl.u32 %s2755, 2
    %s2757 = sor.u32 %s2755, %s2756
    %s2758 = sand.u32 15, %s2757
    %v2759 = vld [vmem:[%s2749] sm:%s2758]
    %v2760 = vunpack.c.l.bf16 %v2759
    %v2761 = vunpack.c.h.bf16 %v2759
    %s2762 = scalar_lea.vmem [#allocation1], 576
    %2763 = vst [vmem:[%s2762] sm:%s3] %v2760
    %s2764 = scalar_lea.vmem %s0, 284
    %s2765 = sshrl.u32 %s3, 1
    %s2766 = sor.u32 %s3, %s2765
    %s2767 = sand.u32 %s2766, 85
    %s2768 = sshrl.u32 %s2767, 1
    %s2769 = sor.u32 %s2767, %s2768
    %s2770 = sand.u32 51, %s2769
    %s2771 = sshrl.u32 %s2770, 2
    %s2772 = sor.u32 %s2770, %s2771
    %s2773 = sand.u32 15, %s2772
    %v2774 = vld [vmem:[%s2764] sm:%s2773]
    %v2775 = vunpack.c.l.bf16 %v2774
    %v2776 = vunpack.c.h.bf16 %v2774
    %s2777 = scalar_lea.vmem [#allocation1], 568
    %2778 = vst [vmem:[%s2777] sm:%s3] %v2775
    %s2779 = scalar_lea.vmem %s0, 280
    %s2780 = sshrl.u32 %s3, 1
    %s2781 = sor.u32 %s3, %s2780
    %s2782 = sand.u32 %s2781, 85
    %s2783 = sshrl.u32 %s2782, 1
    %s2784 = sor.u32 %s2782, %s2783
    %s2785 = sand.u32 51, %s2784
    %s2786 = sshrl.u32 %s2785, 2
    %s2787 = sor.u32 %s2785, %s2786
    %s2788 = sand.u32 15, %s2787
    %v2789 = vld [vmem:[%s2779] sm:%s2788]
    %v2790 = vunpack.c.l.bf16 %v2789
    %v2791 = vunpack.c.h.bf16 %v2789
    %s2792 = scalar_lea.vmem [#allocation1], 560
    %2793 = vst [vmem:[%s2792] sm:%s3] %v2790
    %s2794 = scalar_lea.vmem %s0, 276
    %s2795 = sshrl.u32 %s3, 1
    %s2796 = sor.u32 %s3, %s2795
    %s2797 = sand.u32 %s2796, 85
    %s2798 = sshrl.u32 %s2797, 1
    %s2799 = sor.u32 %s2797, %s2798
    %s2800 = sand.u32 51, %s2799
    %s2801 = sshrl.u32 %s2800, 2
    %s2802 = sor.u32 %s2800, %s2801
    %s2803 = sand.u32 15, %s2802
    %v2804 = vld [vmem:[%s2794] sm:%s2803]
    %v2805 = vunpack.c.l.bf16 %v2804
    %v2806 = vunpack.c.h.bf16 %v2804
    %s2807 = scalar_lea.vmem [#allocation1], 552
    %2808 = vst [vmem:[%s2807] sm:%s3] %v2805
    %s2809 = scalar_lea.vmem %s0, 272
    %s2810 = sshrl.u32 %s3, 1
    %s2811 = sor.u32 %s3, %s2810
    %s2812 = sand.u32 %s2811, 85
    %s2813 = sshrl.u32 %s2812, 1
    %s2814 = sor.u32 %s2812, %s2813
    %s2815 = sand.u32 51, %s2814
    %s2816 = sshrl.u32 %s2815, 2
    %s2817 = sor.u32 %s2815, %s2816
    %s2818 = sand.u32 15, %s2817
    %v2819 = vld [vmem:[%s2809] sm:%s2818]
    %v2820 = vunpack.c.l.bf16 %v2819
    %v2821 = vunpack.c.h.bf16 %v2819
    %s2822 = scalar_lea.vmem [#allocation1], 544
    %2823 = vst [vmem:[%s2822] sm:%s3] %v2820
    %s2824 = scalar_lea.vmem %s0, 268
    %s2825 = sshrl.u32 %s3, 1
    %s2826 = sor.u32 %s3, %s2825
    %s2827 = sand.u32 %s2826, 85
    %s2828 = sshrl.u32 %s2827, 1
    %s2829 = sor.u32 %s2827, %s2828
    %s2830 = sand.u32 51, %s2829
    %s2831 = sshrl.u32 %s2830, 2
    %s2832 = sor.u32 %s2830, %s2831
    %s2833 = sand.u32 15, %s2832
    %v2834 = vld [vmem:[%s2824] sm:%s2833]
    %v2835 = vunpack.c.l.bf16 %v2834
    %v2836 = vunpack.c.h.bf16 %v2834
    %s2837 = scalar_lea.vmem [#allocation1], 536
    %2838 = vst [vmem:[%s2837] sm:%s3] %v2835
    %s2839 = scalar_lea.vmem %s0, 264
    %s2840 = sshrl.u32 %s3, 1
    %s2841 = sor.u32 %s3, %s2840
    %s2842 = sand.u32 %s2841, 85
    %s2843 = sshrl.u32 %s2842, 1
    %s2844 = sor.u32 %s2842, %s2843
    %s2845 = sand.u32 51, %s2844
    %s2846 = sshrl.u32 %s2845, 2
    %s2847 = sor.u32 %s2845, %s2846
    %s2848 = sand.u32 15, %s2847
    %v2849 = vld [vmem:[%s2839] sm:%s2848]
    %v2850 = vunpack.c.l.bf16 %v2849
    %v2851 = vunpack.c.h.bf16 %v2849
    %s2852 = scalar_lea.vmem [#allocation1], 528
    %2853 = vst [vmem:[%s2852] sm:%s3] %v2850
    %s2854 = scalar_lea.vmem %s0, 260
    %s2855 = sshrl.u32 %s3, 1
    %s2856 = sor.u32 %s3, %s2855
    %s2857 = sand.u32 %s2856, 85
    %s2858 = sshrl.u32 %s2857, 1
    %s2859 = sor.u32 %s2857, %s2858
    %s2860 = sand.u32 51, %s2859
    %s2861 = sshrl.u32 %s2860, 2
    %s2862 = sor.u32 %s2860, %s2861
    %s2863 = sand.u32 15, %s2862
    %v2864 = vld [vmem:[%s2854] sm:%s2863]
    %v2865 = vunpack.c.l.bf16 %v2864
    %v2866 = vunpack.c.h.bf16 %v2864
    %s2867 = scalar_lea.vmem [#allocation1], 520
    %2868 = vst [vmem:[%s2867] sm:%s3] %v2865
    %s2869 = scalar_lea.vmem %s0, 256
    %s2870 = sshrl.u32 %s3, 1
    %s2871 = sor.u32 %s3, %s2870
    %s2872 = sand.u32 %s2871, 85
    %s2873 = sshrl.u32 %s2872, 1
    %s2874 = sor.u32 %s2872, %s2873
    %s2875 = sand.u32 51, %s2874
    %s2876 = sshrl.u32 %s2875, 2
    %s2877 = sor.u32 %s2875, %s2876
    %s2878 = sand.u32 15, %s2877
    %v2879 = vld [vmem:[%s2869] sm:%s2878]
    %v2880 = vunpack.c.l.bf16 %v2879
    %v2881 = vunpack.c.h.bf16 %v2879
    %s2882 = scalar_lea.vmem [#allocation1], 512
    %2883 = vst [vmem:[%s2882] sm:%s3] %v2880
    %s2884 = scalar_lea.vmem %s0, 252
    %s2885 = sshrl.u32 %s3, 1
    %s2886 = sor.u32 %s3, %s2885
    %s2887 = sand.u32 %s2886, 85
    %s2888 = sshrl.u32 %s2887, 1
    %s2889 = sor.u32 %s2887, %s2888
    %s2890 = sand.u32 51, %s2889
    %s2891 = sshrl.u32 %s2890, 2
    %s2892 = sor.u32 %s2890, %s2891
    %s2893 = sand.u32 15, %s2892
    %v2894 = vld [vmem:[%s2884] sm:%s2893]
    %v2895 = vunpack.c.l.bf16 %v2894
    %v2896 = vunpack.c.h.bf16 %v2894
    %s2897 = scalar_lea.vmem [#allocation1], 504
    %2898 = vst [vmem:[%s2897] sm:%s3] %v2895
    %s2899 = scalar_lea.vmem %s0, 248
    %s2900 = sshrl.u32 %s3, 1
    %s2901 = sor.u32 %s3, %s2900
    %s2902 = sand.u32 %s2901, 85
    %s2903 = sshrl.u32 %s2902, 1
    %s2904 = sor.u32 %s2902, %s2903
    %s2905 = sand.u32 51, %s2904
    %s2906 = sshrl.u32 %s2905, 2
    %s2907 = sor.u32 %s2905, %s2906
    %s2908 = sand.u32 15, %s2907
    %v2909 = vld [vmem:[%s2899] sm:%s2908]
    %v2910 = vunpack.c.l.bf16 %v2909
    %v2911 = vunpack.c.h.bf16 %v2909
    %s2912 = scalar_lea.vmem [#allocation1], 496
    %2913 = vst [vmem:[%s2912] sm:%s3] %v2910
    %s2914 = scalar_lea.vmem %s0, 244
    %s2915 = sshrl.u32 %s3, 1
    %s2916 = sor.u32 %s3, %s2915
    %s2917 = sand.u32 %s2916, 85
    %s2918 = sshrl.u32 %s2917, 1
    %s2919 = sor.u32 %s2917, %s2918
    %s2920 = sand.u32 51, %s2919
    %s2921 = sshrl.u32 %s2920, 2
    %s2922 = sor.u32 %s2920, %s2921
    %s2923 = sand.u32 15, %s2922
    %v2924 = vld [vmem:[%s2914] sm:%s2923]
    %v2925 = vunpack.c.l.bf16 %v2924
    %v2926 = vunpack.c.h.bf16 %v2924
    %s2927 = scalar_lea.vmem [#allocation1], 488
    %2928 = vst [vmem:[%s2927] sm:%s3] %v2925
    %s2929 = scalar_lea.vmem %s0, 240
    %s2930 = sshrl.u32 %s3, 1
    %s2931 = sor.u32 %s3, %s2930
    %s2932 = sand.u32 %s2931, 85
    %s2933 = sshrl.u32 %s2932, 1
    %s2934 = sor.u32 %s2932, %s2933
    %s2935 = sand.u32 51, %s2934
    %s2936 = sshrl.u32 %s2935, 2
    %s2937 = sor.u32 %s2935, %s2936
    %s2938 = sand.u32 15, %s2937
    %v2939 = vld [vmem:[%s2929] sm:%s2938]
    %v2940 = vunpack.c.l.bf16 %v2939
    %v2941 = vunpack.c.h.bf16 %v2939
    %s2942 = scalar_lea.vmem [#allocation1], 480
    %2943 = vst [vmem:[%s2942] sm:%s3] %v2940
    %s2944 = scalar_lea.vmem %s0, 236
    %s2945 = sshrl.u32 %s3, 1
    %s2946 = sor.u32 %s3, %s2945
    %s2947 = sand.u32 %s2946, 85
    %s2948 = sshrl.u32 %s2947, 1
    %s2949 = sor.u32 %s2947, %s2948
    %s2950 = sand.u32 51, %s2949
    %s2951 = sshrl.u32 %s2950, 2
    %s2952 = sor.u32 %s2950, %s2951
    %s2953 = sand.u32 15, %s2952
    %v2954 = vld [vmem:[%s2944] sm:%s2953]
    %v2955 = vunpack.c.l.bf16 %v2954
    %v2956 = vunpack.c.h.bf16 %v2954
    %s2957 = scalar_lea.vmem [#allocation1], 472
    %2958 = vst [vmem:[%s2957] sm:%s3] %v2955
    %s2959 = scalar_lea.vmem %s0, 232
    %s2960 = sshrl.u32 %s3, 1
    %s2961 = sor.u32 %s3, %s2960
    %s2962 = sand.u32 %s2961, 85
    %s2963 = sshrl.u32 %s2962, 1
    %s2964 = sor.u32 %s2962, %s2963
    %s2965 = sand.u32 51, %s2964
    %s2966 = sshrl.u32 %s2965, 2
    %s2967 = sor.u32 %s2965, %s2966
    %s2968 = sand.u32 15, %s2967
    %v2969 = vld [vmem:[%s2959] sm:%s2968]
    %v2970 = vunpack.c.l.bf16 %v2969
    %v2971 = vunpack.c.h.bf16 %v2969
    %s2972 = scalar_lea.vmem [#allocation1], 464
    %2973 = vst [vmem:[%s2972] sm:%s3] %v2970
    %s2974 = scalar_lea.vmem %s0, 228
    %s2975 = sshrl.u32 %s3, 1
    %s2976 = sor.u32 %s3, %s2975
    %s2977 = sand.u32 %s2976, 85
    %s2978 = sshrl.u32 %s2977, 1
    %s2979 = sor.u32 %s2977, %s2978
    %s2980 = sand.u32 51, %s2979
    %s2981 = sshrl.u32 %s2980, 2
    %s2982 = sor.u32 %s2980, %s2981
    %s2983 = sand.u32 15, %s2982
    %v2984 = vld [vmem:[%s2974] sm:%s2983]
    %v2985 = vunpack.c.l.bf16 %v2984
    %v2986 = vunpack.c.h.bf16 %v2984
    %s2987 = scalar_lea.vmem [#allocation1], 456
    %2988 = vst [vmem:[%s2987] sm:%s3] %v2985
    %s2989 = scalar_lea.vmem %s0, 224
    %s2990 = sshrl.u32 %s3, 1
    %s2991 = sor.u32 %s3, %s2990
    %s2992 = sand.u32 %s2991, 85
    %s2993 = sshrl.u32 %s2992, 1
    %s2994 = sor.u32 %s2992, %s2993
    %s2995 = sand.u32 51, %s2994
    %s2996 = sshrl.u32 %s2995, 2
    %s2997 = sor.u32 %s2995, %s2996
    %s2998 = sand.u32 15, %s2997
    %v2999 = vld [vmem:[%s2989] sm:%s2998]
    %v3000 = vunpack.c.l.bf16 %v2999
    %v3001 = vunpack.c.h.bf16 %v2999
    %s3002 = scalar_lea.vmem [#allocation1], 448
    %3003 = vst [vmem:[%s3002] sm:%s3] %v3000
    %s3004 = scalar_lea.vmem %s0, 220
    %s3005 = sshrl.u32 %s3, 1
    %s3006 = sor.u32 %s3, %s3005
    %s3007 = sand.u32 %s3006, 85
    %s3008 = sshrl.u32 %s3007, 1
    %s3009 = sor.u32 %s3007, %s3008
    %s3010 = sand.u32 51, %s3009
    %s3011 = sshrl.u32 %s3010, 2
    %s3012 = sor.u32 %s3010, %s3011
    %s3013 = sand.u32 15, %s3012
    %v3014 = vld [vmem:[%s3004] sm:%s3013]
    %v3015 = vunpack.c.l.bf16 %v3014
    %v3016 = vunpack.c.h.bf16 %v3014
    %s3017 = scalar_lea.vmem [#allocation1], 440
    %3018 = vst [vmem:[%s3017] sm:%s3] %v3015
    %s3019 = scalar_lea.vmem %s0, 216
    %s3020 = sshrl.u32 %s3, 1
    %s3021 = sor.u32 %s3, %s3020
    %s3022 = sand.u32 %s3021, 85
    %s3023 = sshrl.u32 %s3022, 1
    %s3024 = sor.u32 %s3022, %s3023
    %s3025 = sand.u32 51, %s3024
    %s3026 = sshrl.u32 %s3025, 2
    %s3027 = sor.u32 %s3025, %s3026
    %s3028 = sand.u32 15, %s3027
    %v3029 = vld [vmem:[%s3019] sm:%s3028]
    %v3030 = vunpack.c.l.bf16 %v3029
    %v3031 = vunpack.c.h.bf16 %v3029
    %s3032 = scalar_lea.vmem [#allocation1], 432
    %3033 = vst [vmem:[%s3032] sm:%s3] %v3030
    %s3034 = scalar_lea.vmem %s0, 212
    %s3035 = sshrl.u32 %s3, 1
    %s3036 = sor.u32 %s3, %s3035
    %s3037 = sand.u32 %s3036, 85
    %s3038 = sshrl.u32 %s3037, 1
    %s3039 = sor.u32 %s3037, %s3038
    %s3040 = sand.u32 51, %s3039
    %s3041 = sshrl.u32 %s3040, 2
    %s3042 = sor.u32 %s3040, %s3041
    %s3043 = sand.u32 15, %s3042
    %v3044 = vld [vmem:[%s3034] sm:%s3043]
    %v3045 = vunpack.c.l.bf16 %v3044
    %v3046 = vunpack.c.h.bf16 %v3044
    %s3047 = scalar_lea.vmem [#allocation1], 424
    %3048 = vst [vmem:[%s3047] sm:%s3] %v3045
    %s3049 = scalar_lea.vmem %s0, 208
    %s3050 = sshrl.u32 %s3, 1
    %s3051 = sor.u32 %s3, %s3050
    %s3052 = sand.u32 %s3051, 85
    %s3053 = sshrl.u32 %s3052, 1
    %s3054 = sor.u32 %s3052, %s3053
    %s3055 = sand.u32 51, %s3054
    %s3056 = sshrl.u32 %s3055, 2
    %s3057 = sor.u32 %s3055, %s3056
    %s3058 = sand.u32 15, %s3057
    %v3059 = vld [vmem:[%s3049] sm:%s3058]
    %v3060 = vunpack.c.l.bf16 %v3059
    %v3061 = vunpack.c.h.bf16 %v3059
    %s3062 = scalar_lea.vmem [#allocation1], 416
    %3063 = vst [vmem:[%s3062] sm:%s3] %v3060
    %s3064 = scalar_lea.vmem %s0, 204
    %s3065 = sshrl.u32 %s3, 1
    %s3066 = sor.u32 %s3, %s3065
    %s3067 = sand.u32 %s3066, 85
    %s3068 = sshrl.u32 %s3067, 1
    %s3069 = sor.u32 %s3067, %s3068
    %s3070 = sand.u32 51, %s3069
    %s3071 = sshrl.u32 %s3070, 2
    %s3072 = sor.u32 %s3070, %s3071
    %s3073 = sand.u32 15, %s3072
    %v3074 = vld [vmem:[%s3064] sm:%s3073]
    %v3075 = vunpack.c.l.bf16 %v3074
    %v3076 = vunpack.c.h.bf16 %v3074
    %s3077 = scalar_lea.vmem [#allocation1], 408
    %3078 = vst [vmem:[%s3077] sm:%s3] %v3075
    %s3079 = scalar_lea.vmem %s0, 200
    %s3080 = sshrl.u32 %s3, 1
    %s3081 = sor.u32 %s3, %s3080
    %s3082 = sand.u32 %s3081, 85
    %s3083 = sshrl.u32 %s3082, 1
    %s3084 = sor.u32 %s3082, %s3083
    %s3085 = sand.u32 51, %s3084
    %s3086 = sshrl.u32 %s3085, 2
    %s3087 = sor.u32 %s3085, %s3086
    %s3088 = sand.u32 15, %s3087
    %v3089 = vld [vmem:[%s3079] sm:%s3088]
    %v3090 = vunpack.c.l.bf16 %v3089
    %v3091 = vunpack.c.h.bf16 %v3089
    %s3092 = scalar_lea.vmem [#allocation1], 400
    %3093 = vst [vmem:[%s3092] sm:%s3] %v3090
    %s3094 = scalar_lea.vmem %s0, 196
    %s3095 = sshrl.u32 %s3, 1
    %s3096 = sor.u32 %s3, %s3095
    %s3097 = sand.u32 %s3096, 85
    %s3098 = sshrl.u32 %s3097, 1
    %s3099 = sor.u32 %s3097, %s3098
    %s3100 = sand.u32 51, %s3099
    %s3101 = sshrl.u32 %s3100, 2
    %s3102 = sor.u32 %s3100, %s3101
    %s3103 = sand.u32 15, %s3102
    %v3104 = vld [vmem:[%s3094] sm:%s3103]
    %v3105 = vunpack.c.l.bf16 %v3104
    %v3106 = vunpack.c.h.bf16 %v3104
    %s3107 = scalar_lea.vmem [#allocation1], 392
    %3108 = vst [vmem:[%s3107] sm:%s3] %v3105
    %s3109 = scalar_lea.vmem %s0, 192
    %s3110 = sshrl.u32 %s3, 1
    %s3111 = sor.u32 %s3, %s3110
    %s3112 = sand.u32 %s3111, 85
    %s3113 = sshrl.u32 %s3112, 1
    %s3114 = sor.u32 %s3112, %s3113
    %s3115 = sand.u32 51, %s3114
    %s3116 = sshrl.u32 %s3115, 2
    %s3117 = sor.u32 %s3115, %s3116
    %s3118 = sand.u32 15, %s3117
    %v3119 = vld [vmem:[%s3109] sm:%s3118]
    %v3120 = vunpack.c.l.bf16 %v3119
    %v3121 = vunpack.c.h.bf16 %v3119
    %s3122 = scalar_lea.vmem [#allocation1], 384
    %3123 = vst [vmem:[%s3122] sm:%s3] %v3120
    %s3124 = scalar_lea.vmem %s0, 188
    %s3125 = sshrl.u32 %s3, 1
    %s3126 = sor.u32 %s3, %s3125
    %s3127 = sand.u32 %s3126, 85
    %s3128 = sshrl.u32 %s3127, 1
    %s3129 = sor.u32 %s3127, %s3128
    %s3130 = sand.u32 51, %s3129
    %s3131 = sshrl.u32 %s3130, 2
    %s3132 = sor.u32 %s3130, %s3131
    %s3133 = sand.u32 15, %s3132
    %v3134 = vld [vmem:[%s3124] sm:%s3133]
    %v3135 = vunpack.c.l.bf16 %v3134
    %v3136 = vunpack.c.h.bf16 %v3134
    %s3137 = scalar_lea.vmem [#allocation1], 376
    %3138 = vst [vmem:[%s3137] sm:%s3] %v3135
    %s3139 = scalar_lea.vmem %s0, 184
    %s3140 = sshrl.u32 %s3, 1
    %s3141 = sor.u32 %s3, %s3140
    %s3142 = sand.u32 %s3141, 85
    %s3143 = sshrl.u32 %s3142, 1
    %s3144 = sor.u32 %s3142, %s3143
    %s3145 = sand.u32 51, %s3144
    %s3146 = sshrl.u32 %s3145, 2
    %s3147 = sor.u32 %s3145, %s3146
    %s3148 = sand.u32 15, %s3147
    %v3149 = vld [vmem:[%s3139] sm:%s3148]
    %v3150 = vunpack.c.l.bf16 %v3149
    %v3151 = vunpack.c.h.bf16 %v3149
    %s3152 = scalar_lea.vmem [#allocation1], 368
    %3153 = vst [vmem:[%s3152] sm:%s3] %v3150
    %s3154 = scalar_lea.vmem %s0, 180
    %s3155 = sshrl.u32 %s3, 1
    %s3156 = sor.u32 %s3, %s3155
    %s3157 = sand.u32 %s3156, 85
    %s3158 = sshrl.u32 %s3157, 1
    %s3159 = sor.u32 %s3157, %s3158
    %s3160 = sand.u32 51, %s3159
    %s3161 = sshrl.u32 %s3160, 2
    %s3162 = sor.u32 %s3160, %s3161
    %s3163 = sand.u32 15, %s3162
    %v3164 = vld [vmem:[%s3154] sm:%s3163]
    %v3165 = vunpack.c.l.bf16 %v3164
    %v3166 = vunpack.c.h.bf16 %v3164
    %s3167 = scalar_lea.vmem [#allocation1], 360
    %3168 = vst [vmem:[%s3167] sm:%s3] %v3165
    %s3169 = scalar_lea.vmem %s0, 176
    %s3170 = sshrl.u32 %s3, 1
    %s3171 = sor.u32 %s3, %s3170
    %s3172 = sand.u32 %s3171, 85
    %s3173 = sshrl.u32 %s3172, 1
    %s3174 = sor.u32 %s3172, %s3173
    %s3175 = sand.u32 51, %s3174
    %s3176 = sshrl.u32 %s3175, 2
    %s3177 = sor.u32 %s3175, %s3176
    %s3178 = sand.u32 15, %s3177
    %v3179 = vld [vmem:[%s3169] sm:%s3178]
    %v3180 = vunpack.c.l.bf16 %v3179
    %v3181 = vunpack.c.h.bf16 %v3179
    %s3182 = scalar_lea.vmem [#allocation1], 352
    %3183 = vst [vmem:[%s3182] sm:%s3] %v3180
    %s3184 = scalar_lea.vmem %s0, 172
    %s3185 = sshrl.u32 %s3, 1
    %s3186 = sor.u32 %s3, %s3185
    %s3187 = sand.u32 %s3186, 85
    %s3188 = sshrl.u32 %s3187, 1
    %s3189 = sor.u32 %s3187, %s3188
    %s3190 = sand.u32 51, %s3189
    %s3191 = sshrl.u32 %s3190, 2
    %s3192 = sor.u32 %s3190, %s3191
    %s3193 = sand.u32 15, %s3192
    %v3194 = vld [vmem:[%s3184] sm:%s3193]
    %v3195 = vunpack.c.l.bf16 %v3194
    %v3196 = vunpack.c.h.bf16 %v3194
    %s3197 = scalar_lea.vmem [#allocation1], 344
    %3198 = vst [vmem:[%s3197] sm:%s3] %v3195
    %s3199 = scalar_lea.vmem %s0, 168
    %s3200 = sshrl.u32 %s3, 1
    %s3201 = sor.u32 %s3, %s3200
    %s3202 = sand.u32 %s3201, 85
    %s3203 = sshrl.u32 %s3202, 1
    %s3204 = sor.u32 %s3202, %s3203
    %s3205 = sand.u32 51, %s3204
    %s3206 = sshrl.u32 %s3205, 2
    %s3207 = sor.u32 %s3205, %s3206
    %s3208 = sand.u32 15, %s3207
    %v3209 = vld [vmem:[%s3199] sm:%s3208]
    %v3210 = vunpack.c.l.bf16 %v3209
    %v3211 = vunpack.c.h.bf16 %v3209
    %s3212 = scalar_lea.vmem [#allocation1], 336
    %3213 = vst [vmem:[%s3212] sm:%s3] %v3210
    %s3214 = scalar_lea.vmem %s0, 164
    %s3215 = sshrl.u32 %s3, 1
    %s3216 = sor.u32 %s3, %s3215
    %s3217 = sand.u32 %s3216, 85
    %s3218 = sshrl.u32 %s3217, 1
    %s3219 = sor.u32 %s3217, %s3218
    %s3220 = sand.u32 51, %s3219
    %s3221 = sshrl.u32 %s3220, 2
    %s3222 = sor.u32 %s3220, %s3221
    %s3223 = sand.u32 15, %s3222
    %v3224 = vld [vmem:[%s3214] sm:%s3223]
    %v3225 = vunpack.c.l.bf16 %v3224
    %v3226 = vunpack.c.h.bf16 %v3224
    %s3227 = scalar_lea.vmem [#allocation1], 328
    %3228 = vst [vmem:[%s3227] sm:%s3] %v3225
    %s3229 = scalar_lea.vmem %s0, 160
    %s3230 = sshrl.u32 %s3, 1
    %s3231 = sor.u32 %s3, %s3230
    %s3232 = sand.u32 %s3231, 85
    %s3233 = sshrl.u32 %s3232, 1
    %s3234 = sor.u32 %s3232, %s3233
    %s3235 = sand.u32 51, %s3234
    %s3236 = sshrl.u32 %s3235, 2
    %s3237 = sor.u32 %s3235, %s3236
    %s3238 = sand.u32 15, %s3237
    %v3239 = vld [vmem:[%s3229] sm:%s3238]
    %v3240 = vunpack.c.l.bf16 %v3239
    %v3241 = vunpack.c.h.bf16 %v3239
    %s3242 = scalar_lea.vmem [#allocation1], 320
    %3243 = vst [vmem:[%s3242] sm:%s3] %v3240
    %s3244 = scalar_lea.vmem %s0, 156
    %s3245 = sshrl.u32 %s3, 1
    %s3246 = sor.u32 %s3, %s3245
    %s3247 = sand.u32 %s3246, 85
    %s3248 = sshrl.u32 %s3247, 1
    %s3249 = sor.u32 %s3247, %s3248
    %s3250 = sand.u32 51, %s3249
    %s3251 = sshrl.u32 %s3250, 2
    %s3252 = sor.u32 %s3250, %s3251
    %s3253 = sand.u32 15, %s3252
    %v3254 = vld [vmem:[%s3244] sm:%s3253]
    %v3255 = vunpack.c.l.bf16 %v3254
    %v3256 = vunpack.c.h.bf16 %v3254
    %s3257 = scalar_lea.vmem [#allocation1], 312
    %3258 = vst [vmem:[%s3257] sm:%s3] %v3255
    %s3259 = scalar_lea.vmem %s0, 152
    %s3260 = sshrl.u32 %s3, 1
    %s3261 = sor.u32 %s3, %s3260
    %s3262 = sand.u32 %s3261, 85
    %s3263 = sshrl.u32 %s3262, 1
    %s3264 = sor.u32 %s3262, %s3263
    %s3265 = sand.u32 51, %s3264
    %s3266 = sshrl.u32 %s3265, 2
    %s3267 = sor.u32 %s3265, %s3266
    %s3268 = sand.u32 15, %s3267
    %v3269 = vld [vmem:[%s3259] sm:%s3268]
    %v3270 = vunpack.c.l.bf16 %v3269
    %v3271 = vunpack.c.h.bf16 %v3269
    %s3272 = scalar_lea.vmem [#allocation1], 304
    %3273 = vst [vmem:[%s3272] sm:%s3] %v3270
    %s3274 = scalar_lea.vmem %s0, 148
    %s3275 = sshrl.u32 %s3, 1
    %s3276 = sor.u32 %s3, %s3275
    %s3277 = sand.u32 %s3276, 85
    %s3278 = sshrl.u32 %s3277, 1
    %s3279 = sor.u32 %s3277, %s3278
    %s3280 = sand.u32 51, %s3279
    %s3281 = sshrl.u32 %s3280, 2
    %s3282 = sor.u32 %s3280, %s3281
    %s3283 = sand.u32 15, %s3282
    %v3284 = vld [vmem:[%s3274] sm:%s3283]
    %v3285 = vunpack.c.l.bf16 %v3284
    %v3286 = vunpack.c.h.bf16 %v3284
    %s3287 = scalar_lea.vmem [#allocation1], 296
    %3288 = vst [vmem:[%s3287] sm:%s3] %v3285
    %s3289 = scalar_lea.vmem %s0, 144
    %s3290 = sshrl.u32 %s3, 1
    %s3291 = sor.u32 %s3, %s3290
    %s3292 = sand.u32 %s3291, 85
    %s3293 = sshrl.u32 %s3292, 1
    %s3294 = sor.u32 %s3292, %s3293
    %s3295 = sand.u32 51, %s3294
    %s3296 = sshrl.u32 %s3295, 2
    %s3297 = sor.u32 %s3295, %s3296
    %s3298 = sand.u32 15, %s3297
    %v3299 = vld [vmem:[%s3289] sm:%s3298]
    %v3300 = vunpack.c.l.bf16 %v3299
    %v3301 = vunpack.c.h.bf16 %v3299
    %s3302 = scalar_lea.vmem [#allocation1], 288
    %3303 = vst [vmem:[%s3302] sm:%s3] %v3300
    %s3304 = scalar_lea.vmem %s0, 140
    %s3305 = sshrl.u32 %s3, 1
    %s3306 = sor.u32 %s3, %s3305
    %s3307 = sand.u32 %s3306, 85
    %s3308 = sshrl.u32 %s3307, 1
    %s3309 = sor.u32 %s3307, %s3308
    %s3310 = sand.u32 51, %s3309
    %s3311 = sshrl.u32 %s3310, 2
    %s3312 = sor.u32 %s3310, %s3311
    %s3313 = sand.u32 15, %s3312
    %v3314 = vld [vmem:[%s3304] sm:%s3313]
    %v3315 = vunpack.c.l.bf16 %v3314
    %v3316 = vunpack.c.h.bf16 %v3314
    %s3317 = scalar_lea.vmem [#allocation1], 280
    %3318 = vst [vmem:[%s3317] sm:%s3] %v3315
    %s3319 = scalar_lea.vmem %s0, 136
    %s3320 = sshrl.u32 %s3, 1
    %s3321 = sor.u32 %s3, %s3320
    %s3322 = sand.u32 %s3321, 85
    %s3323 = sshrl.u32 %s3322, 1
    %s3324 = sor.u32 %s3322, %s3323
    %s3325 = sand.u32 51, %s3324
    %s3326 = sshrl.u32 %s3325, 2
    %s3327 = sor.u32 %s3325, %s3326
    %s3328 = sand.u32 15, %s3327
    %v3329 = vld [vmem:[%s3319] sm:%s3328]
    %v3330 = vunpack.c.l.bf16 %v3329
    %v3331 = vunpack.c.h.bf16 %v3329
    %s3332 = scalar_lea.vmem [#allocation1], 272
    %3333 = vst [vmem:[%s3332] sm:%s3] %v3330
    %s3334 = scalar_lea.vmem %s0, 132
    %s3335 = sshrl.u32 %s3, 1
    %s3336 = sor.u32 %s3, %s3335
    %s3337 = sand.u32 %s3336, 85
    %s3338 = sshrl.u32 %s3337, 1
    %s3339 = sor.u32 %s3337, %s3338
    %s3340 = sand.u32 51, %s3339
    %s3341 = sshrl.u32 %s3340, 2
    %s3342 = sor.u32 %s3340, %s3341
    %s3343 = sand.u32 15, %s3342
    %v3344 = vld [vmem:[%s3334] sm:%s3343]
    %v3345 = vunpack.c.l.bf16 %v3344
    %v3346 = vunpack.c.h.bf16 %v3344
    %s3347 = scalar_lea.vmem [#allocation1], 264
    %3348 = vst [vmem:[%s3347] sm:%s3] %v3345
    %s3349 = scalar_lea.vmem %s0, 128
    %s3350 = sshrl.u32 %s3, 1
    %s3351 = sor.u32 %s3, %s3350
    %s3352 = sand.u32 %s3351, 85
    %s3353 = sshrl.u32 %s3352, 1
    %s3354 = sor.u32 %s3352, %s3353
    %s3355 = sand.u32 51, %s3354
    %s3356 = sshrl.u32 %s3355, 2
    %s3357 = sor.u32 %s3355, %s3356
    %s3358 = sand.u32 15, %s3357
    %v3359 = vld [vmem:[%s3349] sm:%s3358]
    %v3360 = vunpack.c.l.bf16 %v3359
    %v3361 = vunpack.c.h.bf16 %v3359
    %s3362 = scalar_lea.vmem [#allocation1], 256
    %3363 = vst [vmem:[%s3362] sm:%s3] %v3360
    %s3364 = scalar_lea.vmem %s0, 124
    %s3365 = sshrl.u32 %s3, 1
    %s3366 = sor.u32 %s3, %s3365
    %s3367 = sand.u32 %s3366, 85
    %s3368 = sshrl.u32 %s3367, 1
    %s3369 = sor.u32 %s3367, %s3368
    %s3370 = sand.u32 51, %s3369
    %s3371 = sshrl.u32 %s3370, 2
    %s3372 = sor.u32 %s3370, %s3371
    %s3373 = sand.u32 15, %s3372
    %v3374 = vld [vmem:[%s3364] sm:%s3373]
    %v3375 = vunpack.c.l.bf16 %v3374
    %v3376 = vunpack.c.h.bf16 %v3374
    %s3377 = scalar_lea.vmem [#allocation1], 248
    %3378 = vst [vmem:[%s3377] sm:%s3] %v3375
    %s3379 = scalar_lea.vmem %s0, 120
    %s3380 = sshrl.u32 %s3, 1
    %s3381 = sor.u32 %s3, %s3380
    %s3382 = sand.u32 %s3381, 85
    %s3383 = sshrl.u32 %s3382, 1
    %s3384 = sor.u32 %s3382, %s3383
    %s3385 = sand.u32 51, %s3384
    %s3386 = sshrl.u32 %s3385, 2
    %s3387 = sor.u32 %s3385, %s3386
    %s3388 = sand.u32 15, %s3387
    %v3389 = vld [vmem:[%s3379] sm:%s3388]
    %v3390 = vunpack.c.l.bf16 %v3389
    %v3391 = vunpack.c.h.bf16 %v3389
    %s3392 = scalar_lea.vmem [#allocation1], 240
    %3393 = vst [vmem:[%s3392] sm:%s3] %v3390
    %s3394 = scalar_lea.vmem %s0, 116
    %s3395 = sshrl.u32 %s3, 1
    %s3396 = sor.u32 %s3, %s3395
    %s3397 = sand.u32 %s3396, 85
    %s3398 = sshrl.u32 %s3397, 1
    %s3399 = sor.u32 %s3397, %s3398
    %s3400 = sand.u32 51, %s3399
    %s3401 = sshrl.u32 %s3400, 2
    %s3402 = sor.u32 %s3400, %s3401
    %s3403 = sand.u32 15, %s3402
    %v3404 = vld [vmem:[%s3394] sm:%s3403]
    %v3405 = vunpack.c.l.bf16 %v3404
    %v3406 = vunpack.c.h.bf16 %v3404
    %s3407 = scalar_lea.vmem [#allocation1], 232
    %3408 = vst [vmem:[%s3407] sm:%s3] %v3405
    %s3409 = scalar_lea.vmem %s0, 112
    %s3410 = sshrl.u32 %s3, 1
    %s3411 = sor.u32 %s3, %s3410
    %s3412 = sand.u32 %s3411, 85
    %s3413 = sshrl.u32 %s3412, 1
    %s3414 = sor.u32 %s3412, %s3413
    %s3415 = sand.u32 51, %s3414
    %s3416 = sshrl.u32 %s3415, 2
    %s3417 = sor.u32 %s3415, %s3416
    %s3418 = sand.u32 15, %s3417
    %v3419 = vld [vmem:[%s3409] sm:%s3418]
    %v3420 = vunpack.c.l.bf16 %v3419
    %v3421 = vunpack.c.h.bf16 %v3419
    %s3422 = scalar_lea.vmem [#allocation1], 224
    %3423 = vst [vmem:[%s3422] sm:%s3] %v3420
    %s3424 = scalar_lea.vmem %s0, 108
    %s3425 = sshrl.u32 %s3, 1
    %s3426 = sor.u32 %s3, %s3425
    %s3427 = sand.u32 %s3426, 85
    %s3428 = sshrl.u32 %s3427, 1
    %s3429 = sor.u32 %s3427, %s3428
    %s3430 = sand.u32 51, %s3429
    %s3431 = sshrl.u32 %s3430, 2
    %s3432 = sor.u32 %s3430, %s3431
    %s3433 = sand.u32 15, %s3432
    %v3434 = vld [vmem:[%s3424] sm:%s3433]
    %v3435 = vunpack.c.l.bf16 %v3434
    %v3436 = vunpack.c.h.bf16 %v3434
    %s3437 = scalar_lea.vmem [#allocation1], 216
    %3438 = vst [vmem:[%s3437] sm:%s3] %v3435
    %s3439 = scalar_lea.vmem %s0, 104
    %s3440 = sshrl.u32 %s3, 1
    %s3441 = sor.u32 %s3, %s3440
    %s3442 = sand.u32 %s3441, 85
    %s3443 = sshrl.u32 %s3442, 1
    %s3444 = sor.u32 %s3442, %s3443
    %s3445 = sand.u32 51, %s3444
    %s3446 = sshrl.u32 %s3445, 2
    %s3447 = sor.u32 %s3445, %s3446
    %s3448 = sand.u32 15, %s3447
    %v3449 = vld [vmem:[%s3439] sm:%s3448]
    %v3450 = vunpack.c.l.bf16 %v3449
    %v3451 = vunpack.c.h.bf16 %v3449
    %s3452 = scalar_lea.vmem [#allocation1], 208
    %3453 = vst [vmem:[%s3452] sm:%s3] %v3450
    %s3454 = scalar_lea.vmem %s0, 100
    %s3455 = sshrl.u32 %s3, 1
    %s3456 = sor.u32 %s3, %s3455
    %s3457 = sand.u32 %s3456, 85
    %s3458 = sshrl.u32 %s3457, 1
    %s3459 = sor.u32 %s3457, %s3458
    %s3460 = sand.u32 51, %s3459
    %s3461 = sshrl.u32 %s3460, 2
    %s3462 = sor.u32 %s3460, %s3461
    %s3463 = sand.u32 15, %s3462
    %v3464 = vld [vmem:[%s3454] sm:%s3463]
    %v3465 = vunpack.c.l.bf16 %v3464
    %v3466 = vunpack.c.h.bf16 %v3464
    %s3467 = scalar_lea.vmem [#allocation1], 200
    %3468 = vst [vmem:[%s3467] sm:%s3] %v3465
    %s3469 = scalar_lea.vmem %s0, 96
    %s3470 = sshrl.u32 %s3, 1
    %s3471 = sor.u32 %s3, %s3470
    %s3472 = sand.u32 %s3471, 85
    %s3473 = sshrl.u32 %s3472, 1
    %s3474 = sor.u32 %s3472, %s3473
    %s3475 = sand.u32 51, %s3474
    %s3476 = sshrl.u32 %s3475, 2
    %s3477 = sor.u32 %s3475, %s3476
    %s3478 = sand.u32 15, %s3477
    %v3479 = vld [vmem:[%s3469] sm:%s3478]
    %v3480 = vunpack.c.l.bf16 %v3479
    %v3481 = vunpack.c.h.bf16 %v3479
    %s3482 = scalar_lea.vmem [#allocation1], 192
    %3483 = vst [vmem:[%s3482] sm:%s3] %v3480
    %s3484 = scalar_lea.vmem %s0, 92
    %s3485 = sshrl.u32 %s3, 1
    %s3486 = sor.u32 %s3, %s3485
    %s3487 = sand.u32 %s3486, 85
    %s3488 = sshrl.u32 %s3487, 1
    %s3489 = sor.u32 %s3487, %s3488
    %s3490 = sand.u32 51, %s3489
    %s3491 = sshrl.u32 %s3490, 2
    %s3492 = sor.u32 %s3490, %s3491
    %s3493 = sand.u32 15, %s3492
    %v3494 = vld [vmem:[%s3484] sm:%s3493]
    %v3495 = vunpack.c.l.bf16 %v3494
    %v3496 = vunpack.c.h.bf16 %v3494
    %s3497 = scalar_lea.vmem [#allocation1], 184
    %3498 = vst [vmem:[%s3497] sm:%s3] %v3495
    %s3499 = scalar_lea.vmem %s0, 88
    %s3500 = sshrl.u32 %s3, 1
    %s3501 = sor.u32 %s3, %s3500
    %s3502 = sand.u32 %s3501, 85
    %s3503 = sshrl.u32 %s3502, 1
    %s3504 = sor.u32 %s3502, %s3503
    %s3505 = sand.u32 51, %s3504
    %s3506 = sshrl.u32 %s3505, 2
    %s3507 = sor.u32 %s3505, %s3506
    %s3508 = sand.u32 15, %s3507
    %v3509 = vld [vmem:[%s3499] sm:%s3508]
    %v3510 = vunpack.c.l.bf16 %v3509
    %v3511 = vunpack.c.h.bf16 %v3509
    %s3512 = scalar_lea.vmem [#allocation1], 176
    %3513 = vst [vmem:[%s3512] sm:%s3] %v3510
    %s3514 = scalar_lea.vmem %s0, 84
    %s3515 = sshrl.u32 %s3, 1
    %s3516 = sor.u32 %s3, %s3515
    %s3517 = sand.u32 %s3516, 85
    %s3518 = sshrl.u32 %s3517, 1
    %s3519 = sor.u32 %s3517, %s3518
    %s3520 = sand.u32 51, %s3519
    %s3521 = sshrl.u32 %s3520, 2
    %s3522 = sor.u32 %s3520, %s3521
    %s3523 = sand.u32 15, %s3522
    %v3524 = vld [vmem:[%s3514] sm:%s3523]
    %v3525 = vunpack.c.l.bf16 %v3524
    %v3526 = vunpack.c.h.bf16 %v3524
    %s3527 = scalar_lea.vmem [#allocation1], 168
    %3528 = vst [vmem:[%s3527] sm:%s3] %v3525
    %s3529 = scalar_lea.vmem %s0, 80
    %s3530 = sshrl.u32 %s3, 1
    %s3531 = sor.u32 %s3, %s3530
    %s3532 = sand.u32 %s3531, 85
    %s3533 = sshrl.u32 %s3532, 1
    %s3534 = sor.u32 %s3532, %s3533
    %s3535 = sand.u32 51, %s3534
    %s3536 = sshrl.u32 %s3535, 2
    %s3537 = sor.u32 %s3535, %s3536
    %s3538 = sand.u32 15, %s3537
    %v3539 = vld [vmem:[%s3529] sm:%s3538]
    %v3540 = vunpack.c.l.bf16 %v3539
    %v3541 = vunpack.c.h.bf16 %v3539
    %s3542 = scalar_lea.vmem [#allocation1], 160
    %3543 = vst [vmem:[%s3542] sm:%s3] %v3540
    %s3544 = scalar_lea.vmem %s0, 76
    %s3545 = sshrl.u32 %s3, 1
    %s3546 = sor.u32 %s3, %s3545
    %s3547 = sand.u32 %s3546, 85
    %s3548 = sshrl.u32 %s3547, 1
    %s3549 = sor.u32 %s3547, %s3548
    %s3550 = sand.u32 51, %s3549
    %s3551 = sshrl.u32 %s3550, 2
    %s3552 = sor.u32 %s3550, %s3551
    %s3553 = sand.u32 15, %s3552
    %v3554 = vld [vmem:[%s3544] sm:%s3553]
    %v3555 = vunpack.c.l.bf16 %v3554
    %v3556 = vunpack.c.h.bf16 %v3554
    %s3557 = scalar_lea.vmem [#allocation1], 152
    %3558 = vst [vmem:[%s3557] sm:%s3] %v3555
    %s3559 = scalar_lea.vmem %s0, 72
    %s3560 = sshrl.u32 %s3, 1
    %s3561 = sor.u32 %s3, %s3560
    %s3562 = sand.u32 %s3561, 85
    %s3563 = sshrl.u32 %s3562, 1
    %s3564 = sor.u32 %s3562, %s3563
    %s3565 = sand.u32 51, %s3564
    %s3566 = sshrl.u32 %s3565, 2
    %s3567 = sor.u32 %s3565, %s3566
    %s3568 = sand.u32 15, %s3567
    %v3569 = vld [vmem:[%s3559] sm:%s3568]
    %v3570 = vunpack.c.l.bf16 %v3569
    %v3571 = vunpack.c.h.bf16 %v3569
    %s3572 = scalar_lea.vmem [#allocation1], 144
    %3573 = vst [vmem:[%s3572] sm:%s3] %v3570
    %s3574 = scalar_lea.vmem %s0, 68
    %s3575 = sshrl.u32 %s3, 1
    %s3576 = sor.u32 %s3, %s3575
    %s3577 = sand.u32 %s3576, 85
    %s3578 = sshrl.u32 %s3577, 1
    %s3579 = sor.u32 %s3577, %s3578
    %s3580 = sand.u32 51, %s3579
    %s3581 = sshrl.u32 %s3580, 2
    %s3582 = sor.u32 %s3580, %s3581
    %s3583 = sand.u32 15, %s3582
    %v3584 = vld [vmem:[%s3574] sm:%s3583]
    %v3585 = vunpack.c.l.bf16 %v3584
    %v3586 = vunpack.c.h.bf16 %v3584
    %s3587 = scalar_lea.vmem [#allocation1], 136
    %3588 = vst [vmem:[%s3587] sm:%s3] %v3585
    %s3589 = scalar_lea.vmem %s0, 64
    %s3590 = sshrl.u32 %s3, 1
    %s3591 = sor.u32 %s3, %s3590
    %s3592 = sand.u32 %s3591, 85
    %s3593 = sshrl.u32 %s3592, 1
    %s3594 = sor.u32 %s3592, %s3593
    %s3595 = sand.u32 51, %s3594
    %s3596 = sshrl.u32 %s3595, 2
    %s3597 = sor.u32 %s3595, %s3596
    %s3598 = sand.u32 15, %s3597
    %v3599 = vld [vmem:[%s3589] sm:%s3598]
    %v3600 = vunpack.c.l.bf16 %v3599
    %v3601 = vunpack.c.h.bf16 %v3599
    %s3602 = scalar_lea.vmem [#allocation1], 128
    %3603 = vst [vmem:[%s3602] sm:%s3] %v3600
    %s3604 = scalar_lea.vmem %s0, 60
    %s3605 = sshrl.u32 %s3, 1
    %s3606 = sor.u32 %s3, %s3605
    %s3607 = sand.u32 %s3606, 85
    %s3608 = sshrl.u32 %s3607, 1
    %s3609 = sor.u32 %s3607, %s3608
    %s3610 = sand.u32 51, %s3609
    %s3611 = sshrl.u32 %s3610, 2
    %s3612 = sor.u32 %s3610, %s3611
    %s3613 = sand.u32 15, %s3612
    %v3614 = vld [vmem:[%s3604] sm:%s3613]
    %v3615 = vunpack.c.l.bf16 %v3614
    %v3616 = vunpack.c.h.bf16 %v3614
    %s3617 = scalar_lea.vmem [#allocation1], 120
    %3618 = vst [vmem:[%s3617] sm:%s3] %v3615
    %s3619 = scalar_lea.vmem %s0, 56
    %s3620 = sshrl.u32 %s3, 1
    %s3621 = sor.u32 %s3, %s3620
    %s3622 = sand.u32 %s3621, 85
    %s3623 = sshrl.u32 %s3622, 1
    %s3624 = sor.u32 %s3622, %s3623
    %s3625 = sand.u32 51, %s3624
    %s3626 = sshrl.u32 %s3625, 2
    %s3627 = sor.u32 %s3625, %s3626
    %s3628 = sand.u32 15, %s3627
    %v3629 = vld [vmem:[%s3619] sm:%s3628]
    %v3630 = vunpack.c.l.bf16 %v3629
    %v3631 = vunpack.c.h.bf16 %v3629
    %s3632 = scalar_lea.vmem [#allocation1], 112
    %3633 = vst [vmem:[%s3632] sm:%s3] %v3630
    %s3634 = scalar_lea.vmem %s0, 52
    %s3635 = sshrl.u32 %s3, 1
    %s3636 = sor.u32 %s3, %s3635
    %s3637 = sand.u32 %s3636, 85
    %s3638 = sshrl.u32 %s3637, 1
    %s3639 = sor.u32 %s3637, %s3638
    %s3640 = sand.u32 51, %s3639
    %s3641 = sshrl.u32 %s3640, 2
    %s3642 = sor.u32 %s3640, %s3641
    %s3643 = sand.u32 15, %s3642
    %v3644 = vld [vmem:[%s3634] sm:%s3643]
    %v3645 = vunpack.c.l.bf16 %v3644
    %v3646 = vunpack.c.h.bf16 %v3644
    %s3647 = scalar_lea.vmem [#allocation1], 104
    %3648 = vst [vmem:[%s3647] sm:%s3] %v3645
    %s3649 = scalar_lea.vmem %s0, 48
    %s3650 = sshrl.u32 %s3, 1
    %s3651 = sor.u32 %s3, %s3650
    %s3652 = sand.u32 %s3651, 85
    %s3653 = sshrl.u32 %s3652, 1
    %s3654 = sor.u32 %s3652, %s3653
    %s3655 = sand.u32 51, %s3654
    %s3656 = sshrl.u32 %s3655, 2
    %s3657 = sor.u32 %s3655, %s3656
    %s3658 = sand.u32 15, %s3657
    %v3659 = vld [vmem:[%s3649] sm:%s3658]
    %v3660 = vunpack.c.l.bf16 %v3659
    %v3661 = vunpack.c.h.bf16 %v3659
    %s3662 = scalar_lea.vmem [#allocation1], 96
    %3663 = vst [vmem:[%s3662] sm:%s3] %v3660
    %s3664 = scalar_lea.vmem %s0, 44
    %s3665 = sshrl.u32 %s3, 1
    %s3666 = sor.u32 %s3, %s3665
    %s3667 = sand.u32 %s3666, 85
    %s3668 = sshrl.u32 %s3667, 1
    %s3669 = sor.u32 %s3667, %s3668
    %s3670 = sand.u32 51, %s3669
    %s3671 = sshrl.u32 %s3670, 2
    %s3672 = sor.u32 %s3670, %s3671
    %s3673 = sand.u32 15, %s3672
    %v3674 = vld [vmem:[%s3664] sm:%s3673]
    %v3675 = vunpack.c.l.bf16 %v3674
    %v3676 = vunpack.c.h.bf16 %v3674
    %s3677 = scalar_lea.vmem [#allocation1], 88
    %3678 = vst [vmem:[%s3677] sm:%s3] %v3675
    %s3679 = scalar_lea.vmem %s0, 40
    %s3680 = sshrl.u32 %s3, 1
    %s3681 = sor.u32 %s3, %s3680
    %s3682 = sand.u32 %s3681, 85
    %s3683 = sshrl.u32 %s3682, 1
    %s3684 = sor.u32 %s3682, %s3683
    %s3685 = sand.u32 51, %s3684
    %s3686 = sshrl.u32 %s3685, 2
    %s3687 = sor.u32 %s3685, %s3686
    %s3688 = sand.u32 15, %s3687
    %v3689 = vld [vmem:[%s3679] sm:%s3688]
    %v3690 = vunpack.c.l.bf16 %v3689
    %v3691 = vunpack.c.h.bf16 %v3689
    %s3692 = scalar_lea.vmem [#allocation1], 80
    %3693 = vst [vmem:[%s3692] sm:%s3] %v3690
    %s3694 = scalar_lea.vmem %s0, 36
    %s3695 = sshrl.u32 %s3, 1
    %s3696 = sor.u32 %s3, %s3695
    %s3697 = sand.u32 %s3696, 85
    %s3698 = sshrl.u32 %s3697, 1
    %s3699 = sor.u32 %s3697, %s3698
    %s3700 = sand.u32 51, %s3699
    %s3701 = sshrl.u32 %s3700, 2
    %s3702 = sor.u32 %s3700, %s3701
    %s3703 = sand.u32 15, %s3702
    %v3704 = vld [vmem:[%s3694] sm:%s3703]
    %v3705 = vunpack.c.l.bf16 %v3704
    %v3706 = vunpack.c.h.bf16 %v3704
    %s3707 = scalar_lea.vmem [#allocation1], 72
    %3708 = vst [vmem:[%s3707] sm:%s3] %v3705
    %s3709 = scalar_lea.vmem %s0, 32
    %s3710 = sshrl.u32 %s3, 1
    %s3711 = sor.u32 %s3, %s3710
    %s3712 = sand.u32 %s3711, 85
    %s3713 = sshrl.u32 %s3712, 1
    %s3714 = sor.u32 %s3712, %s3713
    %s3715 = sand.u32 51, %s3714
    %s3716 = sshrl.u32 %s3715, 2
    %s3717 = sor.u32 %s3715, %s3716
    %s3718 = sand.u32 15, %s3717
    %v3719 = vld [vmem:[%s3709] sm:%s3718]
    %v3720 = vunpack.c.l.bf16 %v3719
    %v3721 = vunpack.c.h.bf16 %v3719
    %s3722 = scalar_lea.vmem [#allocation1], 64
    %3723 = vst [vmem:[%s3722] sm:%s3] %v3720
    %s3724 = scalar_lea.vmem %s0, 28
    %s3725 = sshrl.u32 %s3, 1
    %s3726 = sor.u32 %s3, %s3725
    %s3727 = sand.u32 %s3726, 85
    %s3728 = sshrl.u32 %s3727, 1
    %s3729 = sor.u32 %s3727, %s3728
    %s3730 = sand.u32 51, %s3729
    %s3731 = sshrl.u32 %s3730, 2
    %s3732 = sor.u32 %s3730, %s3731
    %s3733 = sand.u32 15, %s3732
    %v3734 = vld [vmem:[%s3724] sm:%s3733]
    %v3735 = vunpack.c.l.bf16 %v3734
    %v3736 = vunpack.c.h.bf16 %v3734
    %s3737 = scalar_lea.vmem [#allocation1], 56
    %3738 = vst [vmem:[%s3737] sm:%s3] %v3735
    %s3739 = scalar_lea.vmem %s0, 24
    %s3740 = sshrl.u32 %s3, 1
    %s3741 = sor.u32 %s3, %s3740
    %s3742 = sand.u32 %s3741, 85
    %s3743 = sshrl.u32 %s3742, 1
    %s3744 = sor.u32 %s3742, %s3743
    %s3745 = sand.u32 51, %s3744
    %s3746 = sshrl.u32 %s3745, 2
    %s3747 = sor.u32 %s3745, %s3746
    %s3748 = sand.u32 15, %s3747
    %v3749 = vld [vmem:[%s3739] sm:%s3748]
    %v3750 = vunpack.c.l.bf16 %v3749
    %v3751 = vunpack.c.h.bf16 %v3749
    %s3752 = scalar_lea.vmem [#allocation1], 48
    %3753 = vst [vmem:[%s3752] sm:%s3] %v3750
    %s3754 = scalar_lea.vmem %s0, 20
    %s3755 = sshrl.u32 %s3, 1
    %s3756 = sor.u32 %s3, %s3755
    %s3757 = sand.u32 %s3756, 85
    %s3758 = sshrl.u32 %s3757, 1
    %s3759 = sor.u32 %s3757, %s3758
    %s3760 = sand.u32 51, %s3759
    %s3761 = sshrl.u32 %s3760, 2
    %s3762 = sor.u32 %s3760, %s3761
    %s3763 = sand.u32 15, %s3762
    %v3764 = vld [vmem:[%s3754] sm:%s3763]
    %v3765 = vunpack.c.l.bf16 %v3764
    %v3766 = vunpack.c.h.bf16 %v3764
    %s3767 = scalar_lea.vmem [#allocation1], 40
    %3768 = vst [vmem:[%s3767] sm:%s3] %v3765
    %s3769 = scalar_lea.vmem %s0, 16
    %s3770 = sshrl.u32 %s3, 1
    %s3771 = sor.u32 %s3, %s3770
    %s3772 = sand.u32 %s3771, 85
    %s3773 = sshrl.u32 %s3772, 1
    %s3774 = sor.u32 %s3772, %s3773
    %s3775 = sand.u32 51, %s3774
    %s3776 = sshrl.u32 %s3775, 2
    %s3777 = sor.u32 %s3775, %s3776
    %s3778 = sand.u32 15, %s3777
    %v3779 = vld [vmem:[%s3769] sm:%s3778]
    %v3780 = vunpack.c.l.bf16 %v3779
    %v3781 = vunpack.c.h.bf16 %v3779
    %s3782 = scalar_lea.vmem [#allocation1], 32
    %3783 = vst [vmem:[%s3782] sm:%s3] %v3780
    %s3784 = scalar_lea.vmem %s0, 12
    %s3785 = sshrl.u32 %s3, 1
    %s3786 = sor.u32 %s3, %s3785
    %s3787 = sand.u32 %s3786, 85
    %s3788 = sshrl.u32 %s3787, 1
    %s3789 = sor.u32 %s3787, %s3788
    %s3790 = sand.u32 51, %s3789
    %s3791 = sshrl.u32 %s3790, 2
    %s3792 = sor.u32 %s3790, %s3791
    %s3793 = sand.u32 15, %s3792
    %v3794 = vld [vmem:[%s3784] sm:%s3793]
    %v3795 = vunpack.c.l.bf16 %v3794
    %v3796 = vunpack.c.h.bf16 %v3794
    %s3797 = scalar_lea.vmem [#allocation1], 24
    %3798 = vst [vmem:[%s3797] sm:%s3] %v3795
    %s3799 = scalar_lea.vmem %s0, 8
    %s3800 = sshrl.u32 %s3, 1
    %s3801 = sor.u32 %s3, %s3800
    %s3802 = sand.u32 %s3801, 85
    %s3803 = sshrl.u32 %s3802, 1
    %s3804 = sor.u32 %s3802, %s3803
    %s3805 = sand.u32 51, %s3804
    %s3806 = sshrl.u32 %s3805, 2
    %s3807 = sor.u32 %s3805, %s3806
    %s3808 = sand.u32 15, %s3807
    %v3809 = vld [vmem:[%s3799] sm:%s3808]
    %v3810 = vunpack.c.l.bf16 %v3809
    %v3811 = vunpack.c.h.bf16 %v3809
    %s3812 = scalar_lea.vmem [#allocation1], 16
    %3813 = vst [vmem:[%s3812] sm:%s3] %v3810
    %s3814 = scalar_lea.vmem %s0, 4
    %s3815 = sshrl.u32 %s3, 1
    %s3816 = sor.u32 %s3, %s3815
    %s3817 = sand.u32 %s3816, 85
    %s3818 = sshrl.u32 %s3817, 1
    %s3819 = sor.u32 %s3817, %s3818
    %s3820 = sand.u32 51, %s3819
    %s3821 = sshrl.u32 %s3820, 2
    %s3822 = sor.u32 %s3820, %s3821
    %s3823 = sand.u32 15, %s3822
    %v3824 = vld [vmem:[%s3814] sm:%s3823]
    %v3825 = vunpack.c.l.bf16 %v3824
    %v3826 = vunpack.c.h.bf16 %v3824
    %s3827 = scalar_lea.vmem [#allocation1], 8
    %3828 = vst [vmem:[%s3827] sm:%s3] %v3825
    %s3829 = sshrl.u32 %s3, 1
    %s3830 = sor.u32 %s3, %s3829
    %s3831 = sand.u32 %s3830, 85
    %s3832 = sshrl.u32 %s3831, 1
    %s3833 = sor.u32 %s3831, %s3832
    %s3834 = sand.u32 51, %s3833
    %s3835 = sshrl.u32 %s3834, 2
    %s3836 = sor.u32 %s3834, %s3835
    %s3837 = sand.u32 15, %s3836
    %v3838 = vld [vmem:[%s0] sm:%s3837]
    %v3839 = vunpack.c.l.bf16 %v3838
    %v3840 = vunpack.c.h.bf16 %v3838
    %3841 = vst [vmem:[#allocation1] sm:%s3] %v3839
    %v3842 = vld [vmem:[#allocation1] ss:$4 sm:$0xff]
    %vm3843 = vcmask 261120
    %3844 = vst.msk [vmem:[#allocation0] ss:$8 sm:$0x3] %vm3843, %v3842
    %s3845 = scalar_lea.vmem [#allocation0], 4294967281
    %3846 = vst.msk [vmem:[%s3845] ss:$8 sm:$0xc] %vm3843, %v3842
    %s3847 = scalar_lea.vmem [#allocation0], 4294967266
    %3848 = vst.msk [vmem:[%s3847] ss:$8 sm:$0x30] %vm3843, %v3842
    %s3849 = scalar_lea.vmem [#allocation0], 4294967251
    %3850 = vst.msk [vmem:[%s3849] ss:$8 sm:$0xc0] %vm3843, %v3842
    %s3851 = scalar_lea.vmem [#allocation1], 32
    %v3852 = vld [vmem:[%s3851] ss:$4 sm:$0xff]
    %vm3853 = vcmask 261120
    %s3854 = scalar_lea.vmem [#allocation0], 4
    %3855 = vst.msk [vmem:[%s3854] ss:$8 sm:$0x3] %vm3853, %v3852
    %s3856 = scalar_lea.vmem [#allocation0], 4294967285
    %3857 = vst.msk [vmem:[%s3856] ss:$8 sm:$0xc] %vm3853, %v3852
    %s3858 = scalar_lea.vmem [#allocation0], 4294967270
    %3859 = vst.msk [vmem:[%s3858] ss:$8 sm:$0x30] %vm3853, %v3852
    %s3860 = scalar_lea.vmem [#allocation0], 4294967255
    %3861 = vst.msk [vmem:[%s3860] ss:$8 sm:$0xc0] %vm3853, %v3852
    %s3862 = scalar_lea.vmem [#allocation1], 64
    %v3863 = vld [vmem:[%s3862] ss:$4 sm:$0xff]
    %vm3864 = vcmask 261120
    %s3865 = scalar_lea.vmem [#allocation0], 16
    %3866 = vst.msk [vmem:[%s3865] ss:$8 sm:$0x3] %vm3864, %v3863
    %s3867 = scalar_lea.vmem [#allocation0], 1
    %3868 = vst.msk [vmem:[%s3867] ss:$8 sm:$0xc] %vm3864, %v3863
    %s3869 = scalar_lea.vmem [#allocation0], 4294967282
    %3870 = vst.msk [vmem:[%s3869] ss:$8 sm:$0x30] %vm3864, %v3863
    %s3871 = scalar_lea.vmem [#allocation0], 4294967267
    %3872 = vst.msk [vmem:[%s3871] ss:$8 sm:$0xc0] %vm3864, %v3863
    %s3873 = scalar_lea.vmem [#allocation1], 96
    %v3874 = vld [vmem:[%s3873] ss:$4 sm:$0xff]
    %vm3875 = vcmask 261120
    %s3876 = scalar_lea.vmem [#allocation0], 20
    %3877 = vst.msk [vmem:[%s3876] ss:$8 sm:$0x3] %vm3875, %v3874
    %s3878 = scalar_lea.vmem [#allocation0], 5
    %3879 = vst.msk [vmem:[%s3878] ss:$8 sm:$0xc] %vm3875, %v3874
    %s3880 = scalar_lea.vmem [#allocation0], 4294967286
    %3881 = vst.msk [vmem:[%s3880] ss:$8 sm:$0x30] %vm3875, %v3874
    %s3882 = scalar_lea.vmem [#allocation0], 4294967271
    %3883 = vst.msk [vmem:[%s3882] ss:$8 sm:$0xc0] %vm3875, %v3874
    %s3884 = scalar_lea.vmem [#allocation1], 128
    %v3885 = vld [vmem:[%s3884] ss:$4 sm:$0xff]
    %vm3886 = vcmask 261120
    %s3887 = scalar_lea.vmem [#allocation0], 32
    %3888 = vst.msk [vmem:[%s3887] ss:$8 sm:$0x3] %vm3886, %v3885
    %s3889 = scalar_lea.vmem [#allocation0], 17
    %3890 = vst.msk [vmem:[%s3889] ss:$8 sm:$0xc] %vm3886, %v3885
    %s3891 = scalar_lea.vmem [#allocation0], 2
    %3892 = vst.msk [vmem:[%s3891] ss:$8 sm:$0x30] %vm3886, %v3885
    %s3893 = scalar_lea.vmem [#allocation0], 4294967283
    %3894 = vst.msk [vmem:[%s3893] ss:$8 sm:$0xc0] %vm3886, %v3885
    %s3895 = scalar_lea.vmem [#allocation1], 160
    %v3896 = vld [vmem:[%s3895] ss:$4 sm:$0xff]
    %vm3897 = vcmask 261120
    %s3898 = scalar_lea.vmem [#allocation0], 36
    %3899 = vst.msk [vmem:[%s3898] ss:$8 sm:$0x3] %vm3897, %v3896
    %s3900 = scalar_lea.vmem [#allocation0], 21
    %3901 = vst.msk [vmem:[%s3900] ss:$8 sm:$0xc] %vm3897, %v3896
    %s3902 = scalar_lea.vmem [#allocation0], 6
    %3903 = vst.msk [vmem:[%s3902] ss:$8 sm:$0x30] %vm3897, %v3896
    %s3904 = scalar_lea.vmem [#allocation0], 4294967287
    %3905 = vst.msk [vmem:[%s3904] ss:$8 sm:$0xc0] %vm3897, %v3896
    %s3906 = scalar_lea.vmem [#allocation1], 192
    %v3907 = vld [vmem:[%s3906] ss:$4 sm:$0xff]
    %vm3908 = vcmask 261120
    %s3909 = scalar_lea.vmem [#allocation0], 48
    %3910 = vst.msk [vmem:[%s3909] ss:$8 sm:$0x3] %vm3908, %v3907
    %s3911 = scalar_lea.vmem [#allocation0], 33
    %3912 = vst.msk [vmem:[%s3911] ss:$8 sm:$0xc] %vm3908, %v3907
    %s3913 = scalar_lea.vmem [#allocation0], 18
    %3914 = vst.msk [vmem:[%s3913] ss:$8 sm:$0x30] %vm3908, %v3907
    %s3915 = scalar_lea.vmem [#allocation0], 3
    %3916 = vst.msk [vmem:[%s3915] ss:$8 sm:$0xc0] %vm3908, %v3907
    %s3917 = scalar_lea.vmem [#allocation1], 224
    %v3918 = vld [vmem:[%s3917] ss:$4 sm:$0xff]
    %vm3919 = vcmask 261120
    %s3920 = scalar_lea.vmem [#allocation0], 52
    %3921 = vst.msk [vmem:[%s3920] ss:$8 sm:$0x3] %vm3919, %v3918
    %s3922 = scalar_lea.vmem [#allocation0], 37
    %3923 = vst.msk [vmem:[%s3922] ss:$8 sm:$0xc] %vm3919, %v3918
    %s3924 = scalar_lea.vmem [#allocation0], 22
    %3925 = vst.msk [vmem:[%s3924] ss:$8 sm:$0x30] %vm3919, %v3918
    %s3926 = scalar_lea.vmem [#allocation0], 7
    %3927 = vst.msk [vmem:[%s3926] ss:$8 sm:$0xc0] %vm3919, %v3918
    %s3928 = scalar_lea.vmem [#allocation1], 256
    %v3929 = vld [vmem:[%s3928] ss:$4 sm:$0xff]
    %vm3930 = vcmask 261120
    %s3931 = scalar_lea.vmem [#allocation0], 64
    %3932 = vst.msk [vmem:[%s3931] ss:$8 sm:$0x3] %vm3930, %v3929
    %s3933 = scalar_lea.vmem [#allocation0], 49
    %3934 = vst.msk [vmem:[%s3933] ss:$8 sm:$0xc] %vm3930, %v3929
    %s3935 = scalar_lea.vmem [#allocation0], 34
    %3936 = vst.msk [vmem:[%s3935] ss:$8 sm:$0x30] %vm3930, %v3929
    %s3937 = scalar_lea.vmem [#allocation0], 19
    %3938 = vst.msk [vmem:[%s3937] ss:$8 sm:$0xc0] %vm3930, %v3929
    %s3939 = scalar_lea.vmem [#allocation1], 288
    %v3940 = vld [vmem:[%s3939] ss:$4 sm:$0xff]
    %vm3941 = vcmask 261120
    %s3942 = scalar_lea.vmem [#allocation0], 68
    %3943 = vst.msk [vmem:[%s3942] ss:$8 sm:$0x3] %vm3941, %v3940
    %s3944 = scalar_lea.vmem [#allocation0], 53
    %3945 = vst.msk [vmem:[%s3944] ss:$8 sm:$0xc] %vm3941, %v3940
    %s3946 = scalar_lea.vmem [#allocation0], 38
    %3947 = vst.msk [vmem:[%s3946] ss:$8 sm:$0x30] %vm3941, %v3940
    %s3948 = scalar_lea.vmem [#allocation0], 23
    %3949 = vst.msk [vmem:[%s3948] ss:$8 sm:$0xc0] %vm3941, %v3940
    %s3950 = scalar_lea.vmem [#allocation1], 320
    %v3951 = vld [vmem:[%s3950] ss:$4 sm:$0xff]
    %vm3952 = vcmask 261120
    %s3953 = scalar_lea.vmem [#allocation0], 80
    %3954 = vst.msk [vmem:[%s3953] ss:$8 sm:$0x3] %vm3952, %v3951
    %s3955 = scalar_lea.vmem [#allocation0], 65
    %3956 = vst.msk [vmem:[%s3955] ss:$8 sm:$0xc] %vm3952, %v3951
    %s3957 = scalar_lea.vmem [#allocation0], 50
    %3958 = vst.msk [vmem:[%s3957] ss:$8 sm:$0x30] %vm3952, %v3951
    %s3959 = scalar_lea.vmem [#allocation0], 35
    %3960 = vst.msk [vmem:[%s3959] ss:$8 sm:$0xc0] %vm3952, %v3951
    %s3961 = scalar_lea.vmem [#allocation1], 352
    %v3962 = vld [vmem:[%s3961] ss:$4 sm:$0xff]
    %vm3963 = vcmask 261120
    %s3964 = scalar_lea.vmem [#allocation0], 84
    %3965 = vst.msk [vmem:[%s3964] ss:$8 sm:$0x3] %vm3963, %v3962
    %s3966 = scalar_lea.vmem [#allocation0], 69
    %3967 = vst.msk [vmem:[%s3966] ss:$8 sm:$0xc] %vm3963, %v3962
    %s3968 = scalar_lea.vmem [#allocation0], 54
    %3969 = vst.msk [vmem:[%s3968] ss:$8 sm:$0x30] %vm3963, %v3962
    %s3970 = scalar_lea.vmem [#allocation0], 39
    %3971 = vst.msk [vmem:[%s3970] ss:$8 sm:$0xc0] %vm3963, %v3962
    %s3972 = scalar_lea.vmem [#allocation1], 384
    %v3973 = vld [vmem:[%s3972] ss:$4 sm:$0xff]
    %vm3974 = vcmask 261120
    %s3975 = scalar_lea.vmem [#allocation0], 96
    %3976 = vst.msk [vmem:[%s3975] ss:$8 sm:$0x3] %vm3974, %v3973
    %s3977 = scalar_lea.vmem [#allocation0], 81
    %3978 = vst.msk [vmem:[%s3977] ss:$8 sm:$0xc] %vm3974, %v3973
    %s3979 = scalar_lea.vmem [#allocation0], 66
    %3980 = vst.msk [vmem:[%s3979] ss:$8 sm:$0x30] %vm3974, %v3973
    %s3981 = scalar_lea.vmem [#allocation0], 51
    %3982 = vst.msk [vmem:[%s3981] ss:$8 sm:$0xc0] %vm3974, %v3973
    %s3983 = scalar_lea.vmem [#allocation1], 416
    %v3984 = vld [vmem:[%s3983] ss:$4 sm:$0xff]
    %vm3985 = vcmask 261120
    %s3986 = scalar_lea.vmem [#allocation0], 100
    %3987 = vst.msk [vmem:[%s3986] ss:$8 sm:$0x3] %vm3985, %v3984
    %s3988 = scalar_lea.vmem [#allocation0], 85
    %3989 = vst.msk [vmem:[%s3988] ss:$8 sm:$0xc] %vm3985, %v3984
    %s3990 = scalar_lea.vmem [#allocation0], 70
    %3991 = vst.msk [vmem:[%s3990] ss:$8 sm:$0x30] %vm3985, %v3984
    %s3992 = scalar_lea.vmem [#allocation0], 55
    %3993 = vst.msk [vmem:[%s3992] ss:$8 sm:$0xc0] %vm3985, %v3984
    %s3994 = scalar_lea.vmem [#allocation1], 448
    %v3995 = vld [vmem:[%s3994] ss:$4 sm:$0xff]
    %vm3996 = vcmask 261120
    %s3997 = scalar_lea.vmem [#allocation0], 112
    %3998 = vst.msk [vmem:[%s3997] ss:$8 sm:$0x3] %vm3996, %v3995
    %s3999 = scalar_lea.vmem [#allocation0], 97
    %4000 = vst.msk [vmem:[%s3999] ss:$8 sm:$0xc] %vm3996, %v3995
    %s4001 = scalar_lea.vmem [#allocation0], 82
    %4002 = vst.msk [vmem:[%s4001] ss:$8 sm:$0x30] %vm3996, %v3995
    %s4003 = scalar_lea.vmem [#allocation0], 67
    %4004 = vst.msk [vmem:[%s4003] ss:$8 sm:$0xc0] %vm3996, %v3995
    %s4005 = scalar_lea.vmem [#allocation1], 480
    %v4006 = vld [vmem:[%s4005] ss:$4 sm:$0xff]
    %vm4007 = vcmask 261120
    %s4008 = scalar_lea.vmem [#allocation0], 116
    %4009 = vst.msk [vmem:[%s4008] ss:$8 sm:$0x3] %vm4007, %v4006
    %s4010 = scalar_lea.vmem [#allocation0], 101
    %4011 = vst.msk [vmem:[%s4010] ss:$8 sm:$0xc] %vm4007, %v4006
    %s4012 = scalar_lea.vmem [#allocation0], 86
    %4013 = vst.msk [vmem:[%s4012] ss:$8 sm:$0x30] %vm4007, %v4006
    %s4014 = scalar_lea.vmem [#allocation0], 71
    %4015 = vst.msk [vmem:[%s4014] ss:$8 sm:$0xc0] %vm4007, %v4006
    %s4016 = scalar_lea.vmem [#allocation1], 512
    %v4017 = vld [vmem:[%s4016] ss:$4 sm:$0xff]
    %vm4018 = vcmask 261120
    %s4019 = scalar_lea.vmem [#allocation0], 128
    %4020 = vst.msk [vmem:[%s4019] ss:$8 sm:$0x3] %vm4018, %v4017
    %s4021 = scalar_lea.vmem [#allocation0], 113
    %4022 = vst.msk [vmem:[%s4021] ss:$8 sm:$0xc] %vm4018, %v4017
    %s4023 = scalar_lea.vmem [#allocation0], 98
    %4024 = vst.msk [vmem:[%s4023] ss:$8 sm:$0x30] %vm4018, %v4017
    %s4025 = scalar_lea.vmem [#allocation0], 83
    %4026 = vst.msk [vmem:[%s4025] ss:$8 sm:$0xc0] %vm4018, %v4017
    %s4027 = scalar_lea.vmem [#allocation1], 544
    %v4028 = vld [vmem:[%s4027] ss:$4 sm:$0xff]
    %vm4029 = vcmask 261120
    %s4030 = scalar_lea.vmem [#allocation0], 132
    %4031 = vst.msk [vmem:[%s4030] ss:$8 sm:$0x3] %vm4029, %v4028
    %s4032 = scalar_lea.vmem [#allocation0], 117
    %4033 = vst.msk [vmem:[%s4032] ss:$8 sm:$0xc] %vm4029, %v4028
    %s4034 = scalar_lea.vmem [#allocation0], 102
    %4035 = vst.msk [vmem:[%s4034] ss:$8 sm:$0x30] %vm4029, %v4028
    %s4036 = scalar_lea.vmem [#allocation0], 87
    %4037 = vst.msk [vmem:[%s4036] ss:$8 sm:$0xc0] %vm4029, %v4028
    %s4038 = scalar_lea.vmem [#allocation1], 576
    %v4039 = vld [vmem:[%s4038] ss:$4 sm:$0xff]
    %vm4040 = vcmask 261120
    %s4041 = scalar_lea.vmem [#allocation0], 144
    %4042 = vst.msk [vmem:[%s4041] ss:$8 sm:$0x3] %vm4040, %v4039
    %s4043 = scalar_lea.vmem [#allocation0], 129
    %4044 = vst.msk [vmem:[%s4043] ss:$8 sm:$0xc] %vm4040, %v4039
    %s4045 = scalar_lea.vmem [#allocation0], 114
    %4046 = vst.msk [vmem:[%s4045] ss:$8 sm:$0x30] %vm4040, %v4039
    %s4047 = scalar_lea.vmem [#allocation0], 99
    %4048 = vst.msk [vmem:[%s4047] ss:$8 sm:$0xc0] %vm4040, %v4039
    %s4049 = scalar_lea.vmem [#allocation1], 608
    %v4050 = vld [vmem:[%s4049] ss:$4 sm:$0xff]
    %vm4051 = vcmask 261120
    %s4052 = scalar_lea.vmem [#allocation0], 148
    %4053 = vst.msk [vmem:[%s4052] ss:$8 sm:$0x3] %vm4051, %v4050
    %s4054 = scalar_lea.vmem [#allocation0], 133
    %4055 = vst.msk [vmem:[%s4054] ss:$8 sm:$0xc] %vm4051, %v4050
    %s4056 = scalar_lea.vmem [#allocation0], 118
    %4057 = vst.msk [vmem:[%s4056] ss:$8 sm:$0x30] %vm4051, %v4050
    %s4058 = scalar_lea.vmem [#allocation0], 103
    %4059 = vst.msk [vmem:[%s4058] ss:$8 sm:$0xc0] %vm4051, %v4050
    %s4060 = scalar_lea.vmem [#allocation1], 640
    %v4061 = vld [vmem:[%s4060] ss:$4 sm:$0xff]
    %vm4062 = vcmask 261120
    %s4063 = scalar_lea.vmem [#allocation0], 160
    %4064 = vst.msk [vmem:[%s4063] ss:$8 sm:$0x3] %vm4062, %v4061
    %s4065 = scalar_lea.vmem [#allocation0], 145
    %4066 = vst.msk [vmem:[%s4065] ss:$8 sm:$0xc] %vm4062, %v4061
    %s4067 = scalar_lea.vmem [#allocation0], 130
    %4068 = vst.msk [vmem:[%s4067] ss:$8 sm:$0x30] %vm4062, %v4061
    %s4069 = scalar_lea.vmem [#allocation0], 115
    %4070 = vst.msk [vmem:[%s4069] ss:$8 sm:$0xc0] %vm4062, %v4061
    %s4071 = scalar_lea.vmem [#allocation1], 672
    %v4072 = vld [vmem:[%s4071] ss:$4 sm:$0xff]
    %vm4073 = vcmask 261120
    %s4074 = scalar_lea.vmem [#allocation0], 164
    %4075 = vst.msk [vmem:[%s4074] ss:$8 sm:$0x3] %vm4073, %v4072
    %s4076 = scalar_lea.vmem [#allocation0], 149
    %4077 = vst.msk [vmem:[%s4076] ss:$8 sm:$0xc] %vm4073, %v4072
    %s4078 = scalar_lea.vmem [#allocation0], 134
    %4079 = vst.msk [vmem:[%s4078] ss:$8 sm:$0x30] %vm4073, %v4072
    %s4080 = scalar_lea.vmem [#allocation0], 119
    %4081 = vst.msk [vmem:[%s4080] ss:$8 sm:$0xc0] %vm4073, %v4072
    %s4082 = scalar_lea.vmem [#allocation1], 704
    %v4083 = vld [vmem:[%s4082] ss:$4 sm:$0xff]
    %vm4084 = vcmask 261120
    %s4085 = scalar_lea.vmem [#allocation0], 176
    %4086 = vst.msk [vmem:[%s4085] ss:$8 sm:$0x3] %vm4084, %v4083
    %s4087 = scalar_lea.vmem [#allocation0], 161
    %4088 = vst.msk [vmem:[%s4087] ss:$8 sm:$0xc] %vm4084, %v4083
    %s4089 = scalar_lea.vmem [#allocation0], 146
    %4090 = vst.msk [vmem:[%s4089] ss:$8 sm:$0x30] %vm4084, %v4083
    %s4091 = scalar_lea.vmem [#allocation0], 131
    %4092 = vst.msk [vmem:[%s4091] ss:$8 sm:$0xc0] %vm4084, %v4083
    %s4093 = scalar_lea.vmem [#allocation1], 736
    %v4094 = vld [vmem:[%s4093] ss:$4 sm:$0xff]
    %vm4095 = vcmask 261120
    %s4096 = scalar_lea.vmem [#allocation0], 180
    %4097 = vst.msk [vmem:[%s4096] ss:$8 sm:$0x3] %vm4095, %v4094
    %s4098 = scalar_lea.vmem [#allocation0], 165
    %4099 = vst.msk [vmem:[%s4098] ss:$8 sm:$0xc] %vm4095, %v4094
    %s4100 = scalar_lea.vmem [#allocation0], 150
    %4101 = vst.msk [vmem:[%s4100] ss:$8 sm:$0x30] %vm4095, %v4094
    %s4102 = scalar_lea.vmem [#allocation0], 135
    %4103 = vst.msk [vmem:[%s4102] ss:$8 sm:$0xc0] %vm4095, %v4094
    %s4104 = scalar_lea.vmem [#allocation1], 768
    %v4105 = vld [vmem:[%s4104] ss:$4 sm:$0xff]
    %vm4106 = vcmask 261120
    %s4107 = scalar_lea.vmem [#allocation0], 192
    %4108 = vst.msk [vmem:[%s4107] ss:$8 sm:$0x3] %vm4106, %v4105
    %s4109 = scalar_lea.vmem [#allocation0], 177
    %4110 = vst.msk [vmem:[%s4109] ss:$8 sm:$0xc] %vm4106, %v4105
    %s4111 = scalar_lea.vmem [#allocation0], 162
    %4112 = vst.msk [vmem:[%s4111] ss:$8 sm:$0x30] %vm4106, %v4105
    %s4113 = scalar_lea.vmem [#allocation0], 147
    %4114 = vst.msk [vmem:[%s4113] ss:$8 sm:$0xc0] %vm4106, %v4105
    %s4115 = scalar_lea.vmem [#allocation1], 800
    %v4116 = vld [vmem:[%s4115] ss:$4 sm:$0xff]
    %vm4117 = vcmask 261120
    %s4118 = scalar_lea.vmem [#allocation0], 196
    %4119 = vst.msk [vmem:[%s4118] ss:$8 sm:$0x3] %vm4117, %v4116
    %s4120 = scalar_lea.vmem [#allocation0], 181
    %4121 = vst.msk [vmem:[%s4120] ss:$8 sm:$0xc] %vm4117, %v4116
    %s4122 = scalar_lea.vmem [#allocation0], 166
    %4123 = vst.msk [vmem:[%s4122] ss:$8 sm:$0x30] %vm4117, %v4116
    %s4124 = scalar_lea.vmem [#allocation0], 151
    %4125 = vst.msk [vmem:[%s4124] ss:$8 sm:$0xc0] %vm4117, %v4116
    %s4126 = scalar_lea.vmem [#allocation1], 832
    %v4127 = vld [vmem:[%s4126] ss:$4 sm:$0xff]
    %vm4128 = vcmask 261120
    %s4129 = scalar_lea.vmem [#allocation0], 208
    %4130 = vst.msk [vmem:[%s4129] ss:$8 sm:$0x3] %vm4128, %v4127
    %s4131 = scalar_lea.vmem [#allocation0], 193
    %4132 = vst.msk [vmem:[%s4131] ss:$8 sm:$0xc] %vm4128, %v4127
    %s4133 = scalar_lea.vmem [#allocation0], 178
    %4134 = vst.msk [vmem:[%s4133] ss:$8 sm:$0x30] %vm4128, %v4127
    %s4135 = scalar_lea.vmem [#allocation0], 163
    %4136 = vst.msk [vmem:[%s4135] ss:$8 sm:$0xc0] %vm4128, %v4127
    %s4137 = scalar_lea.vmem [#allocation1], 864
    %v4138 = vld [vmem:[%s4137] ss:$4 sm:$0xff]
    %vm4139 = vcmask 261120
    %s4140 = scalar_lea.vmem [#allocation0], 212
    %4141 = vst.msk [vmem:[%s4140] ss:$8 sm:$0x3] %vm4139, %v4138
    %s4142 = scalar_lea.vmem [#allocation0], 197
    %4143 = vst.msk [vmem:[%s4142] ss:$8 sm:$0xc] %vm4139, %v4138
    %s4144 = scalar_lea.vmem [#allocation0], 182
    %4145 = vst.msk [vmem:[%s4144] ss:$8 sm:$0x30] %vm4139, %v4138
    %s4146 = scalar_lea.vmem [#allocation0], 167
    %4147 = vst.msk [vmem:[%s4146] ss:$8 sm:$0xc0] %vm4139, %v4138
    %s4148 = scalar_lea.vmem [#allocation1], 896
    %v4149 = vld [vmem:[%s4148] ss:$4 sm:$0xff]
    %vm4150 = vcmask 261120
    %s4151 = scalar_lea.vmem [#allocation0], 224
    %4152 = vst.msk [vmem:[%s4151] ss:$8 sm:$0x3] %vm4150, %v4149
    %s4153 = scalar_lea.vmem [#allocation0], 209
    %4154 = vst.msk [vmem:[%s4153] ss:$8 sm:$0xc] %vm4150, %v4149
    %s4155 = scalar_lea.vmem [#allocation0], 194
    %4156 = vst.msk [vmem:[%s4155] ss:$8 sm:$0x30] %vm4150, %v4149
    %s4157 = scalar_lea.vmem [#allocation0], 179
    %4158 = vst.msk [vmem:[%s4157] ss:$8 sm:$0xc0] %vm4150, %v4149
    %s4159 = scalar_lea.vmem [#allocation1], 928
    %v4160 = vld [vmem:[%s4159] ss:$4 sm:$0xff]
    %vm4161 = vcmask 261120
    %s4162 = scalar_lea.vmem [#allocation0], 228
    %4163 = vst.msk [vmem:[%s4162] ss:$8 sm:$0x3] %vm4161, %v4160
    %s4164 = scalar_lea.vmem [#allocation0], 213
    %4165 = vst.msk [vmem:[%s4164] ss:$8 sm:$0xc] %vm4161, %v4160
    %s4166 = scalar_lea.vmem [#allocation0], 198
    %4167 = vst.msk [vmem:[%s4166] ss:$8 sm:$0x30] %vm4161, %v4160
    %s4168 = scalar_lea.vmem [#allocation0], 183
    %4169 = vst.msk [vmem:[%s4168] ss:$8 sm:$0xc0] %vm4161, %v4160
    %s4170 = scalar_lea.vmem [#allocation1], 960
    %v4171 = vld [vmem:[%s4170] ss:$4 sm:$0xff]
    %vm4172 = vcmask 261120
    %s4173 = scalar_lea.vmem [#allocation0], 240
    %4174 = vst.msk [vmem:[%s4173] ss:$8 sm:$0x3] %vm4172, %v4171
    %s4175 = scalar_lea.vmem [#allocation0], 225
    %4176 = vst.msk [vmem:[%s4175] ss:$8 sm:$0xc] %vm4172, %v4171
    %s4177 = scalar_lea.vmem [#allocation0], 210
    %4178 = vst.msk [vmem:[%s4177] ss:$8 sm:$0x30] %vm4172, %v4171
    %s4179 = scalar_lea.vmem [#allocation0], 195
    %4180 = vst.msk [vmem:[%s4179] ss:$8 sm:$0xc0] %vm4172, %v4171
    %s4181 = scalar_lea.vmem [#allocation1], 992
    %v4182 = vld [vmem:[%s4181] ss:$4 sm:$0xff]
    %vm4183 = vcmask 261120
    %s4184 = scalar_lea.vmem [#allocation0], 244
    %4185 = vst.msk [vmem:[%s4184] ss:$8 sm:$0x3] %vm4183, %v4182
    %s4186 = scalar_lea.vmem [#allocation0], 229
    %4187 = vst.msk [vmem:[%s4186] ss:$8 sm:$0xc] %vm4183, %v4182
    %s4188 = scalar_lea.vmem [#allocation0], 214
    %4189 = vst.msk [vmem:[%s4188] ss:$8 sm:$0x30] %vm4183, %v4182
    %s4190 = scalar_lea.vmem [#allocation0], 199
    %4191 = vst.msk [vmem:[%s4190] ss:$8 sm:$0xc0] %vm4183, %v4182
    %s4192 = scalar_lea.vmem [#allocation1], 1024
    %v4193 = vld [vmem:[%s4192] ss:$4 sm:$0xff]
    %vm4194 = vcmask 261120
    %s4195 = scalar_lea.vmem [#allocation0], 256
    %4196 = vst.msk [vmem:[%s4195] ss:$8 sm:$0x3] %vm4194, %v4193
    %s4197 = scalar_lea.vmem [#allocation0], 241
    %4198 = vst.msk [vmem:[%s4197] ss:$8 sm:$0xc] %vm4194, %v4193
    %s4199 = scalar_lea.vmem [#allocation0], 226
    %4200 = vst.msk [vmem:[%s4199] ss:$8 sm:$0x30] %vm4194, %v4193
    %s4201 = scalar_lea.vmem [#allocation0], 211
    %4202 = vst.msk [vmem:[%s4201] ss:$8 sm:$0xc0] %vm4194, %v4193
    %s4203 = scalar_lea.vmem [#allocation1], 1056
    %v4204 = vld [vmem:[%s4203] ss:$4 sm:$0xff]
    %vm4205 = vcmask 261120
    %s4206 = scalar_lea.vmem [#allocation0], 260
    %4207 = vst.msk [vmem:[%s4206] ss:$8 sm:$0x3] %vm4205, %v4204
    %s4208 = scalar_lea.vmem [#allocation0], 245
    %4209 = vst.msk [vmem:[%s4208] ss:$8 sm:$0xc] %vm4205, %v4204
    %s4210 = scalar_lea.vmem [#allocation0], 230
    %4211 = vst.msk [vmem:[%s4210] ss:$8 sm:$0x30] %vm4205, %v4204
    %s4212 = scalar_lea.vmem [#allocation0], 215
    %4213 = vst.msk [vmem:[%s4212] ss:$8 sm:$0xc0] %vm4205, %v4204
    %s4214 = scalar_lea.vmem [#allocation1], 1088
    %v4215 = vld [vmem:[%s4214] ss:$4 sm:$0xff]
    %vm4216 = vcmask 261120
    %s4217 = scalar_lea.vmem [#allocation0], 272
    %4218 = vst.msk [vmem:[%s4217] ss:$8 sm:$0x3] %vm4216, %v4215
    %s4219 = scalar_lea.vmem [#allocation0], 257
    %4220 = vst.msk [vmem:[%s4219] ss:$8 sm:$0xc] %vm4216, %v4215
    %s4221 = scalar_lea.vmem [#allocation0], 242
    %4222 = vst.msk [vmem:[%s4221] ss:$8 sm:$0x30] %vm4216, %v4215
    %s4223 = scalar_lea.vmem [#allocation0], 227
    %4224 = vst.msk [vmem:[%s4223] ss:$8 sm:$0xc0] %vm4216, %v4215
    %s4225 = scalar_lea.vmem [#allocation1], 1120
    %v4226 = vld [vmem:[%s4225] ss:$4 sm:$0xff]
    %vm4227 = vcmask 261120
    %s4228 = scalar_lea.vmem [#allocation0], 276
    %4229 = vst.msk [vmem:[%s4228] ss:$8 sm:$0x3] %vm4227, %v4226
    %s4230 = scalar_lea.vmem [#allocation0], 261
    %4231 = vst.msk [vmem:[%s4230] ss:$8 sm:$0xc] %vm4227, %v4226
    %s4232 = scalar_lea.vmem [#allocation0], 246
    %4233 = vst.msk [vmem:[%s4232] ss:$8 sm:$0x30] %vm4227, %v4226
    %s4234 = scalar_lea.vmem [#allocation0], 231
    %4235 = vst.msk [vmem:[%s4234] ss:$8 sm:$0xc0] %vm4227, %v4226
    %s4236 = scalar_lea.vmem [#allocation1], 1152
    %v4237 = vld [vmem:[%s4236] ss:$4 sm:$0xff]
    %vm4238 = vcmask 261120
    %s4239 = scalar_lea.vmem [#allocation0], 288
    %4240 = vst.msk [vmem:[%s4239] ss:$8 sm:$0x3] %vm4238, %v4237
    %s4241 = scalar_lea.vmem [#allocation0], 273
    %4242 = vst.msk [vmem:[%s4241] ss:$8 sm:$0xc] %vm4238, %v4237
    %s4243 = scalar_lea.vmem [#allocation0], 258
    %4244 = vst.msk [vmem:[%s4243] ss:$8 sm:$0x30] %vm4238, %v4237
    %s4245 = scalar_lea.vmem [#allocation0], 243
    %4246 = vst.msk [vmem:[%s4245] ss:$8 sm:$0xc0] %vm4238, %v4237
    %s4247 = scalar_lea.vmem [#allocation1], 1184
    %v4248 = vld [vmem:[%s4247] ss:$4 sm:$0xff]
    %vm4249 = vcmask 261120
    %s4250 = scalar_lea.vmem [#allocation0], 292
    %4251 = vst.msk [vmem:[%s4250] ss:$8 sm:$0x3] %vm4249, %v4248
    %s4252 = scalar_lea.vmem [#allocation0], 277
    %4253 = vst.msk [vmem:[%s4252] ss:$8 sm:$0xc] %vm4249, %v4248
    %s4254 = scalar_lea.vmem [#allocation0], 262
    %4255 = vst.msk [vmem:[%s4254] ss:$8 sm:$0x30] %vm4249, %v4248
    %s4256 = scalar_lea.vmem [#allocation0], 247
    %4257 = vst.msk [vmem:[%s4256] ss:$8 sm:$0xc0] %vm4249, %v4248
    %s4258 = scalar_lea.vmem [#allocation1], 1216
    %v4259 = vld [vmem:[%s4258] ss:$4 sm:$0xff]
    %vm4260 = vcmask 261120
    %s4261 = scalar_lea.vmem [#allocation0], 304
    %4262 = vst.msk [vmem:[%s4261] ss:$8 sm:$0x3] %vm4260, %v4259
    %s4263 = scalar_lea.vmem [#allocation0], 289
    %4264 = vst.msk [vmem:[%s4263] ss:$8 sm:$0xc] %vm4260, %v4259
    %s4265 = scalar_lea.vmem [#allocation0], 274
    %4266 = vst.msk [vmem:[%s4265] ss:$8 sm:$0x30] %vm4260, %v4259
    %s4267 = scalar_lea.vmem [#allocation0], 259
    %4268 = vst.msk [vmem:[%s4267] ss:$8 sm:$0xc0] %vm4260, %v4259
    %s4269 = scalar_lea.vmem [#allocation1], 1248
    %v4270 = vld [vmem:[%s4269] ss:$4 sm:$0xff]
    %vm4271 = vcmask 261120
    %s4272 = scalar_lea.vmem [#allocation0], 308
    %4273 = vst.msk [vmem:[%s4272] ss:$8 sm:$0x3] %vm4271, %v4270
    %s4274 = scalar_lea.vmem [#allocation0], 293
    %4275 = vst.msk [vmem:[%s4274] ss:$8 sm:$0xc] %vm4271, %v4270
    %s4276 = scalar_lea.vmem [#allocation0], 278
    %4277 = vst.msk [vmem:[%s4276] ss:$8 sm:$0x30] %vm4271, %v4270
    %s4278 = scalar_lea.vmem [#allocation0], 263
    %4279 = vst.msk [vmem:[%s4278] ss:$8 sm:$0xc0] %vm4271, %v4270
    %s4280 = scalar_lea.vmem [#allocation1], 1280
    %v4281 = vld [vmem:[%s4280] ss:$4 sm:$0xff]
    %vm4282 = vcmask 261120
    %s4283 = scalar_lea.vmem [#allocation0], 320
    %4284 = vst.msk [vmem:[%s4283] ss:$8 sm:$0x3] %vm4282, %v4281
    %s4285 = scalar_lea.vmem [#allocation0], 305
    %4286 = vst.msk [vmem:[%s4285] ss:$8 sm:$0xc] %vm4282, %v4281
    %s4287 = scalar_lea.vmem [#allocation0], 290
    %4288 = vst.msk [vmem:[%s4287] ss:$8 sm:$0x30] %vm4282, %v4281
    %s4289 = scalar_lea.vmem [#allocation0], 275
    %4290 = vst.msk [vmem:[%s4289] ss:$8 sm:$0xc0] %vm4282, %v4281
    %s4291 = scalar_lea.vmem [#allocation1], 1312
    %v4292 = vld [vmem:[%s4291] ss:$4 sm:$0xff]
    %vm4293 = vcmask 261120
    %s4294 = scalar_lea.vmem [#allocation0], 324
    %4295 = vst.msk [vmem:[%s4294] ss:$8 sm:$0x3] %vm4293, %v4292
    %s4296 = scalar_lea.vmem [#allocation0], 309
    %4297 = vst.msk [vmem:[%s4296] ss:$8 sm:$0xc] %vm4293, %v4292
    %s4298 = scalar_lea.vmem [#allocation0], 294
    %4299 = vst.msk [vmem:[%s4298] ss:$8 sm:$0x30] %vm4293, %v4292
    %s4300 = scalar_lea.vmem [#allocation0], 279
    %4301 = vst.msk [vmem:[%s4300] ss:$8 sm:$0xc0] %vm4293, %v4292
    %s4302 = scalar_lea.vmem [#allocation1], 1344
    %v4303 = vld [vmem:[%s4302] ss:$4 sm:$0xff]
    %vm4304 = vcmask 261120
    %s4305 = scalar_lea.vmem [#allocation0], 336
    %4306 = vst.msk [vmem:[%s4305] ss:$8 sm:$0x3] %vm4304, %v4303
    %s4307 = scalar_lea.vmem [#allocation0], 321
    %4308 = vst.msk [vmem:[%s4307] ss:$8 sm:$0xc] %vm4304, %v4303
    %s4309 = scalar_lea.vmem [#allocation0], 306
    %4310 = vst.msk [vmem:[%s4309] ss:$8 sm:$0x30] %vm4304, %v4303
    %s4311 = scalar_lea.vmem [#allocation0], 291
    %4312 = vst.msk [vmem:[%s4311] ss:$8 sm:$0xc0] %vm4304, %v4303
    %s4313 = scalar_lea.vmem [#allocation1], 1376
    %v4314 = vld [vmem:[%s4313] ss:$4 sm:$0xff]
    %vm4315 = vcmask 261120
    %s4316 = scalar_lea.vmem [#allocation0], 340
    %4317 = vst.msk [vmem:[%s4316] ss:$8 sm:$0x3] %vm4315, %v4314
    %s4318 = scalar_lea.vmem [#allocation0], 325
    %4319 = vst.msk [vmem:[%s4318] ss:$8 sm:$0xc] %vm4315, %v4314
    %s4320 = scalar_lea.vmem [#allocation0], 310
    %4321 = vst.msk [vmem:[%s4320] ss:$8 sm:$0x30] %vm4315, %v4314
    %s4322 = scalar_lea.vmem [#allocation0], 295
    %4323 = vst.msk [vmem:[%s4322] ss:$8 sm:$0xc0] %vm4315, %v4314
    %s4324 = scalar_lea.vmem [#allocation1], 1408
    %v4325 = vld [vmem:[%s4324] ss:$4 sm:$0xff]
    %vm4326 = vcmask 261120
    %s4327 = scalar_lea.vmem [#allocation0], 352
    %4328 = vst.msk [vmem:[%s4327] ss:$8 sm:$0x3] %vm4326, %v4325
    %s4329 = scalar_lea.vmem [#allocation0], 337
    %4330 = vst.msk [vmem:[%s4329] ss:$8 sm:$0xc] %vm4326, %v4325
    %s4331 = scalar_lea.vmem [#allocation0], 322
    %4332 = vst.msk [vmem:[%s4331] ss:$8 sm:$0x30] %vm4326, %v4325
    %s4333 = scalar_lea.vmem [#allocation0], 307
    %4334 = vst.msk [vmem:[%s4333] ss:$8 sm:$0xc0] %vm4326, %v4325
    %s4335 = scalar_lea.vmem [#allocation1], 1440
    %v4336 = vld [vmem:[%s4335] ss:$4 sm:$0xff]
    %vm4337 = vcmask 261120
    %s4338 = scalar_lea.vmem [#allocation0], 356
    %4339 = vst.msk [vmem:[%s4338] ss:$8 sm:$0x3] %vm4337, %v4336
    %s4340 = scalar_lea.vmem [#allocation0], 341
    %4341 = vst.msk [vmem:[%s4340] ss:$8 sm:$0xc] %vm4337, %v4336
    %s4342 = scalar_lea.vmem [#allocation0], 326
    %4343 = vst.msk [vmem:[%s4342] ss:$8 sm:$0x30] %vm4337, %v4336
    %s4344 = scalar_lea.vmem [#allocation0], 311
    %4345 = vst.msk [vmem:[%s4344] ss:$8 sm:$0xc0] %vm4337, %v4336
    %s4346 = scalar_lea.vmem [#allocation1], 1472
    %v4347 = vld [vmem:[%s4346] ss:$4 sm:$0xff]
    %vm4348 = vcmask 261120
    %s4349 = scalar_lea.vmem [#allocation0], 368
    %4350 = vst.msk [vmem:[%s4349] ss:$8 sm:$0x3] %vm4348, %v4347
    %s4351 = scalar_lea.vmem [#allocation0], 353
    %4352 = vst.msk [vmem:[%s4351] ss:$8 sm:$0xc] %vm4348, %v4347
    %s4353 = scalar_lea.vmem [#allocation0], 338
    %4354 = vst.msk [vmem:[%s4353] ss:$8 sm:$0x30] %vm4348, %v4347
    %s4355 = scalar_lea.vmem [#allocation0], 323
    %4356 = vst.msk [vmem:[%s4355] ss:$8 sm:$0xc0] %vm4348, %v4347
    %s4357 = scalar_lea.vmem [#allocation1], 1504
    %v4358 = vld [vmem:[%s4357] ss:$4 sm:$0xff]
    %vm4359 = vcmask 261120
    %s4360 = scalar_lea.vmem [#allocation0], 372
    %4361 = vst.msk [vmem:[%s4360] ss:$8 sm:$0x3] %vm4359, %v4358
    %s4362 = scalar_lea.vmem [#allocation0], 357
    %4363 = vst.msk [vmem:[%s4362] ss:$8 sm:$0xc] %vm4359, %v4358
    %s4364 = scalar_lea.vmem [#allocation0], 342
    %4365 = vst.msk [vmem:[%s4364] ss:$8 sm:$0x30] %vm4359, %v4358
    %s4366 = scalar_lea.vmem [#allocation0], 327
    %4367 = vst.msk [vmem:[%s4366] ss:$8 sm:$0xc0] %vm4359, %v4358
    %s4368 = scalar_lea.vmem [#allocation1], 1536
    %v4369 = vld [vmem:[%s4368] ss:$4 sm:$0xff]
    %vm4370 = vcmask 261120
    %s4371 = scalar_lea.vmem [#allocation0], 384
    %4372 = vst.msk [vmem:[%s4371] ss:$8 sm:$0x3] %vm4370, %v4369
    %s4373 = scalar_lea.vmem [#allocation0], 369
    %4374 = vst.msk [vmem:[%s4373] ss:$8 sm:$0xc] %vm4370, %v4369
    %s4375 = scalar_lea.vmem [#allocation0], 354
    %4376 = vst.msk [vmem:[%s4375] ss:$8 sm:$0x30] %vm4370, %v4369
    %s4377 = scalar_lea.vmem [#allocation0], 339
    %4378 = vst.msk [vmem:[%s4377] ss:$8 sm:$0xc0] %vm4370, %v4369
    %s4379 = scalar_lea.vmem [#allocation1], 1568
    %v4380 = vld [vmem:[%s4379] ss:$4 sm:$0xff]
    %vm4381 = vcmask 261120
    %s4382 = scalar_lea.vmem [#allocation0], 388
    %4383 = vst.msk [vmem:[%s4382] ss:$8 sm:$0x3] %vm4381, %v4380
    %s4384 = scalar_lea.vmem [#allocation0], 373
    %4385 = vst.msk [vmem:[%s4384] ss:$8 sm:$0xc] %vm4381, %v4380
    %s4386 = scalar_lea.vmem [#allocation0], 358
    %4387 = vst.msk [vmem:[%s4386] ss:$8 sm:$0x30] %vm4381, %v4380
    %s4388 = scalar_lea.vmem [#allocation0], 343
    %4389 = vst.msk [vmem:[%s4388] ss:$8 sm:$0xc0] %vm4381, %v4380
    %s4390 = scalar_lea.vmem [#allocation1], 1600
    %v4391 = vld [vmem:[%s4390] ss:$4 sm:$0xff]
    %vm4392 = vcmask 261120
    %s4393 = scalar_lea.vmem [#allocation0], 400
    %4394 = vst.msk [vmem:[%s4393] ss:$8 sm:$0x3] %vm4392, %v4391
    %s4395 = scalar_lea.vmem [#allocation0], 385
    %4396 = vst.msk [vmem:[%s4395] ss:$8 sm:$0xc] %vm4392, %v4391
    %s4397 = scalar_lea.vmem [#allocation0], 370
    %4398 = vst.msk [vmem:[%s4397] ss:$8 sm:$0x30] %vm4392, %v4391
    %s4399 = scalar_lea.vmem [#allocation0], 355
    %4400 = vst.msk [vmem:[%s4399] ss:$8 sm:$0xc0] %vm4392, %v4391
    %s4401 = scalar_lea.vmem [#allocation1], 1632
    %v4402 = vld [vmem:[%s4401] ss:$4 sm:$0xff]
    %vm4403 = vcmask 261120
    %s4404 = scalar_lea.vmem [#allocation0], 404
    %4405 = vst.msk [vmem:[%s4404] ss:$8 sm:$0x3] %vm4403, %v4402
    %s4406 = scalar_lea.vmem [#allocation0], 389
    %4407 = vst.msk [vmem:[%s4406] ss:$8 sm:$0xc] %vm4403, %v4402
    %s4408 = scalar_lea.vmem [#allocation0], 374
    %4409 = vst.msk [vmem:[%s4408] ss:$8 sm:$0x30] %vm4403, %v4402
    %s4410 = scalar_lea.vmem [#allocation0], 359
    %4411 = vst.msk [vmem:[%s4410] ss:$8 sm:$0xc0] %vm4403, %v4402
    %s4412 = scalar_lea.vmem [#allocation1], 1664
    %v4413 = vld [vmem:[%s4412] ss:$4 sm:$0xff]
    %vm4414 = vcmask 261120
    %s4415 = scalar_lea.vmem [#allocation0], 416
    %4416 = vst.msk [vmem:[%s4415] ss:$8 sm:$0x3] %vm4414, %v4413
    %s4417 = scalar_lea.vmem [#allocation0], 401
    %4418 = vst.msk [vmem:[%s4417] ss:$8 sm:$0xc] %vm4414, %v4413
    %s4419 = scalar_lea.vmem [#allocation0], 386
    %4420 = vst.msk [vmem:[%s4419] ss:$8 sm:$0x30] %vm4414, %v4413
    %s4421 = scalar_lea.vmem [#allocation0], 371
    %4422 = vst.msk [vmem:[%s4421] ss:$8 sm:$0xc0] %vm4414, %v4413
    %s4423 = scalar_lea.vmem [#allocation1], 1696
    %v4424 = vld [vmem:[%s4423] ss:$4 sm:$0xff]
    %vm4425 = vcmask 261120
    %s4426 = scalar_lea.vmem [#allocation0], 420
    %4427 = vst.msk [vmem:[%s4426] ss:$8 sm:$0x3] %vm4425, %v4424
    %s4428 = scalar_lea.vmem [#allocation0], 405
    %4429 = vst.msk [vmem:[%s4428] ss:$8 sm:$0xc] %vm4425, %v4424
    %s4430 = scalar_lea.vmem [#allocation0], 390
    %4431 = vst.msk [vmem:[%s4430] ss:$8 sm:$0x30] %vm4425, %v4424
    %s4432 = scalar_lea.vmem [#allocation0], 375
    %4433 = vst.msk [vmem:[%s4432] ss:$8 sm:$0xc0] %vm4425, %v4424
    %s4434 = scalar_lea.vmem [#allocation1], 1728
    %v4435 = vld [vmem:[%s4434] ss:$4 sm:$0xff]
    %vm4436 = vcmask 261120
    %s4437 = scalar_lea.vmem [#allocation0], 432
    %4438 = vst.msk [vmem:[%s4437] ss:$8 sm:$0x3] %vm4436, %v4435
    %s4439 = scalar_lea.vmem [#allocation0], 417
    %4440 = vst.msk [vmem:[%s4439] ss:$8 sm:$0xc] %vm4436, %v4435
    %s4441 = scalar_lea.vmem [#allocation0], 402
    %4442 = vst.msk [vmem:[%s4441] ss:$8 sm:$0x30] %vm4436, %v4435
    %s4443 = scalar_lea.vmem [#allocation0], 387
    %4444 = vst.msk [vmem:[%s4443] ss:$8 sm:$0xc0] %vm4436, %v4435
    %s4445 = scalar_lea.vmem [#allocation1], 1760
    %v4446 = vld [vmem:[%s4445] ss:$4 sm:$0xff]
    %vm4447 = vcmask 261120
    %s4448 = scalar_lea.vmem [#allocation0], 436
    %4449 = vst.msk [vmem:[%s4448] ss:$8 sm:$0x3] %vm4447, %v4446
    %s4450 = scalar_lea.vmem [#allocation0], 421
    %4451 = vst.msk [vmem:[%s4450] ss:$8 sm:$0xc] %vm4447, %v4446
    %s4452 = scalar_lea.vmem [#allocation0], 406
    %4453 = vst.msk [vmem:[%s4452] ss:$8 sm:$0x30] %vm4447, %v4446
    %s4454 = scalar_lea.vmem [#allocation0], 391
    %4455 = vst.msk [vmem:[%s4454] ss:$8 sm:$0xc0] %vm4447, %v4446
    %s4456 = scalar_lea.vmem [#allocation1], 1792
    %v4457 = vld [vmem:[%s4456] ss:$4 sm:$0xff]
    %vm4458 = vcmask 261120
    %s4459 = scalar_lea.vmem [#allocation0], 448
    %4460 = vst.msk [vmem:[%s4459] ss:$8 sm:$0x3] %vm4458, %v4457
    %s4461 = scalar_lea.vmem [#allocation0], 433
    %4462 = vst.msk [vmem:[%s4461] ss:$8 sm:$0xc] %vm4458, %v4457
    %s4463 = scalar_lea.vmem [#allocation0], 418
    %4464 = vst.msk [vmem:[%s4463] ss:$8 sm:$0x30] %vm4458, %v4457
    %s4465 = scalar_lea.vmem [#allocation0], 403
    %4466 = vst.msk [vmem:[%s4465] ss:$8 sm:$0xc0] %vm4458, %v4457
    %s4467 = scalar_lea.vmem [#allocation1], 1824
    %v4468 = vld [vmem:[%s4467] ss:$4 sm:$0xff]
    %vm4469 = vcmask 261120
    %s4470 = scalar_lea.vmem [#allocation0], 452
    %4471 = vst.msk [vmem:[%s4470] ss:$8 sm:$0x3] %vm4469, %v4468
    %s4472 = scalar_lea.vmem [#allocation0], 437
    %4473 = vst.msk [vmem:[%s4472] ss:$8 sm:$0xc] %vm4469, %v4468
    %s4474 = scalar_lea.vmem [#allocation0], 422
    %4475 = vst.msk [vmem:[%s4474] ss:$8 sm:$0x30] %vm4469, %v4468
    %s4476 = scalar_lea.vmem [#allocation0], 407
    %4477 = vst.msk [vmem:[%s4476] ss:$8 sm:$0xc0] %vm4469, %v4468
    %s4478 = scalar_lea.vmem [#allocation1], 1856
    %v4479 = vld [vmem:[%s4478] ss:$4 sm:$0xff]
    %vm4480 = vcmask 261120
    %s4481 = scalar_lea.vmem [#allocation0], 464
    %4482 = vst.msk [vmem:[%s4481] ss:$8 sm:$0x3] %vm4480, %v4479
    %s4483 = scalar_lea.vmem [#allocation0], 449
    %4484 = vst.msk [vmem:[%s4483] ss:$8 sm:$0xc] %vm4480, %v4479
    %s4485 = scalar_lea.vmem [#allocation0], 434
    %4486 = vst.msk [vmem:[%s4485] ss:$8 sm:$0x30] %vm4480, %v4479
    %s4487 = scalar_lea.vmem [#allocation0], 419
    %4488 = vst.msk [vmem:[%s4487] ss:$8 sm:$0xc0] %vm4480, %v4479
    %s4489 = scalar_lea.vmem [#allocation1], 1888
    %v4490 = vld [vmem:[%s4489] ss:$4 sm:$0xff]
    %vm4491 = vcmask 261120
    %s4492 = scalar_lea.vmem [#allocation0], 468
    %4493 = vst.msk [vmem:[%s4492] ss:$8 sm:$0x3] %vm4491, %v4490
    %s4494 = scalar_lea.vmem [#allocation0], 453
    %4495 = vst.msk [vmem:[%s4494] ss:$8 sm:$0xc] %vm4491, %v4490
    %s4496 = scalar_lea.vmem [#allocation0], 438
    %4497 = vst.msk [vmem:[%s4496] ss:$8 sm:$0x30] %vm4491, %v4490
    %s4498 = scalar_lea.vmem [#allocation0], 423
    %4499 = vst.msk [vmem:[%s4498] ss:$8 sm:$0xc0] %vm4491, %v4490
    %s4500 = scalar_lea.vmem [#allocation1], 1920
    %v4501 = vld [vmem:[%s4500] ss:$4 sm:$0xff]
    %vm4502 = vcmask 261120
    %s4503 = scalar_lea.vmem [#allocation0], 480
    %4504 = vst.msk [vmem:[%s4503] ss:$8 sm:$0x3] %vm4502, %v4501
    %s4505 = scalar_lea.vmem [#allocation0], 465
    %4506 = vst.msk [vmem:[%s4505] ss:$8 sm:$0xc] %vm4502, %v4501
    %s4507 = scalar_lea.vmem [#allocation0], 450
    %4508 = vst.msk [vmem:[%s4507] ss:$8 sm:$0x30] %vm4502, %v4501
    %s4509 = scalar_lea.vmem [#allocation0], 435
    %4510 = vst.msk [vmem:[%s4509] ss:$8 sm:$0xc0] %vm4502, %v4501
    %s4511 = scalar_lea.vmem [#allocation1], 1952
    %v4512 = vld [vmem:[%s4511] ss:$4 sm:$0xff]
    %vm4513 = vcmask 261120
    %s4514 = scalar_lea.vmem [#allocation0], 484
    %4515 = vst.msk [vmem:[%s4514] ss:$8 sm:$0x3] %vm4513, %v4512
    %s4516 = scalar_lea.vmem [#allocation0], 469
    %4517 = vst.msk [vmem:[%s4516] ss:$8 sm:$0xc] %vm4513, %v4512
    %s4518 = scalar_lea.vmem [#allocation0], 454
    %4519 = vst.msk [vmem:[%s4518] ss:$8 sm:$0x30] %vm4513, %v4512
    %s4520 = scalar_lea.vmem [#allocation0], 439
    %4521 = vst.msk [vmem:[%s4520] ss:$8 sm:$0xc0] %vm4513, %v4512
    %s4522 = scalar_lea.vmem [#allocation1], 1984
    %v4523 = vld [vmem:[%s4522] ss:$4 sm:$0xff]
    %vm4524 = vcmask 261120
    %s4525 = scalar_lea.vmem [#allocation0], 496
    %4526 = vst.msk [vmem:[%s4525] ss:$8 sm:$0x3] %vm4524, %v4523
    %s4527 = scalar_lea.vmem [#allocation0], 481
    %4528 = vst.msk [vmem:[%s4527] ss:$8 sm:$0xc] %vm4524, %v4523
    %s4529 = scalar_lea.vmem [#allocation0], 466
    %4530 = vst.msk [vmem:[%s4529] ss:$8 sm:$0x30] %vm4524, %v4523
    %s4531 = scalar_lea.vmem [#allocation0], 451
    %4532 = vst.msk [vmem:[%s4531] ss:$8 sm:$0xc0] %vm4524, %v4523
    %s4533 = scalar_lea.vmem [#allocation1], 2016
    %v4534 = vld [vmem:[%s4533] ss:$4 sm:$0xff]
    %vm4535 = vcmask 261120
    %s4536 = scalar_lea.vmem [#allocation0], 500
    %4537 = vst.msk [vmem:[%s4536] ss:$8 sm:$0x3] %vm4535, %v4534
    %s4538 = scalar_lea.vmem [#allocation0], 485
    %4539 = vst.msk [vmem:[%s4538] ss:$8 sm:$0xc] %vm4535, %v4534
    %s4540 = scalar_lea.vmem [#allocation0], 470
    %4541 = vst.msk [vmem:[%s4540] ss:$8 sm:$0x30] %vm4535, %v4534
    %s4542 = scalar_lea.vmem [#allocation0], 455
    %4543 = vst.msk [vmem:[%s4542] ss:$8 sm:$0xc0] %vm4535, %v4534
    %s4544 = scalar_lea.vmem [#allocation1], 3
    %v4545 = vld [vmem:[%s4544] ss:$8 sm:$0xf]
    %s4546 = scalar_lea.vmem [#allocation1], 3
    %v4547 = vld [vmem:[%s4546] ss:$8 sm:$0xf0]
    %vm4548 = vcmask 1047556
    %v4549 = vsel %vm4548, %v4547, %v4545
    %4550 = vrot.lane.b32.xlu0 %v4549, 96
    %v4551 = vpop.permute.xlu0 %4550
    %vm4552 = vcmask 1048320
    %4553 = vst.msk [vmem:[#allocation0] sm:$0xff] %vm4552, %v4551
    %s4554 = scalar_lea.vmem [#allocation1], 131
    %v4555 = vld [vmem:[%s4554] ss:$8 sm:$0xf]
    %s4556 = scalar_lea.vmem [#allocation1], 131
    %v4557 = vld [vmem:[%s4556] ss:$8 sm:$0xf0]
    %vm4558 = vcmask 1047556
    %v4559 = vsel %vm4558, %v4557, %v4555
    %4560 = vrot.lane.b32.xlu0 %v4559, 96
    %v4561 = vpop.permute.xlu0 %4560
    %vm4562 = vcmask 1048320
    %s4563 = scalar_lea.vmem [#allocation0], 32
    %4564 = vst.msk [vmem:[%s4563] sm:$0xff] %vm4562, %v4561
    %s4565 = scalar_lea.vmem [#allocation1], 259
    %v4566 = vld [vmem:[%s4565] ss:$8 sm:$0xf]
    %s4567 = scalar_lea.vmem [#allocation1], 259
    %v4568 = vld [vmem:[%s4567] ss:$8 sm:$0xf0]
    %vm4569 = vcmask 1047556
    %v4570 = vsel %vm4569, %v4568, %v4566
    %4571 = vrot.lane.b32.xlu0 %v4570, 96
    %v4572 = vpop.permute.xlu0 %4571
    %vm4573 = vcmask 1048320
    %s4574 = scalar_lea.vmem [#allocation0], 64
    %4575 = vst.msk [vmem:[%s4574] sm:$0xff] %vm4573, %v4572
    %s4576 = scalar_lea.vmem [#allocation1], 387
    %v4577 = vld [vmem:[%s4576] ss:$8 sm:$0xf]
    %s4578 = scalar_lea.vmem [#allocation1], 387
    %v4579 = vld [vmem:[%s4578] ss:$8 sm:$0xf0]
    %vm4580 = vcmask 1047556
    %v4581 = vsel %vm4580, %v4579, %v4577
    %4582 = vrot.lane.b32.xlu0 %v4581, 96
    %v4583 = vpop.permute.xlu0 %4582
    %vm4584 = vcmask 1048320
    %s4585 = scalar_lea.vmem [#allocation0], 96
    %4586 = vst.msk [vmem:[%s4585] sm:$0xff] %vm4584, %v4583
    %s4587 = scalar_lea.vmem [#allocation1], 515
    %v4588 = vld [vmem:[%s4587] ss:$8 sm:$0xf]
    %s4589 = scalar_lea.vmem [#allocation1], 515
    %v4590 = vld [vmem:[%s4589] ss:$8 sm:$0xf0]
    %vm4591 = vcmask 1047556
    %v4592 = vsel %vm4591, %v4590, %v4588
    %4593 = vrot.lane.b32.xlu0 %v4592, 96
    %v4594 = vpop.permute.xlu0 %4593
    %vm4595 = vcmask 1048320
    %s4596 = scalar_lea.vmem [#allocation0], 128
    %4597 = vst.msk [vmem:[%s4596] sm:$0xff] %vm4595, %v4594
    %s4598 = scalar_lea.vmem [#allocation1], 643
    %v4599 = vld [vmem:[%s4598] ss:$8 sm:$0xf]
    %s4600 = scalar_lea.vmem [#allocation1], 643
    %v4601 = vld [vmem:[%s4600] ss:$8 sm:$0xf0]
    %vm4602 = vcmask 1047556
    %v4603 = vsel %vm4602, %v4601, %v4599
    %4604 = vrot.lane.b32.xlu0 %v4603, 96
    %v4605 = vpop.permute.xlu0 %4604
    %vm4606 = vcmask 1048320
    %s4607 = scalar_lea.vmem [#allocation0], 160
    %4608 = vst.msk [vmem:[%s4607] sm:$0xff] %vm4606, %v4605
    %s4609 = scalar_lea.vmem [#allocation1], 771
    %v4610 = vld [vmem:[%s4609] ss:$8 sm:$0xf]
    %s4611 = scalar_lea.vmem [#allocation1], 771
    %v4612 = vld [vmem:[%s4611] ss:$8 sm:$0xf0]
    %vm4613 = vcmask 1047556
    %v4614 = vsel %vm4613, %v4612, %v4610
    %4615 = vrot.lane.b32.xlu0 %v4614, 96
    %v4616 = vpop.permute.xlu0 %4615
    %vm4617 = vcmask 1048320
    %s4618 = scalar_lea.vmem [#allocation0], 192
    %4619 = vst.msk [vmem:[%s4618] sm:$0xff] %vm4617, %v4616
    %s4620 = scalar_lea.vmem [#allocation1], 899
    %v4621 = vld [vmem:[%s4620] ss:$8 sm:$0xf]
    %s4622 = scalar_lea.vmem [#allocation1], 899
    %v4623 = vld [vmem:[%s4622] ss:$8 sm:$0xf0]
    %vm4624 = vcmask 1047556
    %v4625 = vsel %vm4624, %v4623, %v4621
    %4626 = vrot.lane.b32.xlu0 %v4625, 96
    %v4627 = vpop.permute.xlu0 %4626
    %vm4628 = vcmask 1048320
    %s4629 = scalar_lea.vmem [#allocation0], 224
    %4630 = vst.msk [vmem:[%s4629] sm:$0xff] %vm4628, %v4627
    %s4631 = scalar_lea.vmem [#allocation1], 1027
    %v4632 = vld [vmem:[%s4631] ss:$8 sm:$0xf]
    %s4633 = scalar_lea.vmem [#allocation1], 1027
    %v4634 = vld [vmem:[%s4633] ss:$8 sm:$0xf0]
    %vm4635 = vcmask 1047556
    %v4636 = vsel %vm4635, %v4634, %v4632
    %4637 = vrot.lane.b32.xlu0 %v4636, 96
    %v4638 = vpop.permute.xlu0 %4637
    %vm4639 = vcmask 1048320
    %s4640 = scalar_lea.vmem [#allocation0], 256
    %4641 = vst.msk [vmem:[%s4640] sm:$0xff] %vm4639, %v4638
    %s4642 = scalar_lea.vmem [#allocation1], 1155
    %v4643 = vld [vmem:[%s4642] ss:$8 sm:$0xf]
    %s4644 = scalar_lea.vmem [#allocation1], 1155
    %v4645 = vld [vmem:[%s4644] ss:$8 sm:$0xf0]
    %vm4646 = vcmask 1047556
    %v4647 = vsel %vm4646, %v4645, %v4643
    %4648 = vrot.lane.b32.xlu0 %v4647, 96
    %v4649 = vpop.permute.xlu0 %4648
    %vm4650 = vcmask 1048320
    %s4651 = scalar_lea.vmem [#allocation0], 288
    %4652 = vst.msk [vmem:[%s4651] sm:$0xff] %vm4650, %v4649
    %s4653 = scalar_lea.vmem [#allocation1], 1283
    %v4654 = vld [vmem:[%s4653] ss:$8 sm:$0xf]
    %s4655 = scalar_lea.vmem [#allocation1], 1283
    %v4656 = vld [vmem:[%s4655] ss:$8 sm:$0xf0]
    %vm4657 = vcmask 1047556
    %v4658 = vsel %vm4657, %v4656, %v4654
    %4659 = vrot.lane.b32.xlu0 %v4658, 96
    %v4660 = vpop.permute.xlu0 %4659
    %vm4661 = vcmask 1048320
    %s4662 = scalar_lea.vmem [#allocation0], 320
    %4663 = vst.msk [vmem:[%s4662] sm:$0xff] %vm4661, %v4660
    %s4664 = scalar_lea.vmem [#allocation1], 1411
    %v4665 = vld [vmem:[%s4664] ss:$8 sm:$0xf]
    %s4666 = scalar_lea.vmem [#allocation1], 1411
    %v4667 = vld [vmem:[%s4666] ss:$8 sm:$0xf0]
    %vm4668 = vcmask 1047556
    %v4669 = vsel %vm4668, %v4667, %v4665
    %4670 = vrot.lane.b32.xlu0 %v4669, 96
    %v4671 = vpop.permute.xlu0 %4670
    %vm4672 = vcmask 1048320
    %s4673 = scalar_lea.vmem [#allocation0], 352
    %4674 = vst.msk [vmem:[%s4673] sm:$0xff] %vm4672, %v4671
    %s4675 = scalar_lea.vmem [#allocation1], 1539
    %v4676 = vld [vmem:[%s4675] ss:$8 sm:$0xf]
    %s4677 = scalar_lea.vmem [#allocation1], 1539
    %v4678 = vld [vmem:[%s4677] ss:$8 sm:$0xf0]
    %vm4679 = vcmask 1047556
    %v4680 = vsel %vm4679, %v4678, %v4676
    %4681 = vrot.lane.b32.xlu0 %v4680, 96
    %v4682 = vpop.permute.xlu0 %4681
    %vm4683 = vcmask 1048320
    %s4684 = scalar_lea.vmem [#allocation0], 384
    %4685 = vst.msk [vmem:[%s4684] sm:$0xff] %vm4683, %v4682
    %s4686 = scalar_lea.vmem [#allocation1], 1667
    %v4687 = vld [vmem:[%s4686] ss:$8 sm:$0xf]
    %s4688 = scalar_lea.vmem [#allocation1], 1667
    %v4689 = vld [vmem:[%s4688] ss:$8 sm:$0xf0]
    %vm4690 = vcmask 1047556
    %v4691 = vsel %vm4690, %v4689, %v4687
    %4692 = vrot.lane.b32.xlu0 %v4691, 96
    %v4693 = vpop.permute.xlu0 %4692
    %vm4694 = vcmask 1048320
    %s4695 = scalar_lea.vmem [#allocation0], 416
    %4696 = vst.msk [vmem:[%s4695] sm:$0xff] %vm4694, %v4693
    %s4697 = scalar_lea.vmem [#allocation1], 1795
    %v4698 = vld [vmem:[%s4697] ss:$8 sm:$0xf]
    %s4699 = scalar_lea.vmem [#allocation1], 1795
    %v4700 = vld [vmem:[%s4699] ss:$8 sm:$0xf0]
    %vm4701 = vcmask 1047556
    %v4702 = vsel %vm4701, %v4700, %v4698
    %4703 = vrot.lane.b32.xlu0 %v4702, 96
    %v4704 = vpop.permute.xlu0 %4703
    %vm4705 = vcmask 1048320
    %s4706 = scalar_lea.vmem [#allocation0], 448
    %4707 = vst.msk [vmem:[%s4706] sm:$0xff] %vm4705, %v4704
    %s4708 = scalar_lea.vmem [#allocation1], 1923
    %v4709 = vld [vmem:[%s4708] ss:$8 sm:$0xf]
    %s4710 = scalar_lea.vmem [#allocation1], 1923
    %v4711 = vld [vmem:[%s4710] ss:$8 sm:$0xf0]
    %vm4712 = vcmask 1047556
    %v4713 = vsel %vm4712, %v4711, %v4709
    %4714 = vrot.lane.b32.xlu0 %v4713, 96
    %v4715 = vpop.permute.xlu0 %4714
    %vm4716 = vcmask 1048320
    %s4717 = scalar_lea.vmem [#allocation0], 480
    %4718 = vst.msk [vmem:[%s4717] sm:$0xff] %vm4716, %v4715
    %s4719 = scalar_lea.vmem [#allocation1], 7
    %v4720 = vld [vmem:[%s4719] ss:$8 sm:$0xf]
    %s4721 = scalar_lea.vmem [#allocation1], 7
    %v4722 = vld [vmem:[%s4721] ss:$8 sm:$0xf0]
    %vm4723 = vcmask 1047556
    %v4724 = vsel %vm4723, %v4722, %v4720
    %4725 = vrot.lane.b32.xlu0 %v4724, 96
    %v4726 = vpop.permute.xlu0 %4725
    %vm4727 = vcmask 1048320
    %s4728 = scalar_lea.vmem [#allocation0], 8
    %4729 = vst.msk [vmem:[%s4728] sm:$0xff] %vm4727, %v4726
    %s4730 = scalar_lea.vmem [#allocation1], 135
    %v4731 = vld [vmem:[%s4730] ss:$8 sm:$0xf]
    %s4732 = scalar_lea.vmem [#allocation1], 135
    %v4733 = vld [vmem:[%s4732] ss:$8 sm:$0xf0]
    %vm4734 = vcmask 1047556
    %v4735 = vsel %vm4734, %v4733, %v4731
    %4736 = vrot.lane.b32.xlu0 %v4735, 96
    %v4737 = vpop.permute.xlu0 %4736
    %vm4738 = vcmask 1048320
    %s4739 = scalar_lea.vmem [#allocation0], 40
    %4740 = vst.msk [vmem:[%s4739] sm:$0xff] %vm4738, %v4737
    %s4741 = scalar_lea.vmem [#allocation1], 263
    %v4742 = vld [vmem:[%s4741] ss:$8 sm:$0xf]
    %s4743 = scalar_lea.vmem [#allocation1], 263
    %v4744 = vld [vmem:[%s4743] ss:$8 sm:$0xf0]
    %vm4745 = vcmask 1047556
    %v4746 = vsel %vm4745, %v4744, %v4742
    %4747 = vrot.lane.b32.xlu0 %v4746, 96
    %v4748 = vpop.permute.xlu0 %4747
    %vm4749 = vcmask 1048320
    %s4750 = scalar_lea.vmem [#allocation0], 72
    %4751 = vst.msk [vmem:[%s4750] sm:$0xff] %vm4749, %v4748
    %s4752 = scalar_lea.vmem [#allocation1], 391
    %v4753 = vld [vmem:[%s4752] ss:$8 sm:$0xf]
    %s4754 = scalar_lea.vmem [#allocation1], 391
    %v4755 = vld [vmem:[%s4754] ss:$8 sm:$0xf0]
    %vm4756 = vcmask 1047556
    %v4757 = vsel %vm4756, %v4755, %v4753
    %4758 = vrot.lane.b32.xlu0 %v4757, 96
    %v4759 = vpop.permute.xlu0 %4758
    %vm4760 = vcmask 1048320
    %s4761 = scalar_lea.vmem [#allocation0], 104
    %4762 = vst.msk [vmem:[%s4761] sm:$0xff] %vm4760, %v4759
    %s4763 = scalar_lea.vmem [#allocation1], 519
    %v4764 = vld [vmem:[%s4763] ss:$8 sm:$0xf]
    %s4765 = scalar_lea.vmem [#allocation1], 519
    %v4766 = vld [vmem:[%s4765] ss:$8 sm:$0xf0]
    %vm4767 = vcmask 1047556
    %v4768 = vsel %vm4767, %v4766, %v4764
    %4769 = vrot.lane.b32.xlu0 %v4768, 96
    %v4770 = vpop.permute.xlu0 %4769
    %vm4771 = vcmask 1048320
    %s4772 = scalar_lea.vmem [#allocation0], 136
    %4773 = vst.msk [vmem:[%s4772] sm:$0xff] %vm4771, %v4770
    %s4774 = scalar_lea.vmem [#allocation1], 647
    %v4775 = vld [vmem:[%s4774] ss:$8 sm:$0xf]
    %s4776 = scalar_lea.vmem [#allocation1], 647
    %v4777 = vld [vmem:[%s4776] ss:$8 sm:$0xf0]
    %vm4778 = vcmask 1047556
    %v4779 = vsel %vm4778, %v4777, %v4775
    %4780 = vrot.lane.b32.xlu0 %v4779, 96
    %v4781 = vpop.permute.xlu0 %4780
    %vm4782 = vcmask 1048320
    %s4783 = scalar_lea.vmem [#allocation0], 168
    %4784 = vst.msk [vmem:[%s4783] sm:$0xff] %vm4782, %v4781
    %s4785 = scalar_lea.vmem [#allocation1], 775
    %v4786 = vld [vmem:[%s4785] ss:$8 sm:$0xf]
    %s4787 = scalar_lea.vmem [#allocation1], 775
    %v4788 = vld [vmem:[%s4787] ss:$8 sm:$0xf0]
    %vm4789 = vcmask 1047556
    %v4790 = vsel %vm4789, %v4788, %v4786
    %4791 = vrot.lane.b32.xlu0 %v4790, 96
    %v4792 = vpop.permute.xlu0 %4791
    %vm4793 = vcmask 1048320
    %s4794 = scalar_lea.vmem [#allocation0], 200
    %4795 = vst.msk [vmem:[%s4794] sm:$0xff] %vm4793, %v4792
    %s4796 = scalar_lea.vmem [#allocation1], 903
    %v4797 = vld [vmem:[%s4796] ss:$8 sm:$0xf]
    %s4798 = scalar_lea.vmem [#allocation1], 903
    %v4799 = vld [vmem:[%s4798] ss:$8 sm:$0xf0]
    %vm4800 = vcmask 1047556
    %v4801 = vsel %vm4800, %v4799, %v4797
    %4802 = vrot.lane.b32.xlu0 %v4801, 96
    %v4803 = vpop.permute.xlu0 %4802
    %vm4804 = vcmask 1048320
    %s4805 = scalar_lea.vmem [#allocation0], 232
    %4806 = vst.msk [vmem:[%s4805] sm:$0xff] %vm4804, %v4803
    %s4807 = scalar_lea.vmem [#allocation1], 1031
    %v4808 = vld [vmem:[%s4807] ss:$8 sm:$0xf]
    %s4809 = scalar_lea.vmem [#allocation1], 1031
    %v4810 = vld [vmem:[%s4809] ss:$8 sm:$0xf0]
    %vm4811 = vcmask 1047556
    %v4812 = vsel %vm4811, %v4810, %v4808
    %4813 = vrot.lane.b32.xlu0 %v4812, 96
    %v4814 = vpop.permute.xlu0 %4813
    %vm4815 = vcmask 1048320
    %s4816 = scalar_lea.vmem [#allocation0], 264
    %4817 = vst.msk [vmem:[%s4816] sm:$0xff] %vm4815, %v4814
    %s4818 = scalar_lea.vmem [#allocation1], 1159
    %v4819 = vld [vmem:[%s4818] ss:$8 sm:$0xf]
    %s4820 = scalar_lea.vmem [#allocation1], 1159
    %v4821 = vld [vmem:[%s4820] ss:$8 sm:$0xf0]
    %vm4822 = vcmask 1047556
    %v4823 = vsel %vm4822, %v4821, %v4819
    %4824 = vrot.lane.b32.xlu0 %v4823, 96
    %v4825 = vpop.permute.xlu0 %4824
    %vm4826 = vcmask 1048320
    %s4827 = scalar_lea.vmem [#allocation0], 296
    %4828 = vst.msk [vmem:[%s4827] sm:$0xff] %vm4826, %v4825
    %s4829 = scalar_lea.vmem [#allocation1], 1287
    %v4830 = vld [vmem:[%s4829] ss:$8 sm:$0xf]
    %s4831 = scalar_lea.vmem [#allocation1], 1287
    %v4832 = vld [vmem:[%s4831] ss:$8 sm:$0xf0]
    %vm4833 = vcmask 1047556
    %v4834 = vsel %vm4833, %v4832, %v4830
    %4835 = vrot.lane.b32.xlu0 %v4834, 96
    %v4836 = vpop.permute.xlu0 %4835
    %vm4837 = vcmask 1048320
    %s4838 = scalar_lea.vmem [#allocation0], 328
    %4839 = vst.msk [vmem:[%s4838] sm:$0xff] %vm4837, %v4836
    %s4840 = scalar_lea.vmem [#allocation1], 1415
    %v4841 = vld [vmem:[%s4840] ss:$8 sm:$0xf]
    %s4842 = scalar_lea.vmem [#allocation1], 1415
    %v4843 = vld [vmem:[%s4842] ss:$8 sm:$0xf0]
    %vm4844 = vcmask 1047556
    %v4845 = vsel %vm4844, %v4843, %v4841
    %4846 = vrot.lane.b32.xlu0 %v4845, 96
    %v4847 = vpop.permute.xlu0 %4846
    %vm4848 = vcmask 1048320
    %s4849 = scalar_lea.vmem [#allocation0], 360
    %4850 = vst.msk [vmem:[%s4849] sm:$0xff] %vm4848, %v4847
    %s4851 = scalar_lea.vmem [#allocation1], 1543
    %v4852 = vld [vmem:[%s4851] ss:$8 sm:$0xf]
    %s4853 = scalar_lea.vmem [#allocation1], 1543
    %v4854 = vld [vmem:[%s4853] ss:$8 sm:$0xf0]
    %vm4855 = vcmask 1047556
    %v4856 = vsel %vm4855, %v4854, %v4852
    %4857 = vrot.lane.b32.xlu0 %v4856, 96
    %v4858 = vpop.permute.xlu0 %4857
    %vm4859 = vcmask 1048320
    %s4860 = scalar_lea.vmem [#allocation0], 392
    %4861 = vst.msk [vmem:[%s4860] sm:$0xff] %vm4859, %v4858
    %s4862 = scalar_lea.vmem [#allocation1], 1671
    %v4863 = vld [vmem:[%s4862] ss:$8 sm:$0xf]
    %s4864 = scalar_lea.vmem [#allocation1], 1671
    %v4865 = vld [vmem:[%s4864] ss:$8 sm:$0xf0]
    %vm4866 = vcmask 1047556
    %v4867 = vsel %vm4866, %v4865, %v4863
    %4868 = vrot.lane.b32.xlu0 %v4867, 96
    %v4869 = vpop.permute.xlu0 %4868
    %vm4870 = vcmask 1048320
    %s4871 = scalar_lea.vmem [#allocation0], 424
    %4872 = vst.msk [vmem:[%s4871] sm:$0xff] %vm4870, %v4869
    %s4873 = scalar_lea.vmem [#allocation1], 1799
    %v4874 = vld [vmem:[%s4873] ss:$8 sm:$0xf]
    %s4875 = scalar_lea.vmem [#allocation1], 1799
    %v4876 = vld [vmem:[%s4875] ss:$8 sm:$0xf0]
    %vm4877 = vcmask 1047556
    %v4878 = vsel %vm4877, %v4876, %v4874
    %4879 = vrot.lane.b32.xlu0 %v4878, 96
    %v4880 = vpop.permute.xlu0 %4879
    %vm4881 = vcmask 1048320
    %s4882 = scalar_lea.vmem [#allocation0], 456
    %4883 = vst.msk [vmem:[%s4882] sm:$0xff] %vm4881, %v4880
    %s4884 = scalar_lea.vmem [#allocation1], 1927
    %v4885 = vld [vmem:[%s4884] ss:$8 sm:$0xf]
    %s4886 = scalar_lea.vmem [#allocation1], 1927
    %v4887 = vld [vmem:[%s4886] ss:$8 sm:$0xf0]
    %vm4888 = vcmask 1047556
    %v4889 = vsel %vm4888, %v4887, %v4885
    %4890 = vrot.lane.b32.xlu0 %v4889, 96
    %v4891 = vpop.permute.xlu0 %4890
    %vm4892 = vcmask 1048320
    %s4893 = scalar_lea.vmem [#allocation0], 488
    %4894 = vst.msk [vmem:[%s4893] sm:$0xff] %vm4892, %v4891
    %s4895 = scalar_lea.vmem [#allocation1], 67
    %v4896 = vld [vmem:[%s4895] ss:$8 sm:$0xf]
    %s4897 = scalar_lea.vmem [#allocation1], 67
    %v4898 = vld [vmem:[%s4897] ss:$8 sm:$0xf0]
    %vm4899 = vcmask 1047556
    %v4900 = vsel %vm4899, %v4898, %v4896
    %4901 = vrot.lane.b32.xlu0 %v4900, 96
    %v4902 = vpop.permute.xlu0 %4901
    %vm4903 = vcmask 1048320
    %s4904 = scalar_lea.vmem [#allocation0], 16
    %4905 = vst.msk [vmem:[%s4904] sm:$0xff] %vm4903, %v4902
    %s4906 = scalar_lea.vmem [#allocation1], 195
    %v4907 = vld [vmem:[%s4906] ss:$8 sm:$0xf]
    %s4908 = scalar_lea.vmem [#allocation1], 195
    %v4909 = vld [vmem:[%s4908] ss:$8 sm:$0xf0]
    %vm4910 = vcmask 1047556
    %v4911 = vsel %vm4910, %v4909, %v4907
    %4912 = vrot.lane.b32.xlu0 %v4911, 96
    %v4913 = vpop.permute.xlu0 %4912
    %vm4914 = vcmask 1048320
    %s4915 = scalar_lea.vmem [#allocation0], 48
    %4916 = vst.msk [vmem:[%s4915] sm:$0xff] %vm4914, %v4913
    %s4917 = scalar_lea.vmem [#allocation1], 323
    %v4918 = vld [vmem:[%s4917] ss:$8 sm:$0xf]
    %s4919 = scalar_lea.vmem [#allocation1], 323
    %v4920 = vld [vmem:[%s4919] ss:$8 sm:$0xf0]
    %vm4921 = vcmask 1047556
    %v4922 = vsel %vm4921, %v4920, %v4918
    %4923 = vrot.lane.b32.xlu0 %v4922, 96
    %v4924 = vpop.permute.xlu0 %4923
    %vm4925 = vcmask 1048320
    %s4926 = scalar_lea.vmem [#allocation0], 80
    %4927 = vst.msk [vmem:[%s4926] sm:$0xff] %vm4925, %v4924
    %s4928 = scalar_lea.vmem [#allocation1], 451
    %v4929 = vld [vmem:[%s4928] ss:$8 sm:$0xf]
    %s4930 = scalar_lea.vmem [#allocation1], 451
    %v4931 = vld [vmem:[%s4930] ss:$8 sm:$0xf0]
    %vm4932 = vcmask 1047556
    %v4933 = vsel %vm4932, %v4931, %v4929
    %4934 = vrot.lane.b32.xlu0 %v4933, 96
    %v4935 = vpop.permute.xlu0 %4934
    %vm4936 = vcmask 1048320
    %s4937 = scalar_lea.vmem [#allocation0], 112
    %4938 = vst.msk [vmem:[%s4937] sm:$0xff] %vm4936, %v4935
    %s4939 = scalar_lea.vmem [#allocation1], 579
    %v4940 = vld [vmem:[%s4939] ss:$8 sm:$0xf]
    %s4941 = scalar_lea.vmem [#allocation1], 579
    %v4942 = vld [vmem:[%s4941] ss:$8 sm:$0xf0]
    %vm4943 = vcmask 1047556
    %v4944 = vsel %vm4943, %v4942, %v4940
    %4945 = vrot.lane.b32.xlu0 %v4944, 96
    %v4946 = vpop.permute.xlu0 %4945
    %vm4947 = vcmask 1048320
    %s4948 = scalar_lea.vmem [#allocation0], 144
    %4949 = vst.msk [vmem:[%s4948] sm:$0xff] %vm4947, %v4946
    %s4950 = scalar_lea.vmem [#allocation1], 707
    %v4951 = vld [vmem:[%s4950] ss:$8 sm:$0xf]
    %s4952 = scalar_lea.vmem [#allocation1], 707
    %v4953 = vld [vmem:[%s4952] ss:$8 sm:$0xf0]
    %vm4954 = vcmask 1047556
    %v4955 = vsel %vm4954, %v4953, %v4951
    %4956 = vrot.lane.b32.xlu0 %v4955, 96
    %v4957 = vpop.permute.xlu0 %4956
    %vm4958 = vcmask 1048320
    %s4959 = scalar_lea.vmem [#allocation0], 176
    %4960 = vst.msk [vmem:[%s4959] sm:$0xff] %vm4958, %v4957
    %s4961 = scalar_lea.vmem [#allocation1], 835
    %v4962 = vld [vmem:[%s4961] ss:$8 sm:$0xf]
    %s4963 = scalar_lea.vmem [#allocation1], 835
    %v4964 = vld [vmem:[%s4963] ss:$8 sm:$0xf0]
    %vm4965 = vcmask 1047556
    %v4966 = vsel %vm4965, %v4964, %v4962
    %4967 = vrot.lane.b32.xlu0 %v4966, 96
    %v4968 = vpop.permute.xlu0 %4967
    %vm4969 = vcmask 1048320
    %s4970 = scalar_lea.vmem [#allocation0], 208
    %4971 = vst.msk [vmem:[%s4970] sm:$0xff] %vm4969, %v4968
    %s4972 = scalar_lea.vmem [#allocation1], 963
    %v4973 = vld [vmem:[%s4972] ss:$8 sm:$0xf]
    %s4974 = scalar_lea.vmem [#allocation1], 963
    %v4975 = vld [vmem:[%s4974] ss:$8 sm:$0xf0]
    %vm4976 = vcmask 1047556
    %v4977 = vsel %vm4976, %v4975, %v4973
    %4978 = vrot.lane.b32.xlu0 %v4977, 96
    %v4979 = vpop.permute.xlu0 %4978
    %vm4980 = vcmask 1048320
    %s4981 = scalar_lea.vmem [#allocation0], 240
    %4982 = vst.msk [vmem:[%s4981] sm:$0xff] %vm4980, %v4979
    %s4983 = scalar_lea.vmem [#allocation1], 1091
    %v4984 = vld [vmem:[%s4983] ss:$8 sm:$0xf]
    %s4985 = scalar_lea.vmem [#allocation1], 1091
    %v4986 = vld [vmem:[%s4985] ss:$8 sm:$0xf0]
    %vm4987 = vcmask 1047556
    %v4988 = vsel %vm4987, %v4986, %v4984
    %4989 = vrot.lane.b32.xlu0 %v4988, 96
    %v4990 = vpop.permute.xlu0 %4989
    %vm4991 = vcmask 1048320
    %s4992 = scalar_lea.vmem [#allocation0], 272
    %4993 = vst.msk [vmem:[%s4992] sm:$0xff] %vm4991, %v4990
    %s4994 = scalar_lea.vmem [#allocation1], 1219
    %v4995 = vld [vmem:[%s4994] ss:$8 sm:$0xf]
    %s4996 = scalar_lea.vmem [#allocation1], 1219
    %v4997 = vld [vmem:[%s4996] ss:$8 sm:$0xf0]
    %vm4998 = vcmask 1047556
    %v4999 = vsel %vm4998, %v4997, %v4995
    %5000 = vrot.lane.b32.xlu0 %v4999, 96
    %v5001 = vpop.permute.xlu0 %5000
    %vm5002 = vcmask 1048320
    %s5003 = scalar_lea.vmem [#allocation0], 304
    %5004 = vst.msk [vmem:[%s5003] sm:$0xff] %vm5002, %v5001
    %s5005 = scalar_lea.vmem [#allocation1], 1347
    %v5006 = vld [vmem:[%s5005] ss:$8 sm:$0xf]
    %s5007 = scalar_lea.vmem [#allocation1], 1347
    %v5008 = vld [vmem:[%s5007] ss:$8 sm:$0xf0]
    %vm5009 = vcmask 1047556
    %v5010 = vsel %vm5009, %v5008, %v5006
    %5011 = vrot.lane.b32.xlu0 %v5010, 96
    %v5012 = vpop.permute.xlu0 %5011
    %vm5013 = vcmask 1048320
    %s5014 = scalar_lea.vmem [#allocation0], 336
    %5015 = vst.msk [vmem:[%s5014] sm:$0xff] %vm5013, %v5012
    %s5016 = scalar_lea.vmem [#allocation1], 1475
    %v5017 = vld [vmem:[%s5016] ss:$8 sm:$0xf]
    %s5018 = scalar_lea.vmem [#allocation1], 1475
    %v5019 = vld [vmem:[%s5018] ss:$8 sm:$0xf0]
    %vm5020 = vcmask 1047556
    %v5021 = vsel %vm5020, %v5019, %v5017
    %5022 = vrot.lane.b32.xlu0 %v5021, 96
    %v5023 = vpop.permute.xlu0 %5022
    %vm5024 = vcmask 1048320
    %s5025 = scalar_lea.vmem [#allocation0], 368
    %5026 = vst.msk [vmem:[%s5025] sm:$0xff] %vm5024, %v5023
    %s5027 = scalar_lea.vmem [#allocation1], 1603
    %v5028 = vld [vmem:[%s5027] ss:$8 sm:$0xf]
    %s5029 = scalar_lea.vmem [#allocation1], 1603
    %v5030 = vld [vmem:[%s5029] ss:$8 sm:$0xf0]
    %vm5031 = vcmask 1047556
    %v5032 = vsel %vm5031, %v5030, %v5028
    %5033 = vrot.lane.b32.xlu0 %v5032, 96
    %v5034 = vpop.permute.xlu0 %5033
    %vm5035 = vcmask 1048320
    %s5036 = scalar_lea.vmem [#allocation0], 400
    %5037 = vst.msk [vmem:[%s5036] sm:$0xff] %vm5035, %v5034
    %s5038 = scalar_lea.vmem [#allocation1], 1731
    %v5039 = vld [vmem:[%s5038] ss:$8 sm:$0xf]
    %s5040 = scalar_lea.vmem [#allocation1], 1731
    %v5041 = vld [vmem:[%s5040] ss:$8 sm:$0xf0]
    %vm5042 = vcmask 1047556
    %v5043 = vsel %vm5042, %v5041, %v5039
    %5044 = vrot.lane.b32.xlu0 %v5043, 96
    %v5045 = vpop.permute.xlu0 %5044
    %vm5046 = vcmask 1048320
    %s5047 = scalar_lea.vmem [#allocation0], 432
    %5048 = vst.msk [vmem:[%s5047] sm:$0xff] %vm5046, %v5045
    %s5049 = scalar_lea.vmem [#allocation1], 1859
    %v5050 = vld [vmem:[%s5049] ss:$8 sm:$0xf]
    %s5051 = scalar_lea.vmem [#allocation1], 1859
    %v5052 = vld [vmem:[%s5051] ss:$8 sm:$0xf0]
    %vm5053 = vcmask 1047556
    %v5054 = vsel %vm5053, %v5052, %v5050
    %5055 = vrot.lane.b32.xlu0 %v5054, 96
    %v5056 = vpop.permute.xlu0 %5055
    %vm5057 = vcmask 1048320
    %s5058 = scalar_lea.vmem [#allocation0], 464
    %5059 = vst.msk [vmem:[%s5058] sm:$0xff] %vm5057, %v5056
    %s5060 = scalar_lea.vmem [#allocation1], 1987
    %v5061 = vld [vmem:[%s5060] ss:$8 sm:$0xf]
    %s5062 = scalar_lea.vmem [#allocation1], 1987
    %v5063 = vld [vmem:[%s5062] ss:$8 sm:$0xf0]
    %vm5064 = vcmask 1047556
    %v5065 = vsel %vm5064, %v5063, %v5061
    %5066 = vrot.lane.b32.xlu0 %v5065, 96
    %v5067 = vpop.permute.xlu0 %5066
    %vm5068 = vcmask 1048320
    %s5069 = scalar_lea.vmem [#allocation0], 496
    %5070 = vst.msk [vmem:[%s5069] sm:$0xff] %vm5068, %v5067
    %s5071 = scalar_lea.vmem [#allocation1], 71
    %v5072 = vld [vmem:[%s5071] ss:$8 sm:$0xf]
    %s5073 = scalar_lea.vmem [#allocation1], 71
    %v5074 = vld [vmem:[%s5073] ss:$8 sm:$0xf0]
    %vm5075 = vcmask 1047556
    %v5076 = vsel %vm5075, %v5074, %v5072
    %5077 = vrot.lane.b32.xlu0 %v5076, 96
    %v5078 = vpop.permute.xlu0 %5077
    %vm5079 = vcmask 1048320
    %s5080 = scalar_lea.vmem [#allocation0], 24
    %5081 = vst.msk [vmem:[%s5080] sm:$0xff] %vm5079, %v5078
    %s5082 = scalar_lea.vmem [#allocation1], 199
    %v5083 = vld [vmem:[%s5082] ss:$8 sm:$0xf]
    %s5084 = scalar_lea.vmem [#allocation1], 199
    %v5085 = vld [vmem:[%s5084] ss:$8 sm:$0xf0]
    %vm5086 = vcmask 1047556
    %v5087 = vsel %vm5086, %v5085, %v5083
    %5088 = vrot.lane.b32.xlu0 %v5087, 96
    %v5089 = vpop.permute.xlu0 %5088
    %vm5090 = vcmask 1048320
    %s5091 = scalar_lea.vmem [#allocation0], 56
    %5092 = vst.msk [vmem:[%s5091] sm:$0xff] %vm5090, %v5089
    %s5093 = scalar_lea.vmem [#allocation1], 327
    %v5094 = vld [vmem:[%s5093] ss:$8 sm:$0xf]
    %s5095 = scalar_lea.vmem [#allocation1], 327
    %v5096 = vld [vmem:[%s5095] ss:$8 sm:$0xf0]
    %vm5097 = vcmask 1047556
    %v5098 = vsel %vm5097, %v5096, %v5094
    %5099 = vrot.lane.b32.xlu0 %v5098, 96
    %v5100 = vpop.permute.xlu0 %5099
    %vm5101 = vcmask 1048320
    %s5102 = scalar_lea.vmem [#allocation0], 88
    %5103 = vst.msk [vmem:[%s5102] sm:$0xff] %vm5101, %v5100
    %s5104 = scalar_lea.vmem [#allocation1], 455
    %v5105 = vld [vmem:[%s5104] ss:$8 sm:$0xf]
    %s5106 = scalar_lea.vmem [#allocation1], 455
    %v5107 = vld [vmem:[%s5106] ss:$8 sm:$0xf0]
    %vm5108 = vcmask 1047556
    %v5109 = vsel %vm5108, %v5107, %v5105
    %5110 = vrot.lane.b32.xlu0 %v5109, 96
    %v5111 = vpop.permute.xlu0 %5110
    %vm5112 = vcmask 1048320
    %s5113 = scalar_lea.vmem [#allocation0], 120
    %5114 = vst.msk [vmem:[%s5113] sm:$0xff] %vm5112, %v5111
    %s5115 = scalar_lea.vmem [#allocation1], 583
    %v5116 = vld [vmem:[%s5115] ss:$8 sm:$0xf]
    %s5117 = scalar_lea.vmem [#allocation1], 583
    %v5118 = vld [vmem:[%s5117] ss:$8 sm:$0xf0]
    %vm5119 = vcmask 1047556
    %v5120 = vsel %vm5119, %v5118, %v5116
    %5121 = vrot.lane.b32.xlu0 %v5120, 96
    %v5122 = vpop.permute.xlu0 %5121
    %vm5123 = vcmask 1048320
    %s5124 = scalar_lea.vmem [#allocation0], 152
    %5125 = vst.msk [vmem:[%s5124] sm:$0xff] %vm5123, %v5122
    %s5126 = scalar_lea.vmem [#allocation1], 711
    %v5127 = vld [vmem:[%s5126] ss:$8 sm:$0xf]
    %s5128 = scalar_lea.vmem [#allocation1], 711
    %v5129 = vld [vmem:[%s5128] ss:$8 sm:$0xf0]
    %vm5130 = vcmask 1047556
    %v5131 = vsel %vm5130, %v5129, %v5127
    %5132 = vrot.lane.b32.xlu0 %v5131, 96
    %v5133 = vpop.permute.xlu0 %5132
    %vm5134 = vcmask 1048320
    %s5135 = scalar_lea.vmem [#allocation0], 184
    %5136 = vst.msk [vmem:[%s5135] sm:$0xff] %vm5134, %v5133
    %s5137 = scalar_lea.vmem [#allocation1], 839
    %v5138 = vld [vmem:[%s5137] ss:$8 sm:$0xf]
    %s5139 = scalar_lea.vmem [#allocation1], 839
    %v5140 = vld [vmem:[%s5139] ss:$8 sm:$0xf0]
    %vm5141 = vcmask 1047556
    %v5142 = vsel %vm5141, %v5140, %v5138
    %5143 = vrot.lane.b32.xlu0 %v5142, 96
    %v5144 = vpop.permute.xlu0 %5143
    %vm5145 = vcmask 1048320
    %s5146 = scalar_lea.vmem [#allocation0], 216
    %5147 = vst.msk [vmem:[%s5146] sm:$0xff] %vm5145, %v5144
    %s5148 = scalar_lea.vmem [#allocation1], 967
    %v5149 = vld [vmem:[%s5148] ss:$8 sm:$0xf]
    %s5150 = scalar_lea.vmem [#allocation1], 967
    %v5151 = vld [vmem:[%s5150] ss:$8 sm:$0xf0]
    %vm5152 = vcmask 1047556
    %v5153 = vsel %vm5152, %v5151, %v5149
    %5154 = vrot.lane.b32.xlu0 %v5153, 96
    %v5155 = vpop.permute.xlu0 %5154
    %vm5156 = vcmask 1048320
    %s5157 = scalar_lea.vmem [#allocation0], 248
    %5158 = vst.msk [vmem:[%s5157] sm:$0xff] %vm5156, %v5155
    %s5159 = scalar_lea.vmem [#allocation1], 1095
    %v5160 = vld [vmem:[%s5159] ss:$8 sm:$0xf]
    %s5161 = scalar_lea.vmem [#allocation1], 1095
    %v5162 = vld [vmem:[%s5161] ss:$8 sm:$0xf0]
    %vm5163 = vcmask 1047556
    %v5164 = vsel %vm5163, %v5162, %v5160
    %5165 = vrot.lane.b32.xlu0 %v5164, 96
    %v5166 = vpop.permute.xlu0 %5165
    %vm5167 = vcmask 1048320
    %s5168 = scalar_lea.vmem [#allocation0], 280
    %5169 = vst.msk [vmem:[%s5168] sm:$0xff] %vm5167, %v5166
    %s5170 = scalar_lea.vmem [#allocation1], 1223
    %v5171 = vld [vmem:[%s5170] ss:$8 sm:$0xf]
    %s5172 = scalar_lea.vmem [#allocation1], 1223
    %v5173 = vld [vmem:[%s5172] ss:$8 sm:$0xf0]
    %vm5174 = vcmask 1047556
    %v5175 = vsel %vm5174, %v5173, %v5171
    %5176 = vrot.lane.b32.xlu0 %v5175, 96
    %v5177 = vpop.permute.xlu0 %5176
    %vm5178 = vcmask 1048320
    %s5179 = scalar_lea.vmem [#allocation0], 312
    %5180 = vst.msk [vmem:[%s5179] sm:$0xff] %vm5178, %v5177
    %s5181 = scalar_lea.vmem [#allocation1], 1351
    %v5182 = vld [vmem:[%s5181] ss:$8 sm:$0xf]
    %s5183 = scalar_lea.vmem [#allocation1], 1351
    %v5184 = vld [vmem:[%s5183] ss:$8 sm:$0xf0]
    %vm5185 = vcmask 1047556
    %v5186 = vsel %vm5185, %v5184, %v5182
    %5187 = vrot.lane.b32.xlu0 %v5186, 96
    %v5188 = vpop.permute.xlu0 %5187
    %vm5189 = vcmask 1048320
    %s5190 = scalar_lea.vmem [#allocation0], 344
    %5191 = vst.msk [vmem:[%s5190] sm:$0xff] %vm5189, %v5188
    %s5192 = scalar_lea.vmem [#allocation1], 1479
    %v5193 = vld [vmem:[%s5192] ss:$8 sm:$0xf]
    %s5194 = scalar_lea.vmem [#allocation1], 1479
    %v5195 = vld [vmem:[%s5194] ss:$8 sm:$0xf0]
    %vm5196 = vcmask 1047556
    %v5197 = vsel %vm5196, %v5195, %v5193
    %5198 = vrot.lane.b32.xlu0 %v5197, 96
    %v5199 = vpop.permute.xlu0 %5198
    %vm5200 = vcmask 1048320
    %s5201 = scalar_lea.vmem [#allocation0], 376
    %5202 = vst.msk [vmem:[%s5201] sm:$0xff] %vm5200, %v5199
    %s5203 = scalar_lea.vmem [#allocation1], 1607
    %v5204 = vld [vmem:[%s5203] ss:$8 sm:$0xf]
    %s5205 = scalar_lea.vmem [#allocation1], 1607
    %v5206 = vld [vmem:[%s5205] ss:$8 sm:$0xf0]
    %vm5207 = vcmask 1047556
    %v5208 = vsel %vm5207, %v5206, %v5204
    %5209 = vrot.lane.b32.xlu0 %v5208, 96
    %v5210 = vpop.permute.xlu0 %5209
    %vm5211 = vcmask 1048320
    %s5212 = scalar_lea.vmem [#allocation0], 408
    %5213 = vst.msk [vmem:[%s5212] sm:$0xff] %vm5211, %v5210
    %s5214 = scalar_lea.vmem [#allocation1], 1735
    %v5215 = vld [vmem:[%s5214] ss:$8 sm:$0xf]
    %s5216 = scalar_lea.vmem [#allocation1], 1735
    %v5217 = vld [vmem:[%s5216] ss:$8 sm:$0xf0]
    %vm5218 = vcmask 1047556
    %v5219 = vsel %vm5218, %v5217, %v5215
    %5220 = vrot.lane.b32.xlu0 %v5219, 96
    %v5221 = vpop.permute.xlu0 %5220
    %vm5222 = vcmask 1048320
    %s5223 = scalar_lea.vmem [#allocation0], 440
    %5224 = vst.msk [vmem:[%s5223] sm:$0xff] %vm5222, %v5221
    %s5225 = scalar_lea.vmem [#allocation1], 1863
    %v5226 = vld [vmem:[%s5225] ss:$8 sm:$0xf]
    %s5227 = scalar_lea.vmem [#allocation1], 1863
    %v5228 = vld [vmem:[%s5227] ss:$8 sm:$0xf0]
    %vm5229 = vcmask 1047556
    %v5230 = vsel %vm5229, %v5228, %v5226
    %5231 = vrot.lane.b32.xlu0 %v5230, 96
    %v5232 = vpop.permute.xlu0 %5231
    %vm5233 = vcmask 1048320
    %s5234 = scalar_lea.vmem [#allocation0], 472
    %5235 = vst.msk [vmem:[%s5234] sm:$0xff] %vm5233, %v5232
    %s5236 = scalar_lea.vmem [#allocation1], 1991
    %v5237 = vld [vmem:[%s5236] ss:$8 sm:$0xf]
    %s5238 = scalar_lea.vmem [#allocation1], 1991
    %v5239 = vld [vmem:[%s5238] ss:$8 sm:$0xf0]
    %vm5240 = vcmask 1047556
    %v5241 = vsel %vm5240, %v5239, %v5237
    %5242 = vrot.lane.b32.xlu0 %v5241, 96
    %v5243 = vpop.permute.xlu0 %5242
    %vm5244 = vcmask 1048320
    %s5245 = scalar_lea.vmem [#allocation0], 504
    %5246 = vst.msk [vmem:[%s5245] sm:$0xff] %vm5244, %v5243
    %s5247 = scalar_lea.vmem [#allocation1], 2
    %v5248 = vld [vmem:[%s5247] ss:$8 sm:$0xf]
    %s5249 = scalar_lea.vmem [#allocation1], 2
    %v5250 = vld [vmem:[%s5249] ss:$8 sm:$0xf0]
    %vm5251 = vcmask 1047556
    %v5252 = vsel %vm5251, %v5250, %v5248
    %5253 = vrot.lane.b32.xlu0 %v5252, 64
    %v5254 = vpop.permute.xlu0 %5253
    %vm5255 = vcmask 785920
    %5256 = vst.msk [vmem:[#allocation0] sm:$0xff] %vm5255, %v5254
    %s5257 = scalar_lea.vmem [#allocation1], 130
    %v5258 = vld [vmem:[%s5257] ss:$8 sm:$0xf]
    %s5259 = scalar_lea.vmem [#allocation1], 130
    %v5260 = vld [vmem:[%s5259] ss:$8 sm:$0xf0]
    %vm5261 = vcmask 1047556
    %v5262 = vsel %vm5261, %v5260, %v5258
    %5263 = vrot.lane.b32.xlu0 %v5262, 64
    %v5264 = vpop.permute.xlu0 %5263
    %vm5265 = vcmask 785920
    %s5266 = scalar_lea.vmem [#allocation0], 32
    %5267 = vst.msk [vmem:[%s5266] sm:$0xff] %vm5265, %v5264
    %s5268 = scalar_lea.vmem [#allocation1], 258
    %v5269 = vld [vmem:[%s5268] ss:$8 sm:$0xf]
    %s5270 = scalar_lea.vmem [#allocation1], 258
    %v5271 = vld [vmem:[%s5270] ss:$8 sm:$0xf0]
    %vm5272 = vcmask 1047556
    %v5273 = vsel %vm5272, %v5271, %v5269
    %5274 = vrot.lane.b32.xlu0 %v5273, 64
    %v5275 = vpop.permute.xlu0 %5274
    %vm5276 = vcmask 785920
    %s5277 = scalar_lea.vmem [#allocation0], 64
    %5278 = vst.msk [vmem:[%s5277] sm:$0xff] %vm5276, %v5275
    %s5279 = scalar_lea.vmem [#allocation1], 386
    %v5280 = vld [vmem:[%s5279] ss:$8 sm:$0xf]
    %s5281 = scalar_lea.vmem [#allocation1], 386
    %v5282 = vld [vmem:[%s5281] ss:$8 sm:$0xf0]
    %vm5283 = vcmask 1047556
    %v5284 = vsel %vm5283, %v5282, %v5280
    %5285 = vrot.lane.b32.xlu0 %v5284, 64
    %v5286 = vpop.permute.xlu0 %5285
    %vm5287 = vcmask 785920
    %s5288 = scalar_lea.vmem [#allocation0], 96
    %5289 = vst.msk [vmem:[%s5288] sm:$0xff] %vm5287, %v5286
    %s5290 = scalar_lea.vmem [#allocation1], 514
    %v5291 = vld [vmem:[%s5290] ss:$8 sm:$0xf]
    %s5292 = scalar_lea.vmem [#allocation1], 514
    %v5293 = vld [vmem:[%s5292] ss:$8 sm:$0xf0]
    %vm5294 = vcmask 1047556
    %v5295 = vsel %vm5294, %v5293, %v5291
    %5296 = vrot.lane.b32.xlu0 %v5295, 64
    %v5297 = vpop.permute.xlu0 %5296
    %vm5298 = vcmask 785920
    %s5299 = scalar_lea.vmem [#allocation0], 128
    %5300 = vst.msk [vmem:[%s5299] sm:$0xff] %vm5298, %v5297
    %s5301 = scalar_lea.vmem [#allocation1], 642
    %v5302 = vld [vmem:[%s5301] ss:$8 sm:$0xf]
    %s5303 = scalar_lea.vmem [#allocation1], 642
    %v5304 = vld [vmem:[%s5303] ss:$8 sm:$0xf0]
    %vm5305 = vcmask 1047556
    %v5306 = vsel %vm5305, %v5304, %v5302
    %5307 = vrot.lane.b32.xlu0 %v5306, 64
    %v5308 = vpop.permute.xlu0 %5307
    %vm5309 = vcmask 785920
    %s5310 = scalar_lea.vmem [#allocation0], 160
    %5311 = vst.msk [vmem:[%s5310] sm:$0xff] %vm5309, %v5308
    %s5312 = scalar_lea.vmem [#allocation1], 770
    %v5313 = vld [vmem:[%s5312] ss:$8 sm:$0xf]
    %s5314 = scalar_lea.vmem [#allocation1], 770
    %v5315 = vld [vmem:[%s5314] ss:$8 sm:$0xf0]
    %vm5316 = vcmask 1047556
    %v5317 = vsel %vm5316, %v5315, %v5313
    %5318 = vrot.lane.b32.xlu0 %v5317, 64
    %v5319 = vpop.permute.xlu0 %5318
    %vm5320 = vcmask 785920
    %s5321 = scalar_lea.vmem [#allocation0], 192
    %5322 = vst.msk [vmem:[%s5321] sm:$0xff] %vm5320, %v5319
    %s5323 = scalar_lea.vmem [#allocation1], 898
    %v5324 = vld [vmem:[%s5323] ss:$8 sm:$0xf]
    %s5325 = scalar_lea.vmem [#allocation1], 898
    %v5326 = vld [vmem:[%s5325] ss:$8 sm:$0xf0]
    %vm5327 = vcmask 1047556
    %v5328 = vsel %vm5327, %v5326, %v5324
    %5329 = vrot.lane.b32.xlu0 %v5328, 64
    %v5330 = vpop.permute.xlu0 %5329
    %vm5331 = vcmask 785920
    %s5332 = scalar_lea.vmem [#allocation0], 224
    %5333 = vst.msk [vmem:[%s5332] sm:$0xff] %vm5331, %v5330
    %s5334 = scalar_lea.vmem [#allocation1], 1026
    %v5335 = vld [vmem:[%s5334] ss:$8 sm:$0xf]
    %s5336 = scalar_lea.vmem [#allocation1], 1026
    %v5337 = vld [vmem:[%s5336] ss:$8 sm:$0xf0]
    %vm5338 = vcmask 1047556
    %v5339 = vsel %vm5338, %v5337, %v5335
    %5340 = vrot.lane.b32.xlu0 %v5339, 64
    %v5341 = vpop.permute.xlu0 %5340
    %vm5342 = vcmask 785920
    %s5343 = scalar_lea.vmem [#allocation0], 256
    %5344 = vst.msk [vmem:[%s5343] sm:$0xff] %vm5342, %v5341
    %s5345 = scalar_lea.vmem [#allocation1], 1154
    %v5346 = vld [vmem:[%s5345] ss:$8 sm:$0xf]
    %s5347 = scalar_lea.vmem [#allocation1], 1154
    %v5348 = vld [vmem:[%s5347] ss:$8 sm:$0xf0]
    %vm5349 = vcmask 1047556
    %v5350 = vsel %vm5349, %v5348, %v5346
    %5351 = vrot.lane.b32.xlu0 %v5350, 64
    %v5352 = vpop.permute.xlu0 %5351
    %vm5353 = vcmask 785920
    %s5354 = scalar_lea.vmem [#allocation0], 288
    %5355 = vst.msk [vmem:[%s5354] sm:$0xff] %vm5353, %v5352
    %s5356 = scalar_lea.vmem [#allocation1], 1282
    %v5357 = vld [vmem:[%s5356] ss:$8 sm:$0xf]
    %s5358 = scalar_lea.vmem [#allocation1], 1282
    %v5359 = vld [vmem:[%s5358] ss:$8 sm:$0xf0]
    %vm5360 = vcmask 1047556
    %v5361 = vsel %vm5360, %v5359, %v5357
    %5362 = vrot.lane.b32.xlu0 %v5361, 64
    %v5363 = vpop.permute.xlu0 %5362
    %vm5364 = vcmask 785920
    %s5365 = scalar_lea.vmem [#allocation0], 320
    %5366 = vst.msk [vmem:[%s5365] sm:$0xff] %vm5364, %v5363
    %s5367 = scalar_lea.vmem [#allocation1], 1410
    %v5368 = vld [vmem:[%s5367] ss:$8 sm:$0xf]
    %s5369 = scalar_lea.vmem [#allocation1], 1410
    %v5370 = vld [vmem:[%s5369] ss:$8 sm:$0xf0]
    %vm5371 = vcmask 1047556
    %v5372 = vsel %vm5371, %v5370, %v5368
    %5373 = vrot.lane.b32.xlu0 %v5372, 64
    %v5374 = vpop.permute.xlu0 %5373
    %vm5375 = vcmask 785920
    %s5376 = scalar_lea.vmem [#allocation0], 352
    %5377 = vst.msk [vmem:[%s5376] sm:$0xff] %vm5375, %v5374
    %s5378 = scalar_lea.vmem [#allocation1], 1538
    %v5379 = vld [vmem:[%s5378] ss:$8 sm:$0xf]
    %s5380 = scalar_lea.vmem [#allocation1], 1538
    %v5381 = vld [vmem:[%s5380] ss:$8 sm:$0xf0]
    %vm5382 = vcmask 1047556
    %v5383 = vsel %vm5382, %v5381, %v5379
    %5384 = vrot.lane.b32.xlu0 %v5383, 64
    %v5385 = vpop.permute.xlu0 %5384
    %vm5386 = vcmask 785920
    %s5387 = scalar_lea.vmem [#allocation0], 384
    %5388 = vst.msk [vmem:[%s5387] sm:$0xff] %vm5386, %v5385
    %s5389 = scalar_lea.vmem [#allocation1], 1666
    %v5390 = vld [vmem:[%s5389] ss:$8 sm:$0xf]
    %s5391 = scalar_lea.vmem [#allocation1], 1666
    %v5392 = vld [vmem:[%s5391] ss:$8 sm:$0xf0]
    %vm5393 = vcmask 1047556
    %v5394 = vsel %vm5393, %v5392, %v5390
    %5395 = vrot.lane.b32.xlu0 %v5394, 64
    %v5396 = vpop.permute.xlu0 %5395
    %vm5397 = vcmask 785920
    %s5398 = scalar_lea.vmem [#allocation0], 416
    %5399 = vst.msk [vmem:[%s5398] sm:$0xff] %vm5397, %v5396
    %s5400 = scalar_lea.vmem [#allocation1], 1794
    %v5401 = vld [vmem:[%s5400] ss:$8 sm:$0xf]
    %s5402 = scalar_lea.vmem [#allocation1], 1794
    %v5403 = vld [vmem:[%s5402] ss:$8 sm:$0xf0]
    %vm5404 = vcmask 1047556
    %v5405 = vsel %vm5404, %v5403, %v5401
    %5406 = vrot.lane.b32.xlu0 %v5405, 64
    %v5407 = vpop.permute.xlu0 %5406
    %vm5408 = vcmask 785920
    %s5409 = scalar_lea.vmem [#allocation0], 448
    %5410 = vst.msk [vmem:[%s5409] sm:$0xff] %vm5408, %v5407
    %s5411 = scalar_lea.vmem [#allocation1], 1922
    %v5412 = vld [vmem:[%s5411] ss:$8 sm:$0xf]
    %s5413 = scalar_lea.vmem [#allocation1], 1922
    %v5414 = vld [vmem:[%s5413] ss:$8 sm:$0xf0]
    %vm5415 = vcmask 1047556
    %v5416 = vsel %vm5415, %v5414, %v5412
    %5417 = vrot.lane.b32.xlu0 %v5416, 64
    %v5418 = vpop.permute.xlu0 %5417
    %vm5419 = vcmask 785920
    %s5420 = scalar_lea.vmem [#allocation0], 480
    %5421 = vst.msk [vmem:[%s5420] sm:$0xff] %vm5419, %v5418
    %s5422 = scalar_lea.vmem [#allocation1], 6
    %v5423 = vld [vmem:[%s5422] ss:$8 sm:$0xf]
    %s5424 = scalar_lea.vmem [#allocation1], 6
    %v5425 = vld [vmem:[%s5424] ss:$8 sm:$0xf0]
    %vm5426 = vcmask 1047556
    %v5427 = vsel %vm5426, %v5425, %v5423
    %5428 = vrot.lane.b32.xlu0 %v5427, 64
    %v5429 = vpop.permute.xlu0 %5428
    %vm5430 = vcmask 785920
    %s5431 = scalar_lea.vmem [#allocation0], 8
    %5432 = vst.msk [vmem:[%s5431] sm:$0xff] %vm5430, %v5429
    %s5433 = scalar_lea.vmem [#allocation1], 134
    %v5434 = vld [vmem:[%s5433] ss:$8 sm:$0xf]
    %s5435 = scalar_lea.vmem [#allocation1], 134
    %v5436 = vld [vmem:[%s5435] ss:$8 sm:$0xf0]
    %vm5437 = vcmask 1047556
    %v5438 = vsel %vm5437, %v5436, %v5434
    %5439 = vrot.lane.b32.xlu0 %v5438, 64
    %v5440 = vpop.permute.xlu0 %5439
    %vm5441 = vcmask 785920
    %s5442 = scalar_lea.vmem [#allocation0], 40
    %5443 = vst.msk [vmem:[%s5442] sm:$0xff] %vm5441, %v5440
    %s5444 = scalar_lea.vmem [#allocation1], 262
    %v5445 = vld [vmem:[%s5444] ss:$8 sm:$0xf]
    %s5446 = scalar_lea.vmem [#allocation1], 262
    %v5447 = vld [vmem:[%s5446] ss:$8 sm:$0xf0]
    %vm5448 = vcmask 1047556
    %v5449 = vsel %vm5448, %v5447, %v5445
    %5450 = vrot.lane.b32.xlu0 %v5449, 64
    %v5451 = vpop.permute.xlu0 %5450
    %vm5452 = vcmask 785920
    %s5453 = scalar_lea.vmem [#allocation0], 72
    %5454 = vst.msk [vmem:[%s5453] sm:$0xff] %vm5452, %v5451
    %s5455 = scalar_lea.vmem [#allocation1], 390
    %v5456 = vld [vmem:[%s5455] ss:$8 sm:$0xf]
    %s5457 = scalar_lea.vmem [#allocation1], 390
    %v5458 = vld [vmem:[%s5457] ss:$8 sm:$0xf0]
    %vm5459 = vcmask 1047556
    %v5460 = vsel %vm5459, %v5458, %v5456
    %5461 = vrot.lane.b32.xlu0 %v5460, 64
    %v5462 = vpop.permute.xlu0 %5461
    %vm5463 = vcmask 785920
    %s5464 = scalar_lea.vmem [#allocation0], 104
    %5465 = vst.msk [vmem:[%s5464] sm:$0xff] %vm5463, %v5462
    %s5466 = scalar_lea.vmem [#allocation1], 518
    %v5467 = vld [vmem:[%s5466] ss:$8 sm:$0xf]
    %s5468 = scalar_lea.vmem [#allocation1], 518
    %v5469 = vld [vmem:[%s5468] ss:$8 sm:$0xf0]
    %vm5470 = vcmask 1047556
    %v5471 = vsel %vm5470, %v5469, %v5467
    %5472 = vrot.lane.b32.xlu0 %v5471, 64
    %v5473 = vpop.permute.xlu0 %5472
    %vm5474 = vcmask 785920
    %s5475 = scalar_lea.vmem [#allocation0], 136
    %5476 = vst.msk [vmem:[%s5475] sm:$0xff] %vm5474, %v5473
    %s5477 = scalar_lea.vmem [#allocation1], 646
    %v5478 = vld [vmem:[%s5477] ss:$8 sm:$0xf]
    %s5479 = scalar_lea.vmem [#allocation1], 646
    %v5480 = vld [vmem:[%s5479] ss:$8 sm:$0xf0]
    %vm5481 = vcmask 1047556
    %v5482 = vsel %vm5481, %v5480, %v5478
    %5483 = vrot.lane.b32.xlu0 %v5482, 64
    %v5484 = vpop.permute.xlu0 %5483
    %vm5485 = vcmask 785920
    %s5486 = scalar_lea.vmem [#allocation0], 168
    %5487 = vst.msk [vmem:[%s5486] sm:$0xff] %vm5485, %v5484
    %s5488 = scalar_lea.vmem [#allocation1], 774
    %v5489 = vld [vmem:[%s5488] ss:$8 sm:$0xf]
    %s5490 = scalar_lea.vmem [#allocation1], 774
    %v5491 = vld [vmem:[%s5490] ss:$8 sm:$0xf0]
    %vm5492 = vcmask 1047556
    %v5493 = vsel %vm5492, %v5491, %v5489
    %5494 = vrot.lane.b32.xlu0 %v5493, 64
    %v5495 = vpop.permute.xlu0 %5494
    %vm5496 = vcmask 785920
    %s5497 = scalar_lea.vmem [#allocation0], 200
    %5498 = vst.msk [vmem:[%s5497] sm:$0xff] %vm5496, %v5495
    %s5499 = scalar_lea.vmem [#allocation1], 902
    %v5500 = vld [vmem:[%s5499] ss:$8 sm:$0xf]
    %s5501 = scalar_lea.vmem [#allocation1], 902
    %v5502 = vld [vmem:[%s5501] ss:$8 sm:$0xf0]
    %vm5503 = vcmask 1047556
    %v5504 = vsel %vm5503, %v5502, %v5500
    %5505 = vrot.lane.b32.xlu0 %v5504, 64
    %v5506 = vpop.permute.xlu0 %5505
    %vm5507 = vcmask 785920
    %s5508 = scalar_lea.vmem [#allocation0], 232
    %5509 = vst.msk [vmem:[%s5508] sm:$0xff] %vm5507, %v5506
    %s5510 = scalar_lea.vmem [#allocation1], 1030
    %v5511 = vld [vmem:[%s5510] ss:$8 sm:$0xf]
    %s5512 = scalar_lea.vmem [#allocation1], 1030
    %v5513 = vld [vmem:[%s5512] ss:$8 sm:$0xf0]
    %vm5514 = vcmask 1047556
    %v5515 = vsel %vm5514, %v5513, %v5511
    %5516 = vrot.lane.b32.xlu0 %v5515, 64
    %v5517 = vpop.permute.xlu0 %5516
    %vm5518 = vcmask 785920
    %s5519 = scalar_lea.vmem [#allocation0], 264
    %5520 = vst.msk [vmem:[%s5519] sm:$0xff] %vm5518, %v5517
    %s5521 = scalar_lea.vmem [#allocation1], 1158
    %v5522 = vld [vmem:[%s5521] ss:$8 sm:$0xf]
    %s5523 = scalar_lea.vmem [#allocation1], 1158
    %v5524 = vld [vmem:[%s5523] ss:$8 sm:$0xf0]
    %vm5525 = vcmask 1047556
    %v5526 = vsel %vm5525, %v5524, %v5522
    %5527 = vrot.lane.b32.xlu0 %v5526, 64
    %v5528 = vpop.permute.xlu0 %5527
    %vm5529 = vcmask 785920
    %s5530 = scalar_lea.vmem [#allocation0], 296
    %5531 = vst.msk [vmem:[%s5530] sm:$0xff] %vm5529, %v5528
    %s5532 = scalar_lea.vmem [#allocation1], 1286
    %v5533 = vld [vmem:[%s5532] ss:$8 sm:$0xf]
    %s5534 = scalar_lea.vmem [#allocation1], 1286
    %v5535 = vld [vmem:[%s5534] ss:$8 sm:$0xf0]
    %vm5536 = vcmask 1047556
    %v5537 = vsel %vm5536, %v5535, %v5533
    %5538 = vrot.lane.b32.xlu0 %v5537, 64
    %v5539 = vpop.permute.xlu0 %5538
    %vm5540 = vcmask 785920
    %s5541 = scalar_lea.vmem [#allocation0], 328
    %5542 = vst.msk [vmem:[%s5541] sm:$0xff] %vm5540, %v5539
    %s5543 = scalar_lea.vmem [#allocation1], 1414
    %v5544 = vld [vmem:[%s5543] ss:$8 sm:$0xf]
    %s5545 = scalar_lea.vmem [#allocation1], 1414
    %v5546 = vld [vmem:[%s5545] ss:$8 sm:$0xf0]
    %vm5547 = vcmask 1047556
    %v5548 = vsel %vm5547, %v5546, %v5544
    %5549 = vrot.lane.b32.xlu0 %v5548, 64
    %v5550 = vpop.permute.xlu0 %5549
    %vm5551 = vcmask 785920
    %s5552 = scalar_lea.vmem [#allocation0], 360
    %5553 = vst.msk [vmem:[%s5552] sm:$0xff] %vm5551, %v5550
    %s5554 = scalar_lea.vmem [#allocation1], 1542
    %v5555 = vld [vmem:[%s5554] ss:$8 sm:$0xf]
    %s5556 = scalar_lea.vmem [#allocation1], 1542
    %v5557 = vld [vmem:[%s5556] ss:$8 sm:$0xf0]
    %vm5558 = vcmask 1047556
    %v5559 = vsel %vm5558, %v5557, %v5555
    %5560 = vrot.lane.b32.xlu0 %v5559, 64
    %v5561 = vpop.permute.xlu0 %5560
    %vm5562 = vcmask 785920
    %s5563 = scalar_lea.vmem [#allocation0], 392
    %5564 = vst.msk [vmem:[%s5563] sm:$0xff] %vm5562, %v5561
    %s5565 = scalar_lea.vmem [#allocation1], 1670
    %v5566 = vld [vmem:[%s5565] ss:$8 sm:$0xf]
    %s5567 = scalar_lea.vmem [#allocation1], 1670
    %v5568 = vld [vmem:[%s5567] ss:$8 sm:$0xf0]
    %vm5569 = vcmask 1047556
    %v5570 = vsel %vm5569, %v5568, %v5566
    %5571 = vrot.lane.b32.xlu0 %v5570, 64
    %v5572 = vpop.permute.xlu0 %5571
    %vm5573 = vcmask 785920
    %s5574 = scalar_lea.vmem [#allocation0], 424
    %5575 = vst.msk [vmem:[%s5574] sm:$0xff] %vm5573, %v5572
    %s5576 = scalar_lea.vmem [#allocation1], 1798
    %v5577 = vld [vmem:[%s5576] ss:$8 sm:$0xf]
    %s5578 = scalar_lea.vmem [#allocation1], 1798
    %v5579 = vld [vmem:[%s5578] ss:$8 sm:$0xf0]
    %vm5580 = vcmask 1047556
    %v5581 = vsel %vm5580, %v5579, %v5577
    %5582 = vrot.lane.b32.xlu0 %v5581, 64
    %v5583 = vpop.permute.xlu0 %5582
    %vm5584 = vcmask 785920
    %s5585 = scalar_lea.vmem [#allocation0], 456
    %5586 = vst.msk [vmem:[%s5585] sm:$0xff] %vm5584, %v5583
    %s5587 = scalar_lea.vmem [#allocation1], 1926
    %v5588 = vld [vmem:[%s5587] ss:$8 sm:$0xf]
    %s5589 = scalar_lea.vmem [#allocation1], 1926
    %v5590 = vld [vmem:[%s5589] ss:$8 sm:$0xf0]
    %vm5591 = vcmask 1047556
    %v5592 = vsel %vm5591, %v5590, %v5588
    %5593 = vrot.lane.b32.xlu0 %v5592, 64
    %v5594 = vpop.permute.xlu0 %5593
    %vm5595 = vcmask 785920
    %s5596 = scalar_lea.vmem [#allocation0], 488
    %5597 = vst.msk [vmem:[%s5596] sm:$0xff] %vm5595, %v5594
    %s5598 = scalar_lea.vmem [#allocation1], 66
    %v5599 = vld [vmem:[%s5598] ss:$8 sm:$0xf]
    %s5600 = scalar_lea.vmem [#allocation1], 66
    %v5601 = vld [vmem:[%s5600] ss:$8 sm:$0xf0]
    %vm5602 = vcmask 1047556
    %v5603 = vsel %vm5602, %v5601, %v5599
    %5604 = vrot.lane.b32.xlu0 %v5603, 64
    %v5605 = vpop.permute.xlu0 %5604
    %vm5606 = vcmask 785920
    %s5607 = scalar_lea.vmem [#allocation0], 16
    %5608 = vst.msk [vmem:[%s5607] sm:$0xff] %vm5606, %v5605
    %s5609 = scalar_lea.vmem [#allocation1], 194
    %v5610 = vld [vmem:[%s5609] ss:$8 sm:$0xf]
    %s5611 = scalar_lea.vmem [#allocation1], 194
    %v5612 = vld [vmem:[%s5611] ss:$8 sm:$0xf0]
    %vm5613 = vcmask 1047556
    %v5614 = vsel %vm5613, %v5612, %v5610
    %5615 = vrot.lane.b32.xlu0 %v5614, 64
    %v5616 = vpop.permute.xlu0 %5615
    %vm5617 = vcmask 785920
    %s5618 = scalar_lea.vmem [#allocation0], 48
    %5619 = vst.msk [vmem:[%s5618] sm:$0xff] %vm5617, %v5616
    %s5620 = scalar_lea.vmem [#allocation1], 322
    %v5621 = vld [vmem:[%s5620] ss:$8 sm:$0xf]
    %s5622 = scalar_lea.vmem [#allocation1], 322
    %v5623 = vld [vmem:[%s5622] ss:$8 sm:$0xf0]
    %vm5624 = vcmask 1047556
    %v5625 = vsel %vm5624, %v5623, %v5621
    %5626 = vrot.lane.b32.xlu0 %v5625, 64
    %v5627 = vpop.permute.xlu0 %5626
    %vm5628 = vcmask 785920
    %s5629 = scalar_lea.vmem [#allocation0], 80
    %5630 = vst.msk [vmem:[%s5629] sm:$0xff] %vm5628, %v5627
    %s5631 = scalar_lea.vmem [#allocation1], 450
    %v5632 = vld [vmem:[%s5631] ss:$8 sm:$0xf]
    %s5633 = scalar_lea.vmem [#allocation1], 450
    %v5634 = vld [vmem:[%s5633] ss:$8 sm:$0xf0]
    %vm5635 = vcmask 1047556
    %v5636 = vsel %vm5635, %v5634, %v5632
    %5637 = vrot.lane.b32.xlu0 %v5636, 64
    %v5638 = vpop.permute.xlu0 %5637
    %vm5639 = vcmask 785920
    %s5640 = scalar_lea.vmem [#allocation0], 112
    %5641 = vst.msk [vmem:[%s5640] sm:$0xff] %vm5639, %v5638
    %s5642 = scalar_lea.vmem [#allocation1], 578
    %v5643 = vld [vmem:[%s5642] ss:$8 sm:$0xf]
    %s5644 = scalar_lea.vmem [#allocation1], 578
    %v5645 = vld [vmem:[%s5644] ss:$8 sm:$0xf0]
    %vm5646 = vcmask 1047556
    %v5647 = vsel %vm5646, %v5645, %v5643
    %5648 = vrot.lane.b32.xlu0 %v5647, 64
    %v5649 = vpop.permute.xlu0 %5648
    %vm5650 = vcmask 785920
    %s5651 = scalar_lea.vmem [#allocation0], 144
    %5652 = vst.msk [vmem:[%s5651] sm:$0xff] %vm5650, %v5649
    %s5653 = scalar_lea.vmem [#allocation1], 706
    %v5654 = vld [vmem:[%s5653] ss:$8 sm:$0xf]
    %s5655 = scalar_lea.vmem [#allocation1], 706
    %v5656 = vld [vmem:[%s5655] ss:$8 sm:$0xf0]
    %vm5657 = vcmask 1047556
    %v5658 = vsel %vm5657, %v5656, %v5654
    %5659 = vrot.lane.b32.xlu0 %v5658, 64
    %v5660 = vpop.permute.xlu0 %5659
    %vm5661 = vcmask 785920
    %s5662 = scalar_lea.vmem [#allocation0], 176
    %5663 = vst.msk [vmem:[%s5662] sm:$0xff] %vm5661, %v5660
    %s5664 = scalar_lea.vmem [#allocation1], 834
    %v5665 = vld [vmem:[%s5664] ss:$8 sm:$0xf]
    %s5666 = scalar_lea.vmem [#allocation1], 834
    %v5667 = vld [vmem:[%s5666] ss:$8 sm:$0xf0]
    %vm5668 = vcmask 1047556
    %v5669 = vsel %vm5668, %v5667, %v5665
    %5670 = vrot.lane.b32.xlu0 %v5669, 64
    %v5671 = vpop.permute.xlu0 %5670
    %vm5672 = vcmask 785920
    %s5673 = scalar_lea.vmem [#allocation0], 208
    %5674 = vst.msk [vmem:[%s5673] sm:$0xff] %vm5672, %v5671
    %s5675 = scalar_lea.vmem [#allocation1], 962
    %v5676 = vld [vmem:[%s5675] ss:$8 sm:$0xf]
    %s5677 = scalar_lea.vmem [#allocation1], 962
    %v5678 = vld [vmem:[%s5677] ss:$8 sm:$0xf0]
    %vm5679 = vcmask 1047556
    %v5680 = vsel %vm5679, %v5678, %v5676
    %5681 = vrot.lane.b32.xlu0 %v5680, 64
    %v5682 = vpop.permute.xlu0 %5681
    %vm5683 = vcmask 785920
    %s5684 = scalar_lea.vmem [#allocation0], 240
    %5685 = vst.msk [vmem:[%s5684] sm:$0xff] %vm5683, %v5682
    %s5686 = scalar_lea.vmem [#allocation1], 1090
    %v5687 = vld [vmem:[%s5686] ss:$8 sm:$0xf]
    %s5688 = scalar_lea.vmem [#allocation1], 1090
    %v5689 = vld [vmem:[%s5688] ss:$8 sm:$0xf0]
    %vm5690 = vcmask 1047556
    %v5691 = vsel %vm5690, %v5689, %v5687
    %5692 = vrot.lane.b32.xlu0 %v5691, 64
    %v5693 = vpop.permute.xlu0 %5692
    %vm5694 = vcmask 785920
    %s5695 = scalar_lea.vmem [#allocation0], 272
    %5696 = vst.msk [vmem:[%s5695] sm:$0xff] %vm5694, %v5693
    %s5697 = scalar_lea.vmem [#allocation1], 1218
    %v5698 = vld [vmem:[%s5697] ss:$8 sm:$0xf]
    %s5699 = scalar_lea.vmem [#allocation1], 1218
    %v5700 = vld [vmem:[%s5699] ss:$8 sm:$0xf0]
    %vm5701 = vcmask 1047556
    %v5702 = vsel %vm5701, %v5700, %v5698
    %5703 = vrot.lane.b32.xlu0 %v5702, 64
    %v5704 = vpop.permute.xlu0 %5703
    %vm5705 = vcmask 785920
    %s5706 = scalar_lea.vmem [#allocation0], 304
    %5707 = vst.msk [vmem:[%s5706] sm:$0xff] %vm5705, %v5704
    %s5708 = scalar_lea.vmem [#allocation1], 1346
    %v5709 = vld [vmem:[%s5708] ss:$8 sm:$0xf]
    %s5710 = scalar_lea.vmem [#allocation1], 1346
    %v5711 = vld [vmem:[%s5710] ss:$8 sm:$0xf0]
    %vm5712 = vcmask 1047556
    %v5713 = vsel %vm5712, %v5711, %v5709
    %5714 = vrot.lane.b32.xlu0 %v5713, 64
    %v5715 = vpop.permute.xlu0 %5714
    %vm5716 = vcmask 785920
    %s5717 = scalar_lea.vmem [#allocation0], 336
    %5718 = vst.msk [vmem:[%s5717] sm:$0xff] %vm5716, %v5715
    %s5719 = scalar_lea.vmem [#allocation1], 1474
    %v5720 = vld [vmem:[%s5719] ss:$8 sm:$0xf]
    %s5721 = scalar_lea.vmem [#allocation1], 1474
    %v5722 = vld [vmem:[%s5721] ss:$8 sm:$0xf0]
    %vm5723 = vcmask 1047556
    %v5724 = vsel %vm5723, %v5722, %v5720
    %5725 = vrot.lane.b32.xlu0 %v5724, 64
    %v5726 = vpop.permute.xlu0 %5725
    %vm5727 = vcmask 785920
    %s5728 = scalar_lea.vmem [#allocation0], 368
    %5729 = vst.msk [vmem:[%s5728] sm:$0xff] %vm5727, %v5726
    %s5730 = scalar_lea.vmem [#allocation1], 1602
    %v5731 = vld [vmem:[%s5730] ss:$8 sm:$0xf]
    %s5732 = scalar_lea.vmem [#allocation1], 1602
    %v5733 = vld [vmem:[%s5732] ss:$8 sm:$0xf0]
    %vm5734 = vcmask 1047556
    %v5735 = vsel %vm5734, %v5733, %v5731
    %5736 = vrot.lane.b32.xlu0 %v5735, 64
    %v5737 = vpop.permute.xlu0 %5736
    %vm5738 = vcmask 785920
    %s5739 = scalar_lea.vmem [#allocation0], 400
    %5740 = vst.msk [vmem:[%s5739] sm:$0xff] %vm5738, %v5737
    %s5741 = scalar_lea.vmem [#allocation1], 1730
    %v5742 = vld [vmem:[%s5741] ss:$8 sm:$0xf]
    %s5743 = scalar_lea.vmem [#allocation1], 1730
    %v5744 = vld [vmem:[%s5743] ss:$8 sm:$0xf0]
    %vm5745 = vcmask 1047556
    %v5746 = vsel %vm5745, %v5744, %v5742
    %5747 = vrot.lane.b32.xlu0 %v5746, 64
    %v5748 = vpop.permute.xlu0 %5747
    %vm5749 = vcmask 785920
    %s5750 = scalar_lea.vmem [#allocation0], 432
    %5751 = vst.msk [vmem:[%s5750] sm:$0xff] %vm5749, %v5748
    %s5752 = scalar_lea.vmem [#allocation1], 1858
    %v5753 = vld [vmem:[%s5752] ss:$8 sm:$0xf]
    %s5754 = scalar_lea.vmem [#allocation1], 1858
    %v5755 = vld [vmem:[%s5754] ss:$8 sm:$0xf0]
    %vm5756 = vcmask 1047556
    %v5757 = vsel %vm5756, %v5755, %v5753
    %5758 = vrot.lane.b32.xlu0 %v5757, 64
    %v5759 = vpop.permute.xlu0 %5758
    %vm5760 = vcmask 785920
    %s5761 = scalar_lea.vmem [#allocation0], 464
    %5762 = vst.msk [vmem:[%s5761] sm:$0xff] %vm5760, %v5759
    %s5763 = scalar_lea.vmem [#allocation1], 1986
    %v5764 = vld [vmem:[%s5763] ss:$8 sm:$0xf]
    %s5765 = scalar_lea.vmem [#allocation1], 1986
    %v5766 = vld [vmem:[%s5765] ss:$8 sm:$0xf0]
    %vm5767 = vcmask 1047556
    %v5768 = vsel %vm5767, %v5766, %v5764
    %5769 = vrot.lane.b32.xlu0 %v5768, 64
    %v5770 = vpop.permute.xlu0 %5769
    %vm5771 = vcmask 785920
    %s5772 = scalar_lea.vmem [#allocation0], 496
    %5773 = vst.msk [vmem:[%s5772] sm:$0xff] %vm5771, %v5770
    %s5774 = scalar_lea.vmem [#allocation1], 70
    %v5775 = vld [vmem:[%s5774] ss:$8 sm:$0xf]
    %s5776 = scalar_lea.vmem [#allocation1], 70
    %v5777 = vld [vmem:[%s5776] ss:$8 sm:$0xf0]
    %vm5778 = vcmask 1047556
    %v5779 = vsel %vm5778, %v5777, %v5775
    %5780 = vrot.lane.b32.xlu0 %v5779, 64
    %v5781 = vpop.permute.xlu0 %5780
    %vm5782 = vcmask 785920
    %s5783 = scalar_lea.vmem [#allocation0], 24
    %5784 = vst.msk [vmem:[%s5783] sm:$0xff] %vm5782, %v5781
    %s5785 = scalar_lea.vmem [#allocation1], 198
    %v5786 = vld [vmem:[%s5785] ss:$8 sm:$0xf]
    %s5787 = scalar_lea.vmem [#allocation1], 198
    %v5788 = vld [vmem:[%s5787] ss:$8 sm:$0xf0]
    %vm5789 = vcmask 1047556
    %v5790 = vsel %vm5789, %v5788, %v5786
    %5791 = vrot.lane.b32.xlu0 %v5790, 64
    %v5792 = vpop.permute.xlu0 %5791
    %vm5793 = vcmask 785920
    %s5794 = scalar_lea.vmem [#allocation0], 56
    %5795 = vst.msk [vmem:[%s5794] sm:$0xff] %vm5793, %v5792
    %s5796 = scalar_lea.vmem [#allocation1], 326
    %v5797 = vld [vmem:[%s5796] ss:$8 sm:$0xf]
    %s5798 = scalar_lea.vmem [#allocation1], 326
    %v5799 = vld [vmem:[%s5798] ss:$8 sm:$0xf0]
    %vm5800 = vcmask 1047556
    %v5801 = vsel %vm5800, %v5799, %v5797
    %5802 = vrot.lane.b32.xlu0 %v5801, 64
    %v5803 = vpop.permute.xlu0 %5802
    %vm5804 = vcmask 785920
    %s5805 = scalar_lea.vmem [#allocation0], 88
    %5806 = vst.msk [vmem:[%s5805] sm:$0xff] %vm5804, %v5803
    %s5807 = scalar_lea.vmem [#allocation1], 454
    %v5808 = vld [vmem:[%s5807] ss:$8 sm:$0xf]
    %s5809 = scalar_lea.vmem [#allocation1], 454
    %v5810 = vld [vmem:[%s5809] ss:$8 sm:$0xf0]
    %vm5811 = vcmask 1047556
    %v5812 = vsel %vm5811, %v5810, %v5808
    %5813 = vrot.lane.b32.xlu0 %v5812, 64
    %v5814 = vpop.permute.xlu0 %5813
    %vm5815 = vcmask 785920
    %s5816 = scalar_lea.vmem [#allocation0], 120
    %5817 = vst.msk [vmem:[%s5816] sm:$0xff] %vm5815, %v5814
    %s5818 = scalar_lea.vmem [#allocation1], 582
    %v5819 = vld [vmem:[%s5818] ss:$8 sm:$0xf]
    %s5820 = scalar_lea.vmem [#allocation1], 582
    %v5821 = vld [vmem:[%s5820] ss:$8 sm:$0xf0]
    %vm5822 = vcmask 1047556
    %v5823 = vsel %vm5822, %v5821, %v5819
    %5824 = vrot.lane.b32.xlu0 %v5823, 64
    %v5825 = vpop.permute.xlu0 %5824
    %vm5826 = vcmask 785920
    %s5827 = scalar_lea.vmem [#allocation0], 152
    %5828 = vst.msk [vmem:[%s5827] sm:$0xff] %vm5826, %v5825
    %s5829 = scalar_lea.vmem [#allocation1], 710
    %v5830 = vld [vmem:[%s5829] ss:$8 sm:$0xf]
    %s5831 = scalar_lea.vmem [#allocation1], 710
    %v5832 = vld [vmem:[%s5831] ss:$8 sm:$0xf0]
    %vm5833 = vcmask 1047556
    %v5834 = vsel %vm5833, %v5832, %v5830
    %5835 = vrot.lane.b32.xlu0 %v5834, 64
    %v5836 = vpop.permute.xlu0 %5835
    %vm5837 = vcmask 785920
    %s5838 = scalar_lea.vmem [#allocation0], 184
    %5839 = vst.msk [vmem:[%s5838] sm:$0xff] %vm5837, %v5836
    %s5840 = scalar_lea.vmem [#allocation1], 838
    %v5841 = vld [vmem:[%s5840] ss:$8 sm:$0xf]
    %s5842 = scalar_lea.vmem [#allocation1], 838
    %v5843 = vld [vmem:[%s5842] ss:$8 sm:$0xf0]
    %vm5844 = vcmask 1047556
    %v5845 = vsel %vm5844, %v5843, %v5841
    %5846 = vrot.lane.b32.xlu0 %v5845, 64
    %v5847 = vpop.permute.xlu0 %5846
    %vm5848 = vcmask 785920
    %s5849 = scalar_lea.vmem [#allocation0], 216
    %5850 = vst.msk [vmem:[%s5849] sm:$0xff] %vm5848, %v5847
    %s5851 = scalar_lea.vmem [#allocation1], 966
    %v5852 = vld [vmem:[%s5851] ss:$8 sm:$0xf]
    %s5853 = scalar_lea.vmem [#allocation1], 966
    %v5854 = vld [vmem:[%s5853] ss:$8 sm:$0xf0]
    %vm5855 = vcmask 1047556
    %v5856 = vsel %vm5855, %v5854, %v5852
    %5857 = vrot.lane.b32.xlu0 %v5856, 64
    %v5858 = vpop.permute.xlu0 %5857
    %vm5859 = vcmask 785920
    %s5860 = scalar_lea.vmem [#allocation0], 248
    %5861 = vst.msk [vmem:[%s5860] sm:$0xff] %vm5859, %v5858
    %s5862 = scalar_lea.vmem [#allocation1], 1094
    %v5863 = vld [vmem:[%s5862] ss:$8 sm:$0xf]
    %s5864 = scalar_lea.vmem [#allocation1], 1094
    %v5865 = vld [vmem:[%s5864] ss:$8 sm:$0xf0]
    %vm5866 = vcmask 1047556
    %v5867 = vsel %vm5866, %v5865, %v5863
    %5868 = vrot.lane.b32.xlu0 %v5867, 64
    %v5869 = vpop.permute.xlu0 %5868
    %vm5870 = vcmask 785920
    %s5871 = scalar_lea.vmem [#allocation0], 280
    %5872 = vst.msk [vmem:[%s5871] sm:$0xff] %vm5870, %v5869
    %s5873 = scalar_lea.vmem [#allocation1], 1222
    %v5874 = vld [vmem:[%s5873] ss:$8 sm:$0xf]
    %s5875 = scalar_lea.vmem [#allocation1], 1222
    %v5876 = vld [vmem:[%s5875] ss:$8 sm:$0xf0]
    %vm5877 = vcmask 1047556
    %v5878 = vsel %vm5877, %v5876, %v5874
    %5879 = vrot.lane.b32.xlu0 %v5878, 64
    %v5880 = vpop.permute.xlu0 %5879
    %vm5881 = vcmask 785920
    %s5882 = scalar_lea.vmem [#allocation0], 312
    %5883 = vst.msk [vmem:[%s5882] sm:$0xff] %vm5881, %v5880
    %s5884 = scalar_lea.vmem [#allocation1], 1350
    %v5885 = vld [vmem:[%s5884] ss:$8 sm:$0xf]
    %s5886 = scalar_lea.vmem [#allocation1], 1350
    %v5887 = vld [vmem:[%s5886] ss:$8 sm:$0xf0]
    %vm5888 = vcmask 1047556
    %v5889 = vsel %vm5888, %v5887, %v5885
    %5890 = vrot.lane.b32.xlu0 %v5889, 64
    %v5891 = vpop.permute.xlu0 %5890
    %vm5892 = vcmask 785920
    %s5893 = scalar_lea.vmem [#allocation0], 344
    %5894 = vst.msk [vmem:[%s5893] sm:$0xff] %vm5892, %v5891
    %s5895 = scalar_lea.vmem [#allocation1], 1478
    %v5896 = vld [vmem:[%s5895] ss:$8 sm:$0xf]
    %s5897 = scalar_lea.vmem [#allocation1], 1478
    %v5898 = vld [vmem:[%s5897] ss:$8 sm:$0xf0]
    %vm5899 = vcmask 1047556
    %v5900 = vsel %vm5899, %v5898, %v5896
    %5901 = vrot.lane.b32.xlu0 %v5900, 64
    %v5902 = vpop.permute.xlu0 %5901
    %vm5903 = vcmask 785920
    %s5904 = scalar_lea.vmem [#allocation0], 376
    %5905 = vst.msk [vmem:[%s5904] sm:$0xff] %vm5903, %v5902
    %s5906 = scalar_lea.vmem [#allocation1], 1606
    %v5907 = vld [vmem:[%s5906] ss:$8 sm:$0xf]
    %s5908 = scalar_lea.vmem [#allocation1], 1606
    %v5909 = vld [vmem:[%s5908] ss:$8 sm:$0xf0]
    %vm5910 = vcmask 1047556
    %v5911 = vsel %vm5910, %v5909, %v5907
    %5912 = vrot.lane.b32.xlu0 %v5911, 64
    %v5913 = vpop.permute.xlu0 %5912
    %vm5914 = vcmask 785920
    %s5915 = scalar_lea.vmem [#allocation0], 408
    %5916 = vst.msk [vmem:[%s5915] sm:$0xff] %vm5914, %v5913
    %s5917 = scalar_lea.vmem [#allocation1], 1734
    %v5918 = vld [vmem:[%s5917] ss:$8 sm:$0xf]
    %s5919 = scalar_lea.vmem [#allocation1], 1734
    %v5920 = vld [vmem:[%s5919] ss:$8 sm:$0xf0]
    %vm5921 = vcmask 1047556
    %v5922 = vsel %vm5921, %v5920, %v5918
    %5923 = vrot.lane.b32.xlu0 %v5922, 64
    %v5924 = vpop.permute.xlu0 %5923
    %vm5925 = vcmask 785920
    %s5926 = scalar_lea.vmem [#allocation0], 440
    %5927 = vst.msk [vmem:[%s5926] sm:$0xff] %vm5925, %v5924
    %s5928 = scalar_lea.vmem [#allocation1], 1862
    %v5929 = vld [vmem:[%s5928] ss:$8 sm:$0xf]
    %s5930 = scalar_lea.vmem [#allocation1], 1862
    %v5931 = vld [vmem:[%s5930] ss:$8 sm:$0xf0]
    %vm5932 = vcmask 1047556
    %v5933 = vsel %vm5932, %v5931, %v5929
    %5934 = vrot.lane.b32.xlu0 %v5933, 64
    %v5935 = vpop.permute.xlu0 %5934
    %vm5936 = vcmask 785920
    %s5937 = scalar_lea.vmem [#allocation0], 472
    %5938 = vst.msk [vmem:[%s5937] sm:$0xff] %vm5936, %v5935
    %s5939 = scalar_lea.vmem [#allocation1], 1990
    %v5940 = vld [vmem:[%s5939] ss:$8 sm:$0xf]
    %s5941 = scalar_lea.vmem [#allocation1], 1990
    %v5942 = vld [vmem:[%s5941] ss:$8 sm:$0xf0]
    %vm5943 = vcmask 1047556
    %v5944 = vsel %vm5943, %v5942, %v5940
    %5945 = vrot.lane.b32.xlu0 %v5944, 64
    %v5946 = vpop.permute.xlu0 %5945
    %vm5947 = vcmask 785920
    %s5948 = scalar_lea.vmem [#allocation0], 504
    %5949 = vst.msk [vmem:[%s5948] sm:$0xff] %vm5947, %v5946
    %s5950 = scalar_lea.vmem [#allocation1], 1
    %v5951 = vld [vmem:[%s5950] ss:$8 sm:$0xf]
    %s5952 = scalar_lea.vmem [#allocation1], 1
    %v5953 = vld [vmem:[%s5952] ss:$8 sm:$0xf0]
    %vm5954 = vcmask 1047556
    %v5955 = vsel %vm5954, %v5953, %v5951
    %5956 = vrot.lane.b32.xlu0 %v5955, 32
    %v5957 = vpop.permute.xlu0 %5956
    %vm5958 = vcmask 523520
    %5959 = vst.msk [vmem:[#allocation0] sm:$0xff] %vm5958, %v5957
    %s5960 = scalar_lea.vmem [#allocation1], 129
    %v5961 = vld [vmem:[%s5960] ss:$8 sm:$0xf]
    %s5962 = scalar_lea.vmem [#allocation1], 129
    %v5963 = vld [vmem:[%s5962] ss:$8 sm:$0xf0]
    %vm5964 = vcmask 1047556
    %v5965 = vsel %vm5964, %v5963, %v5961
    %5966 = vrot.lane.b32.xlu0 %v5965, 32
    %v5967 = vpop.permute.xlu0 %5966
    %vm5968 = vcmask 523520
    %s5969 = scalar_lea.vmem [#allocation0], 32
    %5970 = vst.msk [vmem:[%s5969] sm:$0xff] %vm5968, %v5967
    %s5971 = scalar_lea.vmem [#allocation1], 257
    %v5972 = vld [vmem:[%s5971] ss:$8 sm:$0xf]
    %s5973 = scalar_lea.vmem [#allocation1], 257
    %v5974 = vld [vmem:[%s5973] ss:$8 sm:$0xf0]
    %vm5975 = vcmask 1047556
    %v5976 = vsel %vm5975, %v5974, %v5972
    %5977 = vrot.lane.b32.xlu0 %v5976, 32
    %v5978 = vpop.permute.xlu0 %5977
    %vm5979 = vcmask 523520
    %s5980 = scalar_lea.vmem [#allocation0], 64
    %5981 = vst.msk [vmem:[%s5980] sm:$0xff] %vm5979, %v5978
    %s5982 = scalar_lea.vmem [#allocation1], 385
    %v5983 = vld [vmem:[%s5982] ss:$8 sm:$0xf]
    %s5984 = scalar_lea.vmem [#allocation1], 385
    %v5985 = vld [vmem:[%s5984] ss:$8 sm:$0xf0]
    %vm5986 = vcmask 1047556
    %v5987 = vsel %vm5986, %v5985, %v5983
    %5988 = vrot.lane.b32.xlu0 %v5987, 32
    %v5989 = vpop.permute.xlu0 %5988
    %vm5990 = vcmask 523520
    %s5991 = scalar_lea.vmem [#allocation0], 96
    %5992 = vst.msk [vmem:[%s5991] sm:$0xff] %vm5990, %v5989
    %s5993 = scalar_lea.vmem [#allocation1], 513
    %v5994 = vld [vmem:[%s5993] ss:$8 sm:$0xf]
    %s5995 = scalar_lea.vmem [#allocation1], 513
    %v5996 = vld [vmem:[%s5995] ss:$8 sm:$0xf0]
    %vm5997 = vcmask 1047556
    %v5998 = vsel %vm5997, %v5996, %v5994
    %5999 = vrot.lane.b32.xlu0 %v5998, 32
    %v6000 = vpop.permute.xlu0 %5999
    %vm6001 = vcmask 523520
    %s6002 = scalar_lea.vmem [#allocation0], 128
    %6003 = vst.msk [vmem:[%s6002] sm:$0xff] %vm6001, %v6000
    %s6004 = scalar_lea.vmem [#allocation1], 641
    %v6005 = vld [vmem:[%s6004] ss:$8 sm:$0xf]
    %s6006 = scalar_lea.vmem [#allocation1], 641
    %v6007 = vld [vmem:[%s6006] ss:$8 sm:$0xf0]
    %vm6008 = vcmask 1047556
    %v6009 = vsel %vm6008, %v6007, %v6005
    %6010 = vrot.lane.b32.xlu0 %v6009, 32
    %v6011 = vpop.permute.xlu0 %6010
    %vm6012 = vcmask 523520
    %s6013 = scalar_lea.vmem [#allocation0], 160
    %6014 = vst.msk [vmem:[%s6013] sm:$0xff] %vm6012, %v6011
    %s6015 = scalar_lea.vmem [#allocation1], 769
    %v6016 = vld [vmem:[%s6015] ss:$8 sm:$0xf]
    %s6017 = scalar_lea.vmem [#allocation1], 769
    %v6018 = vld [vmem:[%s6017] ss:$8 sm:$0xf0]
    %vm6019 = vcmask 1047556
    %v6020 = vsel %vm6019, %v6018, %v6016
    %6021 = vrot.lane.b32.xlu0 %v6020, 32
    %v6022 = vpop.permute.xlu0 %6021
    %vm6023 = vcmask 523520
    %s6024 = scalar_lea.vmem [#allocation0], 192
    %6025 = vst.msk [vmem:[%s6024] sm:$0xff] %vm6023, %v6022
    %s6026 = scalar_lea.vmem [#allocation1], 897
    %v6027 = vld [vmem:[%s6026] ss:$8 sm:$0xf]
    %s6028 = scalar_lea.vmem [#allocation1], 897
    %v6029 = vld [vmem:[%s6028] ss:$8 sm:$0xf0]
    %vm6030 = vcmask 1047556
    %v6031 = vsel %vm6030, %v6029, %v6027
    %6032 = vrot.lane.b32.xlu0 %v6031, 32
    %v6033 = vpop.permute.xlu0 %6032
    %vm6034 = vcmask 523520
    %s6035 = scalar_lea.vmem [#allocation0], 224
    %6036 = vst.msk [vmem:[%s6035] sm:$0xff] %vm6034, %v6033
    %s6037 = scalar_lea.vmem [#allocation1], 1025
    %v6038 = vld [vmem:[%s6037] ss:$8 sm:$0xf]
    %s6039 = scalar_lea.vmem [#allocation1], 1025
    %v6040 = vld [vmem:[%s6039] ss:$8 sm:$0xf0]
    %vm6041 = vcmask 1047556
    %v6042 = vsel %vm6041, %v6040, %v6038
    %6043 = vrot.lane.b32.xlu0 %v6042, 32
    %v6044 = vpop.permute.xlu0 %6043
    %vm6045 = vcmask 523520
    %s6046 = scalar_lea.vmem [#allocation0], 256
    %6047 = vst.msk [vmem:[%s6046] sm:$0xff] %vm6045, %v6044
    %s6048 = scalar_lea.vmem [#allocation1], 1153
    %v6049 = vld [vmem:[%s6048] ss:$8 sm:$0xf]
    %s6050 = scalar_lea.vmem [#allocation1], 1153
    %v6051 = vld [vmem:[%s6050] ss:$8 sm:$0xf0]
    %vm6052 = vcmask 1047556
    %v6053 = vsel %vm6052, %v6051, %v6049
    %6054 = vrot.lane.b32.xlu0 %v6053, 32
    %v6055 = vpop.permute.xlu0 %6054
    %vm6056 = vcmask 523520
    %s6057 = scalar_lea.vmem [#allocation0], 288
    %6058 = vst.msk [vmem:[%s6057] sm:$0xff] %vm6056, %v6055
    %s6059 = scalar_lea.vmem [#allocation1], 1281
    %v6060 = vld [vmem:[%s6059] ss:$8 sm:$0xf]
    %s6061 = scalar_lea.vmem [#allocation1], 1281
    %v6062 = vld [vmem:[%s6061] ss:$8 sm:$0xf0]
    %vm6063 = vcmask 1047556
    %v6064 = vsel %vm6063, %v6062, %v6060
    %6065 = vrot.lane.b32.xlu0 %v6064, 32
    %v6066 = vpop.permute.xlu0 %6065
    %vm6067 = vcmask 523520
    %s6068 = scalar_lea.vmem [#allocation0], 320
    %6069 = vst.msk [vmem:[%s6068] sm:$0xff] %vm6067, %v6066
    %s6070 = scalar_lea.vmem [#allocation1], 1409
    %v6071 = vld [vmem:[%s6070] ss:$8 sm:$0xf]
    %s6072 = scalar_lea.vmem [#allocation1], 1409
    %v6073 = vld [vmem:[%s6072] ss:$8 sm:$0xf0]
    %vm6074 = vcmask 1047556
    %v6075 = vsel %vm6074, %v6073, %v6071
    %6076 = vrot.lane.b32.xlu0 %v6075, 32
    %v6077 = vpop.permute.xlu0 %6076
    %vm6078 = vcmask 523520
    %s6079 = scalar_lea.vmem [#allocation0], 352
    %6080 = vst.msk [vmem:[%s6079] sm:$0xff] %vm6078, %v6077
    %s6081 = scalar_lea.vmem [#allocation1], 1537
    %v6082 = vld [vmem:[%s6081] ss:$8 sm:$0xf]
    %s6083 = scalar_lea.vmem [#allocation1], 1537
    %v6084 = vld [vmem:[%s6083] ss:$8 sm:$0xf0]
    %vm6085 = vcmask 1047556
    %v6086 = vsel %vm6085, %v6084, %v6082
    %6087 = vrot.lane.b32.xlu0 %v6086, 32
    %v6088 = vpop.permute.xlu0 %6087
    %vm6089 = vcmask 523520
    %s6090 = scalar_lea.vmem [#allocation0], 384
    %6091 = vst.msk [vmem:[%s6090] sm:$0xff] %vm6089, %v6088
    %s6092 = scalar_lea.vmem [#allocation1], 1665
    %v6093 = vld [vmem:[%s6092] ss:$8 sm:$0xf]
    %s6094 = scalar_lea.vmem [#allocation1], 1665
    %v6095 = vld [vmem:[%s6094] ss:$8 sm:$0xf0]
    %vm6096 = vcmask 1047556
    %v6097 = vsel %vm6096, %v6095, %v6093
    %6098 = vrot.lane.b32.xlu0 %v6097, 32
    %v6099 = vpop.permute.xlu0 %6098
    %vm6100 = vcmask 523520
    %s6101 = scalar_lea.vmem [#allocation0], 416
    %6102 = vst.msk [vmem:[%s6101] sm:$0xff] %vm6100, %v6099
    %s6103 = scalar_lea.vmem [#allocation1], 1793
    %v6104 = vld [vmem:[%s6103] ss:$8 sm:$0xf]
    %s6105 = scalar_lea.vmem [#allocation1], 1793
    %v6106 = vld [vmem:[%s6105] ss:$8 sm:$0xf0]
    %vm6107 = vcmask 1047556
    %v6108 = vsel %vm6107, %v6106, %v6104
    %6109 = vrot.lane.b32.xlu0 %v6108, 32
    %v6110 = vpop.permute.xlu0 %6109
    %vm6111 = vcmask 523520
    %s6112 = scalar_lea.vmem [#allocation0], 448
    %6113 = vst.msk [vmem:[%s6112] sm:$0xff] %vm6111, %v6110
    %s6114 = scalar_lea.vmem [#allocation1], 1921
    %v6115 = vld [vmem:[%s6114] ss:$8 sm:$0xf]
    %s6116 = scalar_lea.vmem [#allocation1], 1921
    %v6117 = vld [vmem:[%s6116] ss:$8 sm:$0xf0]
    %vm6118 = vcmask 1047556
    %v6119 = vsel %vm6118, %v6117, %v6115
    %6120 = vrot.lane.b32.xlu0 %v6119, 32
    %v6121 = vpop.permute.xlu0 %6120
    %vm6122 = vcmask 523520
    %s6123 = scalar_lea.vmem [#allocation0], 480
    %6124 = vst.msk [vmem:[%s6123] sm:$0xff] %vm6122, %v6121
    %s6125 = scalar_lea.vmem [#allocation1], 5
    %v6126 = vld [vmem:[%s6125] ss:$8 sm:$0xf]
    %s6127 = scalar_lea.vmem [#allocation1], 5
    %v6128 = vld [vmem:[%s6127] ss:$8 sm:$0xf0]
    %vm6129 = vcmask 1047556
    %v6130 = vsel %vm6129, %v6128, %v6126
    %6131 = vrot.lane.b32.xlu0 %v6130, 32
    %v6132 = vpop.permute.xlu0 %6131
    %vm6133 = vcmask 523520
    %s6134 = scalar_lea.vmem [#allocation0], 8
    %6135 = vst.msk [vmem:[%s6134] sm:$0xff] %vm6133, %v6132
    %s6136 = scalar_lea.vmem [#allocation1], 133
    %v6137 = vld [vmem:[%s6136] ss:$8 sm:$0xf]
    %s6138 = scalar_lea.vmem [#allocation1], 133
    %v6139 = vld [vmem:[%s6138] ss:$8 sm:$0xf0]
    %vm6140 = vcmask 1047556
    %v6141 = vsel %vm6140, %v6139, %v6137
    %6142 = vrot.lane.b32.xlu0 %v6141, 32
    %v6143 = vpop.permute.xlu0 %6142
    %vm6144 = vcmask 523520
    %s6145 = scalar_lea.vmem [#allocation0], 40
    %6146 = vst.msk [vmem:[%s6145] sm:$0xff] %vm6144, %v6143
    %s6147 = scalar_lea.vmem [#allocation1], 261
    %v6148 = vld [vmem:[%s6147] ss:$8 sm:$0xf]
    %s6149 = scalar_lea.vmem [#allocation1], 261
    %v6150 = vld [vmem:[%s6149] ss:$8 sm:$0xf0]
    %vm6151 = vcmask 1047556
    %v6152 = vsel %vm6151, %v6150, %v6148
    %6153 = vrot.lane.b32.xlu0 %v6152, 32
    %v6154 = vpop.permute.xlu0 %6153
    %vm6155 = vcmask 523520
    %s6156 = scalar_lea.vmem [#allocation0], 72
    %6157 = vst.msk [vmem:[%s6156] sm:$0xff] %vm6155, %v6154
    %s6158 = scalar_lea.vmem [#allocation1], 389
    %v6159 = vld [vmem:[%s6158] ss:$8 sm:$0xf]
    %s6160 = scalar_lea.vmem [#allocation1], 389
    %v6161 = vld [vmem:[%s6160] ss:$8 sm:$0xf0]
    %vm6162 = vcmask 1047556
    %v6163 = vsel %vm6162, %v6161, %v6159
    %6164 = vrot.lane.b32.xlu0 %v6163, 32
    %v6165 = vpop.permute.xlu0 %6164
    %vm6166 = vcmask 523520
    %s6167 = scalar_lea.vmem [#allocation0], 104
    %6168 = vst.msk [vmem:[%s6167] sm:$0xff] %vm6166, %v6165
    %s6169 = scalar_lea.vmem [#allocation1], 517
    %v6170 = vld [vmem:[%s6169] ss:$8 sm:$0xf]
    %s6171 = scalar_lea.vmem [#allocation1], 517
    %v6172 = vld [vmem:[%s6171] ss:$8 sm:$0xf0]
    %vm6173 = vcmask 1047556
    %v6174 = vsel %vm6173, %v6172, %v6170
    %6175 = vrot.lane.b32.xlu0 %v6174, 32
    %v6176 = vpop.permute.xlu0 %6175
    %vm6177 = vcmask 523520
    %s6178 = scalar_lea.vmem [#allocation0], 136
    %6179 = vst.msk [vmem:[%s6178] sm:$0xff] %vm6177, %v6176
    %s6180 = scalar_lea.vmem [#allocation1], 645
    %v6181 = vld [vmem:[%s6180] ss:$8 sm:$0xf]
    %s6182 = scalar_lea.vmem [#allocation1], 645
    %v6183 = vld [vmem:[%s6182] ss:$8 sm:$0xf0]
    %vm6184 = vcmask 1047556
    %v6185 = vsel %vm6184, %v6183, %v6181
    %6186 = vrot.lane.b32.xlu0 %v6185, 32
    %v6187 = vpop.permute.xlu0 %6186
    %vm6188 = vcmask 523520
    %s6189 = scalar_lea.vmem [#allocation0], 168
    %6190 = vst.msk [vmem:[%s6189] sm:$0xff] %vm6188, %v6187
    %s6191 = scalar_lea.vmem [#allocation1], 773
    %v6192 = vld [vmem:[%s6191] ss:$8 sm:$0xf]
    %s6193 = scalar_lea.vmem [#allocation1], 773
    %v6194 = vld [vmem:[%s6193] ss:$8 sm:$0xf0]
    %vm6195 = vcmask 1047556
    %v6196 = vsel %vm6195, %v6194, %v6192
    %6197 = vrot.lane.b32.xlu0 %v6196, 32
    %v6198 = vpop.permute.xlu0 %6197
    %vm6199 = vcmask 523520
    %s6200 = scalar_lea.vmem [#allocation0], 200
    %6201 = vst.msk [vmem:[%s6200] sm:$0xff] %vm6199, %v6198
    %s6202 = scalar_lea.vmem [#allocation1], 901
    %v6203 = vld [vmem:[%s6202] ss:$8 sm:$0xf]
    %s6204 = scalar_lea.vmem [#allocation1], 901
    %v6205 = vld [vmem:[%s6204] ss:$8 sm:$0xf0]
    %vm6206 = vcmask 1047556
    %v6207 = vsel %vm6206, %v6205, %v6203
    %6208 = vrot.lane.b32.xlu0 %v6207, 32
    %v6209 = vpop.permute.xlu0 %6208
    %vm6210 = vcmask 523520
    %s6211 = scalar_lea.vmem [#allocation0], 232
    %6212 = vst.msk [vmem:[%s6211] sm:$0xff] %vm6210, %v6209
    %s6213 = scalar_lea.vmem [#allocation1], 1029
    %v6214 = vld [vmem:[%s6213] ss:$8 sm:$0xf]
    %s6215 = scalar_lea.vmem [#allocation1], 1029
    %v6216 = vld [vmem:[%s6215] ss:$8 sm:$0xf0]
    %vm6217 = vcmask 1047556
    %v6218 = vsel %vm6217, %v6216, %v6214
    %6219 = vrot.lane.b32.xlu0 %v6218, 32
    %v6220 = vpop.permute.xlu0 %6219
    %vm6221 = vcmask 523520
    %s6222 = scalar_lea.vmem [#allocation0], 264
    %6223 = vst.msk [vmem:[%s6222] sm:$0xff] %vm6221, %v6220
    %s6224 = scalar_lea.vmem [#allocation1], 1157
    %v6225 = vld [vmem:[%s6224] ss:$8 sm:$0xf]
    %s6226 = scalar_lea.vmem [#allocation1], 1157
    %v6227 = vld [vmem:[%s6226] ss:$8 sm:$0xf0]
    %vm6228 = vcmask 1047556
    %v6229 = vsel %vm6228, %v6227, %v6225
    %6230 = vrot.lane.b32.xlu0 %v6229, 32
    %v6231 = vpop.permute.xlu0 %6230
    %vm6232 = vcmask 523520
    %s6233 = scalar_lea.vmem [#allocation0], 296
    %6234 = vst.msk [vmem:[%s6233] sm:$0xff] %vm6232, %v6231
    %s6235 = scalar_lea.vmem [#allocation1], 1285
    %v6236 = vld [vmem:[%s6235] ss:$8 sm:$0xf]
    %s6237 = scalar_lea.vmem [#allocation1], 1285
    %v6238 = vld [vmem:[%s6237] ss:$8 sm:$0xf0]
    %vm6239 = vcmask 1047556
    %v6240 = vsel %vm6239, %v6238, %v6236
    %6241 = vrot.lane.b32.xlu0 %v6240, 32
    %v6242 = vpop.permute.xlu0 %6241
    %vm6243 = vcmask 523520
    %s6244 = scalar_lea.vmem [#allocation0], 328
    %6245 = vst.msk [vmem:[%s6244] sm:$0xff] %vm6243, %v6242
    %s6246 = scalar_lea.vmem [#allocation1], 1413
    %v6247 = vld [vmem:[%s6246] ss:$8 sm:$0xf]
    %s6248 = scalar_lea.vmem [#allocation1], 1413
    %v6249 = vld [vmem:[%s6248] ss:$8 sm:$0xf0]
    %vm6250 = vcmask 1047556
    %v6251 = vsel %vm6250, %v6249, %v6247
    %6252 = vrot.lane.b32.xlu0 %v6251, 32
    %v6253 = vpop.permute.xlu0 %6252
    %vm6254 = vcmask 523520
    %s6255 = scalar_lea.vmem [#allocation0], 360
    %6256 = vst.msk [vmem:[%s6255] sm:$0xff] %vm6254, %v6253
    %s6257 = scalar_lea.vmem [#allocation1], 1541
    %v6258 = vld [vmem:[%s6257] ss:$8 sm:$0xf]
    %s6259 = scalar_lea.vmem [#allocation1], 1541
    %v6260 = vld [vmem:[%s6259] ss:$8 sm:$0xf0]
    %vm6261 = vcmask 1047556
    %v6262 = vsel %vm6261, %v6260, %v6258
    %6263 = vrot.lane.b32.xlu0 %v6262, 32
    %v6264 = vpop.permute.xlu0 %6263
    %vm6265 = vcmask 523520
    %s6266 = scalar_lea.vmem [#allocation0], 392
    %6267 = vst.msk [vmem:[%s6266] sm:$0xff] %vm6265, %v6264
    %s6268 = scalar_lea.vmem [#allocation1], 1669
    %v6269 = vld [vmem:[%s6268] ss:$8 sm:$0xf]
    %s6270 = scalar_lea.vmem [#allocation1], 1669
    %v6271 = vld [vmem:[%s6270] ss:$8 sm:$0xf0]
    %vm6272 = vcmask 1047556
    %v6273 = vsel %vm6272, %v6271, %v6269
    %6274 = vrot.lane.b32.xlu0 %v6273, 32
    %v6275 = vpop.permute.xlu0 %6274
    %vm6276 = vcmask 523520
    %s6277 = scalar_lea.vmem [#allocation0], 424
    %6278 = vst.msk [vmem:[%s6277] sm:$0xff] %vm6276, %v6275
    %s6279 = scalar_lea.vmem [#allocation1], 1797
    %v6280 = vld [vmem:[%s6279] ss:$8 sm:$0xf]
    %s6281 = scalar_lea.vmem [#allocation1], 1797
    %v6282 = vld [vmem:[%s6281] ss:$8 sm:$0xf0]
    %vm6283 = vcmask 1047556
    %v6284 = vsel %vm6283, %v6282, %v6280
    %6285 = vrot.lane.b32.xlu0 %v6284, 32
    %v6286 = vpop.permute.xlu0 %6285
    %vm6287 = vcmask 523520
    %s6288 = scalar_lea.vmem [#allocation0], 456
    %6289 = vst.msk [vmem:[%s6288] sm:$0xff] %vm6287, %v6286
    %s6290 = scalar_lea.vmem [#allocation1], 1925
    %v6291 = vld [vmem:[%s6290] ss:$8 sm:$0xf]
    %s6292 = scalar_lea.vmem [#allocation1], 1925
    %v6293 = vld [vmem:[%s6292] ss:$8 sm:$0xf0]
    %vm6294 = vcmask 1047556
    %v6295 = vsel %vm6294, %v6293, %v6291
    %6296 = vrot.lane.b32.xlu0 %v6295, 32
    %v6297 = vpop.permute.xlu0 %6296
    %vm6298 = vcmask 523520
    %s6299 = scalar_lea.vmem [#allocation0], 488
    %6300 = vst.msk [vmem:[%s6299] sm:$0xff] %vm6298, %v6297
    %s6301 = scalar_lea.vmem [#allocation1], 65
    %v6302 = vld [vmem:[%s6301] ss:$8 sm:$0xf]
    %s6303 = scalar_lea.vmem [#allocation1], 65
    %v6304 = vld [vmem:[%s6303] ss:$8 sm:$0xf0]
    %vm6305 = vcmask 1047556
    %v6306 = vsel %vm6305, %v6304, %v6302
    %6307 = vrot.lane.b32.xlu0 %v6306, 32
    %v6308 = vpop.permute.xlu0 %6307
    %vm6309 = vcmask 523520
    %s6310 = scalar_lea.vmem [#allocation0], 16
    %6311 = vst.msk [vmem:[%s6310] sm:$0xff] %vm6309, %v6308
    %s6312 = scalar_lea.vmem [#allocation1], 193
    %v6313 = vld [vmem:[%s6312] ss:$8 sm:$0xf]
    %s6314 = scalar_lea.vmem [#allocation1], 193
    %v6315 = vld [vmem:[%s6314] ss:$8 sm:$0xf0]
    %vm6316 = vcmask 1047556
    %v6317 = vsel %vm6316, %v6315, %v6313
    %6318 = vrot.lane.b32.xlu0 %v6317, 32
    %v6319 = vpop.permute.xlu0 %6318
    %vm6320 = vcmask 523520
    %s6321 = scalar_lea.vmem [#allocation0], 48
    %6322 = vst.msk [vmem:[%s6321] sm:$0xff] %vm6320, %v6319
    %s6323 = scalar_lea.vmem [#allocation1], 321
    %v6324 = vld [vmem:[%s6323] ss:$8 sm:$0xf]
    %s6325 = scalar_lea.vmem [#allocation1], 321
    %v6326 = vld [vmem:[%s6325] ss:$8 sm:$0xf0]
    %vm6327 = vcmask 1047556
    %v6328 = vsel %vm6327, %v6326, %v6324
    %6329 = vrot.lane.b32.xlu0 %v6328, 32
    %v6330 = vpop.permute.xlu0 %6329
    %vm6331 = vcmask 523520
    %s6332 = scalar_lea.vmem [#allocation0], 80
    %6333 = vst.msk [vmem:[%s6332] sm:$0xff] %vm6331, %v6330
    %s6334 = scalar_lea.vmem [#allocation1], 449
    %v6335 = vld [vmem:[%s6334] ss:$8 sm:$0xf]
    %s6336 = scalar_lea.vmem [#allocation1], 449
    %v6337 = vld [vmem:[%s6336] ss:$8 sm:$0xf0]
    %vm6338 = vcmask 1047556
    %v6339 = vsel %vm6338, %v6337, %v6335
    %6340 = vrot.lane.b32.xlu0 %v6339, 32
    %v6341 = vpop.permute.xlu0 %6340
    %vm6342 = vcmask 523520
    %s6343 = scalar_lea.vmem [#allocation0], 112
    %6344 = vst.msk [vmem:[%s6343] sm:$0xff] %vm6342, %v6341
    %s6345 = scalar_lea.vmem [#allocation1], 577
    %v6346 = vld [vmem:[%s6345] ss:$8 sm:$0xf]
    %s6347 = scalar_lea.vmem [#allocation1], 577
    %v6348 = vld [vmem:[%s6347] ss:$8 sm:$0xf0]
    %vm6349 = vcmask 1047556
    %v6350 = vsel %vm6349, %v6348, %v6346
    %6351 = vrot.lane.b32.xlu0 %v6350, 32
    %v6352 = vpop.permute.xlu0 %6351
    %vm6353 = vcmask 523520
    %s6354 = scalar_lea.vmem [#allocation0], 144
    %6355 = vst.msk [vmem:[%s6354] sm:$0xff] %vm6353, %v6352
    %s6356 = scalar_lea.vmem [#allocation1], 705
    %v6357 = vld [vmem:[%s6356] ss:$8 sm:$0xf]
    %s6358 = scalar_lea.vmem [#allocation1], 705
    %v6359 = vld [vmem:[%s6358] ss:$8 sm:$0xf0]
    %vm6360 = vcmask 1047556
    %v6361 = vsel %vm6360, %v6359, %v6357
    %6362 = vrot.lane.b32.xlu0 %v6361, 32
    %v6363 = vpop.permute.xlu0 %6362
    %vm6364 = vcmask 523520
    %s6365 = scalar_lea.vmem [#allocation0], 176
    %6366 = vst.msk [vmem:[%s6365] sm:$0xff] %vm6364, %v6363
    %s6367 = scalar_lea.vmem [#allocation1], 833
    %v6368 = vld [vmem:[%s6367] ss:$8 sm:$0xf]
    %s6369 = scalar_lea.vmem [#allocation1], 833
    %v6370 = vld [vmem:[%s6369] ss:$8 sm:$0xf0]
    %vm6371 = vcmask 1047556
    %v6372 = vsel %vm6371, %v6370, %v6368
    %6373 = vrot.lane.b32.xlu0 %v6372, 32
    %v6374 = vpop.permute.xlu0 %6373
    %vm6375 = vcmask 523520
    %s6376 = scalar_lea.vmem [#allocation0], 208
    %6377 = vst.msk [vmem:[%s6376] sm:$0xff] %vm6375, %v6374
    %s6378 = scalar_lea.vmem [#allocation1], 961
    %v6379 = vld [vmem:[%s6378] ss:$8 sm:$0xf]
    %s6380 = scalar_lea.vmem [#allocation1], 961
    %v6381 = vld [vmem:[%s6380] ss:$8 sm:$0xf0]
    %vm6382 = vcmask 1047556
    %v6383 = vsel %vm6382, %v6381, %v6379
    %6384 = vrot.lane.b32.xlu0 %v6383, 32
    %v6385 = vpop.permute.xlu0 %6384
    %vm6386 = vcmask 523520
    %s6387 = scalar_lea.vmem [#allocation0], 240
    %6388 = vst.msk [vmem:[%s6387] sm:$0xff] %vm6386, %v6385
    %s6389 = scalar_lea.vmem [#allocation1], 1089
    %v6390 = vld [vmem:[%s6389] ss:$8 sm:$0xf]
    %s6391 = scalar_lea.vmem [#allocation1], 1089
    %v6392 = vld [vmem:[%s6391] ss:$8 sm:$0xf0]
    %vm6393 = vcmask 1047556
    %v6394 = vsel %vm6393, %v6392, %v6390
    %6395 = vrot.lane.b32.xlu0 %v6394, 32
    %v6396 = vpop.permute.xlu0 %6395
    %vm6397 = vcmask 523520
    %s6398 = scalar_lea.vmem [#allocation0], 272
    %6399 = vst.msk [vmem:[%s6398] sm:$0xff] %vm6397, %v6396
    %s6400 = scalar_lea.vmem [#allocation1], 1217
    %v6401 = vld [vmem:[%s6400] ss:$8 sm:$0xf]
    %s6402 = scalar_lea.vmem [#allocation1], 1217
    %v6403 = vld [vmem:[%s6402] ss:$8 sm:$0xf0]
    %vm6404 = vcmask 1047556
    %v6405 = vsel %vm6404, %v6403, %v6401
    %6406 = vrot.lane.b32.xlu0 %v6405, 32
    %v6407 = vpop.permute.xlu0 %6406
    %vm6408 = vcmask 523520
    %s6409 = scalar_lea.vmem [#allocation0], 304
    %6410 = vst.msk [vmem:[%s6409] sm:$0xff] %vm6408, %v6407
    %s6411 = scalar_lea.vmem [#allocation1], 1345
    %v6412 = vld [vmem:[%s6411] ss:$8 sm:$0xf]
    %s6413 = scalar_lea.vmem [#allocation1], 1345
    %v6414 = vld [vmem:[%s6413] ss:$8 sm:$0xf0]
    %vm6415 = vcmask 1047556
    %v6416 = vsel %vm6415, %v6414, %v6412
    %6417 = vrot.lane.b32.xlu0 %v6416, 32
    %v6418 = vpop.permute.xlu0 %6417
    %vm6419 = vcmask 523520
    %s6420 = scalar_lea.vmem [#allocation0], 336
    %6421 = vst.msk [vmem:[%s6420] sm:$0xff] %vm6419, %v6418
    %s6422 = scalar_lea.vmem [#allocation1], 1473
    %v6423 = vld [vmem:[%s6422] ss:$8 sm:$0xf]
    %s6424 = scalar_lea.vmem [#allocation1], 1473
    %v6425 = vld [vmem:[%s6424] ss:$8 sm:$0xf0]
    %vm6426 = vcmask 1047556
    %v6427 = vsel %vm6426, %v6425, %v6423
    %6428 = vrot.lane.b32.xlu0 %v6427, 32
    %v6429 = vpop.permute.xlu0 %6428
    %vm6430 = vcmask 523520
    %s6431 = scalar_lea.vmem [#allocation0], 368
    %6432 = vst.msk [vmem:[%s6431] sm:$0xff] %vm6430, %v6429
    %s6433 = scalar_lea.vmem [#allocation1], 1601
    %v6434 = vld [vmem:[%s6433] ss:$8 sm:$0xf]
    %s6435 = scalar_lea.vmem [#allocation1], 1601
    %v6436 = vld [vmem:[%s6435] ss:$8 sm:$0xf0]
    %vm6437 = vcmask 1047556
    %v6438 = vsel %vm6437, %v6436, %v6434
    %6439 = vrot.lane.b32.xlu0 %v6438, 32
    %v6440 = vpop.permute.xlu0 %6439
    %vm6441 = vcmask 523520
    %s6442 = scalar_lea.vmem [#allocation0], 400
    %6443 = vst.msk [vmem:[%s6442] sm:$0xff] %vm6441, %v6440
    %s6444 = scalar_lea.vmem [#allocation1], 1729
    %v6445 = vld [vmem:[%s6444] ss:$8 sm:$0xf]
    %s6446 = scalar_lea.vmem [#allocation1], 1729
    %v6447 = vld [vmem:[%s6446] ss:$8 sm:$0xf0]
    %vm6448 = vcmask 1047556
    %v6449 = vsel %vm6448, %v6447, %v6445
    %6450 = vrot.lane.b32.xlu0 %v6449, 32
    %v6451 = vpop.permute.xlu0 %6450
    %vm6452 = vcmask 523520
    %s6453 = scalar_lea.vmem [#allocation0], 432
    %6454 = vst.msk [vmem:[%s6453] sm:$0xff] %vm6452, %v6451
    %s6455 = scalar_lea.vmem [#allocation1], 1857
    %v6456 = vld [vmem:[%s6455] ss:$8 sm:$0xf]
    %s6457 = scalar_lea.vmem [#allocation1], 1857
    %v6458 = vld [vmem:[%s6457] ss:$8 sm:$0xf0]
    %vm6459 = vcmask 1047556
    %v6460 = vsel %vm6459, %v6458, %v6456
    %6461 = vrot.lane.b32.xlu0 %v6460, 32
    %v6462 = vpop.permute.xlu0 %6461
    %vm6463 = vcmask 523520
    %s6464 = scalar_lea.vmem [#allocation0], 464
    %6465 = vst.msk [vmem:[%s6464] sm:$0xff] %vm6463, %v6462
    %s6466 = scalar_lea.vmem [#allocation1], 1985
    %v6467 = vld [vmem:[%s6466] ss:$8 sm:$0xf]
    %s6468 = scalar_lea.vmem [#allocation1], 1985
    %v6469 = vld [vmem:[%s6468] ss:$8 sm:$0xf0]
    %vm6470 = vcmask 1047556
    %v6471 = vsel %vm6470, %v6469, %v6467
    %6472 = vrot.lane.b32.xlu0 %v6471, 32
    %v6473 = vpop.permute.xlu0 %6472
    %vm6474 = vcmask 523520
    %s6475 = scalar_lea.vmem [#allocation0], 496
    %6476 = vst.msk [vmem:[%s6475] sm:$0xff] %vm6474, %v6473
    %s6477 = scalar_lea.vmem [#allocation1], 69
    %v6478 = vld [vmem:[%s6477] ss:$8 sm:$0xf]
    %s6479 = scalar_lea.vmem [#allocation1], 69
    %v6480 = vld [vmem:[%s6479] ss:$8 sm:$0xf0]
    %vm6481 = vcmask 1047556
    %v6482 = vsel %vm6481, %v6480, %v6478
    %6483 = vrot.lane.b32.xlu0 %v6482, 32
    %v6484 = vpop.permute.xlu0 %6483
    %vm6485 = vcmask 523520
    %s6486 = scalar_lea.vmem [#allocation0], 24
    %6487 = vst.msk [vmem:[%s6486] sm:$0xff] %vm6485, %v6484
    %s6488 = scalar_lea.vmem [#allocation1], 197
    %v6489 = vld [vmem:[%s6488] ss:$8 sm:$0xf]
    %s6490 = scalar_lea.vmem [#allocation1], 197
    %v6491 = vld [vmem:[%s6490] ss:$8 sm:$0xf0]
    %vm6492 = vcmask 1047556
    %v6493 = vsel %vm6492, %v6491, %v6489
    %6494 = vrot.lane.b32.xlu0 %v6493, 32
    %v6495 = vpop.permute.xlu0 %6494
    %vm6496 = vcmask 523520
    %s6497 = scalar_lea.vmem [#allocation0], 56
    %6498 = vst.msk [vmem:[%s6497] sm:$0xff] %vm6496, %v6495
    %s6499 = scalar_lea.vmem [#allocation1], 325
    %v6500 = vld [vmem:[%s6499] ss:$8 sm:$0xf]
    %s6501 = scalar_lea.vmem [#allocation1], 325
    %v6502 = vld [vmem:[%s6501] ss:$8 sm:$0xf0]
    %vm6503 = vcmask 1047556
    %v6504 = vsel %vm6503, %v6502, %v6500
    %6505 = vrot.lane.b32.xlu0 %v6504, 32
    %v6506 = vpop.permute.xlu0 %6505
    %vm6507 = vcmask 523520
    %s6508 = scalar_lea.vmem [#allocation0], 88
    %6509 = vst.msk [vmem:[%s6508] sm:$0xff] %vm6507, %v6506
    %s6510 = scalar_lea.vmem [#allocation1], 453
    %v6511 = vld [vmem:[%s6510] ss:$8 sm:$0xf]
    %s6512 = scalar_lea.vmem [#allocation1], 453
    %v6513 = vld [vmem:[%s6512] ss:$8 sm:$0xf0]
    %vm6514 = vcmask 1047556
    %v6515 = vsel %vm6514, %v6513, %v6511
    %6516 = vrot.lane.b32.xlu0 %v6515, 32
    %v6517 = vpop.permute.xlu0 %6516
    %vm6518 = vcmask 523520
    %s6519 = scalar_lea.vmem [#allocation0], 120
    %6520 = vst.msk [vmem:[%s6519] sm:$0xff] %vm6518, %v6517
    %s6521 = scalar_lea.vmem [#allocation1], 581
    %v6522 = vld [vmem:[%s6521] ss:$8 sm:$0xf]
    %s6523 = scalar_lea.vmem [#allocation1], 581
    %v6524 = vld [vmem:[%s6523] ss:$8 sm:$0xf0]
    %vm6525 = vcmask 1047556
    %v6526 = vsel %vm6525, %v6524, %v6522
    %6527 = vrot.lane.b32.xlu0 %v6526, 32
    %v6528 = vpop.permute.xlu0 %6527
    %vm6529 = vcmask 523520
    %s6530 = scalar_lea.vmem [#allocation0], 152
    %6531 = vst.msk [vmem:[%s6530] sm:$0xff] %vm6529, %v6528
    %s6532 = scalar_lea.vmem [#allocation1], 709
    %v6533 = vld [vmem:[%s6532] ss:$8 sm:$0xf]
    %s6534 = scalar_lea.vmem [#allocation1], 709
    %v6535 = vld [vmem:[%s6534] ss:$8 sm:$0xf0]
    %vm6536 = vcmask 1047556
    %v6537 = vsel %vm6536, %v6535, %v6533
    %6538 = vrot.lane.b32.xlu0 %v6537, 32
    %v6539 = vpop.permute.xlu0 %6538
    %vm6540 = vcmask 523520
    %s6541 = scalar_lea.vmem [#allocation0], 184
    %6542 = vst.msk [vmem:[%s6541] sm:$0xff] %vm6540, %v6539
    %s6543 = scalar_lea.vmem [#allocation1], 837
    %v6544 = vld [vmem:[%s6543] ss:$8 sm:$0xf]
    %s6545 = scalar_lea.vmem [#allocation1], 837
    %v6546 = vld [vmem:[%s6545] ss:$8 sm:$0xf0]
    %vm6547 = vcmask 1047556
    %v6548 = vsel %vm6547, %v6546, %v6544
    %6549 = vrot.lane.b32.xlu0 %v6548, 32
    %v6550 = vpop.permute.xlu0 %6549
    %vm6551 = vcmask 523520
    %s6552 = scalar_lea.vmem [#allocation0], 216
    %6553 = vst.msk [vmem:[%s6552] sm:$0xff] %vm6551, %v6550
    %s6554 = scalar_lea.vmem [#allocation1], 965
    %v6555 = vld [vmem:[%s6554] ss:$8 sm:$0xf]
    %s6556 = scalar_lea.vmem [#allocation1], 965
    %v6557 = vld [vmem:[%s6556] ss:$8 sm:$0xf0]
    %vm6558 = vcmask 1047556
    %v6559 = vsel %vm6558, %v6557, %v6555
    %6560 = vrot.lane.b32.xlu0 %v6559, 32
    %v6561 = vpop.permute.xlu0 %6560
    %vm6562 = vcmask 523520
    %s6563 = scalar_lea.vmem [#allocation0], 248
    %6564 = vst.msk [vmem:[%s6563] sm:$0xff] %vm6562, %v6561
    %s6565 = scalar_lea.vmem [#allocation1], 1093
    %v6566 = vld [vmem:[%s6565] ss:$8 sm:$0xf]
    %s6567 = scalar_lea.vmem [#allocation1], 1093
    %v6568 = vld [vmem:[%s6567] ss:$8 sm:$0xf0]
    %vm6569 = vcmask 1047556
    %v6570 = vsel %vm6569, %v6568, %v6566
    %6571 = vrot.lane.b32.xlu0 %v6570, 32
    %v6572 = vpop.permute.xlu0 %6571
    %vm6573 = vcmask 523520
    %s6574 = scalar_lea.vmem [#allocation0], 280
    %6575 = vst.msk [vmem:[%s6574] sm:$0xff] %vm6573, %v6572
    %s6576 = scalar_lea.vmem [#allocation1], 1221
    %v6577 = vld [vmem:[%s6576] ss:$8 sm:$0xf]
    %s6578 = scalar_lea.vmem [#allocation1], 1221
    %v6579 = vld [vmem:[%s6578] ss:$8 sm:$0xf0]
    %vm6580 = vcmask 1047556
    %v6581 = vsel %vm6580, %v6579, %v6577
    %6582 = vrot.lane.b32.xlu0 %v6581, 32
    %v6583 = vpop.permute.xlu0 %6582
    %vm6584 = vcmask 523520
    %s6585 = scalar_lea.vmem [#allocation0], 312
    %6586 = vst.msk [vmem:[%s6585] sm:$0xff] %vm6584, %v6583
    %s6587 = scalar_lea.vmem [#allocation1], 1349
    %v6588 = vld [vmem:[%s6587] ss:$8 sm:$0xf]
    %s6589 = scalar_lea.vmem [#allocation1], 1349
    %v6590 = vld [vmem:[%s6589] ss:$8 sm:$0xf0]
    %vm6591 = vcmask 1047556
    %v6592 = vsel %vm6591, %v6590, %v6588
    %6593 = vrot.lane.b32.xlu0 %v6592, 32
    %v6594 = vpop.permute.xlu0 %6593
    %vm6595 = vcmask 523520
    %s6596 = scalar_lea.vmem [#allocation0], 344
    %6597 = vst.msk [vmem:[%s6596] sm:$0xff] %vm6595, %v6594
    %s6598 = scalar_lea.vmem [#allocation1], 1477
    %v6599 = vld [vmem:[%s6598] ss:$8 sm:$0xf]
    %s6600 = scalar_lea.vmem [#allocation1], 1477
    %v6601 = vld [vmem:[%s6600] ss:$8 sm:$0xf0]
    %vm6602 = vcmask 1047556
    %v6603 = vsel %vm6602, %v6601, %v6599
    %6604 = vrot.lane.b32.xlu0 %v6603, 32
    %v6605 = vpop.permute.xlu0 %6604
    %vm6606 = vcmask 523520
    %s6607 = scalar_lea.vmem [#allocation0], 376
    %6608 = vst.msk [vmem:[%s6607] sm:$0xff] %vm6606, %v6605
    %s6609 = scalar_lea.vmem [#allocation1], 1605
    %v6610 = vld [vmem:[%s6609] ss:$8 sm:$0xf]
    %s6611 = scalar_lea.vmem [#allocation1], 1605
    %v6612 = vld [vmem:[%s6611] ss:$8 sm:$0xf0]
    %vm6613 = vcmask 1047556
    %v6614 = vsel %vm6613, %v6612, %v6610
    %6615 = vrot.lane.b32.xlu0 %v6614, 32
    %v6616 = vpop.permute.xlu0 %6615
    %vm6617 = vcmask 523520
    %s6618 = scalar_lea.vmem [#allocation0], 408
    %6619 = vst.msk [vmem:[%s6618] sm:$0xff] %vm6617, %v6616
    %s6620 = scalar_lea.vmem [#allocation1], 1733
    %v6621 = vld [vmem:[%s6620] ss:$8 sm:$0xf]
    %s6622 = scalar_lea.vmem [#allocation1], 1733
    %v6623 = vld [vmem:[%s6622] ss:$8 sm:$0xf0]
    %vm6624 = vcmask 1047556
    %v6625 = vsel %vm6624, %v6623, %v6621
    %6626 = vrot.lane.b32.xlu0 %v6625, 32
    %v6627 = vpop.permute.xlu0 %6626
    %vm6628 = vcmask 523520
    %s6629 = scalar_lea.vmem [#allocation0], 440
    %6630 = vst.msk [vmem:[%s6629] sm:$0xff] %vm6628, %v6627
    %s6631 = scalar_lea.vmem [#allocation1], 1861
    %v6632 = vld [vmem:[%s6631] ss:$8 sm:$0xf]
    %s6633 = scalar_lea.vmem [#allocation1], 1861
    %v6634 = vld [vmem:[%s6633] ss:$8 sm:$0xf0]
    %vm6635 = vcmask 1047556
    %v6636 = vsel %vm6635, %v6634, %v6632
    %6637 = vrot.lane.b32.xlu0 %v6636, 32
    %v6638 = vpop.permute.xlu0 %6637
    %vm6639 = vcmask 523520
    %s6640 = scalar_lea.vmem [#allocation0], 472
    %6641 = vst.msk [vmem:[%s6640] sm:$0xff] %vm6639, %v6638
    %s6642 = scalar_lea.vmem [#allocation1], 1989
    %v6643 = vld [vmem:[%s6642] ss:$8 sm:$0xf]
    %s6644 = scalar_lea.vmem [#allocation1], 1989
    %v6645 = vld [vmem:[%s6644] ss:$8 sm:$0xf0]
    %vm6646 = vcmask 1047556
    %v6647 = vsel %vm6646, %v6645, %v6643
    %6648 = vrot.lane.b32.xlu0 %v6647, 32
    %v6649 = vpop.permute.xlu0 %6648
    %vm6650 = vcmask 523520
    %s6651 = scalar_lea.vmem [#allocation0], 504
    %6652 = vst.msk [vmem:[%s6651] sm:$0xff] %vm6650, %v6649
    %s6654 = ssub.s32 256, 1
    %v6655 = vld [vmem:[#allocation0] sm:%s6654]
    %v6656 = vpack.c.bf16 0.0, %v6655
    %s6658 = ssub.s32 16, 1
    %6659 = vst [vmem:[%s1] sm:%s6658] %v6656
    %s6660 = scalar_lea.vmem [#allocation0], 8
    %v6661 = vld [vmem:[%s6660] sm:%s6654]
    %v6662 = vpack.c.bf16 0.0, %v6661
    %s6664 = ssub.s32 16, 1
    %s6665 = scalar_lea.vmem %s1, 4
    %6666 = vst [vmem:[%s6665] sm:%s6664] %v6662
    %s6667 = scalar_lea.vmem [#allocation0], 16
    %v6668 = vld [vmem:[%s6667] sm:%s6654]
    %v6669 = vpack.c.bf16 0.0, %v6668
    %s6671 = ssub.s32 16, 1
    %s6672 = scalar_lea.vmem %s1, 8
    %6673 = vst [vmem:[%s6672] sm:%s6671] %v6669
    %s6674 = scalar_lea.vmem [#allocation0], 24
    %v6675 = vld [vmem:[%s6674] sm:%s6654]
    %v6676 = vpack.c.bf16 0.0, %v6675
    %s6678 = ssub.s32 16, 1
    %s6679 = scalar_lea.vmem %s1, 12
    %6680 = vst [vmem:[%s6679] sm:%s6678] %v6676
    %s6681 = scalar_lea.vmem [#allocation0], 32
    %v6682 = vld [vmem:[%s6681] sm:%s6654]
    %v6683 = vpack.c.bf16 0.0, %v6682
    %s6685 = ssub.s32 16, 1
    %s6686 = scalar_lea.vmem %s1, 16
    %6687 = vst [vmem:[%s6686] sm:%s6685] %v6683
    %s6688 = scalar_lea.vmem [#allocation0], 40
    %v6689 = vld [vmem:[%s6688] sm:%s6654]
    %v6690 = vpack.c.bf16 0.0, %v6689
    %s6692 = ssub.s32 16, 1
    %s6693 = scalar_lea.vmem %s1, 20
    %6694 = vst [vmem:[%s6693] sm:%s6692] %v6690
    %s6695 = scalar_lea.vmem [#allocation0], 48
    %v6696 = vld [vmem:[%s6695] sm:%s6654]
    %v6697 = vpack.c.bf16 0.0, %v6696
    %s6699 = ssub.s32 16, 1
    %s6700 = scalar_lea.vmem %s1, 24
    %6701 = vst [vmem:[%s6700] sm:%s6699] %v6697
    %s6702 = scalar_lea.vmem [#allocation0], 56
    %v6703 = vld [vmem:[%s6702] sm:%s6654]
    %v6704 = vpack.c.bf16 0.0, %v6703
    %s6706 = ssub.s32 16, 1
    %s6707 = scalar_lea.vmem %s1, 28
    %6708 = vst [vmem:[%s6707] sm:%s6706] %v6704
    %s6709 = scalar_lea.vmem [#allocation0], 64
    %v6710 = vld [vmem:[%s6709] sm:%s6654]
    %v6711 = vpack.c.bf16 0.0, %v6710
    %s6713 = ssub.s32 16, 1
    %s6714 = scalar_lea.vmem %s1, 32
    %6715 = vst [vmem:[%s6714] sm:%s6713] %v6711
    %s6716 = scalar_lea.vmem [#allocation0], 72
    %v6717 = vld [vmem:[%s6716] sm:%s6654]
    %v6718 = vpack.c.bf16 0.0, %v6717
    %s6720 = ssub.s32 16, 1
    %s6721 = scalar_lea.vmem %s1, 36
    %6722 = vst [vmem:[%s6721] sm:%s6720] %v6718
    %s6723 = scalar_lea.vmem [#allocation0], 80
    %v6724 = vld [vmem:[%s6723] sm:%s6654]
    %v6725 = vpack.c.bf16 0.0, %v6724
    %s6727 = ssub.s32 16, 1
    %s6728 = scalar_lea.vmem %s1, 40
    %6729 = vst [vmem:[%s6728] sm:%s6727] %v6725
    %s6730 = scalar_lea.vmem [#allocation0], 88
    %v6731 = vld [vmem:[%s6730] sm:%s6654]
    %v6732 = vpack.c.bf16 0.0, %v6731
    %s6734 = ssub.s32 16, 1
    %s6735 = scalar_lea.vmem %s1, 44
    %6736 = vst [vmem:[%s6735] sm:%s6734] %v6732
    %s6737 = scalar_lea.vmem [#allocation0], 96
    %v6738 = vld [vmem:[%s6737] sm:%s6654]
    %v6739 = vpack.c.bf16 0.0, %v6738
    %s6741 = ssub.s32 16, 1
    %s6742 = scalar_lea.vmem %s1, 48
    %6743 = vst [vmem:[%s6742] sm:%s6741] %v6739
    %s6744 = scalar_lea.vmem [#allocation0], 104
    %v6745 = vld [vmem:[%s6744] sm:%s6654]
    %v6746 = vpack.c.bf16 0.0, %v6745
    %s6748 = ssub.s32 16, 1
    %s6749 = scalar_lea.vmem %s1, 52
    %6750 = vst [vmem:[%s6749] sm:%s6748] %v6746
    %s6751 = scalar_lea.vmem [#allocation0], 112
    %v6752 = vld [vmem:[%s6751] sm:%s6654]
    %v6753 = vpack.c.bf16 0.0, %v6752
    %s6755 = ssub.s32 16, 1
    %s6756 = scalar_lea.vmem %s1, 56
    %6757 = vst [vmem:[%s6756] sm:%s6755] %v6753
    %s6758 = scalar_lea.vmem [#allocation0], 120
    %v6759 = vld [vmem:[%s6758] sm:%s6654]
    %v6760 = vpack.c.bf16 0.0, %v6759
    %s6762 = ssub.s32 16, 1
    %s6763 = scalar_lea.vmem %s1, 60
    %6764 = vst [vmem:[%s6763] sm:%s6762] %v6760
    %s6765 = scalar_lea.vmem [#allocation0], 128
    %v6766 = vld [vmem:[%s6765] sm:%s6654]
    %v6767 = vpack.c.bf16 0.0, %v6766
    %s6769 = ssub.s32 16, 1
    %s6770 = scalar_lea.vmem %s1, 64
    %6771 = vst [vmem:[%s6770] sm:%s6769] %v6767
    %s6772 = scalar_lea.vmem [#allocation0], 136
    %v6773 = vld [vmem:[%s6772] sm:%s6654]
    %v6774 = vpack.c.bf16 0.0, %v6773
    %s6776 = ssub.s32 16, 1
    %s6777 = scalar_lea.vmem %s1, 68
    %6778 = vst [vmem:[%s6777] sm:%s6776] %v6774
    %s6779 = scalar_lea.vmem [#allocation0], 144
    %v6780 = vld [vmem:[%s6779] sm:%s6654]
    %v6781 = vpack.c.bf16 0.0, %v6780
    %s6783 = ssub.s32 16, 1
    %s6784 = scalar_lea.vmem %s1, 72
    %6785 = vst [vmem:[%s6784] sm:%s6783] %v6781
    %s6786 = scalar_lea.vmem [#allocation0], 152
    %v6787 = vld [vmem:[%s6786] sm:%s6654]
    %v6788 = vpack.c.bf16 0.0, %v6787
    %s6790 = ssub.s32 16, 1
    %s6791 = scalar_lea.vmem %s1, 76
    %6792 = vst [vmem:[%s6791] sm:%s6790] %v6788
    %s6793 = scalar_lea.vmem [#allocation0], 160
    %v6794 = vld [vmem:[%s6793] sm:%s6654]
    %v6795 = vpack.c.bf16 0.0, %v6794
    %s6797 = ssub.s32 16, 1
    %s6798 = scalar_lea.vmem %s1, 80
    %6799 = vst [vmem:[%s6798] sm:%s6797] %v6795
    %s6800 = scalar_lea.vmem [#allocation0], 168
    %v6801 = vld [vmem:[%s6800] sm:%s6654]
    %v6802 = vpack.c.bf16 0.0, %v6801
    %s6804 = ssub.s32 16, 1
    %s6805 = scalar_lea.vmem %s1, 84
    %6806 = vst [vmem:[%s6805] sm:%s6804] %v6802
    %s6807 = scalar_lea.vmem [#allocation0], 176
    %v6808 = vld [vmem:[%s6807] sm:%s6654]
    %v6809 = vpack.c.bf16 0.0, %v6808
    %s6811 = ssub.s32 16, 1
    %s6812 = scalar_lea.vmem %s1, 88
    %6813 = vst [vmem:[%s6812] sm:%s6811] %v6809
    %s6814 = scalar_lea.vmem [#allocation0], 184
    %v6815 = vld [vmem:[%s6814] sm:%s6654]
    %v6816 = vpack.c.bf16 0.0, %v6815
    %s6818 = ssub.s32 16, 1
    %s6819 = scalar_lea.vmem %s1, 92
    %6820 = vst [vmem:[%s6819] sm:%s6818] %v6816
    %s6821 = scalar_lea.vmem [#allocation0], 192
    %v6822 = vld [vmem:[%s6821] sm:%s6654]
    %v6823 = vpack.c.bf16 0.0, %v6822
    %s6825 = ssub.s32 16, 1
    %s6826 = scalar_lea.vmem %s1, 96
    %6827 = vst [vmem:[%s6826] sm:%s6825] %v6823
    %s6828 = scalar_lea.vmem [#allocation0], 200
    %v6829 = vld [vmem:[%s6828] sm:%s6654]
    %v6830 = vpack.c.bf16 0.0, %v6829
    %s6832 = ssub.s32 16, 1
    %s6833 = scalar_lea.vmem %s1, 100
    %6834 = vst [vmem:[%s6833] sm:%s6832] %v6830
    %s6835 = scalar_lea.vmem [#allocation0], 208
    %v6836 = vld [vmem:[%s6835] sm:%s6654]
    %v6837 = vpack.c.bf16 0.0, %v6836
    %s6839 = ssub.s32 16, 1
    %s6840 = scalar_lea.vmem %s1, 104
    %6841 = vst [vmem:[%s6840] sm:%s6839] %v6837
    %s6842 = scalar_lea.vmem [#allocation0], 216
    %v6843 = vld [vmem:[%s6842] sm:%s6654]
    %v6844 = vpack.c.bf16 0.0, %v6843
    %s6846 = ssub.s32 16, 1
    %s6847 = scalar_lea.vmem %s1, 108
    %6848 = vst [vmem:[%s6847] sm:%s6846] %v6844
    %s6849 = scalar_lea.vmem [#allocation0], 224
    %v6850 = vld [vmem:[%s6849] sm:%s6654]
    %v6851 = vpack.c.bf16 0.0, %v6850
    %s6853 = ssub.s32 16, 1
    %s6854 = scalar_lea.vmem %s1, 112
    %6855 = vst [vmem:[%s6854] sm:%s6853] %v6851
    %s6856 = scalar_lea.vmem [#allocation0], 232
    %v6857 = vld [vmem:[%s6856] sm:%s6654]
    %v6858 = vpack.c.bf16 0.0, %v6857
    %s6860 = ssub.s32 16, 1
    %s6861 = scalar_lea.vmem %s1, 116
    %6862 = vst [vmem:[%s6861] sm:%s6860] %v6858
    %s6863 = scalar_lea.vmem [#allocation0], 240
    %v6864 = vld [vmem:[%s6863] sm:%s6654]
    %v6865 = vpack.c.bf16 0.0, %v6864
    %s6867 = ssub.s32 16, 1
    %s6868 = scalar_lea.vmem %s1, 120
    %6869 = vst [vmem:[%s6868] sm:%s6867] %v6865
    %s6870 = scalar_lea.vmem [#allocation0], 248
    %v6871 = vld [vmem:[%s6870] sm:%s6654]
    %v6872 = vpack.c.bf16 0.0, %v6871
    %s6874 = ssub.s32 16, 1
    %s6875 = scalar_lea.vmem %s1, 124
    %6876 = vst [vmem:[%s6875] sm:%s6874] %v6872
    %s6877 = scalar_lea.vmem [#allocation0], 256
    %v6878 = vld [vmem:[%s6877] sm:%s6654]
    %v6879 = vpack.c.bf16 0.0, %v6878
    %s6881 = ssub.s32 16, 1
    %s6882 = scalar_lea.vmem %s1, 128
    %6883 = vst [vmem:[%s6882] sm:%s6881] %v6879
    %s6884 = scalar_lea.vmem [#allocation0], 264
    %v6885 = vld [vmem:[%s6884] sm:%s6654]
    %v6886 = vpack.c.bf16 0.0, %v6885
    %s6888 = ssub.s32 16, 1
    %s6889 = scalar_lea.vmem %s1, 132
    %6890 = vst [vmem:[%s6889] sm:%s6888] %v6886
    %s6891 = scalar_lea.vmem [#allocation0], 272
    %v6892 = vld [vmem:[%s6891] sm:%s6654]
    %v6893 = vpack.c.bf16 0.0, %v6892
    %s6895 = ssub.s32 16, 1
    %s6896 = scalar_lea.vmem %s1, 136
    %6897 = vst [vmem:[%s6896] sm:%s6895] %v6893
    %s6898 = scalar_lea.vmem [#allocation0], 280
    %v6899 = vld [vmem:[%s6898] sm:%s6654]
    %v6900 = vpack.c.bf16 0.0, %v6899
    %s6902 = ssub.s32 16, 1
    %s6903 = scalar_lea.vmem %s1, 140
    %6904 = vst [vmem:[%s6903] sm:%s6902] %v6900
    %s6905 = scalar_lea.vmem [#allocation0], 288
    %v6906 = vld [vmem:[%s6905] sm:%s6654]
    %v6907 = vpack.c.bf16 0.0, %v6906
    %s6909 = ssub.s32 16, 1
    %s6910 = scalar_lea.vmem %s1, 144
    %6911 = vst [vmem:[%s6910] sm:%s6909] %v6907
    %s6912 = scalar_lea.vmem [#allocation0], 296
    %v6913 = vld [vmem:[%s6912] sm:%s6654]
    %v6914 = vpack.c.bf16 0.0, %v6913
    %s6916 = ssub.s32 16, 1
    %s6917 = scalar_lea.vmem %s1, 148
    %6918 = vst [vmem:[%s6917] sm:%s6916] %v6914
    %s6919 = scalar_lea.vmem [#allocation0], 304
    %v6920 = vld [vmem:[%s6919] sm:%s6654]
    %v6921 = vpack.c.bf16 0.0, %v6920
    %s6923 = ssub.s32 16, 1
    %s6924 = scalar_lea.vmem %s1, 152
    %6925 = vst [vmem:[%s6924] sm:%s6923] %v6921
    %s6926 = scalar_lea.vmem [#allocation0], 312
    %v6927 = vld [vmem:[%s6926] sm:%s6654]
    %v6928 = vpack.c.bf16 0.0, %v6927
    %s6930 = ssub.s32 16, 1
    %s6931 = scalar_lea.vmem %s1, 156
    %6932 = vst [vmem:[%s6931] sm:%s6930] %v6928
    %s6933 = scalar_lea.vmem [#allocation0], 320
    %v6934 = vld [vmem:[%s6933] sm:%s6654]
    %v6935 = vpack.c.bf16 0.0, %v6934
    %s6937 = ssub.s32 16, 1
    %s6938 = scalar_lea.vmem %s1, 160
    %6939 = vst [vmem:[%s6938] sm:%s6937] %v6935
    %s6940 = scalar_lea.vmem [#allocation0], 328
    %v6941 = vld [vmem:[%s6940] sm:%s6654]
    %v6942 = vpack.c.bf16 0.0, %v6941
    %s6944 = ssub.s32 16, 1
    %s6945 = scalar_lea.vmem %s1, 164
    %6946 = vst [vmem:[%s6945] sm:%s6944] %v6942
    %s6947 = scalar_lea.vmem [#allocation0], 336
    %v6948 = vld [vmem:[%s6947] sm:%s6654]
    %v6949 = vpack.c.bf16 0.0, %v6948
    %s6951 = ssub.s32 16, 1
    %s6952 = scalar_lea.vmem %s1, 168
    %6953 = vst [vmem:[%s6952] sm:%s6951] %v6949
    %s6954 = scalar_lea.vmem [#allocation0], 344
    %v6955 = vld [vmem:[%s6954] sm:%s6654]
    %v6956 = vpack.c.bf16 0.0, %v6955
    %s6958 = ssub.s32 16, 1
    %s6959 = scalar_lea.vmem %s1, 172
    %6960 = vst [vmem:[%s6959] sm:%s6958] %v6956
    %s6961 = scalar_lea.vmem [#allocation0], 352
    %v6962 = vld [vmem:[%s6961] sm:%s6654]
    %v6963 = vpack.c.bf16 0.0, %v6962
    %s6965 = ssub.s32 16, 1
    %s6966 = scalar_lea.vmem %s1, 176
    %6967 = vst [vmem:[%s6966] sm:%s6965] %v6963
    %s6968 = scalar_lea.vmem [#allocation0], 360
    %v6969 = vld [vmem:[%s6968] sm:%s6654]
    %v6970 = vpack.c.bf16 0.0, %v6969
    %s6972 = ssub.s32 16, 1
    %s6973 = scalar_lea.vmem %s1, 180
    %6974 = vst [vmem:[%s6973] sm:%s6972] %v6970
    %s6975 = scalar_lea.vmem [#allocation0], 368
    %v6976 = vld [vmem:[%s6975] sm:%s6654]
    %v6977 = vpack.c.bf16 0.0, %v6976
    %s6979 = ssub.s32 16, 1
    %s6980 = scalar_lea.vmem %s1, 184
    %6981 = vst [vmem:[%s6980] sm:%s6979] %v6977
    %s6982 = scalar_lea.vmem [#allocation0], 376
    %v6983 = vld [vmem:[%s6982] sm:%s6654]
    %v6984 = vpack.c.bf16 0.0, %v6983
    %s6986 = ssub.s32 16, 1
    %s6987 = scalar_lea.vmem %s1, 188
    %6988 = vst [vmem:[%s6987] sm:%s6986] %v6984
    %s6989 = scalar_lea.vmem [#allocation0], 384
    %v6990 = vld [vmem:[%s6989] sm:%s6654]
    %v6991 = vpack.c.bf16 0.0, %v6990
    %s6993 = ssub.s32 16, 1
    %s6994 = scalar_lea.vmem %s1, 192
    %6995 = vst [vmem:[%s6994] sm:%s6993] %v6991
    %s6996 = scalar_lea.vmem [#allocation0], 392
    %v6997 = vld [vmem:[%s6996] sm:%s6654]
    %v6998 = vpack.c.bf16 0.0, %v6997
    %s7000 = ssub.s32 16, 1
    %s7001 = scalar_lea.vmem %s1, 196
    %7002 = vst [vmem:[%s7001] sm:%s7000] %v6998
    %s7003 = scalar_lea.vmem [#allocation0], 400
    %v7004 = vld [vmem:[%s7003] sm:%s6654]
    %v7005 = vpack.c.bf16 0.0, %v7004
    %s7007 = ssub.s32 16, 1
    %s7008 = scalar_lea.vmem %s1, 200
    %7009 = vst [vmem:[%s7008] sm:%s7007] %v7005
    %s7010 = scalar_lea.vmem [#allocation0], 408
    %v7011 = vld [vmem:[%s7010] sm:%s6654]
    %v7012 = vpack.c.bf16 0.0, %v7011
    %s7014 = ssub.s32 16, 1
    %s7015 = scalar_lea.vmem %s1, 204
    %7016 = vst [vmem:[%s7015] sm:%s7014] %v7012
    %s7017 = scalar_lea.vmem [#allocation0], 416
    %v7018 = vld [vmem:[%s7017] sm:%s6654]
    %v7019 = vpack.c.bf16 0.0, %v7018
    %s7021 = ssub.s32 16, 1
    %s7022 = scalar_lea.vmem %s1, 208
    %7023 = vst [vmem:[%s7022] sm:%s7021] %v7019
    %s7024 = scalar_lea.vmem [#allocation0], 424
    %v7025 = vld [vmem:[%s7024] sm:%s6654]
    %v7026 = vpack.c.bf16 0.0, %v7025
    %s7028 = ssub.s32 16, 1
    %s7029 = scalar_lea.vmem %s1, 212
    %7030 = vst [vmem:[%s7029] sm:%s7028] %v7026
    %s7031 = scalar_lea.vmem [#allocation0], 432
    %v7032 = vld [vmem:[%s7031] sm:%s6654]
    %v7033 = vpack.c.bf16 0.0, %v7032
    %s7035 = ssub.s32 16, 1
    %s7036 = scalar_lea.vmem %s1, 216
    %7037 = vst [vmem:[%s7036] sm:%s7035] %v7033
    %s7038 = scalar_lea.vmem [#allocation0], 440
    %v7039 = vld [vmem:[%s7038] sm:%s6654]
    %v7040 = vpack.c.bf16 0.0, %v7039
    %s7042 = ssub.s32 16, 1
    %s7043 = scalar_lea.vmem %s1, 220
    %7044 = vst [vmem:[%s7043] sm:%s7042] %v7040
    %s7045 = scalar_lea.vmem [#allocation0], 448
    %v7046 = vld [vmem:[%s7045] sm:%s6654]
    %v7047 = vpack.c.bf16 0.0, %v7046
    %s7049 = ssub.s32 16, 1
    %s7050 = scalar_lea.vmem %s1, 224
    %7051 = vst [vmem:[%s7050] sm:%s7049] %v7047
    %s7052 = scalar_lea.vmem [#allocation0], 456
    %v7053 = vld [vmem:[%s7052] sm:%s6654]
    %v7054 = vpack.c.bf16 0.0, %v7053
    %s7056 = ssub.s32 16, 1
    %s7057 = scalar_lea.vmem %s1, 228
    %7058 = vst [vmem:[%s7057] sm:%s7056] %v7054
    %s7059 = scalar_lea.vmem [#allocation0], 464
    %v7060 = vld [vmem:[%s7059] sm:%s6654]
    %v7061 = vpack.c.bf16 0.0, %v7060
    %s7063 = ssub.s32 16, 1
    %s7064 = scalar_lea.vmem %s1, 232
    %7065 = vst [vmem:[%s7064] sm:%s7063] %v7061
    %s7066 = scalar_lea.vmem [#allocation0], 472
    %v7067 = vld [vmem:[%s7066] sm:%s6654]
    %v7068 = vpack.c.bf16 0.0, %v7067
    %s7070 = ssub.s32 16, 1
    %s7071 = scalar_lea.vmem %s1, 236
    %7072 = vst [vmem:[%s7071] sm:%s7070] %v7068
    %s7073 = scalar_lea.vmem [#allocation0], 480
    %v7074 = vld [vmem:[%s7073] sm:%s6654]
    %v7075 = vpack.c.bf16 0.0, %v7074
    %s7077 = ssub.s32 16, 1
    %s7078 = scalar_lea.vmem %s1, 240
    %7079 = vst [vmem:[%s7078] sm:%s7077] %v7075
    %s7080 = scalar_lea.vmem [#allocation0], 488
    %v7081 = vld [vmem:[%s7080] sm:%s6654]
    %v7082 = vpack.c.bf16 0.0, %v7081
    %s7084 = ssub.s32 16, 1
    %s7085 = scalar_lea.vmem %s1, 244
    %7086 = vst [vmem:[%s7085] sm:%s7084] %v7082
    %s7087 = scalar_lea.vmem [#allocation0], 496
    %v7088 = vld [vmem:[%s7087] sm:%s6654]
    %v7089 = vpack.c.bf16 0.0, %v7088
    %s7091 = ssub.s32 16, 1
    %s7092 = scalar_lea.vmem %s1, 248
    %7093 = vst [vmem:[%s7092] sm:%s7091] %v7089
    %s7094 = scalar_lea.vmem [#allocation0], 504
    %v7095 = vld [vmem:[%s7094] sm:%s6654]
    %v7096 = vpack.c.bf16 0.0, %v7095
    %s7098 = ssub.s32 16, 1
    %s7099 = scalar_lea.vmem %s1, 252
    %7100 = vst [vmem:[%s7099] sm:%s7098] %v7096

// kernel: tile.23
$region0: #{tile.23}
  #allocation0 [shape = 's32[1]{0}', space=sflag, size = 0x4, scoped, tag = 'scoped memory for tile.23']
  %s0 = inlined_call_operand.vmem [shape: f32[32], index: 0, kind: input, shape index: {}]
  %s1 = inlined_call_operand.vmem [shape: f32[8,32], index: 1, kind: output, shape index: {}]
  // Predicated region
  $region2: #{tile.23} parent=0 // pred_check
    _
  $region3: #{tile.23} parent=0 // pred_check_branch
    %3 = sbr.rel (0) target = $region5
  $region4: #{tile.23} parent=0 // pred_region
    _
  $region5: #{tile.23} parent=0 // pred_fallthru
    _
  %v4 = vld [vmem:[%s0] ss:$0 sm:$0xff]
  %5 = vst [vmem:[%s1] sm:$0xff] %v4

// kernel: tile.24
$region0: #{tile.24}
  %s0 = inlined_call_operand.vmem [shape: f32[8,32], index: 0, kind: input, shape index: {}]
  %s1 = inlined_call_operand.vmem [shape: f32[1,256], index: 1, kind: output, shape index: {}]
  $region1: #{tile.24} parent=0
    #allocation0 [shape = 'u8[8192]{0}', space=vmem, size = 0x2000, scoped, tag = 'scoped mem for output reshape']
    %s2 = smov 3
    %v3 = vld [vmem:[%s0] ss:$4 sm:%s2]
    %vm4 = vcmask 261120
    %5 = vst.msk [vmem:[#allocation0] ss:$8 sm:$0x3] %vm4, %v3
    %s6 = scalar_lea.vmem %s0, 3
    %s7 = smov 3
    %v8 = vld [vmem:[%s6] ss:$4 sm:%s7]
    %9 = vrot.lane.b32.xlu0 %v8, 96
    %v10 = vpop.permute.xlu0 %9
    %vm11 = vcmask 1048320
    %12 = vst.msk [vmem:[#allocation0] ss:$8 sm:$0x3] %vm11, %v10
    %s13 = scalar_lea.vmem %s0, 2
    %s14 = smov 3
    %v15 = vld [vmem:[%s13] ss:$4 sm:%s14]
    %16 = vrot.lane.b32.xlu0 %v15, 64
    %v17 = vpop.permute.xlu0 %16
    %vm18 = vcmask 785920
    %19 = vst.msk [vmem:[#allocation0] ss:$8 sm:$0x3] %vm18, %v17
    %s20 = scalar_lea.vmem %s0, 1
    %s21 = smov 3
    %v22 = vld [vmem:[%s20] ss:$4 sm:%s21]
    %23 = vrot.lane.b32.xlu0 %v22, 32
    %v24 = vpop.permute.xlu0 %23
    %vm25 = vcmask 523520
    %26 = vst.msk [vmem:[#allocation0] ss:$8 sm:$0x3] %vm25, %v24
    %s28 = ssub.s32 2, 1
    %v29 = vld [vmem:[#allocation0] sm:%s28]
    %s31 = ssub.s32 2, 1
    %32 = vst [vmem:[%s1] sm:%s31] %v29
    %s33 = scalar_lea.vmem [#allocation0], 8
    %v34 = vld [vmem:[%s33] sm:%s28]
    %s36 = ssub.s32 2, 1
    %s37 = scalar_lea.vmem %s1, 1
    %38 = vst [vmem:[%s37] sm:%s36] %v34

// kernel: resblock_forward.1
$region0: #{resblock_forward.1}
  #allocation0 [shape = 'u32[]', space=smem, size = 0x4, offset = 0x4, fixed_abs, tag = 'smem constant byte address 0x4 - core index']
  #allocation1 [shape = 'u32[72,128]{1,0:T(1,128)}', space=vmem, size = 0x9000, scoped, tag = 'internal scratch']
  %s0 = inlined_call_operand.vmem [shape: f32[16,256], index: 0, kind: input, shape index: {}]
  %s1 = inlined_call_operand.vmem [shape: bf16[256,256], index: 1, kind: input, shape index: {}]
  %s2 = inlined_call_operand.vmem [shape: bf16[256,256], index: 2, kind: input, shape index: {}]
  %s3 = inlined_call_operand.vmem [shape: f32[1,256], index: 3, kind: input, shape index: {}]
  %s4 = inlined_call_operand.vmem [shape: f32[1,256], index: 4, kind: input, shape index: {}]
  %s5 = inlined_call_operand.vmem [shape: bf16[256,256], index: 5, kind: input, shape index: {}]
  %s6 = inlined_call_operand.vmem [shape: bf16[256,256], index: 6, kind: input, shape index: {}]
  %s7 = inlined_call_operand.vmem [shape: f32[1,256], index: 7, kind: input, shape index: {}]
  %s8 = inlined_call_operand.vmem [shape: f32[1,256], index: 8, kind: input, shape index: {}]
  %s9 = inlined_call_operand.vmem [shape: f32[16,256], index: 9, kind: input, shape index: {}]
  %s10 = inlined_call_operand.vmem [shape: f32[16,256], index: 10, kind: output, shape index: {}]
  %s11 = sld [smem:[#allocation0]]
  $region50: #{resblock_forward.1} parent=0
    _
  %s13 = ssub.s32 1, %s11
  %s14 = scalar_select 0, %s13, %s11
  // Predicated region
  $region2: #{resblock_forward.1} parent=0 // pred_check
    _
  $region3: #{resblock_forward.1} parent=0 // pred_check_branch
    %16 = sbr.rel (0) target = $region5
  $region4: #{resblock_forward.1} parent=0 // pred_region
    _
  $region5: #{resblock_forward.1} parent=0 // pred_fallthru
    _
  // Predicated region
  $region6: #{resblock_forward.1} parent=0 // pred_check
    _
  $region7: #{resblock_forward.1} parent=0 // pred_check_branch
    %18 = sbr.rel (0) target = $region9
  $region8: #{resblock_forward.1} parent=0 // pred_region
    _
  $region9: #{resblock_forward.1} parent=0 // pred_fallthru
    _
  // Predicated region
  $region10: #{resblock_forward.1} parent=0 // pred_check
    _
  $region11: #{resblock_forward.1} parent=0 // pred_check_branch
    %20 = sbr.rel (0) target = $region13
  $region12: #{resblock_forward.1} parent=0 // pred_region
    _
  $region13: #{resblock_forward.1} parent=0 // pred_fallthru
    _
  // Predicated region
  $region14: #{resblock_forward.1} parent=0 // pred_check
    _
  $region15: #{resblock_forward.1} parent=0 // pred_check_branch
    %22 = sbr.rel (0) target = $region17
  $region16: #{resblock_forward.1} parent=0 // pred_region
    _
  $region17: #{resblock_forward.1} parent=0 // pred_fallthru
    _
  // Predicated region
  $region18: #{resblock_forward.1} parent=0 // pred_check
    _
  $region19: #{resblock_forward.1} parent=0 // pred_check_branch
    %24 = sbr.rel (0) target = $region21
  $region20: #{resblock_forward.1} parent=0 // pred_region
    _
  $region21: #{resblock_forward.1} parent=0 // pred_fallthru
    _
  // Predicated region
  $region22: #{resblock_forward.1} parent=0 // pred_check
    _
  $region23: #{resblock_forward.1} parent=0 // pred_check_branch
    %26 = sbr.rel (0) target = $region25
  $region24: #{resblock_forward.1} parent=0 // pred_region
    _
  $region25: #{resblock_forward.1} parent=0 // pred_fallthru
    _
  // Predicated region
  $region26: #{resblock_forward.1} parent=0 // pred_check
    _
  $region27: #{resblock_forward.1} parent=0 // pred_check_branch
    %28 = sbr.rel (0) target = $region29
  $region28: #{resblock_forward.1} parent=0 // pred_region
    _
  $region29: #{resblock_forward.1} parent=0 // pred_fallthru
    _
  // Predicated region
  $region30: #{resblock_forward.1} parent=0 // pred_check
    _
  $region31: #{resblock_forward.1} parent=0 // pred_check_branch
    %30 = sbr.rel (0) target = $region33
  $region32: #{resblock_forward.1} parent=0 // pred_region
    _
  $region33: #{resblock_forward.1} parent=0 // pred_fallthru
    _
  // Predicated region
  $region34: #{resblock_forward.1} parent=0 // pred_check
    _
  $region35: #{resblock_forward.1} parent=0 // pred_check_branch
    %32 = sbr.rel (0) target = $region37
  $region36: #{resblock_forward.1} parent=0 // pred_region
    _
  $region37: #{resblock_forward.1} parent=0 // pred_fallthru
    _
  // Predicated region
  $region38: #{resblock_forward.1} parent=0 // pred_check
    _
  $region39: #{resblock_forward.1} parent=0 // pred_check_branch
    %34 = sbr.rel (0) target = $region41
  $region40: #{resblock_forward.1} parent=0 // pred_region
    _
  $region41: #{resblock_forward.1} parent=0 // pred_fallthru
    _
  %v35 = vld [vmem:[%s0] sm:$0xff]
  %v36 = vld [vmem:[%s0 + $0x8] sm:$0xff]
  %v37 = vld [vmem:[%s0 + $0x10] sm:$0xff]
  %v38 = vld [vmem:[%s0 + $0x18] sm:$0xff]
  %v39 = vld [vmem:[%s9] sm:$0xff]
  %v40 = vld [vmem:[%s9 + $0x8] sm:$0xff]
  %v41 = vld [vmem:[%s9 + $0x10] sm:$0xff]
  %v42 = vld [vmem:[%s9 + $0x18] sm:$0xff]
  %v43 = vrot.slane %v35, 1
  %v44 = vrot.slane %v36, 1
  %v45 = vrot.slane %v37, 1
  %v46 = vrot.slane %v38, 1
  %v47 = vlaneseq
  %v48 = vshrl.u32 %v47, 7
  %vm49 = vcmp.lt.s32.totalorder %v48, 7
  %v50 = vsel %vm49, %v43, %v45
  %v51 = vsel %vm49, %v44, %v46
  %v52 = vsel %vm49, %v45, %v43
  %v53 = vsel %vm49, %v46, %v44
  %v54 = vpack.c.bf16 %v37, %v35
  %v55 = vpack.c.bf16 %v38, %v36
  %v56 = vld [vmem:[%s1] sm:$0xff]
  %v57 = vld [vmem:[%s1 + $0x8] sm:$0xff]
  %v58 = vld [vmem:[%s1 + $0x10] sm:$0xff]
  %v59 = vld [vmem:[%s1 + $0x18] sm:$0xff]
  %v60 = vld [vmem:[%s1 + $0x20] sm:$0xff]
  %v61 = vld [vmem:[%s1 + $0x28] sm:$0xff]
  %v62 = vld [vmem:[%s1 + $0x30] sm:$0xff]
  %v63 = vld [vmem:[%s1 + $0x38] sm:$0xff]
  %v64 = vld [vmem:[%s1 + $0x40] sm:$0xff]
  %v65 = vld [vmem:[%s1 + $0x48] sm:$0xff]
  %v66 = vld [vmem:[%s1 + $0x50] sm:$0xff]
  %v67 = vld [vmem:[%s1 + $0x58] sm:$0xff]
  %v68 = vld [vmem:[%s1 + $0x60] sm:$0xff]
  %v69 = vld [vmem:[%s1 + $0x68] sm:$0xff]
  %v70 = vld [vmem:[%s1 + $0x70] sm:$0xff]
  %v71 = vld [vmem:[%s1 + $0x78] sm:$0xff]
  %v72 = vld [vmem:[%s1 + $0x80] sm:$0xff]
  %v73 = vld [vmem:[%s1 + $0x88] sm:$0xff]
  %v74 = vld [vmem:[%s1 + $0x90] sm:$0xff]
  %v75 = vld [vmem:[%s1 + $0x98] sm:$0xff]
  %v76 = vld [vmem:[%s1 + $0xa0] sm:$0xff]
  %v77 = vld [vmem:[%s1 + $0xa8] sm:$0xff]
  %v78 = vld [vmem:[%s1 + $0xb0] sm:$0xff]
  %v79 = vld [vmem:[%s1 + $0xb8] sm:$0xff]
  %v80 = vld [vmem:[%s1 + $0xc0] sm:$0xff]
  %v81 = vld [vmem:[%s1 + $0xc8] sm:$0xff]
  %v82 = vld [vmem:[%s1 + $0xd0] sm:$0xff]
  %v83 = vld [vmem:[%s1 + $0xd8] sm:$0xff]
  %v84 = vld [vmem:[%s1 + $0xe0] sm:$0xff]
  %v85 = vld [vmem:[%s1 + $0xe8] sm:$0xff]
  %v86 = vld [vmem:[%s1 + $0xf0] sm:$0xff]
  %v87 = vld [vmem:[%s1 + $0xf8] sm:$0xff]
  %v88 = vpack.c.bf16 %v52, %v50
  %v89 = vpack.c.bf16 %v53, %v51
  %v90 = vld [vmem:[%s2] sm:$0xff]
  %v91 = vld [vmem:[%s2 + $0x8] sm:$0xff]
  %v92 = vld [vmem:[%s2 + $0x10] sm:$0xff]
  %v93 = vld [vmem:[%s2 + $0x18] sm:$0xff]
  %v94 = vld [vmem:[%s2 + $0x20] sm:$0xff]
  %v95 = vld [vmem:[%s2 + $0x28] sm:$0xff]
  %v96 = vld [vmem:[%s2 + $0x30] sm:$0xff]
  %v97 = vld [vmem:[%s2 + $0x38] sm:$0xff]
  %v98 = vld [vmem:[%s2 + $0x40] sm:$0xff]
  %v99 = vld [vmem:[%s2 + $0x48] sm:$0xff]
  %v100 = vld [vmem:[%s2 + $0x50] sm:$0xff]
  %v101 = vld [vmem:[%s2 + $0x58] sm:$0xff]
  %v102 = vld [vmem:[%s2 + $0x60] sm:$0xff]
  %v103 = vld [vmem:[%s2 + $0x68] sm:$0xff]
  %v104 = vld [vmem:[%s2 + $0x70] sm:$0xff]
  %v105 = vld [vmem:[%s2 + $0x78] sm:$0xff]
  %v106 = vld [vmem:[%s2 + $0x80] sm:$0xff]
  %v107 = vld [vmem:[%s2 + $0x88] sm:$0xff]
  %v108 = vld [vmem:[%s2 + $0x90] sm:$0xff]
  %v109 = vld [vmem:[%s2 + $0x98] sm:$0xff]
  %v110 = vld [vmem:[%s2 + $0xa0] sm:$0xff]
  %v111 = vld [vmem:[%s2 + $0xa8] sm:$0xff]
  %v112 = vld [vmem:[%s2 + $0xb0] sm:$0xff]
  %v113 = vld [vmem:[%s2 + $0xb8] sm:$0xff]
  %v114 = vld [vmem:[%s2 + $0xc0] sm:$0xff]
  %v115 = vld [vmem:[%s2 + $0xc8] sm:$0xff]
  %v116 = vld [vmem:[%s2 + $0xd0] sm:$0xff]
  %v117 = vld [vmem:[%s2 + $0xd8] sm:$0xff]
  %v118 = vld [vmem:[%s2 + $0xe0] sm:$0xff]
  %v119 = vld [vmem:[%s2 + $0xe8] sm:$0xff]
  %v120 = vld [vmem:[%s2 + $0xf0] sm:$0xff]
  %v121 = vld [vmem:[%s2 + $0xf8] sm:$0xff]
  %v154 = vunpack.c.l.b16 %v90
  %v155 = vunpack.c.h.b16 %v90
  %v156 = vunpack.c.l.b16 %v91
  %v157 = vunpack.c.h.b16 %v91
  %v158 = vunpack.c.l.b16 %v92
  %v159 = vunpack.c.h.b16 %v92
  %v160 = vunpack.c.l.b16 %v93
  %v161 = vunpack.c.h.b16 %v93
  %v162 = vunpack.c.l.b16 %v94
  %v163 = vunpack.c.h.b16 %v94
  %v164 = vunpack.c.l.b16 %v95
  %v165 = vunpack.c.h.b16 %v95
  %v166 = vunpack.c.l.b16 %v96
  %v167 = vunpack.c.h.b16 %v96
  %v168 = vunpack.c.l.b16 %v97
  %v169 = vunpack.c.h.b16 %v97
  %v170 = vunpack.c.l.b16 %v98
  %v171 = vunpack.c.h.b16 %v98
  %v172 = vunpack.c.l.b16 %v99
  %v173 = vunpack.c.h.b16 %v99
  %v174 = vunpack.c.l.b16 %v100
  %v175 = vunpack.c.h.b16 %v100
  %v176 = vunpack.c.l.b16 %v101
  %v177 = vunpack.c.h.b16 %v101
  %v178 = vunpack.c.l.b16 %v102
  %v179 = vunpack.c.h.b16 %v102
  %v180 = vunpack.c.l.b16 %v103
  %v181 = vunpack.c.h.b16 %v103
  %v182 = vunpack.c.l.b16 %v104
  %v183 = vunpack.c.h.b16 %v104
  %v184 = vunpack.c.l.b16 %v105
  %v185 = vunpack.c.h.b16 %v105
  %v186 = vunpack.c.l.b16 %v106
  %v187 = vunpack.c.h.b16 %v106
  %v188 = vunpack.c.l.b16 %v107
  %v189 = vunpack.c.h.b16 %v107
  %v190 = vunpack.c.l.b16 %v108
  %v191 = vunpack.c.h.b16 %v108
  %v192 = vunpack.c.l.b16 %v109
  %v193 = vunpack.c.h.b16 %v109
  %v194 = vunpack.c.l.b16 %v110
  %v195 = vunpack.c.h.b16 %v110
  %v196 = vunpack.c.l.b16 %v111
  %v197 = vunpack.c.h.b16 %v111
  %v198 = vunpack.c.l.b16 %v112
  %v199 = vunpack.c.h.b16 %v112
  %v200 = vunpack.c.l.b16 %v113
  %v201 = vunpack.c.h.b16 %v113
  %v202 = vunpack.c.l.b16 %v114
  %v203 = vunpack.c.h.b16 %v114
  %v204 = vunpack.c.l.b16 %v115
  %v205 = vunpack.c.h.b16 %v115
  %v206 = vunpack.c.l.b16 %v116
  %v207 = vunpack.c.h.b16 %v116
  %v208 = vunpack.c.l.b16 %v117
  %v209 = vunpack.c.h.b16 %v117
  %v210 = vunpack.c.l.b16 %v118
  %v211 = vunpack.c.h.b16 %v118
  %v212 = vunpack.c.l.b16 %v119
  %v213 = vunpack.c.h.b16 %v119
  %v214 = vunpack.c.l.b16 %v120
  %v215 = vunpack.c.h.b16 %v120
  %v216 = vunpack.c.l.b16 %v121
  %v217 = vunpack.c.h.b16 %v121
  %v218 = vpack.c.b16 %v156, %v154
  %v219 = vpack.c.b16 %v157, %v155
  %v220 = vpack.c.b16 %v160, %v158
  %v221 = vpack.c.b16 %v161, %v159
  %v222 = vpack.c.b16 %v164, %v162
  %v223 = vpack.c.b16 %v165, %v163
  %v224 = vpack.c.b16 %v168, %v166
  %v225 = vpack.c.b16 %v169, %v167
  %v226 = vpack.c.b16 %v172, %v170
  %v227 = vpack.c.b16 %v173, %v171
  %v228 = vpack.c.b16 %v176, %v174
  %v229 = vpack.c.b16 %v177, %v175
  %v230 = vpack.c.b16 %v180, %v178
  %v231 = vpack.c.b16 %v181, %v179
  %v232 = vpack.c.b16 %v184, %v182
  %v233 = vpack.c.b16 %v185, %v183
  %v234 = vpack.c.b16 %v188, %v186
  %v235 = vpack.c.b16 %v189, %v187
  %v236 = vpack.c.b16 %v192, %v190
  %v237 = vpack.c.b16 %v193, %v191
  %v238 = vpack.c.b16 %v196, %v194
  %v239 = vpack.c.b16 %v197, %v195
  %v240 = vpack.c.b16 %v200, %v198
  %v241 = vpack.c.b16 %v201, %v199
  %v242 = vpack.c.b16 %v204, %v202
  %v243 = vpack.c.b16 %v205, %v203
  %v244 = vpack.c.b16 %v208, %v206
  %v245 = vpack.c.b16 %v209, %v207
  %v246 = vpack.c.b16 %v212, %v210
  %v247 = vpack.c.b16 %v213, %v211
  %v248 = vpack.c.b16 %v216, %v214
  %v249 = vpack.c.b16 %v217, %v215
  %282 = vmatpush.bf16.msra.mxu0 %v232
  %283 = vmatpush.bf16.msra.mxu0 %v230
  %284 = vmatpush.bf16.msra.mxu0 %v228
  %285 = vmatpush.bf16.msra.mxu0 %v226
  %286 = vmatpush.bf16.msra.mxu0 %v224
  %287 = vmatpush.bf16.msra.mxu0 %v222
  %288 = vmatpush.bf16.msra.mxu0 %v220
  %289 = vmatpush.bf16.msra.mxu0 %v218
  %290 = vmatmul.bf16.gmra.mxu0 %v88
  %v291 = vpop.f32.mrf.mxu0
  %v292 = vadd.f32 0.0, %v291
  %v293 = vpop.f32.mrf.mxu0
  %v294 = vadd.f32 0.0, %v293
  %295 = vdwg.mxu0
  %296 = vmatpush.bf16.msra.mxu0 %v248
  %297 = vmatpush.bf16.msra.mxu0 %v246
  %298 = vmatpush.bf16.msra.mxu0 %v244
  %299 = vmatpush.bf16.msra.mxu0 %v242
  %300 = vmatpush.bf16.msra.mxu0 %v240
  %301 = vmatpush.bf16.msra.mxu0 %v238
  %302 = vmatpush.bf16.msra.mxu0 %v236
  %303 = vmatpush.bf16.msra.mxu0 %v234
  %304 = vmatmul.bf16.gmra.mxu0 %v89
  %v305 = vpop.f32.mrf.mxu0
  %v306 = vadd.f32 %v292, %v305
  %v307 = vpop.f32.mrf.mxu0
  %v308 = vadd.f32 %v294, %v307
  %309 = vdwg.mxu0
  %310 = vmatpush.bf16.msra.mxu0 %v233
  %311 = vmatpush.bf16.msra.mxu0 %v231
  %312 = vmatpush.bf16.msra.mxu0 %v229
  %313 = vmatpush.bf16.msra.mxu0 %v227
  %314 = vmatpush.bf16.msra.mxu0 %v225
  %315 = vmatpush.bf16.msra.mxu0 %v223
  %316 = vmatpush.bf16.msra.mxu0 %v221
  %317 = vmatpush.bf16.msra.mxu0 %v219
  %318 = vmatmul.bf16.gmra.mxu0 %v88
  %v319 = vpop.f32.mrf.mxu0
  %v320 = vadd.f32 0.0, %v319
  %v321 = vpop.f32.mrf.mxu0
  %v322 = vadd.f32 0.0, %v321
  %323 = vdwg.mxu0
  %324 = vmatpush.bf16.msra.mxu0 %v249
  %325 = vmatpush.bf16.msra.mxu0 %v247
  %326 = vmatpush.bf16.msra.mxu0 %v245
  %327 = vmatpush.bf16.msra.mxu0 %v243
  %328 = vmatpush.bf16.msra.mxu0 %v241
  %329 = vmatpush.bf16.msra.mxu0 %v239
  %330 = vmatpush.bf16.msra.mxu0 %v237
  %331 = vmatpush.bf16.msra.mxu0 %v235
  %332 = vmatmul.bf16.gmra.mxu0 %v89
  %v333 = vpop.f32.mrf.mxu0
  %v334 = vadd.f32 %v320, %v333
  %v335 = vpop.f32.mrf.mxu0
  %v336 = vadd.f32 %v322, %v335
  %337 = vdwg.mxu0
  %v370 = vunpack.c.l.b16 %v56
  %v371 = vunpack.c.h.b16 %v56
  %v372 = vunpack.c.l.b16 %v57
  %v373 = vunpack.c.h.b16 %v57
  %v374 = vunpack.c.l.b16 %v58
  %v375 = vunpack.c.h.b16 %v58
  %v376 = vunpack.c.l.b16 %v59
  %v377 = vunpack.c.h.b16 %v59
  %v378 = vunpack.c.l.b16 %v60
  %v379 = vunpack.c.h.b16 %v60
  %v380 = vunpack.c.l.b16 %v61
  %v381 = vunpack.c.h.b16 %v61
  %v382 = vunpack.c.l.b16 %v62
  %v383 = vunpack.c.h.b16 %v62
  %v384 = vunpack.c.l.b16 %v63
  %v385 = vunpack.c.h.b16 %v63
  %v386 = vunpack.c.l.b16 %v64
  %v387 = vunpack.c.h.b16 %v64
  %v388 = vunpack.c.l.b16 %v65
  %v389 = vunpack.c.h.b16 %v65
  %v390 = vunpack.c.l.b16 %v66
  %v391 = vunpack.c.h.b16 %v66
  %v392 = vunpack.c.l.b16 %v67
  %v393 = vunpack.c.h.b16 %v67
  %v394 = vunpack.c.l.b16 %v68
  %v395 = vunpack.c.h.b16 %v68
  %v396 = vunpack.c.l.b16 %v69
  %v397 = vunpack.c.h.b16 %v69
  %v398 = vunpack.c.l.b16 %v70
  %v399 = vunpack.c.h.b16 %v70
  %v400 = vunpack.c.l.b16 %v71
  %v401 = vunpack.c.h.b16 %v71
  %v402 = vunpack.c.l.b16 %v72
  %v403 = vunpack.c.h.b16 %v72
  %v404 = vunpack.c.l.b16 %v73
  %v405 = vunpack.c.h.b16 %v73
  %v406 = vunpack.c.l.b16 %v74
  %v407 = vunpack.c.h.b16 %v74
  %v408 = vunpack.c.l.b16 %v75
  %v409 = vunpack.c.h.b16 %v75
  %v410 = vunpack.c.l.b16 %v76
  %v411 = vunpack.c.h.b16 %v76
  %v412 = vunpack.c.l.b16 %v77
  %v413 = vunpack.c.h.b16 %v77
  %v414 = vunpack.c.l.b16 %v78
  %v415 = vunpack.c.h.b16 %v78
  %v416 = vunpack.c.l.b16 %v79
  %v417 = vunpack.c.h.b16 %v79
  %v418 = vunpack.c.l.b16 %v80
  %v419 = vunpack.c.h.b16 %v80
  %v420 = vunpack.c.l.b16 %v81
  %v421 = vunpack.c.h.b16 %v81
  %v422 = vunpack.c.l.b16 %v82
  %v423 = vunpack.c.h.b16 %v82
  %v424 = vunpack.c.l.b16 %v83
  %v425 = vunpack.c.h.b16 %v83
  %v426 = vunpack.c.l.b16 %v84
  %v427 = vunpack.c.h.b16 %v84
  %v428 = vunpack.c.l.b16 %v85
  %v429 = vunpack.c.h.b16 %v85
  %v430 = vunpack.c.l.b16 %v86
  %v431 = vunpack.c.h.b16 %v86
  %v432 = vunpack.c.l.b16 %v87
  %v433 = vunpack.c.h.b16 %v87
  %v434 = vpack.c.b16 %v372, %v370
  %v435 = vpack.c.b16 %v373, %v371
  %v436 = vpack.c.b16 %v376, %v374
  %v437 = vpack.c.b16 %v377, %v375
  %v438 = vpack.c.b16 %v380, %v378
  %v439 = vpack.c.b16 %v381, %v379
  %v440 = vpack.c.b16 %v384, %v382
  %v441 = vpack.c.b16 %v385, %v383
  %v442 = vpack.c.b16 %v388, %v386
  %v443 = vpack.c.b16 %v389, %v387
  %v444 = vpack.c.b16 %v392, %v390
  %v445 = vpack.c.b16 %v393, %v391
  %v446 = vpack.c.b16 %v396, %v394
  %v447 = vpack.c.b16 %v397, %v395
  %v448 = vpack.c.b16 %v400, %v398
  %v449 = vpack.c.b16 %v401, %v399
  %v450 = vpack.c.b16 %v404, %v402
  %v451 = vpack.c.b16 %v405, %v403
  %v452 = vpack.c.b16 %v408, %v406
  %v453 = vpack.c.b16 %v409, %v407
  %v454 = vpack.c.b16 %v412, %v410
  %v455 = vpack.c.b16 %v413, %v411
  %v456 = vpack.c.b16 %v416, %v414
  %v457 = vpack.c.b16 %v417, %v415
  %v458 = vpack.c.b16 %v420, %v418
  %v459 = vpack.c.b16 %v421, %v419
  %v460 = vpack.c.b16 %v424, %v422
  %v461 = vpack.c.b16 %v425, %v423
  %v462 = vpack.c.b16 %v428, %v426
  %v463 = vpack.c.b16 %v429, %v427
  %v464 = vpack.c.b16 %v432, %v430
  %v465 = vpack.c.b16 %v433, %v431
  %498 = vmatpush.bf16.msra.mxu0 %v448
  %499 = vmatpush.bf16.msra.mxu0 %v446
  %500 = vmatpush.bf16.msra.mxu0 %v444
  %501 = vmatpush.bf16.msra.mxu0 %v442
  %502 = vmatpush.bf16.msra.mxu0 %v440
  %503 = vmatpush.bf16.msra.mxu0 %v438
  %504 = vmatpush.bf16.msra.mxu0 %v436
  %505 = vmatpush.bf16.msra.mxu0 %v434
  %506 = vmatmul.bf16.gmra.mxu0 %v54
  %v507 = vpop.f32.mrf.mxu0
  %v508 = vadd.f32 %v306, %v507
  %v509 = vpop.f32.mrf.mxu0
  %v510 = vadd.f32 %v308, %v509
  %511 = vdwg.mxu0
  %512 = vmatpush.bf16.msra.mxu0 %v464
  %513 = vmatpush.bf16.msra.mxu0 %v462
  %514 = vmatpush.bf16.msra.mxu0 %v460
  %515 = vmatpush.bf16.msra.mxu0 %v458
  %516 = vmatpush.bf16.msra.mxu0 %v456
  %517 = vmatpush.bf16.msra.mxu0 %v454
  %518 = vmatpush.bf16.msra.mxu0 %v452
  %519 = vmatpush.bf16.msra.mxu0 %v450
  %520 = vmatmul.bf16.gmra.mxu0 %v55
  %v521 = vpop.f32.mrf.mxu0
  %v522 = vadd.f32 %v508, %v521
  %v523 = vpop.f32.mrf.mxu0
  %v524 = vadd.f32 %v510, %v523
  %525 = vdwg.mxu0
  %526 = vmatpush.bf16.msra.mxu0 %v449
  %527 = vmatpush.bf16.msra.mxu0 %v447
  %528 = vmatpush.bf16.msra.mxu0 %v445
  %529 = vmatpush.bf16.msra.mxu0 %v443
  %530 = vmatpush.bf16.msra.mxu0 %v441
  %531 = vmatpush.bf16.msra.mxu0 %v439
  %532 = vmatpush.bf16.msra.mxu0 %v437
  %533 = vmatpush.bf16.msra.mxu0 %v435
  %534 = vmatmul.bf16.gmra.mxu0 %v54
  %v535 = vpop.f32.mrf.mxu0
  %v536 = vadd.f32 %v334, %v535
  %v537 = vpop.f32.mrf.mxu0
  %v538 = vadd.f32 %v336, %v537
  %539 = vdwg.mxu0
  %540 = vmatpush.bf16.msra.mxu0 %v465
  %541 = vmatpush.bf16.msra.mxu0 %v463
  %542 = vmatpush.bf16.msra.mxu0 %v461
  %543 = vmatpush.bf16.msra.mxu0 %v459
  %544 = vmatpush.bf16.msra.mxu0 %v457
  %545 = vmatpush.bf16.msra.mxu0 %v455
  %546 = vmatpush.bf16.msra.mxu0 %v453
  %547 = vmatpush.bf16.msra.mxu0 %v451
  %548 = vmatmul.bf16.gmra.mxu0 %v55
  %v549 = vpop.f32.mrf.mxu0
  %v550 = vadd.f32 %v536, %v549
  %v551 = vpop.f32.mrf.mxu0
  %v552 = vadd.f32 %v538, %v551
  %553 = vdwg.mxu0
  %v554 = vmul.f32 %v522, %v39
  %v555 = vmul.f32 %v550, %v40
  %v556 = vmul.f32 %v524, %v41
  %v557 = vmul.f32 %v552, %v42
  %v558 = vadd.f32 %v554, %v556
  %v559 = vrot.slane %v558, 4
  %v560 = vadd.f32 %v558, %v559
  %v561 = vrot.slane %v560, 2
  %v562 = vadd.f32 %v560, %v561
  %v563 = vrot.slane %v562, 1
  %v564 = vadd.f32 %v562, %v563
  %v565 = vadd.f32 %v555, %v557
  %v566 = vrot.slane %v565, 4
  %v567 = vadd.f32 %v565, %v566
  %v568 = vrot.slane %v567, 2
  %v569 = vadd.f32 %v567, %v568
  %v570 = vrot.slane %v569, 1
  %v571 = vadd.f32 %v569, %v570
  %572 = vrot.lane.b32.xlu0 %v564, 32
  %v573 = vpop.permute.xlu0 %572
  %574 = vrot.lane.b32.xlu0 %v571, 32
  %v575 = vpop.permute.xlu0 %574
  %v576 = vlaneseq
  %v577 = vand.u32 %v576, 127
  %vm578 = vcmp.lt.s32.totalorder %v577, 32
  %v579 = vsel %vm578, %v573, %v575
  %v580 = vsel %vm578, %v575, %v573
  %v581 = vadd.f32 %v564, %v580
  %v582 = vadd.f32 %v571, %v579
  %583 = vrot.lane.b32.xlu0 %v581, 64
  %v584 = vpop.permute.xlu0 %583
  %585 = vrot.lane.b32.xlu0 %v582, 64
  %v586 = vpop.permute.xlu0 %585
  %vm587 = vcmp.lt.s32.totalorder %v577, 64
  %v588 = vsel %vm587, %v584, %v586
  %v589 = vsel %vm587, %v586, %v584
  %v590 = vadd.f32 %v581, %v589
  %v591 = vadd.f32 %v582, %v588
  %v592 = vadd.f32 %v590, %v591
  %v593 = vmul.f32 %v592, 0.010204081
  %v594 = vperm.slane %v593, 0
  %v595 = vsub.f32 %v522, %v594
  %v596 = vsub.f32 %v550, %v594
  %v597 = vsub.f32 %v524, %v594
  %v598 = vsub.f32 %v552, %v594
  %v599 = vmul.f32 %v595, %v39
  %v600 = vmul.f32 %v596, %v40
  %v601 = vmul.f32 %v597, %v41
  %v602 = vmul.f32 %v598, %v42
  %v603 = vmul.f32 %v599, %v599
  %v604 = vmul.f32 %v600, %v600
  %v605 = vmul.f32 %v601, %v601
  %v606 = vmul.f32 %v602, %v602
  %v607 = vadd.f32 %v603, %v605
  %v608 = vrot.slane %v607, 4
  %v609 = vadd.f32 %v607, %v608
  %v610 = vrot.slane %v609, 2
  %v611 = vadd.f32 %v609, %v610
  %v612 = vrot.slane %v611, 1
  %v613 = vadd.f32 %v611, %v612
  %v614 = vadd.f32 %v604, %v606
  %v615 = vrot.slane %v614, 4
  %v616 = vadd.f32 %v614, %v615
  %v617 = vrot.slane %v616, 2
  %v618 = vadd.f32 %v616, %v617
  %v619 = vrot.slane %v618, 1
  %v620 = vadd.f32 %v618, %v619
  %621 = vrot.lane.b32.xlu0 %v613, 32
  %v622 = vpop.permute.xlu0 %621
  %623 = vrot.lane.b32.xlu0 %v620, 32
  %v624 = vpop.permute.xlu0 %623
  %v625 = vsel %vm578, %v622, %v624
  %v626 = vsel %vm578, %v624, %v622
  %v627 = vadd.f32 %v613, %v626
  %v628 = vadd.f32 %v620, %v625
  %629 = vrot.lane.b32.xlu0 %v627, 64
  %v630 = vpop.permute.xlu0 %629
  %631 = vrot.lane.b32.xlu0 %v628, 64
  %v632 = vpop.permute.xlu0 %631
  %v633 = vsel %vm587, %v630, %v632
  %v634 = vsel %vm587, %v632, %v630
  %v635 = vadd.f32 %v627, %v634
  %v636 = vadd.f32 %v628, %v633
  %v637 = vadd.f32 %v635, %v636
  %v638 = vmul.f32 %v637, 0.010204081
  %v639 = vld [vmem:[%s3] sm:$0x3]
  %v640 = vadd.f32 %v638, 1e-05
  %v641 = vrsqrt.pop %v640
  %v642 = vmul.f32 %v641, %v640
  %v643 = vmul.f32 %v642, %v641
  %v644 = vmul.f32 0.5, %v643
  %v645 = vsub.f32 1.5, %v644
  %v646 = vmul.f32 %v641, %v645
  %vm647 = vweird.f32 %v640
  %vm648 = vweird.f32 %v641
  %vm649 = vmor %vm647, %vm648
  %v650 = vsel %vm649, %v641, %v646
  %v652 = vrot.slane %v650, 7
  %vm653 = vcmask 1040384
  %v654 = vsel %vm653, %v650, %v652
  %v656 = vmul.f32 %v639, %v654
  %v658 = vperm.slane %v656, 0
  %v659 = vperm.slane %v656, 1
  %v662 = vmul.f32 %v599, %v658
  %v663 = vmul.f32 %v600, %v659
  %v664 = vmul.f32 %v601, %v658
  %v665 = vmul.f32 %v602, %v659
  %v666 = vld [vmem:[%s4] sm:$0x3]
  %v668 = vperm.slane %v666, 0
  %v669 = vperm.slane %v666, 1
  %v672 = vadd.f32 %v662, %v668
  %v673 = vadd.f32 %v663, %v669
  %v674 = vadd.f32 %v664, %v668
  %v675 = vadd.f32 %v665, %v669
  %v676 = vmax.f32 %v672, 0.0
  %v677 = vmax.f32 %v673, 0.0
  %v678 = vmax.f32 %v674, 0.0
  %v679 = vmax.f32 %v675, 0.0
  %v680 = vmul.f32 %v676, %v39
  %v681 = vmul.f32 %v677, %v40
  %v682 = vmul.f32 %v678, %v41
  %v683 = vmul.f32 %v679, %v42
  %v684 = vrot.slane %v680, 7
  %v685 = vrot.slane %v681, 7
  %v686 = vrot.slane %v682, 7
  %v687 = vrot.slane %v683, 7
  %vm688 = vcmp.lt.s32.totalorder %v48, 1
  %v689 = vsel %vm688, %v684, %v686
  %v690 = vsel %vm688, %v685, %v687
  %v691 = vsel %vm688, %v686, %v684
  %v692 = vsel %vm688, %v687, %v685
  %v693 = vpack.c.bf16 %v689, %v691
  %v694 = vpack.c.bf16 %v690, %v692
  %v695 = vld [vmem:[%s5] sm:$0xff]
  %v696 = vld [vmem:[%s5 + $0x8] sm:$0xff]
  %v697 = vld [vmem:[%s5 + $0x10] sm:$0xff]
  %v698 = vld [vmem:[%s5 + $0x18] sm:$0xff]
  %v699 = vld [vmem:[%s5 + $0x20] sm:$0xff]
  %v700 = vld [vmem:[%s5 + $0x28] sm:$0xff]
  %v701 = vld [vmem:[%s5 + $0x30] sm:$0xff]
  %v702 = vld [vmem:[%s5 + $0x38] sm:$0xff]
  %v703 = vld [vmem:[%s5 + $0x40] sm:$0xff]
  %v704 = vld [vmem:[%s5 + $0x48] sm:$0xff]
  %v705 = vld [vmem:[%s5 + $0x50] sm:$0xff]
  %v706 = vld [vmem:[%s5 + $0x58] sm:$0xff]
  %v707 = vld [vmem:[%s5 + $0x60] sm:$0xff]
  %v708 = vld [vmem:[%s5 + $0x68] sm:$0xff]
  %v709 = vld [vmem:[%s5 + $0x70] sm:$0xff]
  %v710 = vld [vmem:[%s5 + $0x78] sm:$0xff]
  %v711 = vld [vmem:[%s5 + $0x80] sm:$0xff]
  %v712 = vld [vmem:[%s5 + $0x88] sm:$0xff]
  %v713 = vld [vmem:[%s5 + $0x90] sm:$0xff]
  %v714 = vld [vmem:[%s5 + $0x98] sm:$0xff]
  %v715 = vld [vmem:[%s5 + $0xa0] sm:$0xff]
  %v716 = vld [vmem:[%s5 + $0xa8] sm:$0xff]
  %v717 = vld [vmem:[%s5 + $0xb0] sm:$0xff]
  %v718 = vld [vmem:[%s5 + $0xb8] sm:$0xff]
  %v719 = vld [vmem:[%s5 + $0xc0] sm:$0xff]
  %v720 = vld [vmem:[%s5 + $0xc8] sm:$0xff]
  %v721 = vld [vmem:[%s5 + $0xd0] sm:$0xff]
  %v722 = vld [vmem:[%s5 + $0xd8] sm:$0xff]
  %v723 = vld [vmem:[%s5 + $0xe0] sm:$0xff]
  %v724 = vld [vmem:[%s5 + $0xe8] sm:$0xff]
  %v725 = vld [vmem:[%s5 + $0xf0] sm:$0xff]
  %v726 = vld [vmem:[%s5 + $0xf8] sm:$0xff]
  %v727 = vpack.c.bf16 %v682, %v680
  %v728 = vpack.c.bf16 %v683, %v681
  %v729 = vld [vmem:[%s6] sm:$0xff]
  %v730 = vld [vmem:[%s6 + $0x8] sm:$0xff]
  %v731 = vld [vmem:[%s6 + $0x10] sm:$0xff]
  %v732 = vld [vmem:[%s6 + $0x18] sm:$0xff]
  %v733 = vld [vmem:[%s6 + $0x20] sm:$0xff]
  %v734 = vld [vmem:[%s6 + $0x28] sm:$0xff]
  %v735 = vld [vmem:[%s6 + $0x30] sm:$0xff]
  %v736 = vld [vmem:[%s6 + $0x38] sm:$0xff]
  %v737 = vld [vmem:[%s6 + $0x40] sm:$0xff]
  %v738 = vld [vmem:[%s6 + $0x48] sm:$0xff]
  %v739 = vld [vmem:[%s6 + $0x50] sm:$0xff]
  %v740 = vld [vmem:[%s6 + $0x58] sm:$0xff]
  %v741 = vld [vmem:[%s6 + $0x60] sm:$0xff]
  %v742 = vld [vmem:[%s6 + $0x68] sm:$0xff]
  %v743 = vld [vmem:[%s6 + $0x70] sm:$0xff]
  %v744 = vld [vmem:[%s6 + $0x78] sm:$0xff]
  %v745 = vld [vmem:[%s6 + $0x80] sm:$0xff]
  %v746 = vld [vmem:[%s6 + $0x88] sm:$0xff]
  %v747 = vld [vmem:[%s6 + $0x90] sm:$0xff]
  %v748 = vld [vmem:[%s6 + $0x98] sm:$0xff]
  %v749 = vld [vmem:[%s6 + $0xa0] sm:$0xff]
  %v750 = vld [vmem:[%s6 + $0xa8] sm:$0xff]
  %v751 = vld [vmem:[%s6 + $0xb0] sm:$0xff]
  %v752 = vld [vmem:[%s6 + $0xb8] sm:$0xff]
  %v753 = vld [vmem:[%s6 + $0xc0] sm:$0xff]
  %v754 = vld [vmem:[%s6 + $0xc8] sm:$0xff]
  %v755 = vld [vmem:[%s6 + $0xd0] sm:$0xff]
  %v756 = vld [vmem:[%s6 + $0xd8] sm:$0xff]
  %v757 = vld [vmem:[%s6 + $0xe0] sm:$0xff]
  %v758 = vld [vmem:[%s6 + $0xe8] sm:$0xff]
  %v759 = vld [vmem:[%s6 + $0xf0] sm:$0xff]
  %v760 = vld [vmem:[%s6 + $0xf8] sm:$0xff]
  %v793 = vunpack.c.l.b16 %v729
  %v794 = vunpack.c.h.b16 %v729
  %v795 = vunpack.c.l.b16 %v730
  %v796 = vunpack.c.h.b16 %v730
  %v797 = vunpack.c.l.b16 %v731
  %v798 = vunpack.c.h.b16 %v731
  %v799 = vunpack.c.l.b16 %v732
  %v800 = vunpack.c.h.b16 %v732
  %v801 = vunpack.c.l.b16 %v733
  %v802 = vunpack.c.h.b16 %v733
  %v803 = vunpack.c.l.b16 %v734
  %v804 = vunpack.c.h.b16 %v734
  %v805 = vunpack.c.l.b16 %v735
  %v806 = vunpack.c.h.b16 %v735
  %v807 = vunpack.c.l.b16 %v736
  %v808 = vunpack.c.h.b16 %v736
  %v809 = vunpack.c.l.b16 %v737
  %v810 = vunpack.c.h.b16 %v737
  %v811 = vunpack.c.l.b16 %v738
  %v812 = vunpack.c.h.b16 %v738
  %v813 = vunpack.c.l.b16 %v739
  %v814 = vunpack.c.h.b16 %v739
  %v815 = vunpack.c.l.b16 %v740
  %v816 = vunpack.c.h.b16 %v740
  %v817 = vunpack.c.l.b16 %v741
  %v818 = vunpack.c.h.b16 %v741
  %v819 = vunpack.c.l.b16 %v742
  %v820 = vunpack.c.h.b16 %v742
  %v821 = vunpack.c.l.b16 %v743
  %v822 = vunpack.c.h.b16 %v743
  %v823 = vunpack.c.l.b16 %v744
  %v824 = vunpack.c.h.b16 %v744
  %v825 = vunpack.c.l.b16 %v745
  %v826 = vunpack.c.h.b16 %v745
  %v827 = vunpack.c.l.b16 %v746
  %v828 = vunpack.c.h.b16 %v746
  %v829 = vunpack.c.l.b16 %v747
  %v830 = vunpack.c.h.b16 %v747
  %v831 = vunpack.c.l.b16 %v748
  %v832 = vunpack.c.h.b16 %v748
  %v833 = vunpack.c.l.b16 %v749
  %v834 = vunpack.c.h.b16 %v749
  %v835 = vunpack.c.l.b16 %v750
  %v836 = vunpack.c.h.b16 %v750
  %v837 = vunpack.c.l.b16 %v751
  %v838 = vunpack.c.h.b16 %v751
  %v839 = vunpack.c.l.b16 %v752
  %v840 = vunpack.c.h.b16 %v752
  %v841 = vunpack.c.l.b16 %v753
  %v842 = vunpack.c.h.b16 %v753
  %v843 = vunpack.c.l.b16 %v754
  %v844 = vunpack.c.h.b16 %v754
  %v845 = vunpack.c.l.b16 %v755
  %v846 = vunpack.c.h.b16 %v755
  %v847 = vunpack.c.l.b16 %v756
  %v848 = vunpack.c.h.b16 %v756
  %v849 = vunpack.c.l.b16 %v757
  %v850 = vunpack.c.h.b16 %v757
  %v851 = vunpack.c.l.b16 %v758
  %v852 = vunpack.c.h.b16 %v758
  %v853 = vunpack.c.l.b16 %v759
  %v854 = vunpack.c.h.b16 %v759
  %v855 = vunpack.c.l.b16 %v760
  %v856 = vunpack.c.h.b16 %v760
  %v857 = vpack.c.b16 %v795, %v793
  %v858 = vpack.c.b16 %v796, %v794
  %v859 = vpack.c.b16 %v799, %v797
  %v860 = vpack.c.b16 %v800, %v798
  %v861 = vpack.c.b16 %v803, %v801
  %v862 = vpack.c.b16 %v804, %v802
  %v863 = vpack.c.b16 %v807, %v805
  %v864 = vpack.c.b16 %v808, %v806
  %v865 = vpack.c.b16 %v811, %v809
  %v866 = vpack.c.b16 %v812, %v810
  %v867 = vpack.c.b16 %v815, %v813
  %v868 = vpack.c.b16 %v816, %v814
  %v869 = vpack.c.b16 %v819, %v817
  %v870 = vpack.c.b16 %v820, %v818
  %v871 = vpack.c.b16 %v823, %v821
  %v872 = vpack.c.b16 %v824, %v822
  %v873 = vpack.c.b16 %v827, %v825
  %v874 = vpack.c.b16 %v828, %v826
  %v875 = vpack.c.b16 %v831, %v829
  %v876 = vpack.c.b16 %v832, %v830
  %v877 = vpack.c.b16 %v835, %v833
  %v878 = vpack.c.b16 %v836, %v834
  %v879 = vpack.c.b16 %v839, %v837
  %v880 = vpack.c.b16 %v840, %v838
  %v881 = vpack.c.b16 %v843, %v841
  %v882 = vpack.c.b16 %v844, %v842
  %v883 = vpack.c.b16 %v847, %v845
  %v884 = vpack.c.b16 %v848, %v846
  %v885 = vpack.c.b16 %v851, %v849
  %v886 = vpack.c.b16 %v852, %v850
  %v887 = vpack.c.b16 %v855, %v853
  %v888 = vpack.c.b16 %v856, %v854
  %921 = vmatpush.bf16.msra.mxu0 %v871
  %922 = vmatpush.bf16.msra.mxu0 %v869
  %923 = vmatpush.bf16.msra.mxu0 %v867
  %924 = vmatpush.bf16.msra.mxu0 %v865
  %925 = vmatpush.bf16.msra.mxu0 %v863
  %926 = vmatpush.bf16.msra.mxu0 %v861
  %927 = vmatpush.bf16.msra.mxu0 %v859
  %928 = vmatpush.bf16.msra.mxu0 %v857
  %929 = vmatmul.bf16.gmra.mxu0 %v727
  %v930 = vpop.f32.mrf.mxu0
  %v931 = vadd.f32 0.0, %v930
  %v932 = vpop.f32.mrf.mxu0
  %v933 = vadd.f32 0.0, %v932
  %934 = vdwg.mxu0
  %935 = vmatpush.bf16.msra.mxu0 %v887
  %936 = vmatpush.bf16.msra.mxu0 %v885
  %937 = vmatpush.bf16.msra.mxu0 %v883
  %938 = vmatpush.bf16.msra.mxu0 %v881
  %939 = vmatpush.bf16.msra.mxu0 %v879
  %940 = vmatpush.bf16.msra.mxu0 %v877
  %941 = vmatpush.bf16.msra.mxu0 %v875
  %942 = vmatpush.bf16.msra.mxu0 %v873
  %943 = vmatmul.bf16.gmra.mxu0 %v728
  %v944 = vpop.f32.mrf.mxu0
  %v945 = vadd.f32 %v931, %v944
  %v946 = vpop.f32.mrf.mxu0
  %v947 = vadd.f32 %v933, %v946
  %948 = vdwg.mxu0
  %949 = vmatpush.bf16.msra.mxu0 %v872
  %950 = vmatpush.bf16.msra.mxu0 %v870
  %951 = vmatpush.bf16.msra.mxu0 %v868
  %952 = vmatpush.bf16.msra.mxu0 %v866
  %953 = vmatpush.bf16.msra.mxu0 %v864
  %954 = vmatpush.bf16.msra.mxu0 %v862
  %955 = vmatpush.bf16.msra.mxu0 %v860
  %956 = vmatpush.bf16.msra.mxu0 %v858
  %957 = vmatmul.bf16.gmra.mxu0 %v727
  %v958 = vpop.f32.mrf.mxu0
  %v959 = vadd.f32 0.0, %v958
  %v960 = vpop.f32.mrf.mxu0
  %v961 = vadd.f32 0.0, %v960
  %962 = vdwg.mxu0
  %963 = vmatpush.bf16.msra.mxu0 %v888
  %964 = vmatpush.bf16.msra.mxu0 %v886
  %965 = vmatpush.bf16.msra.mxu0 %v884
  %966 = vmatpush.bf16.msra.mxu0 %v882
  %967 = vmatpush.bf16.msra.mxu0 %v880
  %968 = vmatpush.bf16.msra.mxu0 %v878
  %969 = vmatpush.bf16.msra.mxu0 %v876
  %970 = vmatpush.bf16.msra.mxu0 %v874
  %971 = vmatmul.bf16.gmra.mxu0 %v728
  %v972 = vpop.f32.mrf.mxu0
  %v973 = vadd.f32 %v959, %v972
  %v974 = vpop.f32.mrf.mxu0
  %v975 = vadd.f32 %v961, %v974
  %976 = vdwg.mxu0
  %v1009 = vunpack.c.l.b16 %v695
  %v1010 = vunpack.c.h.b16 %v695
  %v1011 = vunpack.c.l.b16 %v696
  %v1012 = vunpack.c.h.b16 %v696
  %v1013 = vunpack.c.l.b16 %v697
  %v1014 = vunpack.c.h.b16 %v697
  %v1015 = vunpack.c.l.b16 %v698
  %v1016 = vunpack.c.h.b16 %v698
  %v1017 = vunpack.c.l.b16 %v699
  %v1018 = vunpack.c.h.b16 %v699
  %v1019 = vunpack.c.l.b16 %v700
  %v1020 = vunpack.c.h.b16 %v700
  %v1021 = vunpack.c.l.b16 %v701
  %v1022 = vunpack.c.h.b16 %v701
  %v1023 = vunpack.c.l.b16 %v702
  %v1024 = vunpack.c.h.b16 %v702
  %v1025 = vunpack.c.l.b16 %v703
  %v1026 = vunpack.c.h.b16 %v703
  %v1027 = vunpack.c.l.b16 %v704
  %v1028 = vunpack.c.h.b16 %v704
  %v1029 = vunpack.c.l.b16 %v705
  %v1030 = vunpack.c.h.b16 %v705
  %v1031 = vunpack.c.l.b16 %v706
  %v1032 = vunpack.c.h.b16 %v706
  %v1033 = vunpack.c.l.b16 %v707
  %v1034 = vunpack.c.h.b16 %v707
  %v1035 = vunpack.c.l.b16 %v708
  %v1036 = vunpack.c.h.b16 %v708
  %v1037 = vunpack.c.l.b16 %v709
  %v1038 = vunpack.c.h.b16 %v709
  %v1039 = vunpack.c.l.b16 %v710
  %v1040 = vunpack.c.h.b16 %v710
  %v1041 = vunpack.c.l.b16 %v711
  %v1042 = vunpack.c.h.b16 %v711
  %v1043 = vunpack.c.l.b16 %v712
  %v1044 = vunpack.c.h.b16 %v712
  %v1045 = vunpack.c.l.b16 %v713
  %v1046 = vunpack.c.h.b16 %v713
  %v1047 = vunpack.c.l.b16 %v714
  %v1048 = vunpack.c.h.b16 %v714
  %v1049 = vunpack.c.l.b16 %v715
  %v1050 = vunpack.c.h.b16 %v715
  %v1051 = vunpack.c.l.b16 %v716
  %v1052 = vunpack.c.h.b16 %v716
  %v1053 = vunpack.c.l.b16 %v717
  %v1054 = vunpack.c.h.b16 %v717
  %v1055 = vunpack.c.l.b16 %v718
  %v1056 = vunpack.c.h.b16 %v718
  %v1057 = vunpack.c.l.b16 %v719
  %v1058 = vunpack.c.h.b16 %v719
  %v1059 = vunpack.c.l.b16 %v720
  %v1060 = vunpack.c.h.b16 %v720
  %v1061 = vunpack.c.l.b16 %v721
  %v1062 = vunpack.c.h.b16 %v721
  %v1063 = vunpack.c.l.b16 %v722
  %v1064 = vunpack.c.h.b16 %v722
  %v1065 = vunpack.c.l.b16 %v723
  %v1066 = vunpack.c.h.b16 %v723
  %v1067 = vunpack.c.l.b16 %v724
  %v1068 = vunpack.c.h.b16 %v724
  %v1069 = vunpack.c.l.b16 %v725
  %v1070 = vunpack.c.h.b16 %v725
  %v1071 = vunpack.c.l.b16 %v726
  %v1072 = vunpack.c.h.b16 %v726
  %v1073 = vpack.c.b16 %v1011, %v1009
  %v1074 = vpack.c.b16 %v1012, %v1010
  %v1075 = vpack.c.b16 %v1015, %v1013
  %v1076 = vpack.c.b16 %v1016, %v1014
  %v1077 = vpack.c.b16 %v1019, %v1017
  %v1078 = vpack.c.b16 %v1020, %v1018
  %v1079 = vpack.c.b16 %v1023, %v1021
  %v1080 = vpack.c.b16 %v1024, %v1022
  %v1081 = vpack.c.b16 %v1027, %v1025
  %v1082 = vpack.c.b16 %v1028, %v1026
  %v1083 = vpack.c.b16 %v1031, %v1029
  %v1084 = vpack.c.b16 %v1032, %v1030
  %v1085 = vpack.c.b16 %v1035, %v1033
  %v1086 = vpack.c.b16 %v1036, %v1034
  %v1087 = vpack.c.b16 %v1039, %v1037
  %v1088 = vpack.c.b16 %v1040, %v1038
  %v1089 = vpack.c.b16 %v1043, %v1041
  %v1090 = vpack.c.b16 %v1044, %v1042
  %v1091 = vpack.c.b16 %v1047, %v1045
  %v1092 = vpack.c.b16 %v1048, %v1046
  %v1093 = vpack.c.b16 %v1051, %v1049
  %v1094 = vpack.c.b16 %v1052, %v1050
  %v1095 = vpack.c.b16 %v1055, %v1053
  %v1096 = vpack.c.b16 %v1056, %v1054
  %v1097 = vpack.c.b16 %v1059, %v1057
  %v1098 = vpack.c.b16 %v1060, %v1058
  %v1099 = vpack.c.b16 %v1063, %v1061
  %v1100 = vpack.c.b16 %v1064, %v1062
  %v1101 = vpack.c.b16 %v1067, %v1065
  %v1102 = vpack.c.b16 %v1068, %v1066
  %v1103 = vpack.c.b16 %v1071, %v1069
  %v1104 = vpack.c.b16 %v1072, %v1070
  %1137 = vmatpush.bf16.msra.mxu0 %v1087
  %1138 = vmatpush.bf16.msra.mxu0 %v1085
  %1139 = vmatpush.bf16.msra.mxu0 %v1083
  %1140 = vmatpush.bf16.msra.mxu0 %v1081
  %1141 = vmatpush.bf16.msra.mxu0 %v1079
  %1142 = vmatpush.bf16.msra.mxu0 %v1077
  %1143 = vmatpush.bf16.msra.mxu0 %v1075
  %1144 = vmatpush.bf16.msra.mxu0 %v1073
  %1145 = vmatmul.bf16.gmra.mxu0 %v693
  %v1146 = vpop.f32.mrf.mxu0
  %v1147 = vadd.f32 %v945, %v1146
  %v1148 = vpop.f32.mrf.mxu0
  %v1149 = vadd.f32 %v947, %v1148
  %1150 = vdwg.mxu0
  %1151 = vmatpush.bf16.msra.mxu0 %v1103
  %1152 = vmatpush.bf16.msra.mxu0 %v1101
  %1153 = vmatpush.bf16.msra.mxu0 %v1099
  %1154 = vmatpush.bf16.msra.mxu0 %v1097
  %1155 = vmatpush.bf16.msra.mxu0 %v1095
  %1156 = vmatpush.bf16.msra.mxu0 %v1093
  %1157 = vmatpush.bf16.msra.mxu0 %v1091
  %1158 = vmatpush.bf16.msra.mxu0 %v1089
  %1159 = vmatmul.bf16.gmra.mxu0 %v694
  %v1160 = vpop.f32.mrf.mxu0
  %v1161 = vadd.f32 %v1147, %v1160
  %v1162 = vpop.f32.mrf.mxu0
  %v1163 = vadd.f32 %v1149, %v1162
  %1164 = vdwg.mxu0
  %1165 = vmatpush.bf16.msra.mxu0 %v1088
  %1166 = vmatpush.bf16.msra.mxu0 %v1086
  %1167 = vmatpush.bf16.msra.mxu0 %v1084
  %1168 = vmatpush.bf16.msra.mxu0 %v1082
  %1169 = vmatpush.bf16.msra.mxu0 %v1080
  %1170 = vmatpush.bf16.msra.mxu0 %v1078
  %1171 = vmatpush.bf16.msra.mxu0 %v1076
  %1172 = vmatpush.bf16.msra.mxu0 %v1074
  %1173 = vmatmul.bf16.gmra.mxu0 %v693
  %v1174 = vpop.f32.mrf.mxu0
  %v1175 = vadd.f32 %v973, %v1174
  %v1176 = vpop.f32.mrf.mxu0
  %v1177 = vadd.f32 %v975, %v1176
  %1178 = vdwg.mxu0
  %1179 = vmatpush.bf16.msra.mxu0 %v1104
  %1180 = vmatpush.bf16.msra.mxu0 %v1102
  %1181 = vmatpush.bf16.msra.mxu0 %v1100
  %1182 = vmatpush.bf16.msra.mxu0 %v1098
  %1183 = vmatpush.bf16.msra.mxu0 %v1096
  %1184 = vmatpush.bf16.msra.mxu0 %v1094
  %1185 = vmatpush.bf16.msra.mxu0 %v1092
  %1186 = vmatpush.bf16.msra.mxu0 %v1090
  %1187 = vmatmul.bf16.gmra.mxu0 %v694
  %v1188 = vpop.f32.mrf.mxu0
  %v1189 = vadd.f32 %v1175, %v1188
  %v1190 = vpop.f32.mrf.mxu0
  %v1191 = vadd.f32 %v1177, %v1190
  %1192 = vdwg.mxu0
  %v1193 = vadd.f32 %v1161, %v1163
  %v1194 = vrot.slane %v1193, 4
  %v1195 = vadd.f32 %v1193, %v1194
  %v1196 = vrot.slane %v1195, 2
  %v1197 = vadd.f32 %v1195, %v1196
  %v1198 = vrot.slane %v1197, 1
  %v1199 = vadd.f32 %v1197, %v1198
  %v1200 = vadd.f32 %v1189, %v1191
  %v1201 = vrot.slane %v1200, 4
  %v1202 = vadd.f32 %v1200, %v1201
  %v1203 = vrot.slane %v1202, 2
  %v1204 = vadd.f32 %v1202, %v1203
  %v1205 = vrot.slane %v1204, 1
  %v1206 = vadd.f32 %v1204, %v1205
  %1207 = vrot.lane.b32.xlu0 %v1199, 32
  %v1208 = vpop.permute.xlu0 %1207
  %1209 = vrot.lane.b32.xlu0 %v1206, 32
  %v1210 = vpop.permute.xlu0 %1209
  %v1211 = vsel %vm578, %v1208, %v1210
  %v1212 = vsel %vm578, %v1210, %v1208
  %v1213 = vadd.f32 %v1199, %v1212
  %v1214 = vadd.f32 %v1206, %v1211
  %1215 = vrot.lane.b32.xlu0 %v1213, 64
  %v1216 = vpop.permute.xlu0 %1215
  %1217 = vrot.lane.b32.xlu0 %v1214, 64
  %v1218 = vpop.permute.xlu0 %1217
  %v1219 = vsel %vm587, %v1216, %v1218
  %v1220 = vsel %vm587, %v1218, %v1216
  %v1221 = vadd.f32 %v1213, %v1220
  %v1222 = vadd.f32 %v1214, %v1219
  %v1223 = vadd.f32 %v1221, %v1222
  %v1224 = vmul.f32 %v1223, 0.0078125
  %v1225 = vperm.slane %v1224, 0
  %v1226 = vsub.f32 %v1161, %v1225
  %v1227 = vsub.f32 %v1189, %v1225
  %v1228 = vsub.f32 %v1163, %v1225
  %v1229 = vsub.f32 %v1191, %v1225
  %v1230 = vmul.f32 %v1226, %v1226
  %v1231 = vmul.f32 %v1227, %v1227
  %v1232 = vmul.f32 %v1228, %v1228
  %v1233 = vmul.f32 %v1229, %v1229
  %v1234 = vadd.f32 %v1230, %v1232
  %v1235 = vrot.slane %v1234, 4
  %v1236 = vadd.f32 %v1234, %v1235
  %v1237 = vrot.slane %v1236, 2
  %v1238 = vadd.f32 %v1236, %v1237
  %v1239 = vrot.slane %v1238, 1
  %v1240 = vadd.f32 %v1238, %v1239
  %v1241 = vadd.f32 %v1231, %v1233
  %v1242 = vrot.slane %v1241, 4
  %v1243 = vadd.f32 %v1241, %v1242
  %v1244 = vrot.slane %v1243, 2
  %v1245 = vadd.f32 %v1243, %v1244
  %v1246 = vrot.slane %v1245, 1
  %v1247 = vadd.f32 %v1245, %v1246
  %1248 = vrot.lane.b32.xlu0 %v1240, 32
  %v1249 = vpop.permute.xlu0 %1248
  %1250 = vrot.lane.b32.xlu0 %v1247, 32
  %v1251 = vpop.permute.xlu0 %1250
  %v1252 = vsel %vm578, %v1249, %v1251
  %v1253 = vsel %vm578, %v1251, %v1249
  %v1254 = vadd.f32 %v1240, %v1253
  %v1255 = vadd.f32 %v1247, %v1252
  %1256 = vrot.lane.b32.xlu0 %v1254, 64
  %v1257 = vpop.permute.xlu0 %1256
  %1258 = vrot.lane.b32.xlu0 %v1255, 64
  %v1259 = vpop.permute.xlu0 %1258
  %v1260 = vsel %vm587, %v1257, %v1259
  %v1261 = vsel %vm587, %v1259, %v1257
  %v1262 = vadd.f32 %v1254, %v1261
  %v1263 = vadd.f32 %v1255, %v1260
  %v1264 = vadd.f32 %v1262, %v1263
  %v1265 = vmul.f32 %v1264, 0.0078125
  %v1266 = vld [vmem:[%s7] sm:$0x3]
  %v1267 = vadd.f32 %v1265, 1e-05
  %v1268 = vrsqrt.pop %v1267
  %v1269 = vmul.f32 %v1268, %v1267
  %v1270 = vmul.f32 %v1269, %v1268
  %v1271 = vmul.f32 0.5, %v1270
  %v1272 = vsub.f32 1.5, %v1271
  %v1273 = vmul.f32 %v1268, %v1272
  %vm1274 = vweird.f32 %v1267
  %vm1275 = vweird.f32 %v1268
  %vm1276 = vmor %vm1274, %vm1275
  %v1277 = vsel %vm1276, %v1268, %v1273
  %v1279 = vrot.slane %v1277, 7
  %v1280 = vsel %vm653, %v1277, %v1279
  %v1282 = vmul.f32 %v1266, %v1280
  %v1284 = vperm.slane %v1282, 0
  %v1285 = vperm.slane %v1282, 1
  %v1288 = vmul.f32 %v1226, %v1284
  %v1289 = vmul.f32 %v1227, %v1285
  %v1290 = vmul.f32 %v1228, %v1284
  %v1291 = vmul.f32 %v1229, %v1285
  %v1292 = vld [vmem:[%s8] sm:$0x3]
  %v1294 = vperm.slane %v1292, 0
  %v1295 = vperm.slane %v1292, 1
  %v1298 = vadd.f32 %v1288, %v1294
  %v1299 = vadd.f32 %v1289, %v1295
  %v1300 = vadd.f32 %v1290, %v1294
  %v1301 = vadd.f32 %v1291, %v1295
  %v1302 = vadd.f32 %v1298, %v35
  %v1303 = vadd.f32 %v1299, %v36
  %v1304 = vadd.f32 %v1300, %v37
  %v1305 = vadd.f32 %v1301, %v38
  %v1306 = vmax.f32 %v1302, 0.0
  %v1307 = vmax.f32 %v1303, 0.0
  %v1308 = vmax.f32 %v1304, 0.0
  %v1309 = vmax.f32 %v1305, 0.0
  %1310 = vst [vmem:[%s10] sm:$0xff] %v1306
  %1311 = vst [vmem:[%s10 + $0x8] sm:$0xff] %v1307
  %1312 = vst [vmem:[%s10 + $0x10] sm:$0xff] %v1308
  %1313 = vst [vmem:[%s10 + $0x18] sm:$0xff] %v1309
  // Predicated region
  $region42: #{resblock_forward.1} parent=0 // pred_check
    _
  $region43: #{resblock_forward.1} parent=0 // pred_check_branch
    %1315 = sbr.rel (0) target = $region45
  $region44: #{resblock_forward.1} parent=0 // pred_region
    _
  $region45: #{resblock_forward.1} parent=0 // pred_fallthru
    _
  // Predicated region
  $region46: #{resblock_forward.1} parent=0 // pred_check
    _
  $region47: #{resblock_forward.1} parent=0 // pred_check_branch
    %1317 = sbr.rel (0) target = $region49
  $region48: #{resblock_forward.1} parent=0 // pred_region
    _
  $region49: #{resblock_forward.1} parent=0 // pred_fallthru
    _

</llo_original>
